<compile_context>
chip_gen: v7x
topology: tpu7x:2x2x1
jax: 0.10.0
libtpu: 0.0.40
codegen_flags: <defaults>
</compile_context>

<pallas_src>
import math

import jax
import jax.numpy as jnp
from jax.experimental import pallas as pl
from jax.experimental.pallas import tpu as pltpu  # noqa: F401


# ----------------------------------------------------------------------------
# Parameters (PyTorch layouts, deterministic synthetic init)
# ----------------------------------------------------------------------------
def init_params(key, z_size=128, out_c=3):
    specs = {
        "enc1": ("conv", (32, 3, 4, 4)),
        "enc2": ("conv", (64, 32, 4, 4)),
        "enc3": ("conv", (128, 64, 4, 4)),
        "h": ("lin", (2 * z_size, 512)),        # PyTorch Linear: (out, in)
        "dh": ("lin", (512, z_size)),
        "dec1": ("tconv", (512, 64, 3, 3)),     # ConvTranspose2d: (Cin, Cout, k, k)
        "dec2": ("tconv", (64, 32, 3, 3)),
        "dec3": ("tconv", (32, 16, 3, 3)),
        "dec4": ("tconv", (16, out_c, 4, 4)),
    }
    params = {}
    keys = jax.random.split(key, len(specs))
    for (name, (kind, shape)), k in zip(specs.items(), keys):
        if kind == "conv":
            fan_in = shape[1] * shape[2] * shape[3]
            bias_n = shape[0]
        elif kind == "tconv":
            fan_in = shape[0] * shape[2] * shape[3]
            bias_n = shape[1]
        else:
            fan_in = shape[1]
            bias_n = shape[0]
        scale = 1.0 / math.sqrt(fan_in)
        kw, kb = jax.random.split(k)
        params[name + "_w"] = jax.random.normal(kw, shape, jnp.float32) * scale
        params[name + "_b"] = jax.random.normal(kb, (bias_n,), jnp.float32) * scale
    return params


# ----------------------------------------------------------------------------
# One-time lowering of conv / conv-transpose weights into matmul operators.
# Activations are 2-D matrices  A[b*H + h, w*C + c]  (lane-dense NHWC).
# ----------------------------------------------------------------------------
def _conv_ops(w, b, h_in, stride, batch):
    """Conv2d (PyTorch weight (Cout,Cin,k,k), padding=0) -> (R, M, b_tiled, Ho)."""
    c_out, c_in, k, _ = w.shape
    h_out = (h_in - k) // stride + 1
    # R[ki]: 0/1 row selector, block-diagonal over batch: (k, B*Ho, B*H)
    oi = jnp.arange(h_out)[:, None]
    hi = jnp.arange(h_in)[None, :]
    r_single = jnp.stack([(hi == stride * oi + ki) for ki in range(k)]).astype(jnp.float32)
    eye_b = jnp.eye(batch, dtype=jnp.float32)
    r_bd = jnp.stack([jnp.kron(eye_b, r_single[ki]) for ki in range(k)])
    # M[ki]: weight-banded column mixer: (k, W*Cin, Wo*Cout)
    w_in, w_out = h_in, h_out
    kj = jnp.arange(w_in)[:, None] - stride * jnp.arange(w_out)[None, :]   # (W, Wo)
    valid = ((kj >= 0) & (kj < k)).astype(jnp.float32)
    kj_c = jnp.clip(kj, 0, k - 1)
    wt = jnp.transpose(w, (2, 3, 1, 0))                     # (kh, kw, Cin, Cout)
    m = wt[:, kj_c, :, :] * valid[None, :, :, None, None]   # (k, W, Wo, Cin, Cout)
    m = jnp.transpose(m, (0, 1, 3, 2, 4)).reshape(k, w_in * c_in, w_out * c_out)
    b_t = jnp.tile(b, w_out).reshape(1, w_out * c_out)
    return r_bd, m, b_t, h_out


def _tconv_ops(w, b, h_in, stride, batch):
    """ConvTranspose2d (PyTorch weight (Cin,Cout,k,k), padding=0) -> (P, N, b_tiled, Ho)."""
    c_in, c_out, k, _ = w.shape
    h_out = (h_in - 1) * stride + k
    oi = jnp.arange(h_out)[:, None]
    hi = jnp.arange(h_in)[None, :]
    p_single = jnp.stack([(oi == stride * hi + ki) for ki in range(k)]).astype(jnp.float32)
    eye_b = jnp.eye(batch, dtype=jnp.float32)
    p_bd = jnp.stack([jnp.kron(eye_b, p_single[ki]) for ki in range(k)])
    w_in, w_out = h_in, h_out
    kj = jnp.arange(w_out)[None, :] - stride * jnp.arange(w_in)[:, None]   # (W_in, W_out)
    valid = ((kj >= 0) & (kj < k)).astype(jnp.float32)
    kj_c = jnp.clip(kj, 0, k - 1)
    wt = jnp.transpose(w, (2, 3, 0, 1))                     # (kh, kw, Cin, Cout)
    n = wt[:, kj_c, :, :] * valid[None, :, :, None, None]
    n = jnp.transpose(n, (0, 1, 3, 2, 4)).reshape(k, w_in * c_in, w_out * c_out)
    b_t = jnp.tile(b, w_out).reshape(1, w_out * c_out)
    return p_bd, n, b_t, h_out


def prepare_operators(params, batch, in_size=32):
    p = {}
    p["R1"], p["M1"], p["b1"], h1 = _conv_ops(params["enc1_w"], params["enc1_b"], in_size, 2, batch)
    p["R2"], p["M2"], p["b2"], h2 = _conv_ops(params["enc2_w"], params["enc2_b"], h1, 2, batch)
    p["R3"], p["M3"], p["b3"], h3 = _conv_ops(params["enc3_w"], params["enc3_b"], h2, 2, batch)
    c3_ch = params["enc3_w"].shape[0]

    # h: Linear(c3*h3*h3 -> 2z).  PyTorch flattens NCHW (c, hh, ww); our rows
    # are (b*h3 + hh) with columns (ww*c3 + c), so permute the weight rows once
    # and split per encoder output row hh (flatten folded into row selectors).
    h_wt = params["h_w"].T                                  # (c3*h3*h3, 2z), CHW rows
    ww, cc = jnp.meshgrid(jnp.arange(h3), jnp.arange(c3_ch), indexing="ij")
    eye_b = jnp.eye(batch, dtype=jnp.float32)
    wh, sel = [], []
    for hh in range(h3):
        idx = (cc * (h3 * h3) + hh * h3 + ww).reshape(-1)
        wh.append(jnp.take(h_wt, idx, axis=0))              # (h3*c3, 2z)
        one_hot = (jnp.arange(h3) == hh).astype(jnp.float32).reshape(1, h3)
        sel.append(jnp.kron(eye_b, one_hot))                # (B, B*h3)
    p["Wh"] = jnp.stack(wh)                                 # (h3, h3*c3, 2z)
    p["S"] = jnp.stack(sel)                                 # (h3, B, B*h3)
    p["hb"] = params["h_b"].reshape(1, -1)

    p["Wdh"] = params["dh_w"].T                             # (z, 512) pre-transposed
    p["dhb"] = params["dh_b"].reshape(1, -1)

    p["P1"], p["N1"], p["c1"], d1 = _tconv_ops(params["dec1_w"], params["dec1_b"], 1, 2, batch)
    p["P2"], p["N2"], p["c2"], d2 = _tconv_ops(params["dec2_w"], params["dec2_b"], d1, 2, batch)
    p["P3"], p["N3"], p["c3"], d3 = _tconv_ops(params["dec3_w"], params["dec3_b"], d2, 2, batch)
    p["P4"], p["N4"], p["c4"], d4 = _tconv_ops(params["dec4_w"], params["dec4_b"], d3, 2, batch)
    return p


# ----------------------------------------------------------------------------
# Fused forward pass: one Pallas kernel for the whole network (loss_fn='mse')
# ----------------------------------------------------------------------------
def unet_forward(prep, x, eps, sigma=1.0, vae_sigma=1.0, z_size=128,
                 kl_tolerance=0.5):
    # `sigma` is only used by the non-'mse' branches of the reference module.
    del sigma
    batch, chan, height, width = x.shape
    x_s = jnp.transpose(x, (0, 2, 3, 1)).reshape(batch * height, width * chan)
    x_s = x_s.astype(jnp.float32)

    vae_sigma = float(vae_sigma)
    kl_tolerance = float(kl_tolerance)
    inv_n = 1.0 / float(batch * chan * height * width)

    out_rows = prep["P4"].shape[1]          # B * H_out
    out_cols = prep["N4"].shape[2]          # W_out * C_out
    h_out = out_rows // batch
    c_out = out_cols // h_out

    def kernel(x_ref, eps_ref,
               r1, m1, b1, r2, m2, b2, r3, m3, b3,
               s_sel, wh, hb, wdh, dhb,
               p1, n1, c1, p2, n2, c2, p3, n3, c3, p4, n4, c4,
               y_ref, z_ref, loss_ref, kl_ref):
        f32 = jnp.float32

        def conv(xv, r_ref, m_ref, b_ref, relu):
            acc = None
            for ki in range(r_ref.shape[0]):
                t = jnp.dot(jnp.dot(r_ref[ki], xv, preferred_element_type=f32),
                            m_ref[ki], preferred_element_type=f32)
                acc = t if acc is None else acc + t
            acc = acc + b_ref[...]
            return jnp.maximum(acc, 0.0) if relu else acc

        def tconv(xv, p_ref, n_ref, b_ref, relu):
            acc = None
            for ki in range(p_ref.shape[0]):
                t = jnp.dot(p_ref[ki],
                            jnp.dot(xv, n_ref[ki], preferred_element_type=f32),
                            preferred_element_type=f32)
                acc = t if acc is None else acc + t
            acc = acc + b_ref[...]
            return jnp.maximum(acc, 0.0) if relu else acc

        # ---- encoder ----
        x0 = x_ref[...]
        a1 = conv(x0, r1, m1, b1, True)
        a2 = conv(a1, r2, m2, b2, True)
        a3 = conv(a2, r3, m3, b3, False)

        # ---- h linear (flatten folded into 0/1 row selectors) ----
        zs = hb[...]
        for hh in range(s_sel.shape[0]):
            zs = zs + jnp.dot(jnp.dot(s_sel[hh], a3, preferred_element_type=f32),
                              wh[hh], preferred_element_type=f32)

        # ---- VAE head ----
        mu = zs[:, :z_size]
        log_var = zs[:, z_size:]
        z = mu + jnp.exp(log_var * 0.5) * eps_ref[...] * vae_sigma
        z_ref[...] = z
        kl = -0.5 * jnp.mean(1.0 + log_var - mu * mu - jnp.exp(log_var),
                             axis=1, keepdims=True)
        kl = jnp.maximum(kl, kl_tolerance)
        kl_ref[...] = jnp.mean(kl).reshape(1, 1)

        # ---- decoder ----
        dz = jnp.dot(z, wdh[...], preferred_element_type=f32) + dhb[...]
        d1 = tconv(dz, p1, n1, c1, True)
        d2 = tconv(d1, p2, n2, c2, True)
        d3 = tconv(d2, p3, n3, c3, True)
        out = tconv(d3, p4, n4, c4, False)

        # ---- sigmoid + MSE ----
        y = 1.0 / (1.0 + jnp.exp(-out))
        y_ref[...] = y
        diff = x0 - y
        loss_ref[...] = (jnp.sum(diff * diff) * inv_n).reshape(1, 1)

    y_s, z, loss, kl_loss = pl.pallas_call(
        kernel,
        out_shape=(
            jax.ShapeDtypeStruct((out_rows, out_cols), jnp.float32),
            jax.ShapeDtypeStruct((batch, z_size), jnp.float32),
            jax.ShapeDtypeStruct((1, 1), jnp.float32),
            jax.ShapeDtypeStruct((1, 1), jnp.float32),
        ),
    )(x_s, eps.astype(jnp.float32),
      prep["R1"], prep["M1"], prep["b1"],
      prep["R2"], prep["M2"], prep["b2"],
      prep["R3"], prep["M3"], prep["b3"],
      prep["S"], prep["Wh"], prep["hb"],
      prep["Wdh"], prep["dhb"],
      prep["P1"], prep["N1"], prep["c1"],
      prep["P2"], prep["N2"], prep["c2"],
      prep["P3"], prep["N3"], prep["c3"],
      prep["P4"], prep["N4"], prep["c4"])

    y = y_s.reshape(batch, h_out, h_out, c_out).transpose(0, 3, 1, 2)
    return y, z, loss[0, 0], kl_loss[0, 0]


# ----------------------------------------------------------------------------
# Pure-JAX (XLA) reference, used as a numerical self-check
# ----------------------------------------------------------------------------
_HI = jax.lax.Precision.HIGHEST


def _ref_conv(x, w, b, stride):
    out = jax.lax.conv_general_dilated(
        x, w, window_strides=(stride, stride), padding="VALID",
        dimension_numbers=("NCHW", "OIHW", "NCHW"), precision=_HI)
    return out + b.reshape(1, -1, 1, 1)


def _ref_tconv(x, w, b, stride):
    k = w.shape[2]
    w_f = jnp.flip(w, (2, 3)).transpose(1, 0, 2, 3)     # -> (Cout, Cin, k, k)
    out = jax.lax.conv_general_dilated(
        x, w_f, window_strides=(1, 1),
        padding=[(k - 1, k - 1), (k - 1, k - 1)],
        lhs_dilation=(stride, stride),
        dimension_numbers=("NCHW", "OIHW", "NCHW"), precision=_HI)
    return out + b.reshape(1, -1, 1, 1)


def ref_forward(params, x, eps, vae_sigma=1.0, z_size=128, kl_tolerance=0.5):
    batch = x.shape[0]
    h1 = jax.nn.relu(_ref_conv(x, params["enc1_w"], params["enc1_b"], 2))
    h2 = jax.nn.relu(_ref_conv(h1, params["enc2_w"], params["enc2_b"], 2))
    h3 = _ref_conv(h2, params["enc3_w"], params["enc3_b"], 2)
    flat = h3.reshape(batch, -1)
    zs = jnp.dot(flat, params["h_w"].T, precision=_HI) + params["h_b"]
    mu, log_var = zs[:, :z_size], zs[:, z_size:]
    z = mu + jnp.exp(log_var / 2.0) * eps * vae_sigma
    kl = -0.5 * jnp.mean(1.0 + log_var - mu ** 2 - jnp.exp(log_var), axis=1)
    kl_loss = jnp.mean(jnp.maximum(kl, kl_tolerance))
    dz = (jnp.dot(z, params["dh_w"].T, precision=_HI) + params["dh_b"])
    dz = dz.reshape(batch, -1, 1, 1)
    d1 = jax.nn.relu(_ref_tconv(dz, params["dec1_w"], params["dec1_b"], 2))
    d2 = jax.nn.relu(_ref_tconv(d1, params["dec2_w"], params["dec2_b"], 2))
    d3 = jax.nn.relu(_ref_tconv(d2, params["dec3_w"], params["dec3_b"], 2))
    out = _ref_tconv(d3, params["dec4_w"], params["dec4_b"], 2)
    y = jax.nn.sigmoid(out)
    loss = jnp.mean((x - y) ** 2)
    return y, z, loss, kl_loss


# ----------------------------------------------------------------------------
if __name__ == "__main__":
    key = jax.random.PRNGKey(0)
    pkey, xkey, ekey = jax.random.split(key, 3)

    B, z_size = 2, 128
    params = init_params(pkey, z_size=z_size)
    prep = prepare_operators(params, batch=B, in_size=32)

    x = jax.random.uniform(xkey, (B, 3, 32, 32), jnp.float32)   # NCHW, in [0,1)
    eps = jax.random.normal(ekey, (B, z_size), jnp.float32)     # replaces randn_like(mu)

    fwd = jax.jit(unet_forward,
                  static_argnames=("sigma", "vae_sigma", "z_size", "kl_tolerance"))
    y, z, loss, kl_loss = fwd(prep, x, eps, sigma=1.0, vae_sigma=1.0,
                              z_size=z_size, kl_tolerance=0.5)
    jax.block_until_ready((y, z, loss, kl_loss))

    assert y.shape == (B, 3, 32, 32)
    assert z.shape == (B, z_size)
    assert loss.shape == () and kl_loss.shape == ()
    assert bool(jnp.isfinite(loss)) and bool(jnp.isfinite(kl_loss))

    # numerical self-check of the fused kernel against the XLA reference
    y_r, z_r, loss_r, kl_r = ref_forward(params, x, eps, vae_sigma=1.0,
                                         z_size=z_size, kl_tolerance=0.5)
    assert bool(jnp.allclose(y, y_r, atol=5e-2, rtol=5e-2)), "y mismatch"
    assert bool(jnp.allclose(z, z_r, atol=5e-2, rtol=5e-2)), "z mismatch"
    assert bool(jnp.allclose(loss, loss_r, atol=1e-2, rtol=1e-2)), "loss mismatch"
    assert bool(jnp.allclose(kl_loss, kl_r, atol=1e-2, rtol=1e-2)), "kl mismatch"

    print("KERNEL_OK")
</pallas_src>

<mosaic_0001>
module attributes {stable_mosaic.version = 11 : i64} {
  func.func @kernel(%arg0: memref<64x96xf32, #tpu.memory_space<vmem>>, %arg1: memref<2x128xf32, #tpu.memory_space<vmem>>, %arg2: memref<4x30x64xf32, #tpu.memory_space<vmem>>, %arg3: memref<4x96x480xf32, #tpu.memory_space<vmem>>, %arg4: memref<1x480xf32, #tpu.memory_space<vmem>>, %arg5: memref<4x12x30xf32, #tpu.memory_space<vmem>>, %arg6: memref<4x480x384xf32, #tpu.memory_space<vmem>>, %arg7: memref<1x384xf32, #tpu.memory_space<vmem>>, %arg8: memref<4x4x12xf32, #tpu.memory_space<vmem>>, %arg9: memref<4x384x256xf32, #tpu.memory_space<vmem>>, %arg10: memref<1x256xf32, #tpu.memory_space<vmem>>, %arg11: memref<2x2x4xf32, #tpu.memory_space<vmem>>, %arg12: memref<2x256x256xf32, #tpu.memory_space<vmem>>, %arg13: memref<1x256xf32, #tpu.memory_space<vmem>>, %arg14: memref<128x512xf32, #tpu.memory_space<vmem>>, %arg15: memref<1x512xf32, #tpu.memory_space<vmem>>, %arg16: memref<3x6x2xf32, #tpu.memory_space<vmem>>, %arg17: memref<3x512x192xf32, #tpu.memory_space<vmem>>, %arg18: memref<1x192xf32, #tpu.memory_space<vmem>>, %arg19: memref<3x14x6xf32, #tpu.memory_space<vmem>>, %arg20: memref<3x192x224xf32, #tpu.memory_space<vmem>>, %arg21: memref<1x224xf32, #tpu.memory_space<vmem>>, %arg22: memref<3x30x14xf32, #tpu.memory_space<vmem>>, %arg23: memref<3x224x240xf32, #tpu.memory_space<vmem>>, %arg24: memref<1x240xf32, #tpu.memory_space<vmem>>, %arg25: memref<4x64x30xf32, #tpu.memory_space<vmem>>, %arg26: memref<4x240x96xf32, #tpu.memory_space<vmem>>, %arg27: memref<1x96xf32, #tpu.memory_space<vmem>>, %arg28: memref<64x96xf32, #tpu.memory_space<vmem>>, %arg29: memref<2x128xf32, #tpu.memory_space<vmem>>, %arg30: memref<1x1xf32, #tpu.memory_space<vmem>>, %arg31: memref<1x1xf32, #tpu.memory_space<vmem>>) attributes {dimension_semantics = [], scalar_prefetch = 0 : i64, scratch_operands = 0 : i64, tpu.core_type = #tpu.core_type<tc>} {
    %c0 = arith.constant 0 : index
    %c0_0 = arith.constant 0 : index
    %0 = vector.load %arg0[%c0, %c0_0] : memref<64x96xf32, #tpu.memory_space<vmem>>, vector<64x96xf32>
    %c0_1 = arith.constant 0 : index
    %c0_2 = arith.constant 0 : index
    %c0_3 = arith.constant 0 : index
    %1 = vector.load %arg2[%c0_1, %c0_2, %c0_3] : memref<4x30x64xf32, #tpu.memory_space<vmem>>, vector<1x30x64xf32>
    %2 = vector.shape_cast %1 : vector<1x30x64xf32> to vector<30x64xf32>
    %cst = arith.constant dense<0.000000e+00> : vector<30x96xf32>
    %3 = tpu.matmul %2, %0, %cst {dimension_numbers = #tpu.dot_dimension_numbers<[1], [0], [0], [1], [0, 0, 1, 1], [], []>} : vector<30x64xf32>, vector<64x96xf32>, vector<30x96xf32> -> vector<30x96xf32>
    %c0_4 = arith.constant 0 : index
    %c0_5 = arith.constant 0 : index
    %c0_6 = arith.constant 0 : index
    %4 = vector.load %arg3[%c0_4, %c0_5, %c0_6] : memref<4x96x480xf32, #tpu.memory_space<vmem>>, vector<1x96x480xf32>
    %5 = vector.shape_cast %4 : vector<1x96x480xf32> to vector<96x480xf32>
    %cst_7 = arith.constant dense<0.000000e+00> : vector<30x480xf32>
    %6 = tpu.matmul %3, %5, %cst_7 {dimension_numbers = #tpu.dot_dimension_numbers<[1], [0], [0], [1], [0, 0, 1, 1], [], []>} : vector<30x96xf32>, vector<96x480xf32>, vector<30x480xf32> -> vector<30x480xf32>
    %c1 = arith.constant 1 : index
    %c0_8 = arith.constant 0 : index
    %c0_9 = arith.constant 0 : index
    %7 = vector.load %arg2[%c1, %c0_8, %c0_9] : memref<4x30x64xf32, #tpu.memory_space<vmem>>, vector<1x30x64xf32>
    %8 = vector.shape_cast %7 : vector<1x30x64xf32> to vector<30x64xf32>
    %cst_10 = arith.constant dense<0.000000e+00> : vector<30x96xf32>
    %9 = tpu.matmul %8, %0, %cst_10 {dimension_numbers = #tpu.dot_dimension_numbers<[1], [0], [0], [1], [0, 0, 1, 1], [], []>} : vector<30x64xf32>, vector<64x96xf32>, vector<30x96xf32> -> vector<30x96xf32>
    %c1_11 = arith.constant 1 : index
    %c0_12 = arith.constant 0 : index
    %c0_13 = arith.constant 0 : index
    %10 = vector.load %arg3[%c1_11, %c0_12, %c0_13] : memref<4x96x480xf32, #tpu.memory_space<vmem>>, vector<1x96x480xf32>
    %11 = vector.shape_cast %10 : vector<1x96x480xf32> to vector<96x480xf32>
    %cst_14 = arith.constant dense<0.000000e+00> : vector<30x480xf32>
    %12 = tpu.matmul %9, %11, %cst_14 {dimension_numbers = #tpu.dot_dimension_numbers<[1], [0], [0], [1], [0, 0, 1, 1], [], []>} : vector<30x96xf32>, vector<96x480xf32>, vector<30x480xf32> -> vector<30x480xf32>
    %13 = arith.addf %6, %12 : vector<30x480xf32>
    %c2 = arith.constant 2 : index
    %c0_15 = arith.constant 0 : index
    %c0_16 = arith.constant 0 : index
    %14 = vector.load %arg2[%c2, %c0_15, %c0_16] : memref<4x30x64xf32, #tpu.memory_space<vmem>>, vector<1x30x64xf32>
    %15 = vector.shape_cast %14 : vector<1x30x64xf32> to vector<30x64xf32>
    %cst_17 = arith.constant dense<0.000000e+00> : vector<30x96xf32>
    %16 = tpu.matmul %15, %0, %cst_17 {dimension_numbers = #tpu.dot_dimension_numbers<[1], [0], [0], [1], [0, 0, 1, 1], [], []>} : vector<30x64xf32>, vector<64x96xf32>, vector<30x96xf32> -> vector<30x96xf32>
    %c2_18 = arith.constant 2 : index
    %c0_19 = arith.constant 0 : index
    %c0_20 = arith.constant 0 : index
    %17 = vector.load %arg3[%c2_18, %c0_19, %c0_20] : memref<4x96x480xf32, #tpu.memory_space<vmem>>, vector<1x96x480xf32>
    %18 = vector.shape_cast %17 : vector<1x96x480xf32> to vector<96x480xf32>
    %cst_21 = arith.constant dense<0.000000e+00> : vector<30x480xf32>
    %19 = tpu.matmul %16, %18, %cst_21 {dimension_numbers = #tpu.dot_dimension_numbers<[1], [0], [0], [1], [0, 0, 1, 1], [], []>} : vector<30x96xf32>, vector<96x480xf32>, vector<30x480xf32> -> vector<30x480xf32>
    %20 = arith.addf %13, %19 : vector<30x480xf32>
    %c3 = arith.constant 3 : index
    %c0_22 = arith.constant 0 : index
    %c0_23 = arith.constant 0 : index
    %21 = vector.load %arg2[%c3, %c0_22, %c0_23] : memref<4x30x64xf32, #tpu.memory_space<vmem>>, vector<1x30x64xf32>
    %22 = vector.shape_cast %21 : vector<1x30x64xf32> to vector<30x64xf32>
    %cst_24 = arith.constant dense<0.000000e+00> : vector<30x96xf32>
    %23 = tpu.matmul %22, %0, %cst_24 {dimension_numbers = #tpu.dot_dimension_numbers<[1], [0], [0], [1], [0, 0, 1, 1], [], []>} : vector<30x64xf32>, vector<64x96xf32>, vector<30x96xf32> -> vector<30x96xf32>
    %c3_25 = arith.constant 3 : index
    %c0_26 = arith.constant 0 : index
    %c0_27 = arith.constant 0 : index
    %24 = vector.load %arg3[%c3_25, %c0_26, %c0_27] : memref<4x96x480xf32, #tpu.memory_space<vmem>>, vector<1x96x480xf32>
    %25 = vector.shape_cast %24 : vector<1x96x480xf32> to vector<96x480xf32>
    %cst_28 = arith.constant dense<0.000000e+00> : vector<30x480xf32>
    %26 = tpu.matmul %23, %25, %cst_28 {dimension_numbers = #tpu.dot_dimension_numbers<[1], [0], [0], [1], [0, 0, 1, 1], [], []>} : vector<30x96xf32>, vector<96x480xf32>, vector<30x480xf32> -> vector<30x480xf32>
    %27 = arith.addf %20, %26 : vector<30x480xf32>
    %c0_29 = arith.constant 0 : index
    %c0_30 = arith.constant 0 : index
    %28 = vector.load %arg4[%c0_29, %c0_30] : memref<1x480xf32, #tpu.memory_space<vmem>>, vector<1x480xf32>
    %29 = vector.broadcast %28 : vector<1x480xf32> to vector<30x480xf32>
    %30 = arith.addf %27, %29 : vector<30x480xf32>
    %cst_31 = arith.constant 0.000000e+00 : f32
    %31 = vector.broadcast %cst_31 : f32 to vector<30x480xf32>
    %32 = arith.maximumf %30, %31 : vector<30x480xf32>
    %c0_32 = arith.constant 0 : index
    %c0_33 = arith.constant 0 : index
    %c0_34 = arith.constant 0 : index
    %33 = vector.load %arg5[%c0_32, %c0_33, %c0_34] : memref<4x12x30xf32, #tpu.memory_space<vmem>>, vector<1x12x30xf32>
    %34 = vector.shape_cast %33 : vector<1x12x30xf32> to vector<12x30xf32>
    %cst_35 = arith.constant dense<0.000000e+00> : vector<12x480xf32>
    %35 = tpu.matmul %34, %32, %cst_35 {dimension_numbers = #tpu.dot_dimension_numbers<[1], [0], [0], [1], [0, 0, 1, 1], [], []>} : vector<12x30xf32>, vector<30x480xf32>, vector<12x480xf32> -> vector<12x480xf32>
    %c0_36 = arith.constant 0 : index
    %c0_37 = arith.constant 0 : index
    %c0_38 = arith.constant 0 : index
    %36 = vector.load %arg6[%c0_36, %c0_37, %c0_38] : memref<4x480x384xf32, #tpu.memory_space<vmem>>, vector<1x480x384xf32>
    %37 = vector.shape_cast %36 : vector<1x480x384xf32> to vector<480x384xf32>
    %cst_39 = arith.constant dense<0.000000e+00> : vector<12x384xf32>
    %38 = tpu.matmul %35, %37, %cst_39 {dimension_numbers = #tpu.dot_dimension_numbers<[1], [0], [0], [1], [0, 0, 1, 1], [], []>} : vector<12x480xf32>, vector<480x384xf32>, vector<12x384xf32> -> vector<12x384xf32>
    %c1_40 = arith.constant 1 : index
    %c0_41 = arith.constant 0 : index
    %c0_42 = arith.constant 0 : index
    %39 = vector.load %arg5[%c1_40, %c0_41, %c0_42] : memref<4x12x30xf32, #tpu.memory_space<vmem>>, vector<1x12x30xf32>
    %40 = vector.shape_cast %39 : vector<1x12x30xf32> to vector<12x30xf32>
    %cst_43 = arith.constant dense<0.000000e+00> : vector<12x480xf32>
    %41 = tpu.matmul %40, %32, %cst_43 {dimension_numbers = #tpu.dot_dimension_numbers<[1], [0], [0], [1], [0, 0, 1, 1], [], []>} : vector<12x30xf32>, vector<30x480xf32>, vector<12x480xf32> -> vector<12x480xf32>
    %c1_44 = arith.constant 1 : index
    %c0_45 = arith.constant 0 : index
    %c0_46 = arith.constant 0 : index
    %42 = vector.load %arg6[%c1_44, %c0_45, %c0_46] : memref<4x480x384xf32, #tpu.memory_space<vmem>>, vector<1x480x384xf32>
    %43 = vector.shape_cast %42 : vector<1x480x384xf32> to vector<480x384xf32>
    %cst_47 = arith.constant dense<0.000000e+00> : vector<12x384xf32>
    %44 = tpu.matmul %41, %43, %cst_47 {dimension_numbers = #tpu.dot_dimension_numbers<[1], [0], [0], [1], [0, 0, 1, 1], [], []>} : vector<12x480xf32>, vector<480x384xf32>, vector<12x384xf32> -> vector<12x384xf32>
    %45 = arith.addf %38, %44 : vector<12x384xf32>
    %c2_48 = arith.constant 2 : index
    %c0_49 = arith.constant 0 : index
    %c0_50 = arith.constant 0 : index
    %46 = vector.load %arg5[%c2_48, %c0_49, %c0_50] : memref<4x12x30xf32, #tpu.memory_space<vmem>>, vector<1x12x30xf32>
    %47 = vector.shape_cast %46 : vector<1x12x30xf32> to vector<12x30xf32>
    %cst_51 = arith.constant dense<0.000000e+00> : vector<12x480xf32>
    %48 = tpu.matmul %47, %32, %cst_51 {dimension_numbers = #tpu.dot_dimension_numbers<[1], [0], [0], [1], [0, 0, 1, 1], [], []>} : vector<12x30xf32>, vector<30x480xf32>, vector<12x480xf32> -> vector<12x480xf32>
    %c2_52 = arith.constant 2 : index
    %c0_53 = arith.constant 0 : index
    %c0_54 = arith.constant 0 : index
    %49 = vector.load %arg6[%c2_52, %c0_53, %c0_54] : memref<4x480x384xf32, #tpu.memory_space<vmem>>, vector<1x480x384xf32>
    %50 = vector.shape_cast %49 : vector<1x480x384xf32> to vector<480x384xf32>
    %cst_55 = arith.constant dense<0.000000e+00> : vector<12x384xf32>
    %51 = tpu.matmul %48, %50, %cst_55 {dimension_numbers = #tpu.dot_dimension_numbers<[1], [0], [0], [1], [0, 0, 1, 1], [], []>} : vector<12x480xf32>, vector<480x384xf32>, vector<12x384xf32> -> vector<12x384xf32>
    %52 = arith.addf %45, %51 : vector<12x384xf32>
    %c3_56 = arith.constant 3 : index
    %c0_57 = arith.constant 0 : index
    %c0_58 = arith.constant 0 : index
    %53 = vector.load %arg5[%c3_56, %c0_57, %c0_58] : memref<4x12x30xf32, #tpu.memory_space<vmem>>, vector<1x12x30xf32>
    %54 = vector.shape_cast %53 : vector<1x12x30xf32> to vector<12x30xf32>
    %cst_59 = arith.constant dense<0.000000e+00> : vector<12x480xf32>
    %55 = tpu.matmul %54, %32, %cst_59 {dimension_numbers = #tpu.dot_dimension_numbers<[1], [0], [0], [1], [0, 0, 1, 1], [], []>} : vector<12x30xf32>, vector<30x480xf32>, vector<12x480xf32> -> vector<12x480xf32>
    %c3_60 = arith.constant 3 : index
    %c0_61 = arith.constant 0 : index
    %c0_62 = arith.constant 0 : index
    %56 = vector.load %arg6[%c3_60, %c0_61, %c0_62] : memref<4x480x384xf32, #tpu.memory_space<vmem>>, vector<1x480x384xf32>
    %57 = vector.shape_cast %56 : vector<1x480x384xf32> to vector<480x384xf32>
    %cst_63 = arith.constant dense<0.000000e+00> : vector<12x384xf32>
    %58 = tpu.matmul %55, %57, %cst_63 {dimension_numbers = #tpu.dot_dimension_numbers<[1], [0], [0], [1], [0, 0, 1, 1], [], []>} : vector<12x480xf32>, vector<480x384xf32>, vector<12x384xf32> -> vector<12x384xf32>
    %59 = arith.addf %52, %58 : vector<12x384xf32>
    %c0_64 = arith.constant 0 : index
    %c0_65 = arith.constant 0 : index
    %60 = vector.load %arg7[%c0_64, %c0_65] : memref<1x384xf32, #tpu.memory_space<vmem>>, vector<1x384xf32>
    %61 = vector.broadcast %60 : vector<1x384xf32> to vector<12x384xf32>
    %62 = arith.addf %59, %61 : vector<12x384xf32>
    %cst_66 = arith.constant 0.000000e+00 : f32
    %63 = vector.broadcast %cst_66 : f32 to vector<12x384xf32>
    %64 = arith.maximumf %62, %63 : vector<12x384xf32>
    %c0_67 = arith.constant 0 : index
    %c0_68 = arith.constant 0 : index
    %c0_69 = arith.constant 0 : index
    %65 = vector.load %arg8[%c0_67, %c0_68, %c0_69] : memref<4x4x12xf32, #tpu.memory_space<vmem>>, vector<1x4x12xf32>
    %66 = vector.shape_cast %65 : vector<1x4x12xf32> to vector<4x12xf32>
    %cst_70 = arith.constant dense<0.000000e+00> : vector<4x384xf32>
    %67 = tpu.matmul %66, %64, %cst_70 {dimension_numbers = #tpu.dot_dimension_numbers<[1], [0], [0], [1], [0, 0, 1, 1], [], []>} : vector<4x12xf32>, vector<12x384xf32>, vector<4x384xf32> -> vector<4x384xf32>
    %c0_71 = arith.constant 0 : index
    %c0_72 = arith.constant 0 : index
    %c0_73 = arith.constant 0 : index
    %68 = vector.load %arg9[%c0_71, %c0_72, %c0_73] : memref<4x384x256xf32, #tpu.memory_space<vmem>>, vector<1x384x256xf32>
    %69 = vector.shape_cast %68 : vector<1x384x256xf32> to vector<384x256xf32>
    %cst_74 = arith.constant dense<0.000000e+00> : vector<4x256xf32>
    %70 = tpu.matmul %67, %69, %cst_74 {dimension_numbers = #tpu.dot_dimension_numbers<[1], [0], [0], [1], [0, 0, 1, 1], [], []>} : vector<4x384xf32>, vector<384x256xf32>, vector<4x256xf32> -> vector<4x256xf32>
    %c1_75 = arith.constant 1 : index
    %c0_76 = arith.constant 0 : index
    %c0_77 = arith.constant 0 : index
    %71 = vector.load %arg8[%c1_75, %c0_76, %c0_77] : memref<4x4x12xf32, #tpu.memory_space<vmem>>, vector<1x4x12xf32>
    %72 = vector.shape_cast %71 : vector<1x4x12xf32> to vector<4x12xf32>
    %cst_78 = arith.constant dense<0.000000e+00> : vector<4x384xf32>
    %73 = tpu.matmul %72, %64, %cst_78 {dimension_numbers = #tpu.dot_dimension_numbers<[1], [0], [0], [1], [0, 0, 1, 1], [], []>} : vector<4x12xf32>, vector<12x384xf32>, vector<4x384xf32> -> vector<4x384xf32>
    %c1_79 = arith.constant 1 : index
    %c0_80 = arith.constant 0 : index
    %c0_81 = arith.constant 0 : index
    %74 = vector.load %arg9[%c1_79, %c0_80, %c0_81] : memref<4x384x256xf32, #tpu.memory_space<vmem>>, vector<1x384x256xf32>
    %75 = vector.shape_cast %74 : vector<1x384x256xf32> to vector<384x256xf32>
    %cst_82 = arith.constant dense<0.000000e+00> : vector<4x256xf32>
    %76 = tpu.matmul %73, %75, %cst_82 {dimension_numbers = #tpu.dot_dimension_numbers<[1], [0], [0], [1], [0, 0, 1, 1], [], []>} : vector<4x384xf32>, vector<384x256xf32>, vector<4x256xf32> -> vector<4x256xf32>
    %77 = arith.addf %70, %76 : vector<4x256xf32>
    %c2_83 = arith.constant 2 : index
    %c0_84 = arith.constant 0 : index
    %c0_85 = arith.constant 0 : index
    %78 = vector.load %arg8[%c2_83, %c0_84, %c0_85] : memref<4x4x12xf32, #tpu.memory_space<vmem>>, vector<1x4x12xf32>
    %79 = vector.shape_cast %78 : vector<1x4x12xf32> to vector<4x12xf32>
    %cst_86 = arith.constant dense<0.000000e+00> : vector<4x384xf32>
    %80 = tpu.matmul %79, %64, %cst_86 {dimension_numbers = #tpu.dot_dimension_numbers<[1], [0], [0], [1], [0, 0, 1, 1], [], []>} : vector<4x12xf32>, vector<12x384xf32>, vector<4x384xf32> -> vector<4x384xf32>
    %c2_87 = arith.constant 2 : index
    %c0_88 = arith.constant 0 : index
    %c0_89 = arith.constant 0 : index
    %81 = vector.load %arg9[%c2_87, %c0_88, %c0_89] : memref<4x384x256xf32, #tpu.memory_space<vmem>>, vector<1x384x256xf32>
    %82 = vector.shape_cast %81 : vector<1x384x256xf32> to vector<384x256xf32>
    %cst_90 = arith.constant dense<0.000000e+00> : vector<4x256xf32>
    %83 = tpu.matmul %80, %82, %cst_90 {dimension_numbers = #tpu.dot_dimension_numbers<[1], [0], [0], [1], [0, 0, 1, 1], [], []>} : vector<4x384xf32>, vector<384x256xf32>, vector<4x256xf32> -> vector<4x256xf32>
    %84 = arith.addf %77, %83 : vector<4x256xf32>
    %c3_91 = arith.constant 3 : index
    %c0_92 = arith.constant 0 : index
    %c0_93 = arith.constant 0 : index
    %85 = vector.load %arg8[%c3_91, %c0_92, %c0_93] : memref<4x4x12xf32, #tpu.memory_space<vmem>>, vector<1x4x12xf32>
    %86 = vector.shape_cast %85 : vector<1x4x12xf32> to vector<4x12xf32>
    %cst_94 = arith.constant dense<0.000000e+00> : vector<4x384xf32>
    %87 = tpu.matmul %86, %64, %cst_94 {dimension_numbers = #tpu.dot_dimension_numbers<[1], [0], [0], [1], [0, 0, 1, 1], [], []>} : vector<4x12xf32>, vector<12x384xf32>, vector<4x384xf32> -> vector<4x384xf32>
    %c3_95 = arith.constant 3 : index
    %c0_96 = arith.constant 0 : index
    %c0_97 = arith.constant 0 : index
    %88 = vector.load %arg9[%c3_95, %c0_96, %c0_97] : memref<4x384x256xf32, #tpu.memory_space<vmem>>, vector<1x384x256xf32>
    %89 = vector.shape_cast %88 : vector<1x384x256xf32> to vector<384x256xf32>
    %cst_98 = arith.constant dense<0.000000e+00> : vector<4x256xf32>
    %90 = tpu.matmul %87, %89, %cst_98 {dimension_numbers = #tpu.dot_dimension_numbers<[1], [0], [0], [1], [0, 0, 1, 1], [], []>} : vector<4x384xf32>, vector<384x256xf32>, vector<4x256xf32> -> vector<4x256xf32>
    %91 = arith.addf %84, %90 : vector<4x256xf32>
    %c0_99 = arith.constant 0 : index
    %c0_100 = arith.constant 0 : index
    %92 = vector.load %arg10[%c0_99, %c0_100] : memref<1x256xf32, #tpu.memory_space<vmem>>, vector<1x256xf32>
    %93 = vector.broadcast %92 : vector<1x256xf32> to vector<4x256xf32>
    %94 = arith.addf %91, %93 : vector<4x256xf32>
    %c0_101 = arith.constant 0 : index
    %c0_102 = arith.constant 0 : index
    %95 = vector.load %arg13[%c0_101, %c0_102] : memref<1x256xf32, #tpu.memory_space<vmem>>, vector<1x256xf32>
    %c0_103 = arith.constant 0 : index
    %c0_104 = arith.constant 0 : index
    %c0_105 = arith.constant 0 : index
    %96 = vector.load %arg11[%c0_103, %c0_104, %c0_105] : memref<2x2x4xf32, #tpu.memory_space<vmem>>, vector<1x2x4xf32>
    %97 = vector.shape_cast %96 : vector<1x2x4xf32> to vector<2x4xf32>
    %cst_106 = arith.constant dense<0.000000e+00> : vector<2x256xf32>
    %98 = tpu.matmul %97, %94, %cst_106 {dimension_numbers = #tpu.dot_dimension_numbers<[1], [0], [0], [1], [0, 0, 1, 1], [], []>} : vector<2x4xf32>, vector<4x256xf32>, vector<2x256xf32> -> vector<2x256xf32>
    %c0_107 = arith.constant 0 : index
    %c0_108 = arith.constant 0 : index
    %c0_109 = arith.constant 0 : index
    %99 = vector.load %arg12[%c0_107, %c0_108, %c0_109] : memref<2x256x256xf32, #tpu.memory_space<vmem>>, vector<1x256x256xf32>
    %100 = vector.shape_cast %99 : vector<1x256x256xf32> to vector<256x256xf32>
    %cst_110 = arith.constant dense<0.000000e+00> : vector<2x256xf32>
    %101 = tpu.matmul %98, %100, %cst_110 {dimension_numbers = #tpu.dot_dimension_numbers<[1], [0], [0], [1], [0, 0, 1, 1], [], []>} : vector<2x256xf32>, vector<256x256xf32>, vector<2x256xf32> -> vector<2x256xf32>
    %102 = vector.broadcast %95 : vector<1x256xf32> to vector<2x256xf32>
    %103 = arith.addf %102, %101 : vector<2x256xf32>
    %c1_111 = arith.constant 1 : index
    %c0_112 = arith.constant 0 : index
    %c0_113 = arith.constant 0 : index
    %104 = vector.load %arg11[%c1_111, %c0_112, %c0_113] : memref<2x2x4xf32, #tpu.memory_space<vmem>>, vector<1x2x4xf32>
    %105 = vector.shape_cast %104 : vector<1x2x4xf32> to vector<2x4xf32>
    %cst_114 = arith.constant dense<0.000000e+00> : vector<2x256xf32>
    %106 = tpu.matmul %105, %94, %cst_114 {dimension_numbers = #tpu.dot_dimension_numbers<[1], [0], [0], [1], [0, 0, 1, 1], [], []>} : vector<2x4xf32>, vector<4x256xf32>, vector<2x256xf32> -> vector<2x256xf32>
    %c1_115 = arith.constant 1 : index
    %c0_116 = arith.constant 0 : index
    %c0_117 = arith.constant 0 : index
    %107 = vector.load %arg12[%c1_115, %c0_116, %c0_117] : memref<2x256x256xf32, #tpu.memory_space<vmem>>, vector<1x256x256xf32>
    %108 = vector.shape_cast %107 : vector<1x256x256xf32> to vector<256x256xf32>
    %cst_118 = arith.constant dense<0.000000e+00> : vector<2x256xf32>
    %109 = tpu.matmul %106, %108, %cst_118 {dimension_numbers = #tpu.dot_dimension_numbers<[1], [0], [0], [1], [0, 0, 1, 1], [], []>} : vector<2x256xf32>, vector<256x256xf32>, vector<2x256xf32> -> vector<2x256xf32>
    %110 = arith.addf %103, %109 : vector<2x256xf32>
    %111 = vector.extract_strided_slice %110 {offsets = [0, 0], sizes = [2, 128], strides = [1, 1]} : vector<2x256xf32> to vector<2x128xf32>
    %112 = vector.extract_strided_slice %110 {offsets = [0, 128], sizes = [2, 128], strides = [1, 1]} : vector<2x256xf32> to vector<2x128xf32>
    %cst_119 = arith.constant 5.000000e-01 : f32
    %113 = vector.broadcast %cst_119 : f32 to vector<2x128xf32>
    %114 = arith.mulf %112, %113 : vector<2x128xf32>
    %115 = math.exp %114 : vector<2x128xf32>
    %c0_120 = arith.constant 0 : index
    %c0_121 = arith.constant 0 : index
    %116 = vector.load %arg1[%c0_120, %c0_121] : memref<2x128xf32, #tpu.memory_space<vmem>>, vector<2x128xf32>
    %117 = arith.mulf %115, %116 : vector<2x128xf32>
    %cst_122 = arith.constant 1.000000e+00 : f32
    %118 = vector.broadcast %cst_122 : f32 to vector<2x128xf32>
    %119 = arith.mulf %117, %118 : vector<2x128xf32>
    %120 = arith.addf %111, %119 : vector<2x128xf32>
    %c0_123 = arith.constant 0 : index
    %c0_124 = arith.constant 0 : index
    %121 = vector.load %arg29[%c0_123, %c0_124] : memref<2x128xf32, #tpu.memory_space<vmem>>, vector<2x128xf32>
    tpu.vector_store %arg29[%c0_123, %c0_124], %120 {strides = array<i32>} : memref<2x128xf32, #tpu.memory_space<vmem>>, vector<2x128xf32>,
    %cst_125 = arith.constant 1.000000e+00 : f32
    %122 = vector.broadcast %cst_125 : f32 to vector<2x128xf32>
    %123 = arith.addf %122, %112 : vector<2x128xf32>
    %124 = arith.mulf %111, %111 : vector<2x128xf32>
    %125 = arith.subf %123, %124 : vector<2x128xf32>
    %126 = math.exp %112 : vector<2x128xf32>
    %127 = arith.subf %125, %126 : vector<2x128xf32>
    %cst_126 = arith.constant dense<0.000000e+00> : vector<2xf32>
    %128 = vector.multi_reduction <add>, %127, %cst_126 [1] : vector<2x128xf32> to vector<2xf32>
    %129 = vector.shape_cast %128 : vector<2xf32> to vector<2x1xf32>
    %cst_127 = arith.constant 1.280000e+02 : f32
    %130 = vector.broadcast %cst_127 : f32 to vector<2x1xf32>
    %131 = arith.divf %129, %130 : vector<2x1xf32>
    %cst_128 = arith.constant -5.000000e-01 : f32
    %132 = vector.broadcast %cst_128 : f32 to vector<2x1xf32>
    %133 = arith.mulf %132, %131 : vector<2x1xf32>
    %cst_129 = arith.constant 5.000000e-01 : f32
    %134 = vector.broadcast %cst_129 : f32 to vector<2x1xf32>
    %135 = arith.maximumf %133, %134 : vector<2x1xf32>
    %136 = vector.shape_cast %135 : vector<2x1xf32> to vector<1x2x1xf32>
    %cst_130 = arith.constant dense<0.000000e+00> : vector<1xf32>
    %137 = vector.multi_reduction <add>, %136, %cst_130 [1, 2] : vector<1x2x1xf32> to vector<1xf32>
    %138 = vector.shape_cast %137 : vector<1xf32> to vector<1x1x1xf32>
    %139 = vector.extract %138[0, 0, 0] : f32 from vector<1x1x1xf32>
    %cst_131 = arith.constant 2.000000e+00 : f32
    %140 = arith.divf %139, %cst_131 : f32
    %141 = vector.broadcast %140 : f32 to vector<1x1xf32>
    %c0_132 = arith.constant 0 : index
    %c0_133 = arith.constant 0 : index
    %142 = vector.load %arg31[%c0_132, %c0_133] : memref<1x1xf32, #tpu.memory_space<vmem>>, vector<1x1xf32>
    tpu.vector_store %arg31[%c0_132, %c0_133], %141 {strides = array<i32>} : memref<1x1xf32, #tpu.memory_space<vmem>>, vector<1x1xf32>,
    %c0_134 = arith.constant 0 : index
    %c0_135 = arith.constant 0 : index
    %143 = vector.load %arg14[%c0_134, %c0_135] : memref<128x512xf32, #tpu.memory_space<vmem>>, vector<128x512xf32>
    %cst_136 = arith.constant dense<0.000000e+00> : vector<2x512xf32>
    %144 = tpu.matmul %120, %143, %cst_136 {dimension_numbers = #tpu.dot_dimension_numbers<[1], [0], [0], [1], [0, 0, 1, 1], [], []>} : vector<2x128xf32>, vector<128x512xf32>, vector<2x512xf32> -> vector<2x512xf32>
    %c0_137 = arith.constant 0 : index
    %c0_138 = arith.constant 0 : index
    %145 = vector.load %arg15[%c0_137, %c0_138] : memref<1x512xf32, #tpu.memory_space<vmem>>, vector<1x512xf32>
    %146 = vector.broadcast %145 : vector<1x512xf32> to vector<2x512xf32>
    %147 = arith.addf %144, %146 : vector<2x512xf32>
    %c0_139 = arith.constant 0 : index
    %c0_140 = arith.constant 0 : index
    %c0_141 = arith.constant 0 : index
    %148 = vector.load %arg16[%c0_139, %c0_140, %c0_141] : memref<3x6x2xf32, #tpu.memory_space<vmem>>, vector<1x6x2xf32>
    %149 = vector.shape_cast %148 : vector<1x6x2xf32> to vector<6x2xf32>
    %c0_142 = arith.constant 0 : index
    %c0_143 = arith.constant 0 : index
    %c0_144 = arith.constant 0 : index
    %150 = vector.load %arg17[%c0_142, %c0_143, %c0_144] : memref<3x512x192xf32, #tpu.memory_space<vmem>>, vector<1x512x192xf32>
    %151 = vector.shape_cast %150 : vector<1x512x192xf32> to vector<512x192xf32>
    %cst_145 = arith.constant dense<0.000000e+00> : vector<2x192xf32>
    %152 = tpu.matmul %147, %151, %cst_145 {dimension_numbers = #tpu.dot_dimension_numbers<[1], [0], [0], [1], [0, 0, 1, 1], [], []>} : vector<2x512xf32>, vector<512x192xf32>, vector<2x192xf32> -> vector<2x192xf32>
    %cst_146 = arith.constant dense<0.000000e+00> : vector<6x192xf32>
    %153 = tpu.matmul %149, %152, %cst_146 {dimension_numbers = #tpu.dot_dimension_numbers<[1], [0], [0], [1], [0, 0, 1, 1], [], []>} : vector<6x2xf32>, vector<2x192xf32>, vector<6x192xf32> -> vector<6x192xf32>
    %c1_147 = arith.constant 1 : index
    %c0_148 = arith.constant 0 : index
    %c0_149 = arith.constant 0 : index
    %154 = vector.load %arg16[%c1_147, %c0_148, %c0_149] : memref<3x6x2xf32, #tpu.memory_space<vmem>>, vector<1x6x2xf32>
    %155 = vector.shape_cast %154 : vector<1x6x2xf32> to vector<6x2xf32>
    %c1_150 = arith.constant 1 : index
    %c0_151 = arith.constant 0 : index
    %c0_152 = arith.constant 0 : index
    %156 = vector.load %arg17[%c1_150, %c0_151, %c0_152] : memref<3x512x192xf32, #tpu.memory_space<vmem>>, vector<1x512x192xf32>
    %157 = vector.shape_cast %156 : vector<1x512x192xf32> to vector<512x192xf32>
    %cst_153 = arith.constant dense<0.000000e+00> : vector<2x192xf32>
    %158 = tpu.matmul %147, %157, %cst_153 {dimension_numbers = #tpu.dot_dimension_numbers<[1], [0], [0], [1], [0, 0, 1, 1], [], []>} : vector<2x512xf32>, vector<512x192xf32>, vector<2x192xf32> -> vector<2x192xf32>
    %cst_154 = arith.constant dense<0.000000e+00> : vector<6x192xf32>
    %159 = tpu.matmul %155, %158, %cst_154 {dimension_numbers = #tpu.dot_dimension_numbers<[1], [0], [0], [1], [0, 0, 1, 1], [], []>} : vector<6x2xf32>, vector<2x192xf32>, vector<6x192xf32> -> vector<6x192xf32>
    %160 = arith.addf %153, %159 : vector<6x192xf32>
    %c2_155 = arith.constant 2 : index
    %c0_156 = arith.constant 0 : index
    %c0_157 = arith.constant 0 : index
    %161 = vector.load %arg16[%c2_155, %c0_156, %c0_157] : memref<3x6x2xf32, #tpu.memory_space<vmem>>, vector<1x6x2xf32>
    %162 = vector.shape_cast %161 : vector<1x6x2xf32> to vector<6x2xf32>
    %c2_158 = arith.constant 2 : index
    %c0_159 = arith.constant 0 : index
    %c0_160 = arith.constant 0 : index
    %163 = vector.load %arg17[%c2_158, %c0_159, %c0_160] : memref<3x512x192xf32, #tpu.memory_space<vmem>>, vector<1x512x192xf32>
    %164 = vector.shape_cast %163 : vector<1x512x192xf32> to vector<512x192xf32>
    %cst_161 = arith.constant dense<0.000000e+00> : vector<2x192xf32>
    %165 = tpu.matmul %147, %164, %cst_161 {dimension_numbers = #tpu.dot_dimension_numbers<[1], [0], [0], [1], [0, 0, 1, 1], [], []>} : vector<2x512xf32>, vector<512x192xf32>, vector<2x192xf32> -> vector<2x192xf32>
    %cst_162 = arith.constant dense<0.000000e+00> : vector<6x192xf32>
    %166 = tpu.matmul %162, %165, %cst_162 {dimension_numbers = #tpu.dot_dimension_numbers<[1], [0], [0], [1], [0, 0, 1, 1], [], []>} : vector<6x2xf32>, vector<2x192xf32>, vector<6x192xf32> -> vector<6x192xf32>
    %167 = arith.addf %160, %166 : vector<6x192xf32>
    %c0_163 = arith.constant 0 : index
    %c0_164 = arith.constant 0 : index
    %168 = vector.load %arg18[%c0_163, %c0_164] : memref<1x192xf32, #tpu.memory_space<vmem>>, vector<1x192xf32>
    %169 = vector.broadcast %168 : vector<1x192xf32> to vector<6x192xf32>
    %170 = arith.addf %167, %169 : vector<6x192xf32>
    %cst_165 = arith.constant 0.000000e+00 : f32
    %171 = vector.broadcast %cst_165 : f32 to vector<6x192xf32>
    %172 = arith.maximumf %170, %171 : vector<6x192xf32>
    %c0_166 = arith.constant 0 : index
    %c0_167 = arith.constant 0 : index
    %c0_168 = arith.constant 0 : index
    %173 = vector.load %arg19[%c0_166, %c0_167, %c0_168] : memref<3x14x6xf32, #tpu.memory_space<vmem>>, vector<1x14x6xf32>
    %174 = vector.shape_cast %173 : vector<1x14x6xf32> to vector<14x6xf32>
    %c0_169 = arith.constant 0 : index
    %c0_170 = arith.constant 0 : index
    %c0_171 = arith.constant 0 : index
    %175 = vector.load %arg20[%c0_169, %c0_170, %c0_171] : memref<3x192x224xf32, #tpu.memory_space<vmem>>, vector<1x192x224xf32>
    %176 = vector.shape_cast %175 : vector<1x192x224xf32> to vector<192x224xf32>
    %cst_172 = arith.constant dense<0.000000e+00> : vector<6x224xf32>
    %177 = tpu.matmul %172, %176, %cst_172 {dimension_numbers = #tpu.dot_dimension_numbers<[1], [0], [0], [1], [0, 0, 1, 1], [], []>} : vector<6x192xf32>, vector<192x224xf32>, vector<6x224xf32> -> vector<6x224xf32>
    %cst_173 = arith.constant dense<0.000000e+00> : vector<14x224xf32>
    %178 = tpu.matmul %174, %177, %cst_173 {dimension_numbers = #tpu.dot_dimension_numbers<[1], [0], [0], [1], [0, 0, 1, 1], [], []>} : vector<14x6xf32>, vector<6x224xf32>, vector<14x224xf32> -> vector<14x224xf32>
    %c1_174 = arith.constant 1 : index
    %c0_175 = arith.constant 0 : index
    %c0_176 = arith.constant 0 : index
    %179 = vector.load %arg19[%c1_174, %c0_175, %c0_176] : memref<3x14x6xf32, #tpu.memory_space<vmem>>, vector<1x14x6xf32>
    %180 = vector.shape_cast %179 : vector<1x14x6xf32> to vector<14x6xf32>
    %c1_177 = arith.constant 1 : index
    %c0_178 = arith.constant 0 : index
    %c0_179 = arith.constant 0 : index
    %181 = vector.load %arg20[%c1_177, %c0_178, %c0_179] : memref<3x192x224xf32, #tpu.memory_space<vmem>>, vector<1x192x224xf32>
    %182 = vector.shape_cast %181 : vector<1x192x224xf32> to vector<192x224xf32>
    %cst_180 = arith.constant dense<0.000000e+00> : vector<6x224xf32>
    %183 = tpu.matmul %172, %182, %cst_180 {dimension_numbers = #tpu.dot_dimension_numbers<[1], [0], [0], [1], [0, 0, 1, 1], [], []>} : vector<6x192xf32>, vector<192x224xf32>, vector<6x224xf32> -> vector<6x224xf32>
    %cst_181 = arith.constant dense<0.000000e+00> : vector<14x224xf32>
    %184 = tpu.matmul %180, %183, %cst_181 {dimension_numbers = #tpu.dot_dimension_numbers<[1], [0], [0], [1], [0, 0, 1, 1], [], []>} : vector<14x6xf32>, vector<6x224xf32>, vector<14x224xf32> -> vector<14x224xf32>
    %185 = arith.addf %178, %184 : vector<14x224xf32>
    %c2_182 = arith.constant 2 : index
    %c0_183 = arith.constant 0 : index
    %c0_184 = arith.constant 0 : index
    %186 = vector.load %arg19[%c2_182, %c0_183, %c0_184] : memref<3x14x6xf32, #tpu.memory_space<vmem>>, vector<1x14x6xf32>
    %187 = vector.shape_cast %186 : vector<1x14x6xf32> to vector<14x6xf32>
    %c2_185 = arith.constant 2 : index
    %c0_186 = arith.constant 0 : index
    %c0_187 = arith.constant 0 : index
    %188 = vector.load %arg20[%c2_185, %c0_186, %c0_187] : memref<3x192x224xf32, #tpu.memory_space<vmem>>, vector<1x192x224xf32>
    %189 = vector.shape_cast %188 : vector<1x192x224xf32> to vector<192x224xf32>
    %cst_188 = arith.constant dense<0.000000e+00> : vector<6x224xf32>
    %190 = tpu.matmul %172, %189, %cst_188 {dimension_numbers = #tpu.dot_dimension_numbers<[1], [0], [0], [1], [0, 0, 1, 1], [], []>} : vector<6x192xf32>, vector<192x224xf32>, vector<6x224xf32> -> vector<6x224xf32>
    %cst_189 = arith.constant dense<0.000000e+00> : vector<14x224xf32>
    %191 = tpu.matmul %187, %190, %cst_189 {dimension_numbers = #tpu.dot_dimension_numbers<[1], [0], [0], [1], [0, 0, 1, 1], [], []>} : vector<14x6xf32>, vector<6x224xf32>, vector<14x224xf32> -> vector<14x224xf32>
    %192 = arith.addf %185, %191 : vector<14x224xf32>
    %c0_190 = arith.constant 0 : index
    %c0_191 = arith.constant 0 : index
    %193 = vector.load %arg21[%c0_190, %c0_191] : memref<1x224xf32, #tpu.memory_space<vmem>>, vector<1x224xf32>
    %194 = vector.broadcast %193 : vector<1x224xf32> to vector<14x224xf32>
    %195 = arith.addf %192, %194 : vector<14x224xf32>
    %cst_192 = arith.constant 0.000000e+00 : f32
    %196 = vector.broadcast %cst_192 : f32 to vector<14x224xf32>
    %197 = arith.maximumf %195, %196 : vector<14x224xf32>
    %c0_193 = arith.constant 0 : index
    %c0_194 = arith.constant 0 : index
    %c0_195 = arith.constant 0 : index
    %198 = vector.load %arg22[%c0_193, %c0_194, %c0_195] : memref<3x30x14xf32, #tpu.memory_space<vmem>>, vector<1x30x14xf32>
    %199 = vector.shape_cast %198 : vector<1x30x14xf32> to vector<30x14xf32>
    %c0_196 = arith.constant 0 : index
    %c0_197 = arith.constant 0 : index
    %c0_198 = arith.constant 0 : index
    %200 = vector.load %arg23[%c0_196, %c0_197, %c0_198] : memref<3x224x240xf32, #tpu.memory_space<vmem>>, vector<1x224x240xf32>
    %201 = vector.shape_cast %200 : vector<1x224x240xf32> to vector<224x240xf32>
    %cst_199 = arith.constant dense<0.000000e+00> : vector<14x240xf32>
    %202 = tpu.matmul %197, %201, %cst_199 {dimension_numbers = #tpu.dot_dimension_numbers<[1], [0], [0], [1], [0, 0, 1, 1], [], []>} : vector<14x224xf32>, vector<224x240xf32>, vector<14x240xf32> -> vector<14x240xf32>
    %cst_200 = arith.constant dense<0.000000e+00> : vector<30x240xf32>
    %203 = tpu.matmul %199, %202, %cst_200 {dimension_numbers = #tpu.dot_dimension_numbers<[1], [0], [0], [1], [0, 0, 1, 1], [], []>} : vector<30x14xf32>, vector<14x240xf32>, vector<30x240xf32> -> vector<30x240xf32>
    %c1_201 = arith.constant 1 : index
    %c0_202 = arith.constant 0 : index
    %c0_203 = arith.constant 0 : index
    %204 = vector.load %arg22[%c1_201, %c0_202, %c0_203] : memref<3x30x14xf32, #tpu.memory_space<vmem>>, vector<1x30x14xf32>
    %205 = vector.shape_cast %204 : vector<1x30x14xf32> to vector<30x14xf32>
    %c1_204 = arith.constant 1 : index
    %c0_205 = arith.constant 0 : index
    %c0_206 = arith.constant 0 : index
    %206 = vector.load %arg23[%c1_204, %c0_205, %c0_206] : memref<3x224x240xf32, #tpu.memory_space<vmem>>, vector<1x224x240xf32>
    %207 = vector.shape_cast %206 : vector<1x224x240xf32> to vector<224x240xf32>
    %cst_207 = arith.constant dense<0.000000e+00> : vector<14x240xf32>
    %208 = tpu.matmul %197, %207, %cst_207 {dimension_numbers = #tpu.dot_dimension_numbers<[1], [0], [0], [1], [0, 0, 1, 1], [], []>} : vector<14x224xf32>, vector<224x240xf32>, vector<14x240xf32> -> vector<14x240xf32>
    %cst_208 = arith.constant dense<0.000000e+00> : vector<30x240xf32>
    %209 = tpu.matmul %205, %208, %cst_208 {dimension_numbers = #tpu.dot_dimension_numbers<[1], [0], [0], [1], [0, 0, 1, 1], [], []>} : vector<30x14xf32>, vector<14x240xf32>, vector<30x240xf32> -> vector<30x240xf32>
    %210 = arith.addf %203, %209 : vector<30x240xf32>
    %c2_209 = arith.constant 2 : index
    %c0_210 = arith.constant 0 : index
    %c0_211 = arith.constant 0 : index
    %211 = vector.load %arg22[%c2_209, %c0_210, %c0_211] : memref<3x30x14xf32, #tpu.memory_space<vmem>>, vector<1x30x14xf32>
    %212 = vector.shape_cast %211 : vector<1x30x14xf32> to vector<30x14xf32>
    %c2_212 = arith.constant 2 : index
    %c0_213 = arith.constant 0 : index
    %c0_214 = arith.constant 0 : index
    %213 = vector.load %arg23[%c2_212, %c0_213, %c0_214] : memref<3x224x240xf32, #tpu.memory_space<vmem>>, vector<1x224x240xf32>
    %214 = vector.shape_cast %213 : vector<1x224x240xf32> to vector<224x240xf32>
    %cst_215 = arith.constant dense<0.000000e+00> : vector<14x240xf32>
    %215 = tpu.matmul %197, %214, %cst_215 {dimension_numbers = #tpu.dot_dimension_numbers<[1], [0], [0], [1], [0, 0, 1, 1], [], []>} : vector<14x224xf32>, vector<224x240xf32>, vector<14x240xf32> -> vector<14x240xf32>
    %cst_216 = arith.constant dense<0.000000e+00> : vector<30x240xf32>
    %216 = tpu.matmul %212, %215, %cst_216 {dimension_numbers = #tpu.dot_dimension_numbers<[1], [0], [0], [1], [0, 0, 1, 1], [], []>} : vector<30x14xf32>, vector<14x240xf32>, vector<30x240xf32> -> vector<30x240xf32>
    %217 = arith.addf %210, %216 : vector<30x240xf32>
    %c0_217 = arith.constant 0 : index
    %c0_218 = arith.constant 0 : index
    %218 = vector.load %arg24[%c0_217, %c0_218] : memref<1x240xf32, #tpu.memory_space<vmem>>, vector<1x240xf32>
    %219 = vector.broadcast %218 : vector<1x240xf32> to vector<30x240xf32>
    %220 = arith.addf %217, %219 : vector<30x240xf32>
    %cst_219 = arith.constant 0.000000e+00 : f32
    %221 = vector.broadcast %cst_219 : f32 to vector<30x240xf32>
    %222 = arith.maximumf %220, %221 : vector<30x240xf32>
    %c0_220 = arith.constant 0 : index
    %c0_221 = arith.constant 0 : index
    %c0_222 = arith.constant 0 : index
    %223 = vector.load %arg25[%c0_220, %c0_221, %c0_222] : memref<4x64x30xf32, #tpu.memory_space<vmem>>, vector<1x64x30xf32>
    %224 = vector.shape_cast %223 : vector<1x64x30xf32> to vector<64x30xf32>
    %c0_223 = arith.constant 0 : index
    %c0_224 = arith.constant 0 : index
    %c0_225 = arith.constant 0 : index
    %225 = vector.load %arg26[%c0_223, %c0_224, %c0_225] : memref<4x240x96xf32, #tpu.memory_space<vmem>>, vector<1x240x96xf32>
    %226 = vector.shape_cast %225 : vector<1x240x96xf32> to vector<240x96xf32>
    %cst_226 = arith.constant dense<0.000000e+00> : vector<30x96xf32>
    %227 = tpu.matmul %222, %226, %cst_226 {dimension_numbers = #tpu.dot_dimension_numbers<[1], [0], [0], [1], [0, 0, 1, 1], [], []>} : vector<30x240xf32>, vector<240x96xf32>, vector<30x96xf32> -> vector<30x96xf32>
    %cst_227 = arith.constant dense<0.000000e+00> : vector<64x96xf32>
    %228 = tpu.matmul %224, %227, %cst_227 {dimension_numbers = #tpu.dot_dimension_numbers<[1], [0], [0], [1], [0, 0, 1, 1], [], []>} : vector<64x30xf32>, vector<30x96xf32>, vector<64x96xf32> -> vector<64x96xf32>
    %c1_228 = arith.constant 1 : index
    %c0_229 = arith.constant 0 : index
    %c0_230 = arith.constant 0 : index
    %229 = vector.load %arg25[%c1_228, %c0_229, %c0_230] : memref<4x64x30xf32, #tpu.memory_space<vmem>>, vector<1x64x30xf32>
    %230 = vector.shape_cast %229 : vector<1x64x30xf32> to vector<64x30xf32>
    %c1_231 = arith.constant 1 : index
    %c0_232 = arith.constant 0 : index
    %c0_233 = arith.constant 0 : index
    %231 = vector.load %arg26[%c1_231, %c0_232, %c0_233] : memref<4x240x96xf32, #tpu.memory_space<vmem>>, vector<1x240x96xf32>
    %232 = vector.shape_cast %231 : vector<1x240x96xf32> to vector<240x96xf32>
    %cst_234 = arith.constant dense<0.000000e+00> : vector<30x96xf32>
    %233 = tpu.matmul %222, %232, %cst_234 {dimension_numbers = #tpu.dot_dimension_numbers<[1], [0], [0], [1], [0, 0, 1, 1], [], []>} : vector<30x240xf32>, vector<240x96xf32>, vector<30x96xf32> -> vector<30x96xf32>
    %cst_235 = arith.constant dense<0.000000e+00> : vector<64x96xf32>
    %234 = tpu.matmul %230, %233, %cst_235 {dimension_numbers = #tpu.dot_dimension_numbers<[1], [0], [0], [1], [0, 0, 1, 1], [], []>} : vector<64x30xf32>, vector<30x96xf32>, vector<64x96xf32> -> vector<64x96xf32>
    %235 = arith.addf %228, %234 : vector<64x96xf32>
    %c2_236 = arith.constant 2 : index
    %c0_237 = arith.constant 0 : index
    %c0_238 = arith.constant 0 : index
    %236 = vector.load %arg25[%c2_236, %c0_237, %c0_238] : memref<4x64x30xf32, #tpu.memory_space<vmem>>, vector<1x64x30xf32>
    %237 = vector.shape_cast %236 : vector<1x64x30xf32> to vector<64x30xf32>
    %c2_239 = arith.constant 2 : index
    %c0_240 = arith.constant 0 : index
    %c0_241 = arith.constant 0 : index
    %238 = vector.load %arg26[%c2_239, %c0_240, %c0_241] : memref<4x240x96xf32, #tpu.memory_space<vmem>>, vector<1x240x96xf32>
    %239 = vector.shape_cast %238 : vector<1x240x96xf32> to vector<240x96xf32>
    %cst_242 = arith.constant dense<0.000000e+00> : vector<30x96xf32>
    %240 = tpu.matmul %222, %239, %cst_242 {dimension_numbers = #tpu.dot_dimension_numbers<[1], [0], [0], [1], [0, 0, 1, 1], [], []>} : vector<30x240xf32>, vector<240x96xf32>, vector<30x96xf32> -> vector<30x96xf32>
    %cst_243 = arith.constant dense<0.000000e+00> : vector<64x96xf32>
    %241 = tpu.matmul %237, %240, %cst_243 {dimension_numbers = #tpu.dot_dimension_numbers<[1], [0], [0], [1], [0, 0, 1, 1], [], []>} : vector<64x30xf32>, vector<30x96xf32>, vector<64x96xf32> -> vector<64x96xf32>
    %242 = arith.addf %235, %241 : vector<64x96xf32>
    %c3_244 = arith.constant 3 : index
    %c0_245 = arith.constant 0 : index
    %c0_246 = arith.constant 0 : index
    %243 = vector.load %arg25[%c3_244, %c0_245, %c0_246] : memref<4x64x30xf32, #tpu.memory_space<vmem>>, vector<1x64x30xf32>
    %244 = vector.shape_cast %243 : vector<1x64x30xf32> to vector<64x30xf32>
    %c3_247 = arith.constant 3 : index
    %c0_248 = arith.constant 0 : index
    %c0_249 = arith.constant 0 : index
    %245 = vector.load %arg26[%c3_247, %c0_248, %c0_249] : memref<4x240x96xf32, #tpu.memory_space<vmem>>, vector<1x240x96xf32>
    %246 = vector.shape_cast %245 : vector<1x240x96xf32> to vector<240x96xf32>
    %cst_250 = arith.constant dense<0.000000e+00> : vector<30x96xf32>
    %247 = tpu.matmul %222, %246, %cst_250 {dimension_numbers = #tpu.dot_dimension_numbers<[1], [0], [0], [1], [0, 0, 1, 1], [], []>} : vector<30x240xf32>, vector<240x96xf32>, vector<30x96xf32> -> vector<30x96xf32>
    %cst_251 = arith.constant dense<0.000000e+00> : vector<64x96xf32>
    %248 = tpu.matmul %244, %247, %cst_251 {dimension_numbers = #tpu.dot_dimension_numbers<[1], [0], [0], [1], [0, 0, 1, 1], [], []>} : vector<64x30xf32>, vector<30x96xf32>, vector<64x96xf32> -> vector<64x96xf32>
    %249 = arith.addf %242, %248 : vector<64x96xf32>
    %c0_252 = arith.constant 0 : index
    %c0_253 = arith.constant 0 : index
    %250 = vector.load %arg27[%c0_252, %c0_253] : memref<1x96xf32, #tpu.memory_space<vmem>>, vector<1x96xf32>
    %251 = vector.broadcast %250 : vector<1x96xf32> to vector<64x96xf32>
    %252 = arith.addf %249, %251 : vector<64x96xf32>
    %cst_254 = arith.constant 0.000000e+00 : f32
    %253 = vector.broadcast %cst_254 : f32 to vector<64x96xf32>
    %254 = arith.subf %253, %252 : vector<64x96xf32>
    %255 = math.exp %254 : vector<64x96xf32>
    %cst_255 = arith.constant 1.000000e+00 : f32
    %256 = vector.broadcast %cst_255 : f32 to vector<64x96xf32>
    %257 = arith.addf %256, %255 : vector<64x96xf32>
    %cst_256 = arith.constant 1.000000e+00 : f32
    %258 = vector.broadcast %cst_256 : f32 to vector<64x96xf32>
    %259 = arith.divf %258, %257 : vector<64x96xf32>
    %c0_257 = arith.constant 0 : index
    %c0_258 = arith.constant 0 : index
    %260 = vector.load %arg28[%c0_257, %c0_258] : memref<64x96xf32, #tpu.memory_space<vmem>>, vector<64x96xf32>
    tpu.vector_store %arg28[%c0_257, %c0_258], %259 {strides = array<i32>} : memref<64x96xf32, #tpu.memory_space<vmem>>, vector<64x96xf32>,
    %261 = arith.subf %0, %259 : vector<64x96xf32>
    %262 = arith.mulf %261, %261 : vector<64x96xf32>
    %263 = vector.shape_cast %262 : vector<64x96xf32> to vector<1x64x96xf32>
    %cst_259 = arith.constant dense<0.000000e+00> : vector<1xf32>
    %264 = vector.multi_reduction <add>, %263, %cst_259 [1, 2] : vector<1x64x96xf32> to vector<1xf32>
    %265 = vector.shape_cast %264 : vector<1xf32> to vector<1x1x1xf32>
    %266 = vector.extract %265[0, 0, 0] : f32 from vector<1x1x1xf32>
    %cst_260 = arith.constant 1.62760422E-4 : f32
    %267 = arith.mulf %266, %cst_260 : f32
    %268 = vector.broadcast %267 : f32 to vector<1x1xf32>
    %c0_261 = arith.constant 0 : index
    %c0_262 = arith.constant 0 : index
    %269 = vector.load %arg30[%c0_261, %c0_262] : memref<1x1xf32, #tpu.memory_space<vmem>>, vector<1x1xf32>
    tpu.vector_store %arg30[%c0_261, %c0_262], %268 {strides = array<i32>} : memref<1x1xf32, #tpu.memory_space<vmem>>, vector<1x1xf32>,
    return
  }
}

</mosaic_0001>

<llo_original>
// kernel: unet_forward.1
$region0: #{unet_forward.1}
  #allocation0 [shape = 'u32[]', space=smem, size = 0x4, offset = 0x4, fixed_abs, tag = 'smem constant byte address 0x4 - core index']
  #allocation1 [shape = 'u32[144,128]{1,0:T(1,128)}', space=vmem, size = 0x12000, scoped, tag = 'internal scratch']
  %s0 = inlined_call_operand.smem [shape: u32[32], index: -1, kind: input, shape index: {}]
  %s1 = sld [smem:[%s0]]
  %s2 = scalar_lea.smem %s0, 1
  %s3 = sld [smem:[%s2]]
  %s4 = scalar_lea.smem %s0, 2
  %s5 = sld [smem:[%s4]]
  %s6 = scalar_lea.smem %s0, 3
  %s7 = sld [smem:[%s6]]
  %s8 = scalar_lea.smem %s0, 4
  %s9 = sld [smem:[%s8]]
  %s10 = scalar_lea.smem %s0, 5
  %s11 = sld [smem:[%s10]]
  %s12 = scalar_lea.smem %s0, 6
  %s13 = sld [smem:[%s12]]
  %s14 = scalar_lea.smem %s0, 7
  %s15 = sld [smem:[%s14]]
  %s16 = scalar_lea.smem %s0, 8
  %s17 = sld [smem:[%s16]]
  %s18 = scalar_lea.smem %s0, 9
  %s19 = sld [smem:[%s18]]
  %s20 = scalar_lea.smem %s0, 10
  %s21 = sld [smem:[%s20]]
  %s22 = scalar_lea.smem %s0, 11
  %s23 = sld [smem:[%s22]]
  %s24 = scalar_lea.smem %s0, 12
  %s25 = sld [smem:[%s24]]
  %s26 = scalar_lea.smem %s0, 13
  %s27 = sld [smem:[%s26]]
  %s28 = scalar_lea.smem %s0, 14
  %s29 = sld [smem:[%s28]]
  %s30 = scalar_lea.smem %s0, 15
  %s31 = sld [smem:[%s30]]
  %s32 = scalar_lea.smem %s0, 16
  %s33 = sld [smem:[%s32]]
  %s34 = scalar_lea.smem %s0, 17
  %s35 = sld [smem:[%s34]]
  %s36 = scalar_lea.smem %s0, 18
  %s37 = sld [smem:[%s36]]
  %s38 = scalar_lea.smem %s0, 19
  %s39 = sld [smem:[%s38]]
  %s40 = scalar_lea.smem %s0, 20
  %s41 = sld [smem:[%s40]]
  %s42 = scalar_lea.smem %s0, 21
  %s43 = sld [smem:[%s42]]
  %s44 = scalar_lea.smem %s0, 22
  %s45 = sld [smem:[%s44]]
  %s46 = scalar_lea.smem %s0, 23
  %s47 = sld [smem:[%s46]]
  %s48 = scalar_lea.smem %s0, 24
  %s49 = sld [smem:[%s48]]
  %s50 = scalar_lea.smem %s0, 25
  %s51 = sld [smem:[%s50]]
  %s52 = scalar_lea.smem %s0, 26
  %s53 = sld [smem:[%s52]]
  %s54 = scalar_lea.smem %s0, 27
  %s55 = sld [smem:[%s54]]
  %s56 = scalar_lea.smem %s0, 28
  %s57 = sld [smem:[%s56]]
  %s58 = scalar_lea.smem %s0, 29
  %s59 = sld [smem:[%s58]]
  %s60 = scalar_lea.smem %s0, 30
  %s61 = sld [smem:[%s60]]
  %s62 = scalar_lea.smem %s0, 31
  %s63 = sld [smem:[%s62]]
  %64 = xla_tuple %s57, %s59, %s61, %s63
  %s65 = sld [smem:[#allocation0]]
  $region166: #{unet_forward.1} parent=0
    _
  %s67 = ssub.s32 1, %s65
  %s68 = scalar_select 0, %s67, %s65
  $region1: #{unet_forward.1} parent=0
    #allocation2 [shape = 'u8[786432]{0}', space=vmem, size = 0xc0000, scoped, tag = 'input window, operand 3, single buffered']
    #allocation3 [shape = 's32[1]{0}', space=sflag, size = 0x4, scoped, tag = 'scoped memory for unet_forward.1']
    #allocation4 [shape = 's32[1]{0}', space=sflag, size = 0x4, scoped, tag = 'scoped memory for unet_forward.1']
    #allocation5 [shape = 'u8[524288]{0}', space=vmem, size = 0x80000, scoped, tag = 'input window, operand 12, single buffered']
    #allocation6 [shape = 's32[1]{0}', space=sflag, size = 0x4, scoped, tag = 'scoped memory for unet_forward.1']
    #allocation7 [shape = 'u8[262144]{0}', space=vmem, size = 0x40000, scoped, tag = 'input window, operand 14, single buffered']
    #allocation8 [shape = 'u8[589824]{0}', space=vmem, size = 0x90000, scoped, tag = 'input window, operand 20, single buffered']
    #allocation9 [shape = 's32[1]{0}', space=sflag, size = 0x4, scoped, tag = 'scoped memory for unet_forward.1']
    #allocation10 [shape = 'u8[688128]{0}', space=vmem, size = 0xa8000, scoped, tag = 'input window, operand 23, single buffered']
    #allocation11 [shape = 'u8[1024]{0}', space=vmem, size = 0x400, scoped, tag = 'output window, operand 1, single buffered']
    #allocation12 [shape = 'u8[512]{0}', space=vmem, size = 0x400, scoped, tag = 'output window, operand 2, single buffered']
    #allocation13 [shape = 's32[1]{0}', space=sflag, size = 0x4, scoped, tag = 'scoped memory for unet_forward.1']
    #allocation14 [shape = 'u8[512]{0}', space=vmem, size = 0x400, scoped, tag = 'output window, operand 3, single buffered']
    %69 = vsyncpa [#allocation3], 0
    %70 = vsyncpa [#allocation6], 0
    %71 = vsyncpa [#allocation9], 0
    %72 = vsyncpa [#allocation4], 0
    %73 = vsyncpa [#allocation13], 0
    // Predicated region
    $region2: #{unet_forward.1} parent=1 // pred_check
      _
    $region3: #{unet_forward.1} parent=1 // pred_check_branch
      %75 = sbr.rel (0) target = $region5
    $region4: #{unet_forward.1} parent=1 // pred_region
      _
    $region5: #{unet_forward.1} parent=1 // pred_fallthru
      _
    // Predicated region
    $region6: #{unet_forward.1} parent=1 // pred_check
      _
    $region7: #{unet_forward.1} parent=1 // pred_check_branch
      %77 = sbr.rel (0) target = $region9
    $region8: #{unet_forward.1} parent=1 // pred_region
      _
    $region9: #{unet_forward.1} parent=1 // pred_fallthru
      _
    // Predicated region
    $region10: #{unet_forward.1} parent=1 // pred_check
      _
    $region11: #{unet_forward.1} parent=1 // pred_check_branch
      %79 = sbr.rel (0) target = $region13
    $region12: #{unet_forward.1} parent=1 // pred_region
      _
    $region13: #{unet_forward.1} parent=1 // pred_fallthru
      _
    // Predicated region
    $region14: #{unet_forward.1} parent=1 // pred_check
      _
    $region15: #{unet_forward.1} parent=1 // pred_check_branch
      %81 = sbr.rel (0) target = $region17
    $region16: #{unet_forward.1} parent=1 // pred_region
      %s83 = ssub.s32 24576, 24576
      %84 = vsyncadd [#allocation3], %s83
      %s85 = sshll.u32 [#allocation2], 4
      %s86 = int_to_ptr.vmem [resolvable:$true] %s85
      %91 = dma.hbm_to_vmem [thread:$0]  %s7, 24576, %s86, [#allocation3], 512, 512, 32
    $region17: #{unet_forward.1} parent=1 // pred_fallthru
      _
    // Predicated region
    $region18: #{unet_forward.1} parent=1 // pred_check
      _
    $region19: #{unet_forward.1} parent=1 // pred_check_branch
      %93 = sbr.rel (0) target = $region21
    $region20: #{unet_forward.1} parent=1 // pred_region
      _
    $region21: #{unet_forward.1} parent=1 // pred_fallthru
      _
    // Predicated region
    $region22: #{unet_forward.1} parent=1 // pred_check
      _
    $region23: #{unet_forward.1} parent=1 // pred_check_branch
      %95 = sbr.rel (0) target = $region25
    $region24: #{unet_forward.1} parent=1 // pred_region
      _
    $region25: #{unet_forward.1} parent=1 // pred_fallthru
      _
    // Predicated region
    $region26: #{unet_forward.1} parent=1 // pred_check
      _
    $region27: #{unet_forward.1} parent=1 // pred_check_branch
      %97 = sbr.rel (0) target = $region29
    $region28: #{unet_forward.1} parent=1 // pred_region
      _
    $region29: #{unet_forward.1} parent=1 // pred_fallthru
      _
    // Predicated region
    $region30: #{unet_forward.1} parent=1 // pred_check
      _
    $region31: #{unet_forward.1} parent=1 // pred_check_branch
      %99 = sbr.rel (0) target = $region33
    $region32: #{unet_forward.1} parent=1 // pred_region
      _
    $region33: #{unet_forward.1} parent=1 // pred_fallthru
      _
    // Predicated region
    $region34: #{unet_forward.1} parent=1 // pred_check
      _
    $region35: #{unet_forward.1} parent=1 // pred_check_branch
      %101 = sbr.rel (0) target = $region37
    $region36: #{unet_forward.1} parent=1 // pred_region
      _
    $region37: #{unet_forward.1} parent=1 // pred_fallthru
      _
    // Predicated region
    $region38: #{unet_forward.1} parent=1 // pred_check
      _
    $region39: #{unet_forward.1} parent=1 // pred_check_branch
      %103 = sbr.rel (0) target = $region41
    $region40: #{unet_forward.1} parent=1 // pred_region
      _
    $region41: #{unet_forward.1} parent=1 // pred_fallthru
      _
    // Predicated region
    $region42: #{unet_forward.1} parent=1 // pred_check
      _
    $region43: #{unet_forward.1} parent=1 // pred_check_branch
      %105 = sbr.rel (0) target = $region45
    $region44: #{unet_forward.1} parent=1 // pred_region
      _
    $region45: #{unet_forward.1} parent=1 // pred_fallthru
      _
    // Predicated region
    $region46: #{unet_forward.1} parent=1 // pred_check
      _
    $region47: #{unet_forward.1} parent=1 // pred_check_branch
      %107 = sbr.rel (0) target = $region49
    $region48: #{unet_forward.1} parent=1 // pred_region
      _
    $region49: #{unet_forward.1} parent=1 // pred_fallthru
      _
    // Predicated region
    $region50: #{unet_forward.1} parent=1 // pred_check
      _
    $region51: #{unet_forward.1} parent=1 // pred_check_branch
      %109 = sbr.rel (0) target = $region53
    $region52: #{unet_forward.1} parent=1 // pred_region
      %s111 = ssub.s32 16384, 16384
      %112 = vsyncadd [#allocation6], %s111
      %s113 = sshll.u32 [#allocation5], 4
      %s114 = int_to_ptr.vmem [resolvable:$true] %s113
      %119 = dma.hbm_to_vmem [thread:$0]  %s25, 16384, %s114, [#allocation6], 256, 256, 16
    $region53: #{unet_forward.1} parent=1 // pred_fallthru
      _
    // Predicated region
    $region54: #{unet_forward.1} parent=1 // pred_check
      _
    $region55: #{unet_forward.1} parent=1 // pred_check_branch
      %121 = sbr.rel (0) target = $region57
    $region56: #{unet_forward.1} parent=1 // pred_region
      _
    $region57: #{unet_forward.1} parent=1 // pred_fallthru
      _
    // Predicated region
    $region58: #{unet_forward.1} parent=1 // pred_check
      _
    $region59: #{unet_forward.1} parent=1 // pred_check_branch
      %123 = sbr.rel (0) target = $region61
    $region60: #{unet_forward.1} parent=1 // pred_region
      %s125 = ssub.s32 8192, 8192
      %126 = vsyncadd [#allocation6], %s125
      %s127 = sshll.u32 [#allocation7], 4
      %s128 = int_to_ptr.vmem [resolvable:$true] %s127
      %133 = dma.hbm_to_vmem [thread:$0]  %s29, 8192, %s128, [#allocation6], 512, 512, 32
    $region61: #{unet_forward.1} parent=1 // pred_fallthru
      _
    // Predicated region
    $region62: #{unet_forward.1} parent=1 // pred_check
      _
    $region63: #{unet_forward.1} parent=1 // pred_check_branch
      %135 = sbr.rel (0) target = $region65
    $region64: #{unet_forward.1} parent=1 // pred_region
      _
    $region65: #{unet_forward.1} parent=1 // pred_fallthru
      _
    // Predicated region
    $region66: #{unet_forward.1} parent=1 // pred_check
      _
    $region67: #{unet_forward.1} parent=1 // pred_check_branch
      %137 = sbr.rel (0) target = $region69
    $region68: #{unet_forward.1} parent=1 // pred_region
      _
    $region69: #{unet_forward.1} parent=1 // pred_fallthru
      _
    // Predicated region
    $region70: #{unet_forward.1} parent=1 // pred_check
      _
    $region71: #{unet_forward.1} parent=1 // pred_check_branch
      %139 = sbr.rel (0) target = $region73
    $region72: #{unet_forward.1} parent=1 // pred_region
      _
    $region73: #{unet_forward.1} parent=1 // pred_fallthru
      _
    // Predicated region
    $region74: #{unet_forward.1} parent=1 // pred_check
      _
    $region75: #{unet_forward.1} parent=1 // pred_check_branch
      %141 = sbr.rel (0) target = $region77
    $region76: #{unet_forward.1} parent=1 // pred_region
      _
    $region77: #{unet_forward.1} parent=1 // pred_fallthru
      _
    // Predicated region
    $region78: #{unet_forward.1} parent=1 // pred_check
      _
    $region79: #{unet_forward.1} parent=1 // pred_check_branch
      %143 = sbr.rel (0) target = $region81
    $region80: #{unet_forward.1} parent=1 // pred_region
      _
    $region81: #{unet_forward.1} parent=1 // pred_fallthru
      _
    // Predicated region
    $region82: #{unet_forward.1} parent=1 // pred_check
      _
    $region83: #{unet_forward.1} parent=1 // pred_check_branch
      %145 = sbr.rel (0) target = $region85
    $region84: #{unet_forward.1} parent=1 // pred_region
      %s147 = ssub.s32 18432, 18432
      %148 = vsyncadd [#allocation9], %s147
      %s149 = sshll.u32 [#allocation8], 4
      %s150 = int_to_ptr.vmem [resolvable:$true] %s149
      %155 = dma.hbm_to_vmem [thread:$0]  %s41, 18432, %s150, [#allocation9], 256, 256, 16
    $region85: #{unet_forward.1} parent=1 // pred_fallthru
      _
    // Predicated region
    $region86: #{unet_forward.1} parent=1 // pred_check
      _
    $region87: #{unet_forward.1} parent=1 // pred_check_branch
      %157 = sbr.rel (0) target = $region89
    $region88: #{unet_forward.1} parent=1 // pred_region
      _
    $region89: #{unet_forward.1} parent=1 // pred_fallthru
      _
    // Predicated region
    $region90: #{unet_forward.1} parent=1 // pred_check
      _
    $region91: #{unet_forward.1} parent=1 // pred_check_branch
      %159 = sbr.rel (0) target = $region93
    $region92: #{unet_forward.1} parent=1 // pred_region
      _
    $region93: #{unet_forward.1} parent=1 // pred_fallthru
      _
    // Predicated region
    $region94: #{unet_forward.1} parent=1 // pred_check
      _
    $region95: #{unet_forward.1} parent=1 // pred_check_branch
      %161 = sbr.rel (0) target = $region97
    $region96: #{unet_forward.1} parent=1 // pred_region
      %s163 = ssub.s32 21504, 21504
      %164 = vsyncadd [#allocation9], %s163
      %s165 = sshll.u32 [#allocation10], 4
      %s166 = int_to_ptr.vmem [resolvable:$true] %s165
      %171 = dma.hbm_to_vmem [thread:$0]  %s47, 21504, %s166, [#allocation9], 256, 256, 16
    $region97: #{unet_forward.1} parent=1 // pred_fallthru
      _
    // Predicated region
    $region98: #{unet_forward.1} parent=1 // pred_check
      _
    $region99: #{unet_forward.1} parent=1 // pred_check_branch
      %173 = sbr.rel (0) target = $region101
    $region100: #{unet_forward.1} parent=1 // pred_region
      _
    $region101: #{unet_forward.1} parent=1 // pred_fallthru
      _
    // Predicated region
    $region102: #{unet_forward.1} parent=1 // pred_check
      _
    $region103: #{unet_forward.1} parent=1 // pred_check_branch
      %175 = sbr.rel (0) target = $region105
    $region104: #{unet_forward.1} parent=1 // pred_region
      _
    $region105: #{unet_forward.1} parent=1 // pred_fallthru
      _
    // Predicated region
    $region106: #{unet_forward.1} parent=1 // pred_check
      _
    $region107: #{unet_forward.1} parent=1 // pred_check_branch
      %177 = sbr.rel (0) target = $region109
    $region108: #{unet_forward.1} parent=1 // pred_region
      _
    $region109: #{unet_forward.1} parent=1 // pred_fallthru
      _
    // Predicated region
    $region110: #{unet_forward.1} parent=1 // pred_check
      _
    $region111: #{unet_forward.1} parent=1 // pred_check_branch
      %179 = sbr.rel (0) target = $region113
    $region112: #{unet_forward.1} parent=1 // pred_region
      _
    $region113: #{unet_forward.1} parent=1 // pred_fallthru
      _
    // Predicated region
    $region114: #{unet_forward.1} parent=1 // pred_check
      _
    $region115: #{unet_forward.1} parent=1 // pred_check_branch
      %181 = sbr.rel (0) target = $region117
    $region116: #{unet_forward.1} parent=1 // pred_region
      %182 = dma.done [#allocation3], 24576
    $region117: #{unet_forward.1} parent=1 // pred_fallthru
      _
    // Predicated region
    $region118: #{unet_forward.1} parent=1 // pred_check
      _
    $region119: #{unet_forward.1} parent=1 // pred_check_branch
      %184 = sbr.rel (0) target = $region121
    $region120: #{unet_forward.1} parent=1 // pred_region
      %185 = dma.done [#allocation6], 16384
    $region121: #{unet_forward.1} parent=1 // pred_fallthru
      _
    // Predicated region
    $region122: #{unet_forward.1} parent=1 // pred_check
      _
    $region123: #{unet_forward.1} parent=1 // pred_check_branch
      %187 = sbr.rel (0) target = $region125
    $region124: #{unet_forward.1} parent=1 // pred_region
      %188 = dma.done [#allocation6], 8192
    $region125: #{unet_forward.1} parent=1 // pred_fallthru
      _
    // Predicated region
    $region126: #{unet_forward.1} parent=1 // pred_check
      _
    $region127: #{unet_forward.1} parent=1 // pred_check_branch
      %190 = sbr.rel (0) target = $region129
    $region128: #{unet_forward.1} parent=1 // pred_region
      %191 = dma.done [#allocation9], 18432
    $region129: #{unet_forward.1} parent=1 // pred_fallthru
      _
    // Predicated region
    $region130: #{unet_forward.1} parent=1 // pred_check
      _
    $region131: #{unet_forward.1} parent=1 // pred_check_branch
      %193 = sbr.rel (0) target = $region133
    $region132: #{unet_forward.1} parent=1 // pred_region
      %194 = dma.done [#allocation9], 21504
    $region133: #{unet_forward.1} parent=1 // pred_fallthru
      _
    %v195 = vld [vmem:[%s1] sm:$0xff]
    %v196 = vld [vmem:[%s1 + $0x8] sm:$0xff]
    %v197 = vld [vmem:[%s1 + $0x10] sm:$0xff]
    %v198 = vld [vmem:[%s1 + $0x18] sm:$0xff]
    %v199 = vld [vmem:[%s1 + $0x20] sm:$0xff]
    %v200 = vld [vmem:[%s1 + $0x28] sm:$0xff]
    %v201 = vld [vmem:[%s1 + $0x30] sm:$0xff]
    %v202 = vld [vmem:[%s1 + $0x38] sm:$0xff]
    %v203 = vld [vmem:[%s5] sm:$0xff]
    %v204 = vld [vmem:[%s5 + $0x8] sm:$0xff]
    %v205 = vld [vmem:[%s5 + $0x10] sm:$0xff]
    %v206 = vld [vmem:[%s5 + $0x18] sm:$0x3f]
    %vm207 = vcmask 523264
    %v209 = vsel %vm207, %v203, 0
    %v212 = vsel %vm207, %v204, 0
    %v215 = vsel %vm207, %v205, 0
    %v218 = vsel %vm207, %v206, 0
    %220 = vmatprep.subr.mxu0 0.0
    %221 = vmatpush1.msra.mxu0 %v195
    %222 = vmatprep.subr.mxu0 0.0
    %223 = vmatpush1.msra.mxu0 %v196
    %224 = vmatprep.subr.mxu0 0.0
    %225 = vmatpush1.msra.mxu0 %v197
    %226 = vmatprep.subr.mxu0 0.0
    %227 = vmatpush1.msra.mxu0 %v198
    %228 = vmatprep.subr.mxu0 0.0
    %229 = vmatpush1.msra.mxu0 %v199
    %230 = vmatprep.subr.mxu0 0.0
    %231 = vmatpush1.msra.mxu0 %v200
    %232 = vmatprep.subr.mxu0 0.0
    %233 = vmatpush1.msra.mxu0 %v201
    %234 = vmatprep.subr.mxu0 0.0
    %235 = vmatpush1.msra.mxu0 %v202
    %236 = vmatprep.subr.mxu0 0.0
    %237 = vmatpush1.msra.mxu0 0.0
    %238 = vmatprep.subr.mxu0 0.0
    %239 = vmatpush1.msra.mxu0 0.0
    %240 = vmatprep.subr.mxu0 0.0
    %241 = vmatpush1.msra.mxu0 0.0
    %242 = vmatprep.subr.mxu0 0.0
    %243 = vmatpush1.msra.mxu0 0.0
    %244 = vmatprep.subr.mxu0 0.0
    %245 = vmatpush1.msra.mxu0 0.0
    %246 = vmatprep.subr.mxu0 0.0
    %247 = vmatpush1.msra.mxu0 0.0
    %248 = vmatprep.subr.mxu0 0.0
    %249 = vmatpush1.msra.mxu0 0.0
    %250 = vmatprep.subr.mxu0 0.0
    %251 = vmatpush1.msra.mxu0 0.0
    %252 = vmatprep.subr.mxu0 0.0
    %253 = vmatpush1.msra.mxu0 0.0
    %254 = vmatprep.subr.mxu0 0.0
    %255 = vmatpush1.msra.mxu0 0.0
    %256 = vmatprep.subr.mxu0 0.0
    %257 = vmatpush1.msra.mxu0 0.0
    %258 = vmatprep.subr.mxu0 0.0
    %259 = vmatpush1.msra.mxu0 0.0
    %260 = vmatprep.subr.mxu0 0.0
    %261 = vmatpush1.msra.mxu0 0.0
    %262 = vmatprep.subr.mxu0 0.0
    %263 = vmatpush1.msra.mxu0 0.0
    %264 = vmatprep.subr.mxu0 0.0
    %265 = vmatpush1.msra.mxu0 0.0
    %266 = vmatprep.subr.mxu0 0.0
    %267 = vmatpush1.msra.mxu0 0.0
    %268 = vmatprep.subr.mxu0 0.0
    %269 = vmatpush1.msra.mxu0 0.0
    %270 = vmatprep.subr.mxu0 0.0
    %271 = vmatpush1.msra.mxu0 0.0
    %272 = vmatprep.subr.mxu0 0.0
    %273 = vmatpush1.msra.mxu0 0.0
    %274 = vmatprep.subr.mxu0 0.0
    %275 = vmatpush1.msra.mxu0 0.0
    %276 = vmatprep.subr.mxu0 0.0
    %277 = vmatpush1.msra.mxu0 0.0
    %278 = vmatprep.subr.mxu0 0.0
    %279 = vmatpush1.msra.mxu0 0.0
    %280 = vmatprep.subr.mxu0 0.0
    %281 = vmatpush1.msra.mxu0 0.0
    %282 = vmatprep.subr.mxu0 0.0
    %283 = vmatpush1.msra.mxu0 0.0
    %284 = vmatprep.mubr.f32.mxu0 0.0
    %285 = vmatmul.mubr.f32.gmra.mrb[0].mxu0 %v209
    %v286 = vpop.f32.mrb[0].mxu0
    %v287 = vadd.f32 0.0, %v286
    %v288 = vpop.f32.mrb[0].mxu0
    %289 = vmatprep.mubr.f32.mxu0 0.0
    %290 = vmatmul.mubr.f32.gmra.mrb[0].mxu0 %v212
    %v291 = vpop.f32.mrb[0].mxu0
    %v292 = vadd.f32 0.0, %v291
    %v293 = vpop.f32.mrb[0].mxu0
    %294 = vmatprep.mubr.f32.mxu0 0.0
    %295 = vmatmul.mubr.f32.gmra.mrb[0].mxu0 %v215
    %v296 = vpop.f32.mrb[0].mxu0
    %v297 = vadd.f32 0.0, %v296
    %v298 = vpop.f32.mrb[0].mxu0
    %299 = vmatprep.mubr.f32.mxu0 0.0
    %300 = vmatmul.mubr.f32.gmra.mrb[0].mxu0 %v218
    %v301 = vpop.f32.mrb[0].mxu0
    %v302 = vadd.f32 0.0, %v301
    %v303 = vpop.f32.mrb[0].mxu0
    %304 = vdwg.mxu0
    %v305 = vld [vmem:[#allocation2] sm:$0xff]
    %v306 = vld [vmem:[#allocation2 + $0x8] sm:$0xff]
    %v307 = vld [vmem:[#allocation2 + $0x10] sm:$0xff]
    %v308 = vld [vmem:[#allocation2 + $0x18] sm:$0xff]
    %v309 = vld [vmem:[#allocation2 + $0x20] sm:$0xff]
    %v310 = vld [vmem:[#allocation2 + $0x28] sm:$0xff]
    %v311 = vld [vmem:[#allocation2 + $0x30] sm:$0xff]
    %v312 = vld [vmem:[#allocation2 + $0x38] sm:$0xff]
    %v313 = vld [vmem:[#allocation2 + $0x40] sm:$0xff]
    %v314 = vld [vmem:[#allocation2 + $0x48] sm:$0xff]
    %v315 = vld [vmem:[#allocation2 + $0x50] sm:$0xff]
    %v316 = vld [vmem:[#allocation2 + $0x58] sm:$0xff]
    %v317 = vld [vmem:[#allocation2 + $0x60] sm:$0xff]
    %v318 = vld [vmem:[#allocation2 + $0x68] sm:$0xff]
    %v319 = vld [vmem:[#allocation2 + $0x70] sm:$0xff]
    %v320 = vld [vmem:[#allocation2 + $0x78] sm:$0xff]
    %v321 = vld [vmem:[#allocation2 + $0x80] sm:$0xff]
    %v322 = vld [vmem:[#allocation2 + $0x88] sm:$0xff]
    %v323 = vld [vmem:[#allocation2 + $0x90] sm:$0xff]
    %v324 = vld [vmem:[#allocation2 + $0x98] sm:$0xff]
    %v325 = vld [vmem:[#allocation2 + $0xa0] sm:$0xff]
    %v326 = vld [vmem:[#allocation2 + $0xa8] sm:$0xff]
    %v327 = vld [vmem:[#allocation2 + $0xb0] sm:$0xff]
    %v328 = vld [vmem:[#allocation2 + $0xb8] sm:$0xff]
    %v329 = vld [vmem:[#allocation2 + $0xc0] sm:$0xff]
    %v330 = vld [vmem:[#allocation2 + $0xc8] sm:$0xff]
    %v331 = vld [vmem:[#allocation2 + $0xd0] sm:$0xff]
    %v332 = vld [vmem:[#allocation2 + $0xd8] sm:$0xff]
    %v333 = vld [vmem:[#allocation2 + $0xe0] sm:$0xff]
    %v334 = vld [vmem:[#allocation2 + $0xe8] sm:$0xff]
    %v335 = vld [vmem:[#allocation2 + $0xf0] sm:$0xff]
    %v336 = vld [vmem:[#allocation2 + $0xf8] sm:$0xff]
    %v337 = vld [vmem:[#allocation2 + $0x100] sm:$0xff]
    %v338 = vld [vmem:[#allocation2 + $0x108] sm:$0xff]
    %v339 = vld [vmem:[#allocation2 + $0x110] sm:$0xff]
    %v340 = vld [vmem:[#allocation2 + $0x118] sm:$0xff]
    %v341 = vld [vmem:[#allocation2 + $0x120] sm:$0xff]
    %v342 = vld [vmem:[#allocation2 + $0x128] sm:$0xff]
    %v343 = vld [vmem:[#allocation2 + $0x130] sm:$0xff]
    %v344 = vld [vmem:[#allocation2 + $0x138] sm:$0xff]
    %v345 = vld [vmem:[#allocation2 + $0x140] sm:$0xff]
    %v346 = vld [vmem:[#allocation2 + $0x148] sm:$0xff]
    %v347 = vld [vmem:[#allocation2 + $0x150] sm:$0xff]
    %v348 = vld [vmem:[#allocation2 + $0x158] sm:$0xff]
    %v349 = vld [vmem:[#allocation2 + $0x160] sm:$0xff]
    %v350 = vld [vmem:[#allocation2 + $0x168] sm:$0xff]
    %v351 = vld [vmem:[#allocation2 + $0x170] sm:$0xff]
    %v352 = vld [vmem:[#allocation2 + $0x178] sm:$0xff]
    %s353 = scalar_lea.vmem %s5, 32
    %v354 = vld [vmem:[%s353] sm:$0xff]
    %v355 = vld [vmem:[%s353 + $0x8] sm:$0xff]
    %v356 = vld [vmem:[%s353 + $0x10] sm:$0xff]
    %v357 = vld [vmem:[%s353 + $0x18] sm:$0x3f]
    %v359 = vsel %vm207, %v354, 0
    %v362 = vsel %vm207, %v355, 0
    %v365 = vsel %vm207, %v356, 0
    %v368 = vsel %vm207, %v357, 0
    %370 = vmatprep.subr.mxu0 0.0
    %371 = vmatpush1.msra.mxu0 %v195
    %372 = vmatprep.subr.mxu0 0.0
    %373 = vmatpush1.msra.mxu0 %v196
    %374 = vmatprep.subr.mxu0 0.0
    %375 = vmatpush1.msra.mxu0 %v197
    %376 = vmatprep.subr.mxu0 0.0
    %377 = vmatpush1.msra.mxu0 %v198
    %378 = vmatprep.subr.mxu0 0.0
    %379 = vmatpush1.msra.mxu0 %v199
    %380 = vmatprep.subr.mxu0 0.0
    %381 = vmatpush1.msra.mxu0 %v200
    %382 = vmatprep.subr.mxu0 0.0
    %383 = vmatpush1.msra.mxu0 %v201
    %384 = vmatprep.subr.mxu0 0.0
    %385 = vmatpush1.msra.mxu0 %v202
    %386 = vmatprep.subr.mxu0 0.0
    %387 = vmatpush1.msra.mxu0 0.0
    %388 = vmatprep.subr.mxu0 0.0
    %389 = vmatpush1.msra.mxu0 0.0
    %390 = vmatprep.subr.mxu0 0.0
    %391 = vmatpush1.msra.mxu0 0.0
    %392 = vmatprep.subr.mxu0 0.0
    %393 = vmatpush1.msra.mxu0 0.0
    %394 = vmatprep.subr.mxu0 0.0
    %395 = vmatpush1.msra.mxu0 0.0
    %396 = vmatprep.subr.mxu0 0.0
    %397 = vmatpush1.msra.mxu0 0.0
    %398 = vmatprep.subr.mxu0 0.0
    %399 = vmatpush1.msra.mxu0 0.0
    %400 = vmatprep.subr.mxu0 0.0
    %401 = vmatpush1.msra.mxu0 0.0
    %402 = vmatprep.subr.mxu0 0.0
    %403 = vmatpush1.msra.mxu0 0.0
    %404 = vmatprep.subr.mxu0 0.0
    %405 = vmatpush1.msra.mxu0 0.0
    %406 = vmatprep.subr.mxu0 0.0
    %407 = vmatpush1.msra.mxu0 0.0
    %408 = vmatprep.subr.mxu0 0.0
    %409 = vmatpush1.msra.mxu0 0.0
    %410 = vmatprep.subr.mxu0 0.0
    %411 = vmatpush1.msra.mxu0 0.0
    %412 = vmatprep.subr.mxu0 0.0
    %413 = vmatpush1.msra.mxu0 0.0
    %414 = vmatprep.subr.mxu0 0.0
    %415 = vmatpush1.msra.mxu0 0.0
    %416 = vmatprep.subr.mxu0 0.0
    %417 = vmatpush1.msra.mxu0 0.0
    %418 = vmatprep.subr.mxu0 0.0
    %419 = vmatpush1.msra.mxu0 0.0
    %420 = vmatprep.subr.mxu0 0.0
    %421 = vmatpush1.msra.mxu0 0.0
    %422 = vmatprep.subr.mxu0 0.0
    %423 = vmatpush1.msra.mxu0 0.0
    %424 = vmatprep.subr.mxu0 0.0
    %425 = vmatpush1.msra.mxu0 0.0
    %426 = vmatprep.subr.mxu0 0.0
    %427 = vmatpush1.msra.mxu0 0.0
    %428 = vmatprep.subr.mxu0 0.0
    %429 = vmatpush1.msra.mxu0 0.0
    %430 = vmatprep.subr.mxu0 0.0
    %431 = vmatpush1.msra.mxu0 0.0
    %432 = vmatprep.subr.mxu0 0.0
    %433 = vmatpush1.msra.mxu0 0.0
    %434 = vmatprep.mubr.f32.mxu0 0.0
    %435 = vmatmul.mubr.f32.gmra.mrb[0].mxu0 %v359
    %v436 = vpop.f32.mrb[0].mxu0
    %v437 = vadd.f32 0.0, %v436
    %v438 = vpop.f32.mrb[0].mxu0
    %439 = vmatprep.mubr.f32.mxu0 0.0
    %440 = vmatmul.mubr.f32.gmra.mrb[0].mxu0 %v362
    %v441 = vpop.f32.mrb[0].mxu0
    %v442 = vadd.f32 0.0, %v441
    %v443 = vpop.f32.mrb[0].mxu0
    %444 = vmatprep.mubr.f32.mxu0 0.0
    %445 = vmatmul.mubr.f32.gmra.mrb[0].mxu0 %v365
    %v446 = vpop.f32.mrb[0].mxu0
    %v447 = vadd.f32 0.0, %v446
    %v448 = vpop.f32.mrb[0].mxu0
    %449 = vmatprep.mubr.f32.mxu0 0.0
    %450 = vmatmul.mubr.f32.gmra.mrb[0].mxu0 %v368
    %v451 = vpop.f32.mrb[0].mxu0
    %v452 = vadd.f32 0.0, %v451
    %v453 = vpop.f32.mrb[0].mxu0
    %454 = vdwg.mxu0
    %s455 = scalar_lea.vmem [#allocation2], 384
    %v456 = vld [vmem:[%s455] sm:$0xff]
    %v457 = vld [vmem:[%s455 + $0x8] sm:$0xff]
    %v458 = vld [vmem:[%s455 + $0x10] sm:$0xff]
    %v459 = vld [vmem:[%s455 + $0x18] sm:$0xff]
    %v460 = vld [vmem:[%s455 + $0x20] sm:$0xff]
    %v461 = vld [vmem:[%s455 + $0x28] sm:$0xff]
    %v462 = vld [vmem:[%s455 + $0x30] sm:$0xff]
    %v463 = vld [vmem:[%s455 + $0x38] sm:$0xff]
    %v464 = vld [vmem:[%s455 + $0x40] sm:$0xff]
    %v465 = vld [vmem:[%s455 + $0x48] sm:$0xff]
    %v466 = vld [vmem:[%s455 + $0x50] sm:$0xff]
    %v467 = vld [vmem:[%s455 + $0x58] sm:$0xff]
    %v468 = vld [vmem:[%s455 + $0x60] sm:$0xff]
    %v469 = vld [vmem:[%s455 + $0x68] sm:$0xff]
    %v470 = vld [vmem:[%s455 + $0x70] sm:$0xff]
    %v471 = vld [vmem:[%s455 + $0x78] sm:$0xff]
    %v472 = vld [vmem:[%s455 + $0x80] sm:$0xff]
    %v473 = vld [vmem:[%s455 + $0x88] sm:$0xff]
    %v474 = vld [vmem:[%s455 + $0x90] sm:$0xff]
    %v475 = vld [vmem:[%s455 + $0x98] sm:$0xff]
    %v476 = vld [vmem:[%s455 + $0xa0] sm:$0xff]
    %v477 = vld [vmem:[%s455 + $0xa8] sm:$0xff]
    %v478 = vld [vmem:[%s455 + $0xb0] sm:$0xff]
    %v479 = vld [vmem:[%s455 + $0xb8] sm:$0xff]
    %v480 = vld [vmem:[%s455 + $0xc0] sm:$0xff]
    %v481 = vld [vmem:[%s455 + $0xc8] sm:$0xff]
    %v482 = vld [vmem:[%s455 + $0xd0] sm:$0xff]
    %v483 = vld [vmem:[%s455 + $0xd8] sm:$0xff]
    %v484 = vld [vmem:[%s455 + $0xe0] sm:$0xff]
    %v485 = vld [vmem:[%s455 + $0xe8] sm:$0xff]
    %v486 = vld [vmem:[%s455 + $0xf0] sm:$0xff]
    %v487 = vld [vmem:[%s455 + $0xf8] sm:$0xff]
    %v488 = vld [vmem:[%s455 + $0x100] sm:$0xff]
    %v489 = vld [vmem:[%s455 + $0x108] sm:$0xff]
    %v490 = vld [vmem:[%s455 + $0x110] sm:$0xff]
    %v491 = vld [vmem:[%s455 + $0x118] sm:$0xff]
    %v492 = vld [vmem:[%s455 + $0x120] sm:$0xff]
    %v493 = vld [vmem:[%s455 + $0x128] sm:$0xff]
    %v494 = vld [vmem:[%s455 + $0x130] sm:$0xff]
    %v495 = vld [vmem:[%s455 + $0x138] sm:$0xff]
    %v496 = vld [vmem:[%s455 + $0x140] sm:$0xff]
    %v497 = vld [vmem:[%s455 + $0x148] sm:$0xff]
    %v498 = vld [vmem:[%s455 + $0x150] sm:$0xff]
    %v499 = vld [vmem:[%s455 + $0x158] sm:$0xff]
    %v500 = vld [vmem:[%s455 + $0x160] sm:$0xff]
    %v501 = vld [vmem:[%s455 + $0x168] sm:$0xff]
    %v502 = vld [vmem:[%s455 + $0x170] sm:$0xff]
    %v503 = vld [vmem:[%s455 + $0x178] sm:$0xff]
    %vm504 = vcmask 785408
    %v506 = vsel %vm504, %v437, 0
    %v509 = vsel %vm504, %v442, 0
    %v512 = vsel %vm504, %v447, 0
    %v515 = vsel %vm504, %v452, 0
    %517 = vmatprep.subr.mxu0 %v457
    %518 = vmatpush1.msra.mxu0 %v456
    %519 = vmatprep.subr.mxu0 %v461
    %520 = vmatpush1.msra.mxu0 %v460
    %521 = vmatprep.subr.mxu0 %v465
    %522 = vmatpush1.msra.mxu0 %v464
    %523 = vmatprep.subr.mxu0 %v469
    %524 = vmatpush1.msra.mxu0 %v468
    %525 = vmatprep.subr.mxu0 %v473
    %526 = vmatpush1.msra.mxu0 %v472
    %527 = vmatprep.subr.mxu0 %v477
    %528 = vmatpush1.msra.mxu0 %v476
    %529 = vmatprep.subr.mxu0 %v481
    %530 = vmatpush1.msra.mxu0 %v480
    %531 = vmatprep.subr.mxu0 %v485
    %532 = vmatpush1.msra.mxu0 %v484
    %533 = vmatprep.subr.mxu0 %v489
    %534 = vmatpush1.msra.mxu0 %v488
    %535 = vmatprep.subr.mxu0 %v493
    %536 = vmatpush1.msra.mxu0 %v492
    %537 = vmatprep.subr.mxu0 %v497
    %538 = vmatpush1.msra.mxu0 %v496
    %539 = vmatprep.subr.mxu0 %v501
    %540 = vmatpush1.msra.mxu0 %v500
    %541 = vmatprep.subr.mxu0 0.0
    %542 = vmatpush1.msra.mxu0 0.0
    %543 = vmatprep.subr.mxu0 0.0
    %544 = vmatpush1.msra.mxu0 0.0
    %545 = vmatprep.subr.mxu0 0.0
    %546 = vmatpush1.msra.mxu0 0.0
    %547 = vmatprep.subr.mxu0 0.0
    %548 = vmatpush1.msra.mxu0 0.0
    %549 = vmatprep.subr.mxu0 0.0
    %550 = vmatpush1.msra.mxu0 0.0
    %551 = vmatprep.subr.mxu0 0.0
    %552 = vmatpush1.msra.mxu0 0.0
    %553 = vmatprep.subr.mxu0 0.0
    %554 = vmatpush1.msra.mxu0 0.0
    %555 = vmatprep.subr.mxu0 0.0
    %556 = vmatpush1.msra.mxu0 0.0
    %557 = vmatprep.subr.mxu0 0.0
    %558 = vmatpush1.msra.mxu0 0.0
    %559 = vmatprep.subr.mxu0 0.0
    %560 = vmatpush1.msra.mxu0 0.0
    %561 = vmatprep.subr.mxu0 0.0
    %562 = vmatpush1.msra.mxu0 0.0
    %563 = vmatprep.subr.mxu0 0.0
    %564 = vmatpush1.msra.mxu0 0.0
    %565 = vmatprep.subr.mxu0 0.0
    %566 = vmatpush1.msra.mxu0 0.0
    %567 = vmatprep.subr.mxu0 0.0
    %568 = vmatpush1.msra.mxu0 0.0
    %569 = vmatprep.subr.mxu0 0.0
    %570 = vmatpush1.msra.mxu0 0.0
    %571 = vmatprep.subr.mxu0 0.0
    %572 = vmatpush1.msra.mxu0 0.0
    %573 = vmatprep.subr.mxu0 0.0
    %574 = vmatpush1.msra.mxu0 0.0
    %575 = vmatprep.subr.mxu0 0.0
    %576 = vmatpush1.msra.mxu0 0.0
    %577 = vmatprep.subr.mxu0 0.0
    %578 = vmatpush1.msra.mxu0 0.0
    %579 = vmatprep.subr.mxu0 0.0
    %580 = vmatpush1.msra.mxu0 0.0
    %581 = vmatprep.mubr.f32.mxu0 0.0
    %582 = vmatmul.mubr.f32.gmra.mrb[0].mxu0 %v506
    %v583 = vpop.f32.mrb[0].mxu0
    %v584 = vadd.f32 0.0, %v583
    %v585 = vpop.f32.mrb[0].mxu0
    %v586 = vadd.f32 0.0, %v585
    %587 = vmatprep.mubr.f32.mxu0 0.0
    %588 = vmatmul.mubr.f32.gmra.mrb[0].mxu0 %v509
    %v589 = vpop.f32.mrb[0].mxu0
    %v590 = vadd.f32 0.0, %v589
    %v591 = vpop.f32.mrb[0].mxu0
    %v592 = vadd.f32 0.0, %v591
    %593 = vmatprep.mubr.f32.mxu0 0.0
    %594 = vmatmul.mubr.f32.gmra.mrb[0].mxu0 %v512
    %v595 = vpop.f32.mrb[0].mxu0
    %v596 = vadd.f32 0.0, %v595
    %v597 = vpop.f32.mrb[0].mxu0
    %v598 = vadd.f32 0.0, %v597
    %599 = vmatprep.mubr.f32.mxu0 0.0
    %600 = vmatmul.mubr.f32.gmra.mrb[0].mxu0 %v515
    %v601 = vpop.f32.mrb[0].mxu0
    %v602 = vadd.f32 0.0, %v601
    %v603 = vpop.f32.mrb[0].mxu0
    %v604 = vadd.f32 0.0, %v603
    %605 = vdwg.mxu0
    %606 = vmatprep.subr.mxu0 %v459
    %607 = vmatpush1.msra.mxu0 %v458
    %608 = vmatprep.subr.mxu0 %v463
    %609 = vmatpush1.msra.mxu0 %v462
    %610 = vmatprep.subr.mxu0 %v467
    %611 = vmatpush1.msra.mxu0 %v466
    %612 = vmatprep.subr.mxu0 %v471
    %613 = vmatpush1.msra.mxu0 %v470
    %614 = vmatprep.subr.mxu0 %v475
    %615 = vmatpush1.msra.mxu0 %v474
    %616 = vmatprep.subr.mxu0 %v479
    %617 = vmatpush1.msra.mxu0 %v478
    %618 = vmatprep.subr.mxu0 %v483
    %619 = vmatpush1.msra.mxu0 %v482
    %620 = vmatprep.subr.mxu0 %v487
    %621 = vmatpush1.msra.mxu0 %v486
    %622 = vmatprep.subr.mxu0 %v491
    %623 = vmatpush1.msra.mxu0 %v490
    %624 = vmatprep.subr.mxu0 %v495
    %625 = vmatpush1.msra.mxu0 %v494
    %626 = vmatprep.subr.mxu0 %v499
    %627 = vmatpush1.msra.mxu0 %v498
    %628 = vmatprep.subr.mxu0 %v503
    %629 = vmatpush1.msra.mxu0 %v502
    %630 = vmatprep.subr.mxu0 0.0
    %631 = vmatpush1.msra.mxu0 0.0
    %632 = vmatprep.subr.mxu0 0.0
    %633 = vmatpush1.msra.mxu0 0.0
    %634 = vmatprep.subr.mxu0 0.0
    %635 = vmatpush1.msra.mxu0 0.0
    %636 = vmatprep.subr.mxu0 0.0
    %637 = vmatpush1.msra.mxu0 0.0
    %638 = vmatprep.subr.mxu0 0.0
    %639 = vmatpush1.msra.mxu0 0.0
    %640 = vmatprep.subr.mxu0 0.0
    %641 = vmatpush1.msra.mxu0 0.0
    %642 = vmatprep.subr.mxu0 0.0
    %643 = vmatpush1.msra.mxu0 0.0
    %644 = vmatprep.subr.mxu0 0.0
    %645 = vmatpush1.msra.mxu0 0.0
    %646 = vmatprep.subr.mxu0 0.0
    %647 = vmatpush1.msra.mxu0 0.0
    %648 = vmatprep.subr.mxu0 0.0
    %649 = vmatpush1.msra.mxu0 0.0
    %650 = vmatprep.subr.mxu0 0.0
    %651 = vmatpush1.msra.mxu0 0.0
    %652 = vmatprep.subr.mxu0 0.0
    %653 = vmatpush1.msra.mxu0 0.0
    %654 = vmatprep.subr.mxu0 0.0
    %655 = vmatpush1.msra.mxu0 0.0
    %656 = vmatprep.subr.mxu0 0.0
    %657 = vmatpush1.msra.mxu0 0.0
    %658 = vmatprep.subr.mxu0 0.0
    %659 = vmatpush1.msra.mxu0 0.0
    %660 = vmatprep.subr.mxu0 0.0
    %661 = vmatpush1.msra.mxu0 0.0
    %662 = vmatprep.subr.mxu0 0.0
    %663 = vmatpush1.msra.mxu0 0.0
    %664 = vmatprep.subr.mxu0 0.0
    %665 = vmatpush1.msra.mxu0 0.0
    %666 = vmatprep.subr.mxu0 0.0
    %667 = vmatpush1.msra.mxu0 0.0
    %668 = vmatprep.subr.mxu0 0.0
    %669 = vmatpush1.msra.mxu0 0.0
    %670 = vmatprep.mubr.f32.mxu0 0.0
    %671 = vmatmul.mubr.f32.gmra.mrb[0].mxu0 %v506
    %v672 = vpop.f32.mrb[0].mxu0
    %v673 = vadd.f32 0.0, %v672
    %v674 = vpop.f32.mrb[0].mxu0
    %v675 = vadd.f32 0.0, %v674
    %676 = vmatprep.mubr.f32.mxu0 0.0
    %677 = vmatmul.mubr.f32.gmra.mrb[0].mxu0 %v509
    %v678 = vpop.f32.mrb[0].mxu0
    %v679 = vadd.f32 0.0, %v678
    %v680 = vpop.f32.mrb[0].mxu0
    %v681 = vadd.f32 0.0, %v680
    %682 = vmatprep.mubr.f32.mxu0 0.0
    %683 = vmatmul.mubr.f32.gmra.mrb[0].mxu0 %v512
    %v684 = vpop.f32.mrb[0].mxu0
    %v685 = vadd.f32 0.0, %v684
    %v686 = vpop.f32.mrb[0].mxu0
    %v687 = vadd.f32 0.0, %v686
    %688 = vmatprep.mubr.f32.mxu0 0.0
    %689 = vmatmul.mubr.f32.gmra.mrb[0].mxu0 %v515
    %v690 = vpop.f32.mrb[0].mxu0
    %v691 = vadd.f32 0.0, %v690
    %v692 = vpop.f32.mrb[0].mxu0
    %v693 = vadd.f32 0.0, %v692
    %694 = vdwg.mxu0
    %v696 = vsel %vm504, %v287, 0
    %v699 = vsel %vm504, %v292, 0
    %v702 = vsel %vm504, %v297, 0
    %v705 = vsel %vm504, %v302, 0
    %707 = vmatprep.subr.mxu0 %v306
    %708 = vmatpush1.msra.mxu0 %v305
    %709 = vmatprep.subr.mxu0 %v310
    %710 = vmatpush1.msra.mxu0 %v309
    %711 = vmatprep.subr.mxu0 %v314
    %712 = vmatpush1.msra.mxu0 %v313
    %713 = vmatprep.subr.mxu0 %v318
    %714 = vmatpush1.msra.mxu0 %v317
    %715 = vmatprep.subr.mxu0 %v322
    %716 = vmatpush1.msra.mxu0 %v321
    %717 = vmatprep.subr.mxu0 %v326
    %718 = vmatpush1.msra.mxu0 %v325
    %719 = vmatprep.subr.mxu0 %v330
    %720 = vmatpush1.msra.mxu0 %v329
    %721 = vmatprep.subr.mxu0 %v334
    %722 = vmatpush1.msra.mxu0 %v333
    %723 = vmatprep.subr.mxu0 %v338
    %724 = vmatpush1.msra.mxu0 %v337
    %725 = vmatprep.subr.mxu0 %v342
    %726 = vmatpush1.msra.mxu0 %v341
    %727 = vmatprep.subr.mxu0 %v346
    %728 = vmatpush1.msra.mxu0 %v345
    %729 = vmatprep.subr.mxu0 %v350
    %730 = vmatpush1.msra.mxu0 %v349
    %731 = vmatprep.subr.mxu0 0.0
    %732 = vmatpush1.msra.mxu0 0.0
    %733 = vmatprep.subr.mxu0 0.0
    %734 = vmatpush1.msra.mxu0 0.0
    %735 = vmatprep.subr.mxu0 0.0
    %736 = vmatpush1.msra.mxu0 0.0
    %737 = vmatprep.subr.mxu0 0.0
    %738 = vmatpush1.msra.mxu0 0.0
    %739 = vmatprep.subr.mxu0 0.0
    %740 = vmatpush1.msra.mxu0 0.0
    %741 = vmatprep.subr.mxu0 0.0
    %742 = vmatpush1.msra.mxu0 0.0
    %743 = vmatprep.subr.mxu0 0.0
    %744 = vmatpush1.msra.mxu0 0.0
    %745 = vmatprep.subr.mxu0 0.0
    %746 = vmatpush1.msra.mxu0 0.0
    %747 = vmatprep.subr.mxu0 0.0
    %748 = vmatpush1.msra.mxu0 0.0
    %749 = vmatprep.subr.mxu0 0.0
    %750 = vmatpush1.msra.mxu0 0.0
    %751 = vmatprep.subr.mxu0 0.0
    %752 = vmatpush1.msra.mxu0 0.0
    %753 = vmatprep.subr.mxu0 0.0
    %754 = vmatpush1.msra.mxu0 0.0
    %755 = vmatprep.subr.mxu0 0.0
    %756 = vmatpush1.msra.mxu0 0.0
    %757 = vmatprep.subr.mxu0 0.0
    %758 = vmatpush1.msra.mxu0 0.0
    %759 = vmatprep.subr.mxu0 0.0
    %760 = vmatpush1.msra.mxu0 0.0
    %761 = vmatprep.subr.mxu0 0.0
    %762 = vmatpush1.msra.mxu0 0.0
    %763 = vmatprep.subr.mxu0 0.0
    %764 = vmatpush1.msra.mxu0 0.0
    %765 = vmatprep.subr.mxu0 0.0
    %766 = vmatpush1.msra.mxu0 0.0
    %767 = vmatprep.subr.mxu0 0.0
    %768 = vmatpush1.msra.mxu0 0.0
    %769 = vmatprep.subr.mxu0 0.0
    %770 = vmatpush1.msra.mxu0 0.0
    %771 = vmatprep.mubr.f32.mxu0 0.0
    %772 = vmatmul.mubr.f32.gmra.mrb[0].mxu0 %v696
    %v773 = vpop.f32.mrb[0].mxu0
    %v774 = vadd.f32 %v584, %v773
    %v775 = vpop.f32.mrb[0].mxu0
    %v776 = vadd.f32 %v586, %v775
    %777 = vmatprep.mubr.f32.mxu0 0.0
    %778 = vmatmul.mubr.f32.gmra.mrb[0].mxu0 %v699
    %v779 = vpop.f32.mrb[0].mxu0
    %v780 = vadd.f32 %v590, %v779
    %v781 = vpop.f32.mrb[0].mxu0
    %v782 = vadd.f32 %v592, %v781
    %783 = vmatprep.mubr.f32.mxu0 0.0
    %784 = vmatmul.mubr.f32.gmra.mrb[0].mxu0 %v702
    %v785 = vpop.f32.mrb[0].mxu0
    %v786 = vadd.f32 %v596, %v785
    %v787 = vpop.f32.mrb[0].mxu0
    %v788 = vadd.f32 %v598, %v787
    %789 = vmatprep.mubr.f32.mxu0 0.0
    %790 = vmatmul.mubr.f32.gmra.mrb[0].mxu0 %v705
    %v791 = vpop.f32.mrb[0].mxu0
    %v792 = vadd.f32 %v602, %v791
    %v793 = vpop.f32.mrb[0].mxu0
    %v794 = vadd.f32 %v604, %v793
    %795 = vdwg.mxu0
    %796 = vmatprep.subr.mxu0 %v308
    %797 = vmatpush1.msra.mxu0 %v307
    %798 = vmatprep.subr.mxu0 %v312
    %799 = vmatpush1.msra.mxu0 %v311
    %800 = vmatprep.subr.mxu0 %v316
    %801 = vmatpush1.msra.mxu0 %v315
    %802 = vmatprep.subr.mxu0 %v320
    %803 = vmatpush1.msra.mxu0 %v319
    %804 = vmatprep.subr.mxu0 %v324
    %805 = vmatpush1.msra.mxu0 %v323
    %806 = vmatprep.subr.mxu0 %v328
    %807 = vmatpush1.msra.mxu0 %v327
    %808 = vmatprep.subr.mxu0 %v332
    %809 = vmatpush1.msra.mxu0 %v331
    %810 = vmatprep.subr.mxu0 %v336
    %811 = vmatpush1.msra.mxu0 %v335
    %812 = vmatprep.subr.mxu0 %v340
    %813 = vmatpush1.msra.mxu0 %v339
    %814 = vmatprep.subr.mxu0 %v344
    %815 = vmatpush1.msra.mxu0 %v343
    %816 = vmatprep.subr.mxu0 %v348
    %817 = vmatpush1.msra.mxu0 %v347
    %818 = vmatprep.subr.mxu0 %v352
    %819 = vmatpush1.msra.mxu0 %v351
    %820 = vmatprep.subr.mxu0 0.0
    %821 = vmatpush1.msra.mxu0 0.0
    %822 = vmatprep.subr.mxu0 0.0
    %823 = vmatpush1.msra.mxu0 0.0
    %824 = vmatprep.subr.mxu0 0.0
    %825 = vmatpush1.msra.mxu0 0.0
    %826 = vmatprep.subr.mxu0 0.0
    %827 = vmatpush1.msra.mxu0 0.0
    %828 = vmatprep.subr.mxu0 0.0
    %829 = vmatpush1.msra.mxu0 0.0
    %830 = vmatprep.subr.mxu0 0.0
    %831 = vmatpush1.msra.mxu0 0.0
    %832 = vmatprep.subr.mxu0 0.0
    %833 = vmatpush1.msra.mxu0 0.0
    %834 = vmatprep.subr.mxu0 0.0
    %835 = vmatpush1.msra.mxu0 0.0
    %836 = vmatprep.subr.mxu0 0.0
    %837 = vmatpush1.msra.mxu0 0.0
    %838 = vmatprep.subr.mxu0 0.0
    %839 = vmatpush1.msra.mxu0 0.0
    %840 = vmatprep.subr.mxu0 0.0
    %841 = vmatpush1.msra.mxu0 0.0
    %842 = vmatprep.subr.mxu0 0.0
    %843 = vmatpush1.msra.mxu0 0.0
    %844 = vmatprep.subr.mxu0 0.0
    %845 = vmatpush1.msra.mxu0 0.0
    %846 = vmatprep.subr.mxu0 0.0
    %847 = vmatpush1.msra.mxu0 0.0
    %848 = vmatprep.subr.mxu0 0.0
    %849 = vmatpush1.msra.mxu0 0.0
    %850 = vmatprep.subr.mxu0 0.0
    %851 = vmatpush1.msra.mxu0 0.0
    %852 = vmatprep.subr.mxu0 0.0
    %853 = vmatpush1.msra.mxu0 0.0
    %854 = vmatprep.subr.mxu0 0.0
    %855 = vmatpush1.msra.mxu0 0.0
    %856 = vmatprep.subr.mxu0 0.0
    %857 = vmatpush1.msra.mxu0 0.0
    %858 = vmatprep.subr.mxu0 0.0
    %859 = vmatpush1.msra.mxu0 0.0
    %860 = vmatprep.mubr.f32.mxu0 0.0
    %861 = vmatmul.mubr.f32.gmra.mrb[0].mxu0 %v696
    %v862 = vpop.f32.mrb[0].mxu0
    %v863 = vadd.f32 %v673, %v862
    %v864 = vpop.f32.mrb[0].mxu0
    %v865 = vadd.f32 %v675, %v864
    %866 = vmatprep.mubr.f32.mxu0 0.0
    %867 = vmatmul.mubr.f32.gmra.mrb[0].mxu0 %v699
    %v868 = vpop.f32.mrb[0].mxu0
    %v869 = vadd.f32 %v679, %v868
    %v870 = vpop.f32.mrb[0].mxu0
    %v871 = vadd.f32 %v681, %v870
    %872 = vmatprep.mubr.f32.mxu0 0.0
    %873 = vmatmul.mubr.f32.gmra.mrb[0].mxu0 %v702
    %v874 = vpop.f32.mrb[0].mxu0
    %v875 = vadd.f32 %v685, %v874
    %v876 = vpop.f32.mrb[0].mxu0
    %v877 = vadd.f32 %v687, %v876
    %878 = vmatprep.mubr.f32.mxu0 0.0
    %879 = vmatmul.mubr.f32.gmra.mrb[0].mxu0 %v705
    %v880 = vpop.f32.mrb[0].mxu0
    %v881 = vadd.f32 %v691, %v880
    %v882 = vpop.f32.mrb[0].mxu0
    %v883 = vadd.f32 %v693, %v882
    %884 = vdwg.mxu0
    %s885 = scalar_lea.vmem %s5, 64
    %v886 = vld [vmem:[%s885] sm:$0xff]
    %v887 = vld [vmem:[%s885 + $0x8] sm:$0xff]
    %v888 = vld [vmem:[%s885 + $0x10] sm:$0xff]
    %v889 = vld [vmem:[%s885 + $0x18] sm:$0x3f]
    %v891 = vsel %vm207, %v886, 0
    %v894 = vsel %vm207, %v887, 0
    %v897 = vsel %vm207, %v888, 0
    %v900 = vsel %vm207, %v889, 0
    %902 = vmatprep.subr.mxu0 0.0
    %903 = vmatpush1.msra.mxu0 %v195
    %904 = vmatprep.subr.mxu0 0.0
    %905 = vmatpush1.msra.mxu0 %v196
    %906 = vmatprep.subr.mxu0 0.0
    %907 = vmatpush1.msra.mxu0 %v197
    %908 = vmatprep.subr.mxu0 0.0
    %909 = vmatpush1.msra.mxu0 %v198
    %910 = vmatprep.subr.mxu0 0.0
    %911 = vmatpush1.msra.mxu0 %v199
    %912 = vmatprep.subr.mxu0 0.0
    %913 = vmatpush1.msra.mxu0 %v200
    %914 = vmatprep.subr.mxu0 0.0
    %915 = vmatpush1.msra.mxu0 %v201
    %916 = vmatprep.subr.mxu0 0.0
    %917 = vmatpush1.msra.mxu0 %v202
    %918 = vmatprep.subr.mxu0 0.0
    %919 = vmatpush1.msra.mxu0 0.0
    %920 = vmatprep.subr.mxu0 0.0
    %921 = vmatpush1.msra.mxu0 0.0
    %922 = vmatprep.subr.mxu0 0.0
    %923 = vmatpush1.msra.mxu0 0.0
    %924 = vmatprep.subr.mxu0 0.0
    %925 = vmatpush1.msra.mxu0 0.0
    %926 = vmatprep.subr.mxu0 0.0
    %927 = vmatpush1.msra.mxu0 0.0
    %928 = vmatprep.subr.mxu0 0.0
    %929 = vmatpush1.msra.mxu0 0.0
    %930 = vmatprep.subr.mxu0 0.0
    %931 = vmatpush1.msra.mxu0 0.0
    %932 = vmatprep.subr.mxu0 0.0
    %933 = vmatpush1.msra.mxu0 0.0
    %934 = vmatprep.subr.mxu0 0.0
    %935 = vmatpush1.msra.mxu0 0.0
    %936 = vmatprep.subr.mxu0 0.0
    %937 = vmatpush1.msra.mxu0 0.0
    %938 = vmatprep.subr.mxu0 0.0
    %939 = vmatpush1.msra.mxu0 0.0
    %940 = vmatprep.subr.mxu0 0.0
    %941 = vmatpush1.msra.mxu0 0.0
    %942 = vmatprep.subr.mxu0 0.0
    %943 = vmatpush1.msra.mxu0 0.0
    %944 = vmatprep.subr.mxu0 0.0
    %945 = vmatpush1.msra.mxu0 0.0
    %946 = vmatprep.subr.mxu0 0.0
    %947 = vmatpush1.msra.mxu0 0.0
    %948 = vmatprep.subr.mxu0 0.0
    %949 = vmatpush1.msra.mxu0 0.0
    %950 = vmatprep.subr.mxu0 0.0
    %951 = vmatpush1.msra.mxu0 0.0
    %952 = vmatprep.subr.mxu0 0.0
    %953 = vmatpush1.msra.mxu0 0.0
    %954 = vmatprep.subr.mxu0 0.0
    %955 = vmatpush1.msra.mxu0 0.0
    %956 = vmatprep.subr.mxu0 0.0
    %957 = vmatpush1.msra.mxu0 0.0
    %958 = vmatprep.subr.mxu0 0.0
    %959 = vmatpush1.msra.mxu0 0.0
    %960 = vmatprep.subr.mxu0 0.0
    %961 = vmatpush1.msra.mxu0 0.0
    %962 = vmatprep.subr.mxu0 0.0
    %963 = vmatpush1.msra.mxu0 0.0
    %964 = vmatprep.subr.mxu0 0.0
    %965 = vmatpush1.msra.mxu0 0.0
    %966 = vmatprep.mubr.f32.mxu0 0.0
    %967 = vmatmul.mubr.f32.gmra.mrb[0].mxu0 %v891
    %v968 = vpop.f32.mrb[0].mxu0
    %v969 = vadd.f32 0.0, %v968
    %v970 = vpop.f32.mrb[0].mxu0
    %971 = vmatprep.mubr.f32.mxu0 0.0
    %972 = vmatmul.mubr.f32.gmra.mrb[0].mxu0 %v894
    %v973 = vpop.f32.mrb[0].mxu0
    %v974 = vadd.f32 0.0, %v973
    %v975 = vpop.f32.mrb[0].mxu0
    %976 = vmatprep.mubr.f32.mxu0 0.0
    %977 = vmatmul.mubr.f32.gmra.mrb[0].mxu0 %v897
    %v978 = vpop.f32.mrb[0].mxu0
    %v979 = vadd.f32 0.0, %v978
    %v980 = vpop.f32.mrb[0].mxu0
    %981 = vmatprep.mubr.f32.mxu0 0.0
    %982 = vmatmul.mubr.f32.gmra.mrb[0].mxu0 %v900
    %v983 = vpop.f32.mrb[0].mxu0
    %v984 = vadd.f32 0.0, %v983
    %v985 = vpop.f32.mrb[0].mxu0
    %986 = vdwg.mxu0
    %s987 = scalar_lea.vmem [#allocation2], 768
    %v988 = vld [vmem:[%s987] sm:$0xff]
    %v989 = vld [vmem:[%s987 + $0x8] sm:$0xff]
    %v990 = vld [vmem:[%s987 + $0x10] sm:$0xff]
    %v991 = vld [vmem:[%s987 + $0x18] sm:$0xff]
    %v992 = vld [vmem:[%s987 + $0x20] sm:$0xff]
    %v993 = vld [vmem:[%s987 + $0x28] sm:$0xff]
    %v994 = vld [vmem:[%s987 + $0x30] sm:$0xff]
    %v995 = vld [vmem:[%s987 + $0x38] sm:$0xff]
    %v996 = vld [vmem:[%s987 + $0x40] sm:$0xff]
    %v997 = vld [vmem:[%s987 + $0x48] sm:$0xff]
    %v998 = vld [vmem:[%s987 + $0x50] sm:$0xff]
    %v999 = vld [vmem:[%s987 + $0x58] sm:$0xff]
    %v1000 = vld [vmem:[%s987 + $0x60] sm:$0xff]
    %v1001 = vld [vmem:[%s987 + $0x68] sm:$0xff]
    %v1002 = vld [vmem:[%s987 + $0x70] sm:$0xff]
    %v1003 = vld [vmem:[%s987 + $0x78] sm:$0xff]
    %v1004 = vld [vmem:[%s987 + $0x80] sm:$0xff]
    %v1005 = vld [vmem:[%s987 + $0x88] sm:$0xff]
    %v1006 = vld [vmem:[%s987 + $0x90] sm:$0xff]
    %v1007 = vld [vmem:[%s987 + $0x98] sm:$0xff]
    %v1008 = vld [vmem:[%s987 + $0xa0] sm:$0xff]
    %v1009 = vld [vmem:[%s987 + $0xa8] sm:$0xff]
    %v1010 = vld [vmem:[%s987 + $0xb0] sm:$0xff]
    %v1011 = vld [vmem:[%s987 + $0xb8] sm:$0xff]
    %v1012 = vld [vmem:[%s987 + $0xc0] sm:$0xff]
    %v1013 = vld [vmem:[%s987 + $0xc8] sm:$0xff]
    %v1014 = vld [vmem:[%s987 + $0xd0] sm:$0xff]
    %v1015 = vld [vmem:[%s987 + $0xd8] sm:$0xff]
    %v1016 = vld [vmem:[%s987 + $0xe0] sm:$0xff]
    %v1017 = vld [vmem:[%s987 + $0xe8] sm:$0xff]
    %v1018 = vld [vmem:[%s987 + $0xf0] sm:$0xff]
    %v1019 = vld [vmem:[%s987 + $0xf8] sm:$0xff]
    %v1020 = vld [vmem:[%s987 + $0x100] sm:$0xff]
    %v1021 = vld [vmem:[%s987 + $0x108] sm:$0xff]
    %v1022 = vld [vmem:[%s987 + $0x110] sm:$0xff]
    %v1023 = vld [vmem:[%s987 + $0x118] sm:$0xff]
    %v1024 = vld [vmem:[%s987 + $0x120] sm:$0xff]
    %v1025 = vld [vmem:[%s987 + $0x128] sm:$0xff]
    %v1026 = vld [vmem:[%s987 + $0x130] sm:$0xff]
    %v1027 = vld [vmem:[%s987 + $0x138] sm:$0xff]
    %v1028 = vld [vmem:[%s987 + $0x140] sm:$0xff]
    %v1029 = vld [vmem:[%s987 + $0x148] sm:$0xff]
    %v1030 = vld [vmem:[%s987 + $0x150] sm:$0xff]
    %v1031 = vld [vmem:[%s987 + $0x158] sm:$0xff]
    %v1032 = vld [vmem:[%s987 + $0x160] sm:$0xff]
    %v1033 = vld [vmem:[%s987 + $0x168] sm:$0xff]
    %v1034 = vld [vmem:[%s987 + $0x170] sm:$0xff]
    %v1035 = vld [vmem:[%s987 + $0x178] sm:$0xff]
    %v1037 = vsel %vm504, %v969, 0
    %v1040 = vsel %vm504, %v974, 0
    %v1043 = vsel %vm504, %v979, 0
    %v1046 = vsel %vm504, %v984, 0
    %1048 = vmatprep.subr.mxu0 %v989
    %1049 = vmatpush1.msra.mxu0 %v988
    %1050 = vmatprep.subr.mxu0 %v993
    %1051 = vmatpush1.msra.mxu0 %v992
    %1052 = vmatprep.subr.mxu0 %v997
    %1053 = vmatpush1.msra.mxu0 %v996
    %1054 = vmatprep.subr.mxu0 %v1001
    %1055 = vmatpush1.msra.mxu0 %v1000
    %1056 = vmatprep.subr.mxu0 %v1005
    %1057 = vmatpush1.msra.mxu0 %v1004
    %1058 = vmatprep.subr.mxu0 %v1009
    %1059 = vmatpush1.msra.mxu0 %v1008
    %1060 = vmatprep.subr.mxu0 %v1013
    %1061 = vmatpush1.msra.mxu0 %v1012
    %1062 = vmatprep.subr.mxu0 %v1017
    %1063 = vmatpush1.msra.mxu0 %v1016
    %1064 = vmatprep.subr.mxu0 %v1021
    %1065 = vmatpush1.msra.mxu0 %v1020
    %1066 = vmatprep.subr.mxu0 %v1025
    %1067 = vmatpush1.msra.mxu0 %v1024
    %1068 = vmatprep.subr.mxu0 %v1029
    %1069 = vmatpush1.msra.mxu0 %v1028
    %1070 = vmatprep.subr.mxu0 %v1033
    %1071 = vmatpush1.msra.mxu0 %v1032
    %1072 = vmatprep.subr.mxu0 0.0
    %1073 = vmatpush1.msra.mxu0 0.0
    %1074 = vmatprep.subr.mxu0 0.0
    %1075 = vmatpush1.msra.mxu0 0.0
    %1076 = vmatprep.subr.mxu0 0.0
    %1077 = vmatpush1.msra.mxu0 0.0
    %1078 = vmatprep.subr.mxu0 0.0
    %1079 = vmatpush1.msra.mxu0 0.0
    %1080 = vmatprep.subr.mxu0 0.0
    %1081 = vmatpush1.msra.mxu0 0.0
    %1082 = vmatprep.subr.mxu0 0.0
    %1083 = vmatpush1.msra.mxu0 0.0
    %1084 = vmatprep.subr.mxu0 0.0
    %1085 = vmatpush1.msra.mxu0 0.0
    %1086 = vmatprep.subr.mxu0 0.0
    %1087 = vmatpush1.msra.mxu0 0.0
    %1088 = vmatprep.subr.mxu0 0.0
    %1089 = vmatpush1.msra.mxu0 0.0
    %1090 = vmatprep.subr.mxu0 0.0
    %1091 = vmatpush1.msra.mxu0 0.0
    %1092 = vmatprep.subr.mxu0 0.0
    %1093 = vmatpush1.msra.mxu0 0.0
    %1094 = vmatprep.subr.mxu0 0.0
    %1095 = vmatpush1.msra.mxu0 0.0
    %1096 = vmatprep.subr.mxu0 0.0
    %1097 = vmatpush1.msra.mxu0 0.0
    %1098 = vmatprep.subr.mxu0 0.0
    %1099 = vmatpush1.msra.mxu0 0.0
    %1100 = vmatprep.subr.mxu0 0.0
    %1101 = vmatpush1.msra.mxu0 0.0
    %1102 = vmatprep.subr.mxu0 0.0
    %1103 = vmatpush1.msra.mxu0 0.0
    %1104 = vmatprep.subr.mxu0 0.0
    %1105 = vmatpush1.msra.mxu0 0.0
    %1106 = vmatprep.subr.mxu0 0.0
    %1107 = vmatpush1.msra.mxu0 0.0
    %1108 = vmatprep.subr.mxu0 0.0
    %1109 = vmatpush1.msra.mxu0 0.0
    %1110 = vmatprep.subr.mxu0 0.0
    %1111 = vmatpush1.msra.mxu0 0.0
    %1112 = vmatprep.mubr.f32.mxu0 0.0
    %1113 = vmatmul.mubr.f32.gmra.mrb[0].mxu0 %v1037
    %v1114 = vpop.f32.mrb[0].mxu0
    %v1115 = vadd.f32 0.0, %v1114
    %v1116 = vpop.f32.mrb[0].mxu0
    %v1117 = vadd.f32 0.0, %v1116
    %1118 = vmatprep.mubr.f32.mxu0 0.0
    %1119 = vmatmul.mubr.f32.gmra.mrb[0].mxu0 %v1040
    %v1120 = vpop.f32.mrb[0].mxu0
    %v1121 = vadd.f32 0.0, %v1120
    %v1122 = vpop.f32.mrb[0].mxu0
    %v1123 = vadd.f32 0.0, %v1122
    %1124 = vmatprep.mubr.f32.mxu0 0.0
    %1125 = vmatmul.mubr.f32.gmra.mrb[0].mxu0 %v1043
    %v1126 = vpop.f32.mrb[0].mxu0
    %v1127 = vadd.f32 0.0, %v1126
    %v1128 = vpop.f32.mrb[0].mxu0
    %v1129 = vadd.f32 0.0, %v1128
    %1130 = vmatprep.mubr.f32.mxu0 0.0
    %1131 = vmatmul.mubr.f32.gmra.mrb[0].mxu0 %v1046
    %v1132 = vpop.f32.mrb[0].mxu0
    %v1133 = vadd.f32 0.0, %v1132
    %v1134 = vpop.f32.mrb[0].mxu0
    %v1135 = vadd.f32 0.0, %v1134
    %1136 = vdwg.mxu0
    %1137 = vmatprep.subr.mxu0 %v991
    %1138 = vmatpush1.msra.mxu0 %v990
    %1139 = vmatprep.subr.mxu0 %v995
    %1140 = vmatpush1.msra.mxu0 %v994
    %1141 = vmatprep.subr.mxu0 %v999
    %1142 = vmatpush1.msra.mxu0 %v998
    %1143 = vmatprep.subr.mxu0 %v1003
    %1144 = vmatpush1.msra.mxu0 %v1002
    %1145 = vmatprep.subr.mxu0 %v1007
    %1146 = vmatpush1.msra.mxu0 %v1006
    %1147 = vmatprep.subr.mxu0 %v1011
    %1148 = vmatpush1.msra.mxu0 %v1010
    %1149 = vmatprep.subr.mxu0 %v1015
    %1150 = vmatpush1.msra.mxu0 %v1014
    %1151 = vmatprep.subr.mxu0 %v1019
    %1152 = vmatpush1.msra.mxu0 %v1018
    %1153 = vmatprep.subr.mxu0 %v1023
    %1154 = vmatpush1.msra.mxu0 %v1022
    %1155 = vmatprep.subr.mxu0 %v1027
    %1156 = vmatpush1.msra.mxu0 %v1026
    %1157 = vmatprep.subr.mxu0 %v1031
    %1158 = vmatpush1.msra.mxu0 %v1030
    %1159 = vmatprep.subr.mxu0 %v1035
    %1160 = vmatpush1.msra.mxu0 %v1034
    %1161 = vmatprep.subr.mxu0 0.0
    %1162 = vmatpush1.msra.mxu0 0.0
    %1163 = vmatprep.subr.mxu0 0.0
    %1164 = vmatpush1.msra.mxu0 0.0
    %1165 = vmatprep.subr.mxu0 0.0
    %1166 = vmatpush1.msra.mxu0 0.0
    %1167 = vmatprep.subr.mxu0 0.0
    %1168 = vmatpush1.msra.mxu0 0.0
    %1169 = vmatprep.subr.mxu0 0.0
    %1170 = vmatpush1.msra.mxu0 0.0
    %1171 = vmatprep.subr.mxu0 0.0
    %1172 = vmatpush1.msra.mxu0 0.0
    %1173 = vmatprep.subr.mxu0 0.0
    %1174 = vmatpush1.msra.mxu0 0.0
    %1175 = vmatprep.subr.mxu0 0.0
    %1176 = vmatpush1.msra.mxu0 0.0
    %1177 = vmatprep.subr.mxu0 0.0
    %1178 = vmatpush1.msra.mxu0 0.0
    %1179 = vmatprep.subr.mxu0 0.0
    %1180 = vmatpush1.msra.mxu0 0.0
    %1181 = vmatprep.subr.mxu0 0.0
    %1182 = vmatpush1.msra.mxu0 0.0
    %1183 = vmatprep.subr.mxu0 0.0
    %1184 = vmatpush1.msra.mxu0 0.0
    %1185 = vmatprep.subr.mxu0 0.0
    %1186 = vmatpush1.msra.mxu0 0.0
    %1187 = vmatprep.subr.mxu0 0.0
    %1188 = vmatpush1.msra.mxu0 0.0
    %1189 = vmatprep.subr.mxu0 0.0
    %1190 = vmatpush1.msra.mxu0 0.0
    %1191 = vmatprep.subr.mxu0 0.0
    %1192 = vmatpush1.msra.mxu0 0.0
    %1193 = vmatprep.subr.mxu0 0.0
    %1194 = vmatpush1.msra.mxu0 0.0
    %1195 = vmatprep.subr.mxu0 0.0
    %1196 = vmatpush1.msra.mxu0 0.0
    %1197 = vmatprep.subr.mxu0 0.0
    %1198 = vmatpush1.msra.mxu0 0.0
    %1199 = vmatprep.subr.mxu0 0.0
    %1200 = vmatpush1.msra.mxu0 0.0
    %1201 = vmatprep.mubr.f32.mxu0 0.0
    %1202 = vmatmul.mubr.f32.gmra.mrb[0].mxu0 %v1037
    %v1203 = vpop.f32.mrb[0].mxu0
    %v1204 = vadd.f32 0.0, %v1203
    %v1205 = vpop.f32.mrb[0].mxu0
    %v1206 = vadd.f32 0.0, %v1205
    %1207 = vmatprep.mubr.f32.mxu0 0.0
    %1208 = vmatmul.mubr.f32.gmra.mrb[0].mxu0 %v1040
    %v1209 = vpop.f32.mrb[0].mxu0
    %v1210 = vadd.f32 0.0, %v1209
    %v1211 = vpop.f32.mrb[0].mxu0
    %v1212 = vadd.f32 0.0, %v1211
    %1213 = vmatprep.mubr.f32.mxu0 0.0
    %1214 = vmatmul.mubr.f32.gmra.mrb[0].mxu0 %v1043
    %v1215 = vpop.f32.mrb[0].mxu0
    %v1216 = vadd.f32 0.0, %v1215
    %v1217 = vpop.f32.mrb[0].mxu0
    %v1218 = vadd.f32 0.0, %v1217
    %1219 = vmatprep.mubr.f32.mxu0 0.0
    %1220 = vmatmul.mubr.f32.gmra.mrb[0].mxu0 %v1046
    %v1221 = vpop.f32.mrb[0].mxu0
    %v1222 = vadd.f32 0.0, %v1221
    %v1223 = vpop.f32.mrb[0].mxu0
    %v1224 = vadd.f32 0.0, %v1223
    %1225 = vdwg.mxu0
    %v1226 = vadd.f32 %v774, %v1115
    %v1227 = vadd.f32 %v776, %v1117
    %v1228 = vadd.f32 %v863, %v1204
    %v1229 = vadd.f32 %v865, %v1206
    %v1230 = vadd.f32 %v780, %v1121
    %v1231 = vadd.f32 %v782, %v1123
    %v1232 = vadd.f32 %v869, %v1210
    %v1233 = vadd.f32 %v871, %v1212
    %v1234 = vadd.f32 %v786, %v1127
    %v1235 = vadd.f32 %v788, %v1129
    %v1236 = vadd.f32 %v875, %v1216
    %v1237 = vadd.f32 %v877, %v1218
    %v1238 = vadd.f32 %v792, %v1133
    %v1239 = vadd.f32 %v794, %v1135
    %v1240 = vadd.f32 %v881, %v1222
    %v1241 = vadd.f32 %v883, %v1224
    %s1242 = scalar_lea.vmem %s5, 96
    %v1243 = vld [vmem:[%s1242] sm:$0xff]
    %v1244 = vld [vmem:[%s1242 + $0x8] sm:$0xff]
    %v1245 = vld [vmem:[%s1242 + $0x10] sm:$0xff]
    %v1246 = vld [vmem:[%s1242 + $0x18] sm:$0x3f]
    %v1248 = vsel %vm207, %v1243, 0
    %v1251 = vsel %vm207, %v1244, 0
    %v1254 = vsel %vm207, %v1245, 0
    %v1257 = vsel %vm207, %v1246, 0
    %1259 = vmatprep.subr.mxu0 0.0
    %1260 = vmatpush1.msra.mxu0 %v195
    %1261 = vmatprep.subr.mxu0 0.0
    %1262 = vmatpush1.msra.mxu0 %v196
    %1263 = vmatprep.subr.mxu0 0.0
    %1264 = vmatpush1.msra.mxu0 %v197
    %1265 = vmatprep.subr.mxu0 0.0
    %1266 = vmatpush1.msra.mxu0 %v198
    %1267 = vmatprep.subr.mxu0 0.0
    %1268 = vmatpush1.msra.mxu0 %v199
    %1269 = vmatprep.subr.mxu0 0.0
    %1270 = vmatpush1.msra.mxu0 %v200
    %1271 = vmatprep.subr.mxu0 0.0
    %1272 = vmatpush1.msra.mxu0 %v201
    %1273 = vmatprep.subr.mxu0 0.0
    %1274 = vmatpush1.msra.mxu0 %v202
    %1275 = vmatprep.subr.mxu0 0.0
    %1276 = vmatpush1.msra.mxu0 0.0
    %1277 = vmatprep.subr.mxu0 0.0
    %1278 = vmatpush1.msra.mxu0 0.0
    %1279 = vmatprep.subr.mxu0 0.0
    %1280 = vmatpush1.msra.mxu0 0.0
    %1281 = vmatprep.subr.mxu0 0.0
    %1282 = vmatpush1.msra.mxu0 0.0
    %1283 = vmatprep.subr.mxu0 0.0
    %1284 = vmatpush1.msra.mxu0 0.0
    %1285 = vmatprep.subr.mxu0 0.0
    %1286 = vmatpush1.msra.mxu0 0.0
    %1287 = vmatprep.subr.mxu0 0.0
    %1288 = vmatpush1.msra.mxu0 0.0
    %1289 = vmatprep.subr.mxu0 0.0
    %1290 = vmatpush1.msra.mxu0 0.0
    %1291 = vmatprep.subr.mxu0 0.0
    %1292 = vmatpush1.msra.mxu0 0.0
    %1293 = vmatprep.subr.mxu0 0.0
    %1294 = vmatpush1.msra.mxu0 0.0
    %1295 = vmatprep.subr.mxu0 0.0
    %1296 = vmatpush1.msra.mxu0 0.0
    %1297 = vmatprep.subr.mxu0 0.0
    %1298 = vmatpush1.msra.mxu0 0.0
    %1299 = vmatprep.subr.mxu0 0.0
    %1300 = vmatpush1.msra.mxu0 0.0
    %1301 = vmatprep.subr.mxu0 0.0
    %1302 = vmatpush1.msra.mxu0 0.0
    %1303 = vmatprep.subr.mxu0 0.0
    %1304 = vmatpush1.msra.mxu0 0.0
    %1305 = vmatprep.subr.mxu0 0.0
    %1306 = vmatpush1.msra.mxu0 0.0
    %1307 = vmatprep.subr.mxu0 0.0
    %1308 = vmatpush1.msra.mxu0 0.0
    %1309 = vmatprep.subr.mxu0 0.0
    %1310 = vmatpush1.msra.mxu0 0.0
    %1311 = vmatprep.subr.mxu0 0.0
    %1312 = vmatpush1.msra.mxu0 0.0
    %1313 = vmatprep.subr.mxu0 0.0
    %1314 = vmatpush1.msra.mxu0 0.0
    %1315 = vmatprep.subr.mxu0 0.0
    %1316 = vmatpush1.msra.mxu0 0.0
    %1317 = vmatprep.subr.mxu0 0.0
    %1318 = vmatpush1.msra.mxu0 0.0
    %1319 = vmatprep.subr.mxu0 0.0
    %1320 = vmatpush1.msra.mxu0 0.0
    %1321 = vmatprep.subr.mxu0 0.0
    %1322 = vmatpush1.msra.mxu0 0.0
    %1323 = vmatprep.mubr.f32.mxu0 0.0
    %1324 = vmatmul.mubr.f32.gmra.mrb[0].mxu0 %v1248
    %v1325 = vpop.f32.mrb[0].mxu0
    %v1326 = vadd.f32 0.0, %v1325
    %v1327 = vpop.f32.mrb[0].mxu0
    %1328 = vmatprep.mubr.f32.mxu0 0.0
    %1329 = vmatmul.mubr.f32.gmra.mrb[0].mxu0 %v1251
    %v1330 = vpop.f32.mrb[0].mxu0
    %v1331 = vadd.f32 0.0, %v1330
    %v1332 = vpop.f32.mrb[0].mxu0
    %1333 = vmatprep.mubr.f32.mxu0 0.0
    %1334 = vmatmul.mubr.f32.gmra.mrb[0].mxu0 %v1254
    %v1335 = vpop.f32.mrb[0].mxu0
    %v1336 = vadd.f32 0.0, %v1335
    %v1337 = vpop.f32.mrb[0].mxu0
    %1338 = vmatprep.mubr.f32.mxu0 0.0
    %1339 = vmatmul.mubr.f32.gmra.mrb[0].mxu0 %v1257
    %v1340 = vpop.f32.mrb[0].mxu0
    %v1341 = vadd.f32 0.0, %v1340
    %v1342 = vpop.f32.mrb[0].mxu0
    %1343 = vdwg.mxu0
    %s1344 = scalar_lea.vmem [#allocation2], 1152
    %v1345 = vld [vmem:[%s1344] sm:$0xff]
    %v1346 = vld [vmem:[%s1344 + $0x8] sm:$0xff]
    %v1347 = vld [vmem:[%s1344 + $0x10] sm:$0xff]
    %v1348 = vld [vmem:[%s1344 + $0x18] sm:$0xff]
    %v1349 = vld [vmem:[%s1344 + $0x20] sm:$0xff]
    %v1350 = vld [vmem:[%s1344 + $0x28] sm:$0xff]
    %v1351 = vld [vmem:[%s1344 + $0x30] sm:$0xff]
    %v1352 = vld [vmem:[%s1344 + $0x38] sm:$0xff]
    %v1353 = vld [vmem:[%s1344 + $0x40] sm:$0xff]
    %v1354 = vld [vmem:[%s1344 + $0x48] sm:$0xff]
    %v1355 = vld [vmem:[%s1344 + $0x50] sm:$0xff]
    %v1356 = vld [vmem:[%s1344 + $0x58] sm:$0xff]
    %v1357 = vld [vmem:[%s1344 + $0x60] sm:$0xff]
    %v1358 = vld [vmem:[%s1344 + $0x68] sm:$0xff]
    %v1359 = vld [vmem:[%s1344 + $0x70] sm:$0xff]
    %v1360 = vld [vmem:[%s1344 + $0x78] sm:$0xff]
    %v1361 = vld [vmem:[%s1344 + $0x80] sm:$0xff]
    %v1362 = vld [vmem:[%s1344 + $0x88] sm:$0xff]
    %v1363 = vld [vmem:[%s1344 + $0x90] sm:$0xff]
    %v1364 = vld [vmem:[%s1344 + $0x98] sm:$0xff]
    %v1365 = vld [vmem:[%s1344 + $0xa0] sm:$0xff]
    %v1366 = vld [vmem:[%s1344 + $0xa8] sm:$0xff]
    %v1367 = vld [vmem:[%s1344 + $0xb0] sm:$0xff]
    %v1368 = vld [vmem:[%s1344 + $0xb8] sm:$0xff]
    %v1369 = vld [vmem:[%s1344 + $0xc0] sm:$0xff]
    %v1370 = vld [vmem:[%s1344 + $0xc8] sm:$0xff]
    %v1371 = vld [vmem:[%s1344 + $0xd0] sm:$0xff]
    %v1372 = vld [vmem:[%s1344 + $0xd8] sm:$0xff]
    %v1373 = vld [vmem:[%s1344 + $0xe0] sm:$0xff]
    %v1374 = vld [vmem:[%s1344 + $0xe8] sm:$0xff]
    %v1375 = vld [vmem:[%s1344 + $0xf0] sm:$0xff]
    %v1376 = vld [vmem:[%s1344 + $0xf8] sm:$0xff]
    %v1377 = vld [vmem:[%s1344 + $0x100] sm:$0xff]
    %v1378 = vld [vmem:[%s1344 + $0x108] sm:$0xff]
    %v1379 = vld [vmem:[%s1344 + $0x110] sm:$0xff]
    %v1380 = vld [vmem:[%s1344 + $0x118] sm:$0xff]
    %v1381 = vld [vmem:[%s1344 + $0x120] sm:$0xff]
    %v1382 = vld [vmem:[%s1344 + $0x128] sm:$0xff]
    %v1383 = vld [vmem:[%s1344 + $0x130] sm:$0xff]
    %v1384 = vld [vmem:[%s1344 + $0x138] sm:$0xff]
    %v1385 = vld [vmem:[%s1344 + $0x140] sm:$0xff]
    %v1386 = vld [vmem:[%s1344 + $0x148] sm:$0xff]
    %v1387 = vld [vmem:[%s1344 + $0x150] sm:$0xff]
    %v1388 = vld [vmem:[%s1344 + $0x158] sm:$0xff]
    %v1389 = vld [vmem:[%s1344 + $0x160] sm:$0xff]
    %v1390 = vld [vmem:[%s1344 + $0x168] sm:$0xff]
    %v1391 = vld [vmem:[%s1344 + $0x170] sm:$0xff]
    %v1392 = vld [vmem:[%s1344 + $0x178] sm:$0xff]
    %v1394 = vsel %vm504, %v1326, 0
    %v1397 = vsel %vm504, %v1331, 0
    %v1400 = vsel %vm504, %v1336, 0
    %v1403 = vsel %vm504, %v1341, 0
    %1405 = vmatprep.subr.mxu0 %v1346
    %1406 = vmatpush1.msra.mxu0 %v1345
    %1407 = vmatprep.subr.mxu0 %v1350
    %1408 = vmatpush1.msra.mxu0 %v1349
    %1409 = vmatprep.subr.mxu0 %v1354
    %1410 = vmatpush1.msra.mxu0 %v1353
    %1411 = vmatprep.subr.mxu0 %v1358
    %1412 = vmatpush1.msra.mxu0 %v1357
    %1413 = vmatprep.subr.mxu0 %v1362
    %1414 = vmatpush1.msra.mxu0 %v1361
    %1415 = vmatprep.subr.mxu0 %v1366
    %1416 = vmatpush1.msra.mxu0 %v1365
    %1417 = vmatprep.subr.mxu0 %v1370
    %1418 = vmatpush1.msra.mxu0 %v1369
    %1419 = vmatprep.subr.mxu0 %v1374
    %1420 = vmatpush1.msra.mxu0 %v1373
    %1421 = vmatprep.subr.mxu0 %v1378
    %1422 = vmatpush1.msra.mxu0 %v1377
    %1423 = vmatprep.subr.mxu0 %v1382
    %1424 = vmatpush1.msra.mxu0 %v1381
    %1425 = vmatprep.subr.mxu0 %v1386
    %1426 = vmatpush1.msra.mxu0 %v1385
    %1427 = vmatprep.subr.mxu0 %v1390
    %1428 = vmatpush1.msra.mxu0 %v1389
    %1429 = vmatprep.subr.mxu0 0.0
    %1430 = vmatpush1.msra.mxu0 0.0
    %1431 = vmatprep.subr.mxu0 0.0
    %1432 = vmatpush1.msra.mxu0 0.0
    %1433 = vmatprep.subr.mxu0 0.0
    %1434 = vmatpush1.msra.mxu0 0.0
    %1435 = vmatprep.subr.mxu0 0.0
    %1436 = vmatpush1.msra.mxu0 0.0
    %1437 = vmatprep.subr.mxu0 0.0
    %1438 = vmatpush1.msra.mxu0 0.0
    %1439 = vmatprep.subr.mxu0 0.0
    %1440 = vmatpush1.msra.mxu0 0.0
    %1441 = vmatprep.subr.mxu0 0.0
    %1442 = vmatpush1.msra.mxu0 0.0
    %1443 = vmatprep.subr.mxu0 0.0
    %1444 = vmatpush1.msra.mxu0 0.0
    %1445 = vmatprep.subr.mxu0 0.0
    %1446 = vmatpush1.msra.mxu0 0.0
    %1447 = vmatprep.subr.mxu0 0.0
    %1448 = vmatpush1.msra.mxu0 0.0
    %1449 = vmatprep.subr.mxu0 0.0
    %1450 = vmatpush1.msra.mxu0 0.0
    %1451 = vmatprep.subr.mxu0 0.0
    %1452 = vmatpush1.msra.mxu0 0.0
    %1453 = vmatprep.subr.mxu0 0.0
    %1454 = vmatpush1.msra.mxu0 0.0
    %1455 = vmatprep.subr.mxu0 0.0
    %1456 = vmatpush1.msra.mxu0 0.0
    %1457 = vmatprep.subr.mxu0 0.0
    %1458 = vmatpush1.msra.mxu0 0.0
    %1459 = vmatprep.subr.mxu0 0.0
    %1460 = vmatpush1.msra.mxu0 0.0
    %1461 = vmatprep.subr.mxu0 0.0
    %1462 = vmatpush1.msra.mxu0 0.0
    %1463 = vmatprep.subr.mxu0 0.0
    %1464 = vmatpush1.msra.mxu0 0.0
    %1465 = vmatprep.subr.mxu0 0.0
    %1466 = vmatpush1.msra.mxu0 0.0
    %1467 = vmatprep.subr.mxu0 0.0
    %1468 = vmatpush1.msra.mxu0 0.0
    %1469 = vmatprep.mubr.f32.mxu0 0.0
    %1470 = vmatmul.mubr.f32.gmra.mrb[0].mxu0 %v1394
    %v1471 = vpop.f32.mrb[0].mxu0
    %v1472 = vadd.f32 0.0, %v1471
    %v1473 = vpop.f32.mrb[0].mxu0
    %v1474 = vadd.f32 0.0, %v1473
    %1475 = vmatprep.mubr.f32.mxu0 0.0
    %1476 = vmatmul.mubr.f32.gmra.mrb[0].mxu0 %v1397
    %v1477 = vpop.f32.mrb[0].mxu0
    %v1478 = vadd.f32 0.0, %v1477
    %v1479 = vpop.f32.mrb[0].mxu0
    %v1480 = vadd.f32 0.0, %v1479
    %1481 = vmatprep.mubr.f32.mxu0 0.0
    %1482 = vmatmul.mubr.f32.gmra.mrb[0].mxu0 %v1400
    %v1483 = vpop.f32.mrb[0].mxu0
    %v1484 = vadd.f32 0.0, %v1483
    %v1485 = vpop.f32.mrb[0].mxu0
    %v1486 = vadd.f32 0.0, %v1485
    %1487 = vmatprep.mubr.f32.mxu0 0.0
    %1488 = vmatmul.mubr.f32.gmra.mrb[0].mxu0 %v1403
    %v1489 = vpop.f32.mrb[0].mxu0
    %v1490 = vadd.f32 0.0, %v1489
    %v1491 = vpop.f32.mrb[0].mxu0
    %v1492 = vadd.f32 0.0, %v1491
    %1493 = vdwg.mxu0
    %1494 = vmatprep.subr.mxu0 %v1348
    %1495 = vmatpush1.msra.mxu0 %v1347
    %1496 = vmatprep.subr.mxu0 %v1352
    %1497 = vmatpush1.msra.mxu0 %v1351
    %1498 = vmatprep.subr.mxu0 %v1356
    %1499 = vmatpush1.msra.mxu0 %v1355
    %1500 = vmatprep.subr.mxu0 %v1360
    %1501 = vmatpush1.msra.mxu0 %v1359
    %1502 = vmatprep.subr.mxu0 %v1364
    %1503 = vmatpush1.msra.mxu0 %v1363
    %1504 = vmatprep.subr.mxu0 %v1368
    %1505 = vmatpush1.msra.mxu0 %v1367
    %1506 = vmatprep.subr.mxu0 %v1372
    %1507 = vmatpush1.msra.mxu0 %v1371
    %1508 = vmatprep.subr.mxu0 %v1376
    %1509 = vmatpush1.msra.mxu0 %v1375
    %1510 = vmatprep.subr.mxu0 %v1380
    %1511 = vmatpush1.msra.mxu0 %v1379
    %1512 = vmatprep.subr.mxu0 %v1384
    %1513 = vmatpush1.msra.mxu0 %v1383
    %1514 = vmatprep.subr.mxu0 %v1388
    %1515 = vmatpush1.msra.mxu0 %v1387
    %1516 = vmatprep.subr.mxu0 %v1392
    %1517 = vmatpush1.msra.mxu0 %v1391
    %1518 = vmatprep.subr.mxu0 0.0
    %1519 = vmatpush1.msra.mxu0 0.0
    %1520 = vmatprep.subr.mxu0 0.0
    %1521 = vmatpush1.msra.mxu0 0.0
    %1522 = vmatprep.subr.mxu0 0.0
    %1523 = vmatpush1.msra.mxu0 0.0
    %1524 = vmatprep.subr.mxu0 0.0
    %1525 = vmatpush1.msra.mxu0 0.0
    %1526 = vmatprep.subr.mxu0 0.0
    %1527 = vmatpush1.msra.mxu0 0.0
    %1528 = vmatprep.subr.mxu0 0.0
    %1529 = vmatpush1.msra.mxu0 0.0
    %1530 = vmatprep.subr.mxu0 0.0
    %1531 = vmatpush1.msra.mxu0 0.0
    %1532 = vmatprep.subr.mxu0 0.0
    %1533 = vmatpush1.msra.mxu0 0.0
    %1534 = vmatprep.subr.mxu0 0.0
    %1535 = vmatpush1.msra.mxu0 0.0
    %1536 = vmatprep.subr.mxu0 0.0
    %1537 = vmatpush1.msra.mxu0 0.0
    %1538 = vmatprep.subr.mxu0 0.0
    %1539 = vmatpush1.msra.mxu0 0.0
    %1540 = vmatprep.subr.mxu0 0.0
    %1541 = vmatpush1.msra.mxu0 0.0
    %1542 = vmatprep.subr.mxu0 0.0
    %1543 = vmatpush1.msra.mxu0 0.0
    %1544 = vmatprep.subr.mxu0 0.0
    %1545 = vmatpush1.msra.mxu0 0.0
    %1546 = vmatprep.subr.mxu0 0.0
    %1547 = vmatpush1.msra.mxu0 0.0
    %1548 = vmatprep.subr.mxu0 0.0
    %1549 = vmatpush1.msra.mxu0 0.0
    %1550 = vmatprep.subr.mxu0 0.0
    %1551 = vmatpush1.msra.mxu0 0.0
    %1552 = vmatprep.subr.mxu0 0.0
    %1553 = vmatpush1.msra.mxu0 0.0
    %1554 = vmatprep.subr.mxu0 0.0
    %1555 = vmatpush1.msra.mxu0 0.0
    %1556 = vmatprep.subr.mxu0 0.0
    %1557 = vmatpush1.msra.mxu0 0.0
    %1558 = vmatprep.mubr.f32.mxu0 0.0
    %1559 = vmatmul.mubr.f32.gmra.mrb[0].mxu0 %v1394
    %v1560 = vpop.f32.mrb[0].mxu0
    %v1561 = vadd.f32 0.0, %v1560
    %v1562 = vpop.f32.mrb[0].mxu0
    %v1563 = vadd.f32 0.0, %v1562
    %1564 = vmatprep.mubr.f32.mxu0 0.0
    %1565 = vmatmul.mubr.f32.gmra.mrb[0].mxu0 %v1397
    %v1566 = vpop.f32.mrb[0].mxu0
    %v1567 = vadd.f32 0.0, %v1566
    %v1568 = vpop.f32.mrb[0].mxu0
    %v1569 = vadd.f32 0.0, %v1568
    %1570 = vmatprep.mubr.f32.mxu0 0.0
    %1571 = vmatmul.mubr.f32.gmra.mrb[0].mxu0 %v1400
    %v1572 = vpop.f32.mrb[0].mxu0
    %v1573 = vadd.f32 0.0, %v1572
    %v1574 = vpop.f32.mrb[0].mxu0
    %v1575 = vadd.f32 0.0, %v1574
    %1576 = vmatprep.mubr.f32.mxu0 0.0
    %1577 = vmatmul.mubr.f32.gmra.mrb[0].mxu0 %v1403
    %v1578 = vpop.f32.mrb[0].mxu0
    %v1579 = vadd.f32 0.0, %v1578
    %v1580 = vpop.f32.mrb[0].mxu0
    %v1581 = vadd.f32 0.0, %v1580
    %1582 = vdwg.mxu0
    %v1583 = vadd.f32 %v1226, %v1472
    %v1584 = vadd.f32 %v1227, %v1474
    %v1585 = vadd.f32 %v1228, %v1561
    %v1586 = vadd.f32 %v1229, %v1563
    %v1587 = vadd.f32 %v1230, %v1478
    %v1588 = vadd.f32 %v1231, %v1480
    %v1589 = vadd.f32 %v1232, %v1567
    %v1590 = vadd.f32 %v1233, %v1569
    %v1591 = vadd.f32 %v1234, %v1484
    %v1592 = vadd.f32 %v1235, %v1486
    %v1593 = vadd.f32 %v1236, %v1573
    %v1594 = vadd.f32 %v1237, %v1575
    %v1595 = vadd.f32 %v1238, %v1490
    %v1596 = vadd.f32 %v1239, %v1492
    %v1597 = vadd.f32 %v1240, %v1579
    %v1598 = vadd.f32 %v1241, %v1581
    %v1599 = vld [vmem:[%s9] sm:$0xf]
    %v1601 = vlaneseq
    %v1602 = vshrl.u32 %v1601, 7
    %v1603 = vsub.s32 0, %v1602
    %v1604 = vrot.slane %v1599, %v1603
    %v1605 = vlaneseq
    %v1606 = vshrl.u32 %v1605, 7
    %v1607 = vsub.s32 1, %v1606
    %v1608 = vrot.slane %v1599, %v1607
    %v1609 = vlaneseq
    %v1610 = vshrl.u32 %v1609, 7
    %v1611 = vsub.s32 2, %v1610
    %v1612 = vrot.slane %v1599, %v1611
    %v1613 = vlaneseq
    %v1614 = vshrl.u32 %v1613, 7
    %v1615 = vsub.s32 3, %v1614
    %v1616 = vrot.slane %v1599, %v1615
    %v1621 = vadd.f32 %v1583, %v1604
    %v1622 = vadd.f32 %v1584, %v1608
    %v1623 = vadd.f32 %v1585, %v1612
    %v1624 = vadd.f32 %v1586, %v1616
    %v1625 = vadd.f32 %v1587, %v1604
    %v1626 = vadd.f32 %v1588, %v1608
    %v1627 = vadd.f32 %v1589, %v1612
    %v1628 = vadd.f32 %v1590, %v1616
    %v1629 = vadd.f32 %v1591, %v1604
    %v1630 = vadd.f32 %v1592, %v1608
    %v1631 = vadd.f32 %v1593, %v1612
    %v1632 = vadd.f32 %v1594, %v1616
    %v1633 = vadd.f32 %v1595, %v1604
    %v1634 = vadd.f32 %v1596, %v1608
    %v1635 = vadd.f32 %v1597, %v1612
    %v1636 = vadd.f32 %v1598, %v1616
    %v1637 = vmax.f32 %v1621, 0.0
    %v1638 = vmax.f32 %v1622, 0.0
    %v1639 = vmax.f32 %v1623, 0.0
    %v1640 = vmax.f32 %v1624, 0.0
    %v1641 = vmax.f32 %v1625, 0.0
    %v1642 = vmax.f32 %v1626, 0.0
    %v1643 = vmax.f32 %v1627, 0.0
    %v1644 = vmax.f32 %v1628, 0.0
    %v1645 = vmax.f32 %v1629, 0.0
    %v1646 = vmax.f32 %v1630, 0.0
    %v1647 = vmax.f32 %v1631, 0.0
    %v1648 = vmax.f32 %v1632, 0.0
    %v1649 = vmax.f32 %v1633, 0.0
    %v1650 = vmax.f32 %v1634, 0.0
    %v1651 = vmax.f32 %v1635, 0.0
    %v1652 = vmax.f32 %v1636, 0.0
    %v1653 = vld [vmem:[%s11] sm:$0xff]
    %v1654 = vld [vmem:[%s11 + $0x8] sm:$0xf]
    %vm1655 = vcmask 244736
    %v1657 = vsel %vm1655, %v1653, 0
    %v1660 = vsel %vm1655, %v1654, 0
    %vm1662 = vcmask 1045504
    %v1664 = vsel %vm1662, %v1649, 0
    %v1667 = vsel %vm1662, %v1650, 0
    %v1670 = vsel %vm1662, %v1651, 0
    %v1673 = vsel %vm1662, %v1652, 0
    %1675 = vmatprep.subr.mxu0 %v1638
    %1676 = vmatpush1.msra.mxu0 %v1637
    %1677 = vmatprep.subr.mxu0 %v1642
    %1678 = vmatpush1.msra.mxu0 %v1641
    %1679 = vmatprep.subr.mxu0 %v1646
    %1680 = vmatpush1.msra.mxu0 %v1645
    %1681 = vmatprep.subr.mxu0 %v1667
    %1682 = vmatpush1.msra.mxu0 %v1664
    %1683 = vmatprep.subr.mxu0 0.0
    %1684 = vmatpush1.msra.mxu0 0.0
    %1685 = vmatprep.subr.mxu0 0.0
    %1686 = vmatpush1.msra.mxu0 0.0
    %1687 = vmatprep.subr.mxu0 0.0
    %1688 = vmatpush1.msra.mxu0 0.0
    %1689 = vmatprep.subr.mxu0 0.0
    %1690 = vmatpush1.msra.mxu0 0.0
    %1691 = vmatprep.subr.mxu0 0.0
    %1692 = vmatpush1.msra.mxu0 0.0
    %1693 = vmatprep.subr.mxu0 0.0
    %1694 = vmatpush1.msra.mxu0 0.0
    %1695 = vmatprep.subr.mxu0 0.0
    %1696 = vmatpush1.msra.mxu0 0.0
    %1697 = vmatprep.subr.mxu0 0.0
    %1698 = vmatpush1.msra.mxu0 0.0
    %1699 = vmatprep.subr.mxu0 0.0
    %1700 = vmatpush1.msra.mxu0 0.0
    %1701 = vmatprep.subr.mxu0 0.0
    %1702 = vmatpush1.msra.mxu0 0.0
    %1703 = vmatprep.subr.mxu0 0.0
    %1704 = vmatpush1.msra.mxu0 0.0
    %1705 = vmatprep.subr.mxu0 0.0
    %1706 = vmatpush1.msra.mxu0 0.0
    %1707 = vmatprep.subr.mxu0 0.0
    %1708 = vmatpush1.msra.mxu0 0.0
    %1709 = vmatprep.subr.mxu0 0.0
    %1710 = vmatpush1.msra.mxu0 0.0
    %1711 = vmatprep.subr.mxu0 0.0
    %1712 = vmatpush1.msra.mxu0 0.0
    %1713 = vmatprep.subr.mxu0 0.0
    %1714 = vmatpush1.msra.mxu0 0.0
    %1715 = vmatprep.subr.mxu0 0.0
    %1716 = vmatpush1.msra.mxu0 0.0
    %1717 = vmatprep.subr.mxu0 0.0
    %1718 = vmatpush1.msra.mxu0 0.0
    %1719 = vmatprep.subr.mxu0 0.0
    %1720 = vmatpush1.msra.mxu0 0.0
    %1721 = vmatprep.subr.mxu0 0.0
    %1722 = vmatpush1.msra.mxu0 0.0
    %1723 = vmatprep.subr.mxu0 0.0
    %1724 = vmatpush1.msra.mxu0 0.0
    %1725 = vmatprep.subr.mxu0 0.0
    %1726 = vmatpush1.msra.mxu0 0.0
    %1727 = vmatprep.subr.mxu0 0.0
    %1728 = vmatpush1.msra.mxu0 0.0
    %1729 = vmatprep.subr.mxu0 0.0
    %1730 = vmatpush1.msra.mxu0 0.0
    %1731 = vmatprep.subr.mxu0 0.0
    %1732 = vmatpush1.msra.mxu0 0.0
    %1733 = vmatprep.subr.mxu0 0.0
    %1734 = vmatpush1.msra.mxu0 0.0
    %1735 = vmatprep.subr.mxu0 0.0
    %1736 = vmatpush1.msra.mxu0 0.0
    %1737 = vmatprep.subr.mxu0 0.0
    %1738 = vmatpush1.msra.mxu0 0.0
    %1739 = vmatprep.mubr.f32.mxu0 0.0
    %1740 = vmatmul.mubr.f32.gmra.mrb[0].mxu0 %v1657
    %v1741 = vpop.f32.mrb[0].mxu0
    %v1742 = vadd.f32 0.0, %v1741
    %v1743 = vpop.f32.mrb[0].mxu0
    %v1744 = vadd.f32 0.0, %v1743
    %1745 = vmatprep.mubr.f32.mxu0 0.0
    %1746 = vmatmul.mubr.f32.gmra.mrb[0].mxu0 %v1660
    %v1747 = vpop.f32.mrb[0].mxu0
    %v1748 = vadd.f32 0.0, %v1747
    %v1749 = vpop.f32.mrb[0].mxu0
    %v1750 = vadd.f32 0.0, %v1749
    %1751 = vdwg.mxu0
    %1752 = vmatprep.subr.mxu0 %v1640
    %1753 = vmatpush1.msra.mxu0 %v1639
    %1754 = vmatprep.subr.mxu0 %v1644
    %1755 = vmatpush1.msra.mxu0 %v1643
    %1756 = vmatprep.subr.mxu0 %v1648
    %1757 = vmatpush1.msra.mxu0 %v1647
    %1758 = vmatprep.subr.mxu0 %v1673
    %1759 = vmatpush1.msra.mxu0 %v1670
    %1760 = vmatprep.subr.mxu0 0.0
    %1761 = vmatpush1.msra.mxu0 0.0
    %1762 = vmatprep.subr.mxu0 0.0
    %1763 = vmatpush1.msra.mxu0 0.0
    %1764 = vmatprep.subr.mxu0 0.0
    %1765 = vmatpush1.msra.mxu0 0.0
    %1766 = vmatprep.subr.mxu0 0.0
    %1767 = vmatpush1.msra.mxu0 0.0
    %1768 = vmatprep.subr.mxu0 0.0
    %1769 = vmatpush1.msra.mxu0 0.0
    %1770 = vmatprep.subr.mxu0 0.0
    %1771 = vmatpush1.msra.mxu0 0.0
    %1772 = vmatprep.subr.mxu0 0.0
    %1773 = vmatpush1.msra.mxu0 0.0
    %1774 = vmatprep.subr.mxu0 0.0
    %1775 = vmatpush1.msra.mxu0 0.0
    %1776 = vmatprep.subr.mxu0 0.0
    %1777 = vmatpush1.msra.mxu0 0.0
    %1778 = vmatprep.subr.mxu0 0.0
    %1779 = vmatpush1.msra.mxu0 0.0
    %1780 = vmatprep.subr.mxu0 0.0
    %1781 = vmatpush1.msra.mxu0 0.0
    %1782 = vmatprep.subr.mxu0 0.0
    %1783 = vmatpush1.msra.mxu0 0.0
    %1784 = vmatprep.subr.mxu0 0.0
    %1785 = vmatpush1.msra.mxu0 0.0
    %1786 = vmatprep.subr.mxu0 0.0
    %1787 = vmatpush1.msra.mxu0 0.0
    %1788 = vmatprep.subr.mxu0 0.0
    %1789 = vmatpush1.msra.mxu0 0.0
    %1790 = vmatprep.subr.mxu0 0.0
    %1791 = vmatpush1.msra.mxu0 0.0
    %1792 = vmatprep.subr.mxu0 0.0
    %1793 = vmatpush1.msra.mxu0 0.0
    %1794 = vmatprep.subr.mxu0 0.0
    %1795 = vmatpush1.msra.mxu0 0.0
    %1796 = vmatprep.subr.mxu0 0.0
    %1797 = vmatpush1.msra.mxu0 0.0
    %1798 = vmatprep.subr.mxu0 0.0
    %1799 = vmatpush1.msra.mxu0 0.0
    %1800 = vmatprep.subr.mxu0 0.0
    %1801 = vmatpush1.msra.mxu0 0.0
    %1802 = vmatprep.subr.mxu0 0.0
    %1803 = vmatpush1.msra.mxu0 0.0
    %1804 = vmatprep.subr.mxu0 0.0
    %1805 = vmatpush1.msra.mxu0 0.0
    %1806 = vmatprep.subr.mxu0 0.0
    %1807 = vmatpush1.msra.mxu0 0.0
    %1808 = vmatprep.subr.mxu0 0.0
    %1809 = vmatpush1.msra.mxu0 0.0
    %1810 = vmatprep.subr.mxu0 0.0
    %1811 = vmatpush1.msra.mxu0 0.0
    %1812 = vmatprep.subr.mxu0 0.0
    %1813 = vmatpush1.msra.mxu0 0.0
    %1814 = vmatprep.subr.mxu0 0.0
    %1815 = vmatpush1.msra.mxu0 0.0
    %1816 = vmatprep.mubr.f32.mxu0 0.0
    %1817 = vmatmul.mubr.f32.gmra.mrb[0].mxu0 %v1657
    %v1818 = vpop.f32.mrb[0].mxu0
    %v1819 = vadd.f32 0.0, %v1818
    %v1820 = vpop.f32.mrb[0].mxu0
    %v1821 = vadd.f32 0.0, %v1820
    %1822 = vmatprep.mubr.f32.mxu0 0.0
    %1823 = vmatmul.mubr.f32.gmra.mrb[0].mxu0 %v1660
    %v1824 = vpop.f32.mrb[0].mxu0
    %v1825 = vadd.f32 0.0, %v1824
    %v1826 = vpop.f32.mrb[0].mxu0
    %v1827 = vadd.f32 0.0, %v1826
    %1828 = vdwg.mxu0
    %v1829 = vld [vmem:[%s13] sm:$0xff]
    %v1830 = vld [vmem:[%s13 + $0x8] sm:$0xff]
    %v1831 = vld [vmem:[%s13 + $0x10] sm:$0xff]
    %v1832 = vld [vmem:[%s13 + $0x18] sm:$0xff]
    %v1833 = vld [vmem:[%s13 + $0x20] sm:$0xff]
    %v1834 = vld [vmem:[%s13 + $0x28] sm:$0xff]
    %v1835 = vld [vmem:[%s13 + $0x30] sm:$0xff]
    %v1836 = vld [vmem:[%s13 + $0x38] sm:$0xff]
    %v1837 = vld [vmem:[%s13 + $0x40] sm:$0xff]
    %v1838 = vld [vmem:[%s13 + $0x48] sm:$0xff]
    %v1839 = vld [vmem:[%s13 + $0x50] sm:$0xff]
    %v1840 = vld [vmem:[%s13 + $0x58] sm:$0xff]
    %v1841 = vld [vmem:[%s13 + $0x60] sm:$0xff]
    %v1842 = vld [vmem:[%s13 + $0x68] sm:$0xff]
    %v1843 = vld [vmem:[%s13 + $0x70] sm:$0xff]
    %v1844 = vld [vmem:[%s13 + $0x78] sm:$0xff]
    %v1845 = vld [vmem:[%s13 + $0x80] sm:$0xff]
    %v1846 = vld [vmem:[%s13 + $0x88] sm:$0xff]
    %v1847 = vld [vmem:[%s13 + $0x90] sm:$0xff]
    %v1848 = vld [vmem:[%s13 + $0x98] sm:$0xff]
    %v1849 = vld [vmem:[%s13 + $0xa0] sm:$0xff]
    %v1850 = vld [vmem:[%s13 + $0xa8] sm:$0xff]
    %v1851 = vld [vmem:[%s13 + $0xb0] sm:$0xff]
    %v1852 = vld [vmem:[%s13 + $0xb8] sm:$0xff]
    %v1853 = vld [vmem:[%s13 + $0xc0] sm:$0xff]
    %v1854 = vld [vmem:[%s13 + $0xc8] sm:$0xff]
    %v1855 = vld [vmem:[%s13 + $0xd0] sm:$0xff]
    %v1856 = vld [vmem:[%s13 + $0xd8] sm:$0xff]
    %v1857 = vld [vmem:[%s13 + $0xe0] sm:$0xff]
    %v1858 = vld [vmem:[%s13 + $0xe8] sm:$0xff]
    %v1859 = vld [vmem:[%s13 + $0xf0] sm:$0xff]
    %v1860 = vld [vmem:[%s13 + $0xf8] sm:$0xff]
    %v1861 = vld [vmem:[%s13 + $0x100] sm:$0xff]
    %v1862 = vld [vmem:[%s13 + $0x108] sm:$0xff]
    %v1863 = vld [vmem:[%s13 + $0x110] sm:$0xff]
    %v1864 = vld [vmem:[%s13 + $0x118] sm:$0xff]
    %v1865 = vld [vmem:[%s13 + $0x120] sm:$0xff]
    %v1866 = vld [vmem:[%s13 + $0x128] sm:$0xff]
    %v1867 = vld [vmem:[%s13 + $0x130] sm:$0xff]
    %v1868 = vld [vmem:[%s13 + $0x138] sm:$0xff]
    %v1869 = vld [vmem:[%s13 + $0x140] sm:$0xff]
    %v1870 = vld [vmem:[%s13 + $0x148] sm:$0xff]
    %v1871 = vld [vmem:[%s13 + $0x150] sm:$0xff]
    %v1872 = vld [vmem:[%s13 + $0x158] sm:$0xff]
    %v1873 = vld [vmem:[%s13 + $0x160] sm:$0xff]
    %v1874 = vld [vmem:[%s13 + $0x168] sm:$0xff]
    %v1875 = vld [vmem:[%s13 + $0x170] sm:$0xff]
    %v1876 = vld [vmem:[%s13 + $0x178] sm:$0xff]
    %v1877 = vld [vmem:[%s13 + $0x180] sm:$0xff]
    %v1878 = vld [vmem:[%s13 + $0x188] sm:$0xff]
    %v1879 = vld [vmem:[%s13 + $0x190] sm:$0xff]
    %v1880 = vld [vmem:[%s13 + $0x198] sm:$0xff]
    %v1881 = vld [vmem:[%s13 + $0x1a0] sm:$0xff]
    %v1882 = vld [vmem:[%s13 + $0x1a8] sm:$0xff]
    %v1883 = vld [vmem:[%s13 + $0x1b0] sm:$0xff]
    %v1884 = vld [vmem:[%s13 + $0x1b8] sm:$0xff]
    %v1885 = vld [vmem:[%s13 + $0x1c0] sm:$0xff]
    %v1886 = vld [vmem:[%s13 + $0x1c8] sm:$0xff]
    %v1887 = vld [vmem:[%s13 + $0x1d0] sm:$0xff]
    %v1888 = vld [vmem:[%s13 + $0x1d8] sm:$0xff]
    %v1889 = vld [vmem:[%s13 + $0x1e0] sm:$0xff]
    %v1890 = vld [vmem:[%s13 + $0x1e8] sm:$0xff]
    %v1891 = vld [vmem:[%s13 + $0x1f0] sm:$0xff]
    %v1892 = vld [vmem:[%s13 + $0x1f8] sm:$0xff]
    %v1893 = vld [vmem:[%s13 + $0x200] sm:$0xff]
    %v1894 = vld [vmem:[%s13 + $0x208] sm:$0xff]
    %v1895 = vld [vmem:[%s13 + $0x210] sm:$0xff]
    %v1896 = vld [vmem:[%s13 + $0x218] sm:$0xff]
    %v1897 = vld [vmem:[%s13 + $0x220] sm:$0xff]
    %v1898 = vld [vmem:[%s13 + $0x228] sm:$0xff]
    %v1899 = vld [vmem:[%s13 + $0x230] sm:$0xff]
    %v1900 = vld [vmem:[%s13 + $0x238] sm:$0xff]
    %v1901 = vld [vmem:[%s13 + $0x240] sm:$0xff]
    %v1902 = vld [vmem:[%s13 + $0x248] sm:$0xff]
    %v1903 = vld [vmem:[%s13 + $0x250] sm:$0xff]
    %v1904 = vld [vmem:[%s13 + $0x258] sm:$0xff]
    %v1905 = vld [vmem:[%s13 + $0x260] sm:$0xff]
    %v1906 = vld [vmem:[%s13 + $0x268] sm:$0xff]
    %v1907 = vld [vmem:[%s13 + $0x270] sm:$0xff]
    %v1908 = vld [vmem:[%s13 + $0x278] sm:$0xff]
    %v1909 = vld [vmem:[%s13 + $0x280] sm:$0xff]
    %v1910 = vld [vmem:[%s13 + $0x288] sm:$0xff]
    %v1911 = vld [vmem:[%s13 + $0x290] sm:$0xff]
    %v1912 = vld [vmem:[%s13 + $0x298] sm:$0xff]
    %v1913 = vld [vmem:[%s13 + $0x2a0] sm:$0xff]
    %v1914 = vld [vmem:[%s13 + $0x2a8] sm:$0xff]
    %v1915 = vld [vmem:[%s13 + $0x2b0] sm:$0xff]
    %v1916 = vld [vmem:[%s13 + $0x2b8] sm:$0xff]
    %v1917 = vld [vmem:[%s13 + $0x2c0] sm:$0xff]
    %v1918 = vld [vmem:[%s13 + $0x2c8] sm:$0xff]
    %v1919 = vld [vmem:[%s13 + $0x2d0] sm:$0xff]
    %v1920 = vld [vmem:[%s13 + $0x2d8] sm:$0xff]
    %v1921 = vld [vmem:[%s13 + $0x2e0] sm:$0xff]
    %v1922 = vld [vmem:[%s13 + $0x2e8] sm:$0xff]
    %v1923 = vld [vmem:[%s13 + $0x2f0] sm:$0xff]
    %v1924 = vld [vmem:[%s13 + $0x2f8] sm:$0xff]
    %v1925 = vld [vmem:[%s13 + $0x300] sm:$0xff]
    %v1926 = vld [vmem:[%s13 + $0x308] sm:$0xff]
    %v1927 = vld [vmem:[%s13 + $0x310] sm:$0xff]
    %v1928 = vld [vmem:[%s13 + $0x318] sm:$0xff]
    %v1929 = vld [vmem:[%s13 + $0x320] sm:$0xff]
    %v1930 = vld [vmem:[%s13 + $0x328] sm:$0xff]
    %v1931 = vld [vmem:[%s13 + $0x330] sm:$0xff]
    %v1932 = vld [vmem:[%s13 + $0x338] sm:$0xff]
    %v1933 = vld [vmem:[%s13 + $0x340] sm:$0xff]
    %v1934 = vld [vmem:[%s13 + $0x348] sm:$0xff]
    %v1935 = vld [vmem:[%s13 + $0x350] sm:$0xff]
    %v1936 = vld [vmem:[%s13 + $0x358] sm:$0xff]
    %v1937 = vld [vmem:[%s13 + $0x360] sm:$0xff]
    %v1938 = vld [vmem:[%s13 + $0x368] sm:$0xff]
    %v1939 = vld [vmem:[%s13 + $0x370] sm:$0xff]
    %v1940 = vld [vmem:[%s13 + $0x378] sm:$0xff]
    %v1941 = vld [vmem:[%s13 + $0x380] sm:$0xff]
    %v1942 = vld [vmem:[%s13 + $0x388] sm:$0xff]
    %v1943 = vld [vmem:[%s13 + $0x390] sm:$0xff]
    %v1944 = vld [vmem:[%s13 + $0x398] sm:$0xff]
    %v1945 = vld [vmem:[%s13 + $0x3a0] sm:$0xff]
    %v1946 = vld [vmem:[%s13 + $0x3a8] sm:$0xff]
    %v1947 = vld [vmem:[%s13 + $0x3b0] sm:$0xff]
    %v1948 = vld [vmem:[%s13 + $0x3b8] sm:$0xff]
    %v1949 = vld [vmem:[%s13 + $0x3c0] sm:$0xff]
    %v1950 = vld [vmem:[%s13 + $0x3c8] sm:$0xff]
    %v1951 = vld [vmem:[%s13 + $0x3d0] sm:$0xff]
    %v1952 = vld [vmem:[%s13 + $0x3d8] sm:$0xff]
    %v1953 = vld [vmem:[%s13 + $0x3e0] sm:$0xff]
    %v1954 = vld [vmem:[%s13 + $0x3e8] sm:$0xff]
    %v1955 = vld [vmem:[%s13 + $0x3f0] sm:$0xff]
    %v1956 = vld [vmem:[%s13 + $0x3f8] sm:$0xff]
    %v1957 = vld [vmem:[%s13 + $0x400] sm:$0xff]
    %v1958 = vld [vmem:[%s13 + $0x408] sm:$0xff]
    %v1959 = vld [vmem:[%s13 + $0x410] sm:$0xff]
    %v1960 = vld [vmem:[%s13 + $0x418] sm:$0xff]
    %v1961 = vld [vmem:[%s13 + $0x420] sm:$0xff]
    %v1962 = vld [vmem:[%s13 + $0x428] sm:$0xff]
    %v1963 = vld [vmem:[%s13 + $0x430] sm:$0xff]
    %v1964 = vld [vmem:[%s13 + $0x438] sm:$0xff]
    %v1965 = vld [vmem:[%s13 + $0x440] sm:$0xff]
    %v1966 = vld [vmem:[%s13 + $0x448] sm:$0xff]
    %v1967 = vld [vmem:[%s13 + $0x450] sm:$0xff]
    %v1968 = vld [vmem:[%s13 + $0x458] sm:$0xff]
    %v1969 = vld [vmem:[%s13 + $0x460] sm:$0xff]
    %v1970 = vld [vmem:[%s13 + $0x468] sm:$0xff]
    %v1971 = vld [vmem:[%s13 + $0x470] sm:$0xff]
    %v1972 = vld [vmem:[%s13 + $0x478] sm:$0xff]
    %v1973 = vld [vmem:[%s13 + $0x480] sm:$0xff]
    %v1974 = vld [vmem:[%s13 + $0x488] sm:$0xff]
    %v1975 = vld [vmem:[%s13 + $0x490] sm:$0xff]
    %v1976 = vld [vmem:[%s13 + $0x498] sm:$0xff]
    %v1977 = vld [vmem:[%s13 + $0x4a0] sm:$0xff]
    %v1978 = vld [vmem:[%s13 + $0x4a8] sm:$0xff]
    %v1979 = vld [vmem:[%s13 + $0x4b0] sm:$0xff]
    %v1980 = vld [vmem:[%s13 + $0x4b8] sm:$0xff]
    %v1981 = vld [vmem:[%s13 + $0x4c0] sm:$0xff]
    %v1982 = vld [vmem:[%s13 + $0x4c8] sm:$0xff]
    %v1983 = vld [vmem:[%s13 + $0x4d0] sm:$0xff]
    %v1984 = vld [vmem:[%s13 + $0x4d8] sm:$0xff]
    %v1985 = vld [vmem:[%s13 + $0x4e0] sm:$0xff]
    %v1986 = vld [vmem:[%s13 + $0x4e8] sm:$0xff]
    %v1987 = vld [vmem:[%s13 + $0x4f0] sm:$0xff]
    %v1988 = vld [vmem:[%s13 + $0x4f8] sm:$0xff]
    %v1989 = vld [vmem:[%s13 + $0x500] sm:$0xff]
    %v1990 = vld [vmem:[%s13 + $0x508] sm:$0xff]
    %v1991 = vld [vmem:[%s13 + $0x510] sm:$0xff]
    %v1992 = vld [vmem:[%s13 + $0x518] sm:$0xff]
    %v1993 = vld [vmem:[%s13 + $0x520] sm:$0xff]
    %v1994 = vld [vmem:[%s13 + $0x528] sm:$0xff]
    %v1995 = vld [vmem:[%s13 + $0x530] sm:$0xff]
    %v1996 = vld [vmem:[%s13 + $0x538] sm:$0xff]
    %v1997 = vld [vmem:[%s13 + $0x540] sm:$0xff]
    %v1998 = vld [vmem:[%s13 + $0x548] sm:$0xff]
    %v1999 = vld [vmem:[%s13 + $0x550] sm:$0xff]
    %v2000 = vld [vmem:[%s13 + $0x558] sm:$0xff]
    %v2001 = vld [vmem:[%s13 + $0x560] sm:$0xff]
    %v2002 = vld [vmem:[%s13 + $0x568] sm:$0xff]
    %v2003 = vld [vmem:[%s13 + $0x570] sm:$0xff]
    %v2004 = vld [vmem:[%s13 + $0x578] sm:$0xff]
    %v2005 = vld [vmem:[%s13 + $0x580] sm:$0xff]
    %v2006 = vld [vmem:[%s13 + $0x588] sm:$0xff]
    %v2007 = vld [vmem:[%s13 + $0x590] sm:$0xff]
    %v2008 = vld [vmem:[%s13 + $0x598] sm:$0xff]
    %s2009 = scalar_lea.vmem %s11, 16
    %v2010 = vld [vmem:[%s2009] sm:$0xff]
    %v2011 = vld [vmem:[%s2009 + $0x8] sm:$0xf]
    %v2013 = vsel %vm1655, %v2010, 0
    %v2016 = vsel %vm1655, %v2011, 0
    %2018 = vmatprep.subr.mxu0 %v1638
    %2019 = vmatpush1.msra.mxu0 %v1637
    %2020 = vmatprep.subr.mxu0 %v1642
    %2021 = vmatpush1.msra.mxu0 %v1641
    %2022 = vmatprep.subr.mxu0 %v1646
    %2023 = vmatpush1.msra.mxu0 %v1645
    %2024 = vmatprep.subr.mxu0 %v1667
    %2025 = vmatpush1.msra.mxu0 %v1664
    %2026 = vmatprep.subr.mxu0 0.0
    %2027 = vmatpush1.msra.mxu0 0.0
    %2028 = vmatprep.subr.mxu0 0.0
    %2029 = vmatpush1.msra.mxu0 0.0
    %2030 = vmatprep.subr.mxu0 0.0
    %2031 = vmatpush1.msra.mxu0 0.0
    %2032 = vmatprep.subr.mxu0 0.0
    %2033 = vmatpush1.msra.mxu0 0.0
    %2034 = vmatprep.subr.mxu0 0.0
    %2035 = vmatpush1.msra.mxu0 0.0
    %2036 = vmatprep.subr.mxu0 0.0
    %2037 = vmatpush1.msra.mxu0 0.0
    %2038 = vmatprep.subr.mxu0 0.0
    %2039 = vmatpush1.msra.mxu0 0.0
    %2040 = vmatprep.subr.mxu0 0.0
    %2041 = vmatpush1.msra.mxu0 0.0
    %2042 = vmatprep.subr.mxu0 0.0
    %2043 = vmatpush1.msra.mxu0 0.0
    %2044 = vmatprep.subr.mxu0 0.0
    %2045 = vmatpush1.msra.mxu0 0.0
    %2046 = vmatprep.subr.mxu0 0.0
    %2047 = vmatpush1.msra.mxu0 0.0
    %2048 = vmatprep.subr.mxu0 0.0
    %2049 = vmatpush1.msra.mxu0 0.0
    %2050 = vmatprep.subr.mxu0 0.0
    %2051 = vmatpush1.msra.mxu0 0.0
    %2052 = vmatprep.subr.mxu0 0.0
    %2053 = vmatpush1.msra.mxu0 0.0
    %2054 = vmatprep.subr.mxu0 0.0
    %2055 = vmatpush1.msra.mxu0 0.0
    %2056 = vmatprep.subr.mxu0 0.0
    %2057 = vmatpush1.msra.mxu0 0.0
    %2058 = vmatprep.subr.mxu0 0.0
    %2059 = vmatpush1.msra.mxu0 0.0
    %2060 = vmatprep.subr.mxu0 0.0
    %2061 = vmatpush1.msra.mxu0 0.0
    %2062 = vmatprep.subr.mxu0 0.0
    %2063 = vmatpush1.msra.mxu0 0.0
    %2064 = vmatprep.subr.mxu0 0.0
    %2065 = vmatpush1.msra.mxu0 0.0
    %2066 = vmatprep.subr.mxu0 0.0
    %2067 = vmatpush1.msra.mxu0 0.0
    %2068 = vmatprep.subr.mxu0 0.0
    %2069 = vmatpush1.msra.mxu0 0.0
    %2070 = vmatprep.subr.mxu0 0.0
    %2071 = vmatpush1.msra.mxu0 0.0
    %2072 = vmatprep.subr.mxu0 0.0
    %2073 = vmatpush1.msra.mxu0 0.0
    %2074 = vmatprep.subr.mxu0 0.0
    %2075 = vmatpush1.msra.mxu0 0.0
    %2076 = vmatprep.subr.mxu0 0.0
    %2077 = vmatpush1.msra.mxu0 0.0
    %2078 = vmatprep.subr.mxu0 0.0
    %2079 = vmatpush1.msra.mxu0 0.0
    %2080 = vmatprep.subr.mxu0 0.0
    %2081 = vmatpush1.msra.mxu0 0.0
    %2082 = vmatprep.mubr.f32.mxu0 0.0
    %2083 = vmatmul.mubr.f32.gmra.mrb[0].mxu0 %v2013
    %v2084 = vpop.f32.mrb[0].mxu0
    %v2085 = vadd.f32 0.0, %v2084
    %v2086 = vpop.f32.mrb[0].mxu0
    %v2087 = vadd.f32 0.0, %v2086
    %2088 = vmatprep.mubr.f32.mxu0 0.0
    %2089 = vmatmul.mubr.f32.gmra.mrb[0].mxu0 %v2016
    %v2090 = vpop.f32.mrb[0].mxu0
    %v2091 = vadd.f32 0.0, %v2090
    %v2092 = vpop.f32.mrb[0].mxu0
    %v2093 = vadd.f32 0.0, %v2092
    %2094 = vdwg.mxu0
    %2095 = vmatprep.subr.mxu0 %v1640
    %2096 = vmatpush1.msra.mxu0 %v1639
    %2097 = vmatprep.subr.mxu0 %v1644
    %2098 = vmatpush1.msra.mxu0 %v1643
    %2099 = vmatprep.subr.mxu0 %v1648
    %2100 = vmatpush1.msra.mxu0 %v1647
    %2101 = vmatprep.subr.mxu0 %v1673
    %2102 = vmatpush1.msra.mxu0 %v1670
    %2103 = vmatprep.subr.mxu0 0.0
    %2104 = vmatpush1.msra.mxu0 0.0
    %2105 = vmatprep.subr.mxu0 0.0
    %2106 = vmatpush1.msra.mxu0 0.0
    %2107 = vmatprep.subr.mxu0 0.0
    %2108 = vmatpush1.msra.mxu0 0.0
    %2109 = vmatprep.subr.mxu0 0.0
    %2110 = vmatpush1.msra.mxu0 0.0
    %2111 = vmatprep.subr.mxu0 0.0
    %2112 = vmatpush1.msra.mxu0 0.0
    %2113 = vmatprep.subr.mxu0 0.0
    %2114 = vmatpush1.msra.mxu0 0.0
    %2115 = vmatprep.subr.mxu0 0.0
    %2116 = vmatpush1.msra.mxu0 0.0
    %2117 = vmatprep.subr.mxu0 0.0
    %2118 = vmatpush1.msra.mxu0 0.0
    %2119 = vmatprep.subr.mxu0 0.0
    %2120 = vmatpush1.msra.mxu0 0.0
    %2121 = vmatprep.subr.mxu0 0.0
    %2122 = vmatpush1.msra.mxu0 0.0
    %2123 = vmatprep.subr.mxu0 0.0
    %2124 = vmatpush1.msra.mxu0 0.0
    %2125 = vmatprep.subr.mxu0 0.0
    %2126 = vmatpush1.msra.mxu0 0.0
    %2127 = vmatprep.subr.mxu0 0.0
    %2128 = vmatpush1.msra.mxu0 0.0
    %2129 = vmatprep.subr.mxu0 0.0
    %2130 = vmatpush1.msra.mxu0 0.0
    %2131 = vmatprep.subr.mxu0 0.0
    %2132 = vmatpush1.msra.mxu0 0.0
    %2133 = vmatprep.subr.mxu0 0.0
    %2134 = vmatpush1.msra.mxu0 0.0
    %2135 = vmatprep.subr.mxu0 0.0
    %2136 = vmatpush1.msra.mxu0 0.0
    %2137 = vmatprep.subr.mxu0 0.0
    %2138 = vmatpush1.msra.mxu0 0.0
    %2139 = vmatprep.subr.mxu0 0.0
    %2140 = vmatpush1.msra.mxu0 0.0
    %2141 = vmatprep.subr.mxu0 0.0
    %2142 = vmatpush1.msra.mxu0 0.0
    %2143 = vmatprep.subr.mxu0 0.0
    %2144 = vmatpush1.msra.mxu0 0.0
    %2145 = vmatprep.subr.mxu0 0.0
    %2146 = vmatpush1.msra.mxu0 0.0
    %2147 = vmatprep.subr.mxu0 0.0
    %2148 = vmatpush1.msra.mxu0 0.0
    %2149 = vmatprep.subr.mxu0 0.0
    %2150 = vmatpush1.msra.mxu0 0.0
    %2151 = vmatprep.subr.mxu0 0.0
    %2152 = vmatpush1.msra.mxu0 0.0
    %2153 = vmatprep.subr.mxu0 0.0
    %2154 = vmatpush1.msra.mxu0 0.0
    %2155 = vmatprep.subr.mxu0 0.0
    %2156 = vmatpush1.msra.mxu0 0.0
    %2157 = vmatprep.subr.mxu0 0.0
    %2158 = vmatpush1.msra.mxu0 0.0
    %2159 = vmatprep.mubr.f32.mxu0 0.0
    %2160 = vmatmul.mubr.f32.gmra.mrb[0].mxu0 %v2013
    %v2161 = vpop.f32.mrb[0].mxu0
    %v2162 = vadd.f32 0.0, %v2161
    %v2163 = vpop.f32.mrb[0].mxu0
    %v2164 = vadd.f32 0.0, %v2163
    %2165 = vmatprep.mubr.f32.mxu0 0.0
    %2166 = vmatmul.mubr.f32.gmra.mrb[0].mxu0 %v2016
    %v2167 = vpop.f32.mrb[0].mxu0
    %v2168 = vadd.f32 0.0, %v2167
    %v2169 = vpop.f32.mrb[0].mxu0
    %v2170 = vadd.f32 0.0, %v2169
    %2171 = vdwg.mxu0
    %s2172 = scalar_lea.vmem %s13, 1440
    %v2173 = vld [vmem:[%s2172] sm:$0xff]
    %v2174 = vld [vmem:[%s2172 + $0x8] sm:$0xff]
    %v2175 = vld [vmem:[%s2172 + $0x10] sm:$0xff]
    %v2176 = vld [vmem:[%s2172 + $0x18] sm:$0xff]
    %v2177 = vld [vmem:[%s2172 + $0x20] sm:$0xff]
    %v2178 = vld [vmem:[%s2172 + $0x28] sm:$0xff]
    %v2179 = vld [vmem:[%s2172 + $0x30] sm:$0xff]
    %v2180 = vld [vmem:[%s2172 + $0x38] sm:$0xff]
    %v2181 = vld [vmem:[%s2172 + $0x40] sm:$0xff]
    %v2182 = vld [vmem:[%s2172 + $0x48] sm:$0xff]
    %v2183 = vld [vmem:[%s2172 + $0x50] sm:$0xff]
    %v2184 = vld [vmem:[%s2172 + $0x58] sm:$0xff]
    %v2185 = vld [vmem:[%s2172 + $0x60] sm:$0xff]
    %v2186 = vld [vmem:[%s2172 + $0x68] sm:$0xff]
    %v2187 = vld [vmem:[%s2172 + $0x70] sm:$0xff]
    %v2188 = vld [vmem:[%s2172 + $0x78] sm:$0xff]
    %v2189 = vld [vmem:[%s2172 + $0x80] sm:$0xff]
    %v2190 = vld [vmem:[%s2172 + $0x88] sm:$0xff]
    %v2191 = vld [vmem:[%s2172 + $0x90] sm:$0xff]
    %v2192 = vld [vmem:[%s2172 + $0x98] sm:$0xff]
    %v2193 = vld [vmem:[%s2172 + $0xa0] sm:$0xff]
    %v2194 = vld [vmem:[%s2172 + $0xa8] sm:$0xff]
    %v2195 = vld [vmem:[%s2172 + $0xb0] sm:$0xff]
    %v2196 = vld [vmem:[%s2172 + $0xb8] sm:$0xff]
    %v2197 = vld [vmem:[%s2172 + $0xc0] sm:$0xff]
    %v2198 = vld [vmem:[%s2172 + $0xc8] sm:$0xff]
    %v2199 = vld [vmem:[%s2172 + $0xd0] sm:$0xff]
    %v2200 = vld [vmem:[%s2172 + $0xd8] sm:$0xff]
    %v2201 = vld [vmem:[%s2172 + $0xe0] sm:$0xff]
    %v2202 = vld [vmem:[%s2172 + $0xe8] sm:$0xff]
    %v2203 = vld [vmem:[%s2172 + $0xf0] sm:$0xff]
    %v2204 = vld [vmem:[%s2172 + $0xf8] sm:$0xff]
    %v2205 = vld [vmem:[%s2172 + $0x100] sm:$0xff]
    %v2206 = vld [vmem:[%s2172 + $0x108] sm:$0xff]
    %v2207 = vld [vmem:[%s2172 + $0x110] sm:$0xff]
    %v2208 = vld [vmem:[%s2172 + $0x118] sm:$0xff]
    %v2209 = vld [vmem:[%s2172 + $0x120] sm:$0xff]
    %v2210 = vld [vmem:[%s2172 + $0x128] sm:$0xff]
    %v2211 = vld [vmem:[%s2172 + $0x130] sm:$0xff]
    %v2212 = vld [vmem:[%s2172 + $0x138] sm:$0xff]
    %v2213 = vld [vmem:[%s2172 + $0x140] sm:$0xff]
    %v2214 = vld [vmem:[%s2172 + $0x148] sm:$0xff]
    %v2215 = vld [vmem:[%s2172 + $0x150] sm:$0xff]
    %v2216 = vld [vmem:[%s2172 + $0x158] sm:$0xff]
    %v2217 = vld [vmem:[%s2172 + $0x160] sm:$0xff]
    %v2218 = vld [vmem:[%s2172 + $0x168] sm:$0xff]
    %v2219 = vld [vmem:[%s2172 + $0x170] sm:$0xff]
    %v2220 = vld [vmem:[%s2172 + $0x178] sm:$0xff]
    %v2221 = vld [vmem:[%s2172 + $0x180] sm:$0xff]
    %v2222 = vld [vmem:[%s2172 + $0x188] sm:$0xff]
    %v2223 = vld [vmem:[%s2172 + $0x190] sm:$0xff]
    %v2224 = vld [vmem:[%s2172 + $0x198] sm:$0xff]
    %v2225 = vld [vmem:[%s2172 + $0x1a0] sm:$0xff]
    %v2226 = vld [vmem:[%s2172 + $0x1a8] sm:$0xff]
    %v2227 = vld [vmem:[%s2172 + $0x1b0] sm:$0xff]
    %v2228 = vld [vmem:[%s2172 + $0x1b8] sm:$0xff]
    %v2229 = vld [vmem:[%s2172 + $0x1c0] sm:$0xff]
    %v2230 = vld [vmem:[%s2172 + $0x1c8] sm:$0xff]
    %v2231 = vld [vmem:[%s2172 + $0x1d0] sm:$0xff]
    %v2232 = vld [vmem:[%s2172 + $0x1d8] sm:$0xff]
    %v2233 = vld [vmem:[%s2172 + $0x1e0] sm:$0xff]
    %v2234 = vld [vmem:[%s2172 + $0x1e8] sm:$0xff]
    %v2235 = vld [vmem:[%s2172 + $0x1f0] sm:$0xff]
    %v2236 = vld [vmem:[%s2172 + $0x1f8] sm:$0xff]
    %v2237 = vld [vmem:[%s2172 + $0x200] sm:$0xff]
    %v2238 = vld [vmem:[%s2172 + $0x208] sm:$0xff]
    %v2239 = vld [vmem:[%s2172 + $0x210] sm:$0xff]
    %v2240 = vld [vmem:[%s2172 + $0x218] sm:$0xff]
    %v2241 = vld [vmem:[%s2172 + $0x220] sm:$0xff]
    %v2242 = vld [vmem:[%s2172 + $0x228] sm:$0xff]
    %v2243 = vld [vmem:[%s2172 + $0x230] sm:$0xff]
    %v2244 = vld [vmem:[%s2172 + $0x238] sm:$0xff]
    %v2245 = vld [vmem:[%s2172 + $0x240] sm:$0xff]
    %v2246 = vld [vmem:[%s2172 + $0x248] sm:$0xff]
    %v2247 = vld [vmem:[%s2172 + $0x250] sm:$0xff]
    %v2248 = vld [vmem:[%s2172 + $0x258] sm:$0xff]
    %v2249 = vld [vmem:[%s2172 + $0x260] sm:$0xff]
    %v2250 = vld [vmem:[%s2172 + $0x268] sm:$0xff]
    %v2251 = vld [vmem:[%s2172 + $0x270] sm:$0xff]
    %v2252 = vld [vmem:[%s2172 + $0x278] sm:$0xff]
    %v2253 = vld [vmem:[%s2172 + $0x280] sm:$0xff]
    %v2254 = vld [vmem:[%s2172 + $0x288] sm:$0xff]
    %v2255 = vld [vmem:[%s2172 + $0x290] sm:$0xff]
    %v2256 = vld [vmem:[%s2172 + $0x298] sm:$0xff]
    %v2257 = vld [vmem:[%s2172 + $0x2a0] sm:$0xff]
    %v2258 = vld [vmem:[%s2172 + $0x2a8] sm:$0xff]
    %v2259 = vld [vmem:[%s2172 + $0x2b0] sm:$0xff]
    %v2260 = vld [vmem:[%s2172 + $0x2b8] sm:$0xff]
    %v2261 = vld [vmem:[%s2172 + $0x2c0] sm:$0xff]
    %v2262 = vld [vmem:[%s2172 + $0x2c8] sm:$0xff]
    %v2263 = vld [vmem:[%s2172 + $0x2d0] sm:$0xff]
    %v2264 = vld [vmem:[%s2172 + $0x2d8] sm:$0xff]
    %v2265 = vld [vmem:[%s2172 + $0x2e0] sm:$0xff]
    %v2266 = vld [vmem:[%s2172 + $0x2e8] sm:$0xff]
    %v2267 = vld [vmem:[%s2172 + $0x2f0] sm:$0xff]
    %v2268 = vld [vmem:[%s2172 + $0x2f8] sm:$0xff]
    %v2269 = vld [vmem:[%s2172 + $0x300] sm:$0xff]
    %v2270 = vld [vmem:[%s2172 + $0x308] sm:$0xff]
    %v2271 = vld [vmem:[%s2172 + $0x310] sm:$0xff]
    %v2272 = vld [vmem:[%s2172 + $0x318] sm:$0xff]
    %v2273 = vld [vmem:[%s2172 + $0x320] sm:$0xff]
    %v2274 = vld [vmem:[%s2172 + $0x328] sm:$0xff]
    %v2275 = vld [vmem:[%s2172 + $0x330] sm:$0xff]
    %v2276 = vld [vmem:[%s2172 + $0x338] sm:$0xff]
    %v2277 = vld [vmem:[%s2172 + $0x340] sm:$0xff]
    %v2278 = vld [vmem:[%s2172 + $0x348] sm:$0xff]
    %v2279 = vld [vmem:[%s2172 + $0x350] sm:$0xff]
    %v2280 = vld [vmem:[%s2172 + $0x358] sm:$0xff]
    %v2281 = vld [vmem:[%s2172 + $0x360] sm:$0xff]
    %v2282 = vld [vmem:[%s2172 + $0x368] sm:$0xff]
    %v2283 = vld [vmem:[%s2172 + $0x370] sm:$0xff]
    %v2284 = vld [vmem:[%s2172 + $0x378] sm:$0xff]
    %v2285 = vld [vmem:[%s2172 + $0x380] sm:$0xff]
    %v2286 = vld [vmem:[%s2172 + $0x388] sm:$0xff]
    %v2287 = vld [vmem:[%s2172 + $0x390] sm:$0xff]
    %v2288 = vld [vmem:[%s2172 + $0x398] sm:$0xff]
    %v2289 = vld [vmem:[%s2172 + $0x3a0] sm:$0xff]
    %v2290 = vld [vmem:[%s2172 + $0x3a8] sm:$0xff]
    %v2291 = vld [vmem:[%s2172 + $0x3b0] sm:$0xff]
    %v2292 = vld [vmem:[%s2172 + $0x3b8] sm:$0xff]
    %v2293 = vld [vmem:[%s2172 + $0x3c0] sm:$0xff]
    %v2294 = vld [vmem:[%s2172 + $0x3c8] sm:$0xff]
    %v2295 = vld [vmem:[%s2172 + $0x3d0] sm:$0xff]
    %v2296 = vld [vmem:[%s2172 + $0x3d8] sm:$0xff]
    %v2297 = vld [vmem:[%s2172 + $0x3e0] sm:$0xff]
    %v2298 = vld [vmem:[%s2172 + $0x3e8] sm:$0xff]
    %v2299 = vld [vmem:[%s2172 + $0x3f0] sm:$0xff]
    %v2300 = vld [vmem:[%s2172 + $0x3f8] sm:$0xff]
    %v2301 = vld [vmem:[%s2172 + $0x400] sm:$0xff]
    %v2302 = vld [vmem:[%s2172 + $0x408] sm:$0xff]
    %v2303 = vld [vmem:[%s2172 + $0x410] sm:$0xff]
    %v2304 = vld [vmem:[%s2172 + $0x418] sm:$0xff]
    %v2305 = vld [vmem:[%s2172 + $0x420] sm:$0xff]
    %v2306 = vld [vmem:[%s2172 + $0x428] sm:$0xff]
    %v2307 = vld [vmem:[%s2172 + $0x430] sm:$0xff]
    %v2308 = vld [vmem:[%s2172 + $0x438] sm:$0xff]
    %v2309 = vld [vmem:[%s2172 + $0x440] sm:$0xff]
    %v2310 = vld [vmem:[%s2172 + $0x448] sm:$0xff]
    %v2311 = vld [vmem:[%s2172 + $0x450] sm:$0xff]
    %v2312 = vld [vmem:[%s2172 + $0x458] sm:$0xff]
    %v2313 = vld [vmem:[%s2172 + $0x460] sm:$0xff]
    %v2314 = vld [vmem:[%s2172 + $0x468] sm:$0xff]
    %v2315 = vld [vmem:[%s2172 + $0x470] sm:$0xff]
    %v2316 = vld [vmem:[%s2172 + $0x478] sm:$0xff]
    %v2317 = vld [vmem:[%s2172 + $0x480] sm:$0xff]
    %v2318 = vld [vmem:[%s2172 + $0x488] sm:$0xff]
    %v2319 = vld [vmem:[%s2172 + $0x490] sm:$0xff]
    %v2320 = vld [vmem:[%s2172 + $0x498] sm:$0xff]
    %v2321 = vld [vmem:[%s2172 + $0x4a0] sm:$0xff]
    %v2322 = vld [vmem:[%s2172 + $0x4a8] sm:$0xff]
    %v2323 = vld [vmem:[%s2172 + $0x4b0] sm:$0xff]
    %v2324 = vld [vmem:[%s2172 + $0x4b8] sm:$0xff]
    %v2325 = vld [vmem:[%s2172 + $0x4c0] sm:$0xff]
    %v2326 = vld [vmem:[%s2172 + $0x4c8] sm:$0xff]
    %v2327 = vld [vmem:[%s2172 + $0x4d0] sm:$0xff]
    %v2328 = vld [vmem:[%s2172 + $0x4d8] sm:$0xff]
    %v2329 = vld [vmem:[%s2172 + $0x4e0] sm:$0xff]
    %v2330 = vld [vmem:[%s2172 + $0x4e8] sm:$0xff]
    %v2331 = vld [vmem:[%s2172 + $0x4f0] sm:$0xff]
    %v2332 = vld [vmem:[%s2172 + $0x4f8] sm:$0xff]
    %v2333 = vld [vmem:[%s2172 + $0x500] sm:$0xff]
    %v2334 = vld [vmem:[%s2172 + $0x508] sm:$0xff]
    %v2335 = vld [vmem:[%s2172 + $0x510] sm:$0xff]
    %v2336 = vld [vmem:[%s2172 + $0x518] sm:$0xff]
    %v2337 = vld [vmem:[%s2172 + $0x520] sm:$0xff]
    %v2338 = vld [vmem:[%s2172 + $0x528] sm:$0xff]
    %v2339 = vld [vmem:[%s2172 + $0x530] sm:$0xff]
    %v2340 = vld [vmem:[%s2172 + $0x538] sm:$0xff]
    %v2341 = vld [vmem:[%s2172 + $0x540] sm:$0xff]
    %v2342 = vld [vmem:[%s2172 + $0x548] sm:$0xff]
    %v2343 = vld [vmem:[%s2172 + $0x550] sm:$0xff]
    %v2344 = vld [vmem:[%s2172 + $0x558] sm:$0xff]
    %v2345 = vld [vmem:[%s2172 + $0x560] sm:$0xff]
    %v2346 = vld [vmem:[%s2172 + $0x568] sm:$0xff]
    %v2347 = vld [vmem:[%s2172 + $0x570] sm:$0xff]
    %v2348 = vld [vmem:[%s2172 + $0x578] sm:$0xff]
    %v2349 = vld [vmem:[%s2172 + $0x580] sm:$0xff]
    %v2350 = vld [vmem:[%s2172 + $0x588] sm:$0xff]
    %v2351 = vld [vmem:[%s2172 + $0x590] sm:$0xff]
    %v2352 = vld [vmem:[%s2172 + $0x598] sm:$0xff]
    %v2354 = vsel %vm504, %v2164, 0
    %v2357 = vsel %vm504, %v2170, 0
    %2359 = vmatprep.subr.mxu0 %v2174
    %2360 = vmatpush1.msra.mxu0 %v2173
    %2361 = vmatprep.subr.mxu0 %v2177
    %2362 = vmatpush1.msra.mxu0 %v2176
    %2363 = vmatprep.subr.mxu0 %v2180
    %2364 = vmatpush1.msra.mxu0 %v2179
    %2365 = vmatprep.subr.mxu0 %v2183
    %2366 = vmatpush1.msra.mxu0 %v2182
    %2367 = vmatprep.subr.mxu0 %v2186
    %2368 = vmatpush1.msra.mxu0 %v2185
    %2369 = vmatprep.subr.mxu0 %v2189
    %2370 = vmatpush1.msra.mxu0 %v2188
    %2371 = vmatprep.subr.mxu0 %v2192
    %2372 = vmatpush1.msra.mxu0 %v2191
    %2373 = vmatprep.subr.mxu0 %v2195
    %2374 = vmatpush1.msra.mxu0 %v2194
    %2375 = vmatprep.subr.mxu0 %v2198
    %2376 = vmatpush1.msra.mxu0 %v2197
    %2377 = vmatprep.subr.mxu0 %v2201
    %2378 = vmatpush1.msra.mxu0 %v2200
    %2379 = vmatprep.subr.mxu0 %v2204
    %2380 = vmatpush1.msra.mxu0 %v2203
    %2381 = vmatprep.subr.mxu0 %v2207
    %2382 = vmatpush1.msra.mxu0 %v2206
    %2383 = vmatprep.subr.mxu0 %v2210
    %2384 = vmatpush1.msra.mxu0 %v2209
    %2385 = vmatprep.subr.mxu0 %v2213
    %2386 = vmatpush1.msra.mxu0 %v2212
    %2387 = vmatprep.subr.mxu0 %v2216
    %2388 = vmatpush1.msra.mxu0 %v2215
    %2389 = vmatprep.subr.mxu0 %v2219
    %2390 = vmatpush1.msra.mxu0 %v2218
    %2391 = vmatprep.subr.mxu0 %v2222
    %2392 = vmatpush1.msra.mxu0 %v2221
    %2393 = vmatprep.subr.mxu0 %v2225
    %2394 = vmatpush1.msra.mxu0 %v2224
    %2395 = vmatprep.subr.mxu0 %v2228
    %2396 = vmatpush1.msra.mxu0 %v2227
    %2397 = vmatprep.subr.mxu0 %v2231
    %2398 = vmatpush1.msra.mxu0 %v2230
    %2399 = vmatprep.subr.mxu0 %v2234
    %2400 = vmatpush1.msra.mxu0 %v2233
    %2401 = vmatprep.subr.mxu0 %v2237
    %2402 = vmatpush1.msra.mxu0 %v2236
    %2403 = vmatprep.subr.mxu0 %v2240
    %2404 = vmatpush1.msra.mxu0 %v2239
    %2405 = vmatprep.subr.mxu0 %v2243
    %2406 = vmatpush1.msra.mxu0 %v2242
    %2407 = vmatprep.subr.mxu0 %v2246
    %2408 = vmatpush1.msra.mxu0 %v2245
    %2409 = vmatprep.subr.mxu0 %v2249
    %2410 = vmatpush1.msra.mxu0 %v2248
    %2411 = vmatprep.subr.mxu0 %v2252
    %2412 = vmatpush1.msra.mxu0 %v2251
    %2413 = vmatprep.subr.mxu0 %v2255
    %2414 = vmatpush1.msra.mxu0 %v2254
    %2415 = vmatprep.subr.mxu0 %v2258
    %2416 = vmatpush1.msra.mxu0 %v2257
    %2417 = vmatprep.subr.mxu0 %v2261
    %2418 = vmatpush1.msra.mxu0 %v2260
    %2419 = vmatprep.subr.mxu0 %v2264
    %2420 = vmatpush1.msra.mxu0 %v2263
    %2421 = vmatprep.subr.mxu0 %v2267
    %2422 = vmatpush1.msra.mxu0 %v2266
    %2423 = vmatprep.mubr.f32.mxu0 %v2087
    %2424 = vmatmul.mubr.f32.gmra.mrb[0].mxu0 %v2085
    %v2425 = vpop.f32.mrb[0].mxu0
    %v2426 = vadd.f32 0.0, %v2425
    %v2427 = vpop.f32.mrb[0].mxu0
    %v2428 = vadd.f32 0.0, %v2427
    %2429 = vmatprep.mubr.f32.mxu0 %v2093
    %2430 = vmatmul.mubr.f32.gmra.mrb[0].mxu0 %v2091
    %v2431 = vpop.f32.mrb[0].mxu0
    %v2432 = vadd.f32 0.0, %v2431
    %v2433 = vpop.f32.mrb[0].mxu0
    %v2434 = vadd.f32 0.0, %v2433
    %2435 = vdwg.mxu0
    %2436 = vmatprep.subr.mxu0 %v2270
    %2437 = vmatpush1.msra.mxu0 %v2269
    %2438 = vmatprep.subr.mxu0 %v2273
    %2439 = vmatpush1.msra.mxu0 %v2272
    %2440 = vmatprep.subr.mxu0 %v2276
    %2441 = vmatpush1.msra.mxu0 %v2275
    %2442 = vmatprep.subr.mxu0 %v2279
    %2443 = vmatpush1.msra.mxu0 %v2278
    %2444 = vmatprep.subr.mxu0 %v2282
    %2445 = vmatpush1.msra.mxu0 %v2281
    %2446 = vmatprep.subr.mxu0 %v2285
    %2447 = vmatpush1.msra.mxu0 %v2284
    %2448 = vmatprep.subr.mxu0 %v2288
    %2449 = vmatpush1.msra.mxu0 %v2287
    %2450 = vmatprep.subr.mxu0 %v2291
    %2451 = vmatpush1.msra.mxu0 %v2290
    %2452 = vmatprep.subr.mxu0 %v2294
    %2453 = vmatpush1.msra.mxu0 %v2293
    %2454 = vmatprep.subr.mxu0 %v2297
    %2455 = vmatpush1.msra.mxu0 %v2296
    %2456 = vmatprep.subr.mxu0 %v2300
    %2457 = vmatpush1.msra.mxu0 %v2299
    %2458 = vmatprep.subr.mxu0 %v2303
    %2459 = vmatpush1.msra.mxu0 %v2302
    %2460 = vmatprep.subr.mxu0 %v2306
    %2461 = vmatpush1.msra.mxu0 %v2305
    %2462 = vmatprep.subr.mxu0 %v2309
    %2463 = vmatpush1.msra.mxu0 %v2308
    %2464 = vmatprep.subr.mxu0 %v2312
    %2465 = vmatpush1.msra.mxu0 %v2311
    %2466 = vmatprep.subr.mxu0 %v2315
    %2467 = vmatpush1.msra.mxu0 %v2314
    %2468 = vmatprep.subr.mxu0 %v2318
    %2469 = vmatpush1.msra.mxu0 %v2317
    %2470 = vmatprep.subr.mxu0 %v2321
    %2471 = vmatpush1.msra.mxu0 %v2320
    %2472 = vmatprep.subr.mxu0 %v2324
    %2473 = vmatpush1.msra.mxu0 %v2323
    %2474 = vmatprep.subr.mxu0 %v2327
    %2475 = vmatpush1.msra.mxu0 %v2326
    %2476 = vmatprep.subr.mxu0 %v2330
    %2477 = vmatpush1.msra.mxu0 %v2329
    %2478 = vmatprep.subr.mxu0 %v2333
    %2479 = vmatpush1.msra.mxu0 %v2332
    %2480 = vmatprep.subr.mxu0 %v2336
    %2481 = vmatpush1.msra.mxu0 %v2335
    %2482 = vmatprep.subr.mxu0 %v2339
    %2483 = vmatpush1.msra.mxu0 %v2338
    %2484 = vmatprep.subr.mxu0 %v2342
    %2485 = vmatpush1.msra.mxu0 %v2341
    %2486 = vmatprep.subr.mxu0 %v2345
    %2487 = vmatpush1.msra.mxu0 %v2344
    %2488 = vmatprep.subr.mxu0 %v2348
    %2489 = vmatpush1.msra.mxu0 %v2347
    %2490 = vmatprep.subr.mxu0 %v2351
    %2491 = vmatpush1.msra.mxu0 %v2350
    %2492 = vmatprep.subr.mxu0 0.0
    %2493 = vmatpush1.msra.mxu0 0.0
    %2494 = vmatprep.subr.mxu0 0.0
    %2495 = vmatpush1.msra.mxu0 0.0
    %2496 = vmatprep.subr.mxu0 0.0
    %2497 = vmatpush1.msra.mxu0 0.0
    %2498 = vmatprep.subr.mxu0 0.0
    %2499 = vmatpush1.msra.mxu0 0.0
    %2500 = vmatprep.mubr.f32.mxu0 %v2354
    %2501 = vmatmul.mubr.f32.gmra.mrb[0].mxu0 %v2162
    %v2502 = vpop.f32.mrb[0].mxu0
    %v2503 = vadd.f32 %v2426, %v2502
    %v2504 = vpop.f32.mrb[0].mxu0
    %v2505 = vadd.f32 %v2428, %v2504
    %2506 = vmatprep.mubr.f32.mxu0 %v2357
    %2507 = vmatmul.mubr.f32.gmra.mrb[0].mxu0 %v2168
    %v2508 = vpop.f32.mrb[0].mxu0
    %v2509 = vadd.f32 %v2432, %v2508
    %v2510 = vpop.f32.mrb[0].mxu0
    %v2511 = vadd.f32 %v2434, %v2510
    %2512 = vdwg.mxu0
    %2513 = vmatprep.subr.mxu0 0.0
    %2514 = vmatpush1.msra.mxu0 %v2175
    %2515 = vmatprep.subr.mxu0 0.0
    %2516 = vmatpush1.msra.mxu0 %v2178
    %2517 = vmatprep.subr.mxu0 0.0
    %2518 = vmatpush1.msra.mxu0 %v2181
    %2519 = vmatprep.subr.mxu0 0.0
    %2520 = vmatpush1.msra.mxu0 %v2184
    %2521 = vmatprep.subr.mxu0 0.0
    %2522 = vmatpush1.msra.mxu0 %v2187
    %2523 = vmatprep.subr.mxu0 0.0
    %2524 = vmatpush1.msra.mxu0 %v2190
    %2525 = vmatprep.subr.mxu0 0.0
    %2526 = vmatpush1.msra.mxu0 %v2193
    %2527 = vmatprep.subr.mxu0 0.0
    %2528 = vmatpush1.msra.mxu0 %v2196
    %2529 = vmatprep.subr.mxu0 0.0
    %2530 = vmatpush1.msra.mxu0 %v2199
    %2531 = vmatprep.subr.mxu0 0.0
    %2532 = vmatpush1.msra.mxu0 %v2202
    %2533 = vmatprep.subr.mxu0 0.0
    %2534 = vmatpush1.msra.mxu0 %v2205
    %2535 = vmatprep.subr.mxu0 0.0
    %2536 = vmatpush1.msra.mxu0 %v2208
    %2537 = vmatprep.subr.mxu0 0.0
    %2538 = vmatpush1.msra.mxu0 %v2211
    %2539 = vmatprep.subr.mxu0 0.0
    %2540 = vmatpush1.msra.mxu0 %v2214
    %2541 = vmatprep.subr.mxu0 0.0
    %2542 = vmatpush1.msra.mxu0 %v2217
    %2543 = vmatprep.subr.mxu0 0.0
    %2544 = vmatpush1.msra.mxu0 %v2220
    %2545 = vmatprep.subr.mxu0 0.0
    %2546 = vmatpush1.msra.mxu0 %v2223
    %2547 = vmatprep.subr.mxu0 0.0
    %2548 = vmatpush1.msra.mxu0 %v2226
    %2549 = vmatprep.subr.mxu0 0.0
    %2550 = vmatpush1.msra.mxu0 %v2229
    %2551 = vmatprep.subr.mxu0 0.0
    %2552 = vmatpush1.msra.mxu0 %v2232
    %2553 = vmatprep.subr.mxu0 0.0
    %2554 = vmatpush1.msra.mxu0 %v2235
    %2555 = vmatprep.subr.mxu0 0.0
    %2556 = vmatpush1.msra.mxu0 %v2238
    %2557 = vmatprep.subr.mxu0 0.0
    %2558 = vmatpush1.msra.mxu0 %v2241
    %2559 = vmatprep.subr.mxu0 0.0
    %2560 = vmatpush1.msra.mxu0 %v2244
    %2561 = vmatprep.subr.mxu0 0.0
    %2562 = vmatpush1.msra.mxu0 %v2247
    %2563 = vmatprep.subr.mxu0 0.0
    %2564 = vmatpush1.msra.mxu0 %v2250
    %2565 = vmatprep.subr.mxu0 0.0
    %2566 = vmatpush1.msra.mxu0 %v2253
    %2567 = vmatprep.subr.mxu0 0.0
    %2568 = vmatpush1.msra.mxu0 %v2256
    %2569 = vmatprep.subr.mxu0 0.0
    %2570 = vmatpush1.msra.mxu0 %v2259
    %2571 = vmatprep.subr.mxu0 0.0
    %2572 = vmatpush1.msra.mxu0 %v2262
    %2573 = vmatprep.subr.mxu0 0.0
    %2574 = vmatpush1.msra.mxu0 %v2265
    %2575 = vmatprep.subr.mxu0 0.0
    %2576 = vmatpush1.msra.mxu0 %v2268
    %2577 = vmatprep.mubr.f32.mxu0 %v2087
    %2578 = vmatmul.mubr.f32.gmra.mrb[0].mxu0 %v2085
    %v2579 = vpop.f32.mrb[0].mxu0
    %v2580 = vadd.f32 0.0, %v2579
    %v2581 = vpop.f32.mrb[0].mxu0
    %2582 = vmatprep.mubr.f32.mxu0 %v2093
    %2583 = vmatmul.mubr.f32.gmra.mrb[0].mxu0 %v2091
    %v2584 = vpop.f32.mrb[0].mxu0
    %v2585 = vadd.f32 0.0, %v2584
    %v2586 = vpop.f32.mrb[0].mxu0
    %2587 = vdwg.mxu0
    %2588 = vmatprep.subr.mxu0 0.0
    %2589 = vmatpush1.msra.mxu0 %v2271
    %2590 = vmatprep.subr.mxu0 0.0
    %2591 = vmatpush1.msra.mxu0 %v2274
    %2592 = vmatprep.subr.mxu0 0.0
    %2593 = vmatpush1.msra.mxu0 %v2277
    %2594 = vmatprep.subr.mxu0 0.0
    %2595 = vmatpush1.msra.mxu0 %v2280
    %2596 = vmatprep.subr.mxu0 0.0
    %2597 = vmatpush1.msra.mxu0 %v2283
    %2598 = vmatprep.subr.mxu0 0.0
    %2599 = vmatpush1.msra.mxu0 %v2286
    %2600 = vmatprep.subr.mxu0 0.0
    %2601 = vmatpush1.msra.mxu0 %v2289
    %2602 = vmatprep.subr.mxu0 0.0
    %2603 = vmatpush1.msra.mxu0 %v2292
    %2604 = vmatprep.subr.mxu0 0.0
    %2605 = vmatpush1.msra.mxu0 %v2295
    %2606 = vmatprep.subr.mxu0 0.0
    %2607 = vmatpush1.msra.mxu0 %v2298
    %2608 = vmatprep.subr.mxu0 0.0
    %2609 = vmatpush1.msra.mxu0 %v2301
    %2610 = vmatprep.subr.mxu0 0.0
    %2611 = vmatpush1.msra.mxu0 %v2304
    %2612 = vmatprep.subr.mxu0 0.0
    %2613 = vmatpush1.msra.mxu0 %v2307
    %2614 = vmatprep.subr.mxu0 0.0
    %2615 = vmatpush1.msra.mxu0 %v2310
    %2616 = vmatprep.subr.mxu0 0.0
    %2617 = vmatpush1.msra.mxu0 %v2313
    %2618 = vmatprep.subr.mxu0 0.0
    %2619 = vmatpush1.msra.mxu0 %v2316
    %2620 = vmatprep.subr.mxu0 0.0
    %2621 = vmatpush1.msra.mxu0 %v2319
    %2622 = vmatprep.subr.mxu0 0.0
    %2623 = vmatpush1.msra.mxu0 %v2322
    %2624 = vmatprep.subr.mxu0 0.0
    %2625 = vmatpush1.msra.mxu0 %v2325
    %2626 = vmatprep.subr.mxu0 0.0
    %2627 = vmatpush1.msra.mxu0 %v2328
    %2628 = vmatprep.subr.mxu0 0.0
    %2629 = vmatpush1.msra.mxu0 %v2331
    %2630 = vmatprep.subr.mxu0 0.0
    %2631 = vmatpush1.msra.mxu0 %v2334
    %2632 = vmatprep.subr.mxu0 0.0
    %2633 = vmatpush1.msra.mxu0 %v2337
    %2634 = vmatprep.subr.mxu0 0.0
    %2635 = vmatpush1.msra.mxu0 %v2340
    %2636 = vmatprep.subr.mxu0 0.0
    %2637 = vmatpush1.msra.mxu0 %v2343
    %2638 = vmatprep.subr.mxu0 0.0
    %2639 = vmatpush1.msra.mxu0 %v2346
    %2640 = vmatprep.subr.mxu0 0.0
    %2641 = vmatpush1.msra.mxu0 %v2349
    %2642 = vmatprep.subr.mxu0 0.0
    %2643 = vmatpush1.msra.mxu0 %v2352
    %2644 = vmatprep.subr.mxu0 0.0
    %2645 = vmatpush1.msra.mxu0 0.0
    %2646 = vmatprep.subr.mxu0 0.0
    %2647 = vmatpush1.msra.mxu0 0.0
    %2648 = vmatprep.subr.mxu0 0.0
    %2649 = vmatpush1.msra.mxu0 0.0
    %2650 = vmatprep.subr.mxu0 0.0
    %2651 = vmatpush1.msra.mxu0 0.0
    %2652 = vmatprep.mubr.f32.mxu0 %v2354
    %2653 = vmatmul.mubr.f32.gmra.mrb[0].mxu0 %v2162
    %v2654 = vpop.f32.mrb[0].mxu0
    %v2655 = vadd.f32 %v2580, %v2654
    %v2656 = vpop.f32.mrb[0].mxu0
    %2657 = vmatprep.mubr.f32.mxu0 %v2357
    %2658 = vmatmul.mubr.f32.gmra.mrb[0].mxu0 %v2168
    %v2659 = vpop.f32.mrb[0].mxu0
    %v2660 = vadd.f32 %v2585, %v2659
    %v2661 = vpop.f32.mrb[0].mxu0
    %2662 = vdwg.mxu0
    %v2664 = vsel %vm504, %v1821, 0
    %v2667 = vsel %vm504, %v1827, 0
    %2669 = vmatprep.subr.mxu0 %v1830
    %2670 = vmatpush1.msra.mxu0 %v1829
    %2671 = vmatprep.subr.mxu0 %v1833
    %2672 = vmatpush1.msra.mxu0 %v1832
    %2673 = vmatprep.subr.mxu0 %v1836
    %2674 = vmatpush1.msra.mxu0 %v1835
    %2675 = vmatprep.subr.mxu0 %v1839
    %2676 = vmatpush1.msra.mxu0 %v1838
    %2677 = vmatprep.subr.mxu0 %v1842
    %2678 = vmatpush1.msra.mxu0 %v1841
    %2679 = vmatprep.subr.mxu0 %v1845
    %2680 = vmatpush1.msra.mxu0 %v1844
    %2681 = vmatprep.subr.mxu0 %v1848
    %2682 = vmatpush1.msra.mxu0 %v1847
    %2683 = vmatprep.subr.mxu0 %v1851
    %2684 = vmatpush1.msra.mxu0 %v1850
    %2685 = vmatprep.subr.mxu0 %v1854
    %2686 = vmatpush1.msra.mxu0 %v1853
    %2687 = vmatprep.subr.mxu0 %v1857
    %2688 = vmatpush1.msra.mxu0 %v1856
    %2689 = vmatprep.subr.mxu0 %v1860
    %2690 = vmatpush1.msra.mxu0 %v1859
    %2691 = vmatprep.subr.mxu0 %v1863
    %2692 = vmatpush1.msra.mxu0 %v1862
    %2693 = vmatprep.subr.mxu0 %v1866
    %2694 = vmatpush1.msra.mxu0 %v1865
    %2695 = vmatprep.subr.mxu0 %v1869
    %2696 = vmatpush1.msra.mxu0 %v1868
    %2697 = vmatprep.subr.mxu0 %v1872
    %2698 = vmatpush1.msra.mxu0 %v1871
    %2699 = vmatprep.subr.mxu0 %v1875
    %2700 = vmatpush1.msra.mxu0 %v1874
    %2701 = vmatprep.subr.mxu0 %v1878
    %2702 = vmatpush1.msra.mxu0 %v1877
    %2703 = vmatprep.subr.mxu0 %v1881
    %2704 = vmatpush1.msra.mxu0 %v1880
    %2705 = vmatprep.subr.mxu0 %v1884
    %2706 = vmatpush1.msra.mxu0 %v1883
    %2707 = vmatprep.subr.mxu0 %v1887
    %2708 = vmatpush1.msra.mxu0 %v1886
    %2709 = vmatprep.subr.mxu0 %v1890
    %2710 = vmatpush1.msra.mxu0 %v1889
    %2711 = vmatprep.subr.mxu0 %v1893
    %2712 = vmatpush1.msra.mxu0 %v1892
    %2713 = vmatprep.subr.mxu0 %v1896
    %2714 = vmatpush1.msra.mxu0 %v1895
    %2715 = vmatprep.subr.mxu0 %v1899
    %2716 = vmatpush1.msra.mxu0 %v1898
    %2717 = vmatprep.subr.mxu0 %v1902
    %2718 = vmatpush1.msra.mxu0 %v1901
    %2719 = vmatprep.subr.mxu0 %v1905
    %2720 = vmatpush1.msra.mxu0 %v1904
    %2721 = vmatprep.subr.mxu0 %v1908
    %2722 = vmatpush1.msra.mxu0 %v1907
    %2723 = vmatprep.subr.mxu0 %v1911
    %2724 = vmatpush1.msra.mxu0 %v1910
    %2725 = vmatprep.subr.mxu0 %v1914
    %2726 = vmatpush1.msra.mxu0 %v1913
    %2727 = vmatprep.subr.mxu0 %v1917
    %2728 = vmatpush1.msra.mxu0 %v1916
    %2729 = vmatprep.subr.mxu0 %v1920
    %2730 = vmatpush1.msra.mxu0 %v1919
    %2731 = vmatprep.subr.mxu0 %v1923
    %2732 = vmatpush1.msra.mxu0 %v1922
    %2733 = vmatprep.mubr.f32.mxu0 %v1744
    %2734 = vmatmul.mubr.f32.gmra.mrb[0].mxu0 %v1742
    %v2735 = vpop.f32.mrb[0].mxu0
    %v2736 = vadd.f32 %v2503, %v2735
    %v2737 = vpop.f32.mrb[0].mxu0
    %v2738 = vadd.f32 %v2505, %v2737
    %2739 = vmatprep.mubr.f32.mxu0 %v1750
    %2740 = vmatmul.mubr.f32.gmra.mrb[0].mxu0 %v1748
    %v2741 = vpop.f32.mrb[0].mxu0
    %v2742 = vadd.f32 %v2509, %v2741
    %v2743 = vpop.f32.mrb[0].mxu0
    %v2744 = vadd.f32 %v2511, %v2743
    %2745 = vdwg.mxu0
    %2746 = vmatprep.subr.mxu0 %v1926
    %2747 = vmatpush1.msra.mxu0 %v1925
    %2748 = vmatprep.subr.mxu0 %v1929
    %2749 = vmatpush1.msra.mxu0 %v1928
    %2750 = vmatprep.subr.mxu0 %v1932
    %2751 = vmatpush1.msra.mxu0 %v1931
    %2752 = vmatprep.subr.mxu0 %v1935
    %2753 = vmatpush1.msra.mxu0 %v1934
    %2754 = vmatprep.subr.mxu0 %v1938
    %2755 = vmatpush1.msra.mxu0 %v1937
    %2756 = vmatprep.subr.mxu0 %v1941
    %2757 = vmatpush1.msra.mxu0 %v1940
    %2758 = vmatprep.subr.mxu0 %v1944
    %2759 = vmatpush1.msra.mxu0 %v1943
    %2760 = vmatprep.subr.mxu0 %v1947
    %2761 = vmatpush1.msra.mxu0 %v1946
    %2762 = vmatprep.subr.mxu0 %v1950
    %2763 = vmatpush1.msra.mxu0 %v1949
    %2764 = vmatprep.subr.mxu0 %v1953
    %2765 = vmatpush1.msra.mxu0 %v1952
    %2766 = vmatprep.subr.mxu0 %v1956
    %2767 = vmatpush1.msra.mxu0 %v1955
    %2768 = vmatprep.subr.mxu0 %v1959
    %2769 = vmatpush1.msra.mxu0 %v1958
    %2770 = vmatprep.subr.mxu0 %v1962
    %2771 = vmatpush1.msra.mxu0 %v1961
    %2772 = vmatprep.subr.mxu0 %v1965
    %2773 = vmatpush1.msra.mxu0 %v1964
    %2774 = vmatprep.subr.mxu0 %v1968
    %2775 = vmatpush1.msra.mxu0 %v1967
    %2776 = vmatprep.subr.mxu0 %v1971
    %2777 = vmatpush1.msra.mxu0 %v1970
    %2778 = vmatprep.subr.mxu0 %v1974
    %2779 = vmatpush1.msra.mxu0 %v1973
    %2780 = vmatprep.subr.mxu0 %v1977
    %2781 = vmatpush1.msra.mxu0 %v1976
    %2782 = vmatprep.subr.mxu0 %v1980
    %2783 = vmatpush1.msra.mxu0 %v1979
    %2784 = vmatprep.subr.mxu0 %v1983
    %2785 = vmatpush1.msra.mxu0 %v1982
    %2786 = vmatprep.subr.mxu0 %v1986
    %2787 = vmatpush1.msra.mxu0 %v1985
    %2788 = vmatprep.subr.mxu0 %v1989
    %2789 = vmatpush1.msra.mxu0 %v1988
    %2790 = vmatprep.subr.mxu0 %v1992
    %2791 = vmatpush1.msra.mxu0 %v1991
    %2792 = vmatprep.subr.mxu0 %v1995
    %2793 = vmatpush1.msra.mxu0 %v1994
    %2794 = vmatprep.subr.mxu0 %v1998
    %2795 = vmatpush1.msra.mxu0 %v1997
    %2796 = vmatprep.subr.mxu0 %v2001
    %2797 = vmatpush1.msra.mxu0 %v2000
    %2798 = vmatprep.subr.mxu0 %v2004
    %2799 = vmatpush1.msra.mxu0 %v2003
    %2800 = vmatprep.subr.mxu0 %v2007
    %2801 = vmatpush1.msra.mxu0 %v2006
    %2802 = vmatprep.subr.mxu0 0.0
    %2803 = vmatpush1.msra.mxu0 0.0
    %2804 = vmatprep.subr.mxu0 0.0
    %2805 = vmatpush1.msra.mxu0 0.0
    %2806 = vmatprep.subr.mxu0 0.0
    %2807 = vmatpush1.msra.mxu0 0.0
    %2808 = vmatprep.subr.mxu0 0.0
    %2809 = vmatpush1.msra.mxu0 0.0
    %2810 = vmatprep.mubr.f32.mxu0 %v2664
    %2811 = vmatmul.mubr.f32.gmra.mrb[0].mxu0 %v1819
    %v2812 = vpop.f32.mrb[0].mxu0
    %v2813 = vadd.f32 %v2736, %v2812
    %v2814 = vpop.f32.mrb[0].mxu0
    %v2815 = vadd.f32 %v2738, %v2814
    %2816 = vmatprep.mubr.f32.mxu0 %v2667
    %2817 = vmatmul.mubr.f32.gmra.mrb[0].mxu0 %v1825
    %v2818 = vpop.f32.mrb[0].mxu0
    %v2819 = vadd.f32 %v2742, %v2818
    %v2820 = vpop.f32.mrb[0].mxu0
    %v2821 = vadd.f32 %v2744, %v2820
    %2822 = vdwg.mxu0
    %2823 = vmatprep.subr.mxu0 0.0
    %2824 = vmatpush1.msra.mxu0 %v1831
    %2825 = vmatprep.subr.mxu0 0.0
    %2826 = vmatpush1.msra.mxu0 %v1834
    %2827 = vmatprep.subr.mxu0 0.0
    %2828 = vmatpush1.msra.mxu0 %v1837
    %2829 = vmatprep.subr.mxu0 0.0
    %2830 = vmatpush1.msra.mxu0 %v1840
    %2831 = vmatprep.subr.mxu0 0.0
    %2832 = vmatpush1.msra.mxu0 %v1843
    %2833 = vmatprep.subr.mxu0 0.0
    %2834 = vmatpush1.msra.mxu0 %v1846
    %2835 = vmatprep.subr.mxu0 0.0
    %2836 = vmatpush1.msra.mxu0 %v1849
    %2837 = vmatprep.subr.mxu0 0.0
    %2838 = vmatpush1.msra.mxu0 %v1852
    %2839 = vmatprep.subr.mxu0 0.0
    %2840 = vmatpush1.msra.mxu0 %v1855
    %2841 = vmatprep.subr.mxu0 0.0
    %2842 = vmatpush1.msra.mxu0 %v1858
    %2843 = vmatprep.subr.mxu0 0.0
    %2844 = vmatpush1.msra.mxu0 %v1861
    %2845 = vmatprep.subr.mxu0 0.0
    %2846 = vmatpush1.msra.mxu0 %v1864
    %2847 = vmatprep.subr.mxu0 0.0
    %2848 = vmatpush1.msra.mxu0 %v1867
    %2849 = vmatprep.subr.mxu0 0.0
    %2850 = vmatpush1.msra.mxu0 %v1870
    %2851 = vmatprep.subr.mxu0 0.0
    %2852 = vmatpush1.msra.mxu0 %v1873
    %2853 = vmatprep.subr.mxu0 0.0
    %2854 = vmatpush1.msra.mxu0 %v1876
    %2855 = vmatprep.subr.mxu0 0.0
    %2856 = vmatpush1.msra.mxu0 %v1879
    %2857 = vmatprep.subr.mxu0 0.0
    %2858 = vmatpush1.msra.mxu0 %v1882
    %2859 = vmatprep.subr.mxu0 0.0
    %2860 = vmatpush1.msra.mxu0 %v1885
    %2861 = vmatprep.subr.mxu0 0.0
    %2862 = vmatpush1.msra.mxu0 %v1888
    %2863 = vmatprep.subr.mxu0 0.0
    %2864 = vmatpush1.msra.mxu0 %v1891
    %2865 = vmatprep.subr.mxu0 0.0
    %2866 = vmatpush1.msra.mxu0 %v1894
    %2867 = vmatprep.subr.mxu0 0.0
    %2868 = vmatpush1.msra.mxu0 %v1897
    %2869 = vmatprep.subr.mxu0 0.0
    %2870 = vmatpush1.msra.mxu0 %v1900
    %2871 = vmatprep.subr.mxu0 0.0
    %2872 = vmatpush1.msra.mxu0 %v1903
    %2873 = vmatprep.subr.mxu0 0.0
    %2874 = vmatpush1.msra.mxu0 %v1906
    %2875 = vmatprep.subr.mxu0 0.0
    %2876 = vmatpush1.msra.mxu0 %v1909
    %2877 = vmatprep.subr.mxu0 0.0
    %2878 = vmatpush1.msra.mxu0 %v1912
    %2879 = vmatprep.subr.mxu0 0.0
    %2880 = vmatpush1.msra.mxu0 %v1915
    %2881 = vmatprep.subr.mxu0 0.0
    %2882 = vmatpush1.msra.mxu0 %v1918
    %2883 = vmatprep.subr.mxu0 0.0
    %2884 = vmatpush1.msra.mxu0 %v1921
    %2885 = vmatprep.subr.mxu0 0.0
    %2886 = vmatpush1.msra.mxu0 %v1924
    %2887 = vmatprep.mubr.f32.mxu0 %v1744
    %2888 = vmatmul.mubr.f32.gmra.mrb[0].mxu0 %v1742
    %v2889 = vpop.f32.mrb[0].mxu0
    %v2890 = vadd.f32 %v2655, %v2889
    %v2891 = vpop.f32.mrb[0].mxu0
    %2892 = vmatprep.mubr.f32.mxu0 %v1750
    %2893 = vmatmul.mubr.f32.gmra.mrb[0].mxu0 %v1748
    %v2894 = vpop.f32.mrb[0].mxu0
    %v2895 = vadd.f32 %v2660, %v2894
    %v2896 = vpop.f32.mrb[0].mxu0
    %2897 = vdwg.mxu0
    %2898 = vmatprep.subr.mxu0 0.0
    %2899 = vmatpush1.msra.mxu0 %v1927
    %2900 = vmatprep.subr.mxu0 0.0
    %2901 = vmatpush1.msra.mxu0 %v1930
    %2902 = vmatprep.subr.mxu0 0.0
    %2903 = vmatpush1.msra.mxu0 %v1933
    %2904 = vmatprep.subr.mxu0 0.0
    %2905 = vmatpush1.msra.mxu0 %v1936
    %2906 = vmatprep.subr.mxu0 0.0
    %2907 = vmatpush1.msra.mxu0 %v1939
    %2908 = vmatprep.subr.mxu0 0.0
    %2909 = vmatpush1.msra.mxu0 %v1942
    %2910 = vmatprep.subr.mxu0 0.0
    %2911 = vmatpush1.msra.mxu0 %v1945
    %2912 = vmatprep.subr.mxu0 0.0
    %2913 = vmatpush1.msra.mxu0 %v1948
    %2914 = vmatprep.subr.mxu0 0.0
    %2915 = vmatpush1.msra.mxu0 %v1951
    %2916 = vmatprep.subr.mxu0 0.0
    %2917 = vmatpush1.msra.mxu0 %v1954
    %2918 = vmatprep.subr.mxu0 0.0
    %2919 = vmatpush1.msra.mxu0 %v1957
    %2920 = vmatprep.subr.mxu0 0.0
    %2921 = vmatpush1.msra.mxu0 %v1960
    %2922 = vmatprep.subr.mxu0 0.0
    %2923 = vmatpush1.msra.mxu0 %v1963
    %2924 = vmatprep.subr.mxu0 0.0
    %2925 = vmatpush1.msra.mxu0 %v1966
    %2926 = vmatprep.subr.mxu0 0.0
    %2927 = vmatpush1.msra.mxu0 %v1969
    %2928 = vmatprep.subr.mxu0 0.0
    %2929 = vmatpush1.msra.mxu0 %v1972
    %2930 = vmatprep.subr.mxu0 0.0
    %2931 = vmatpush1.msra.mxu0 %v1975
    %2932 = vmatprep.subr.mxu0 0.0
    %2933 = vmatpush1.msra.mxu0 %v1978
    %2934 = vmatprep.subr.mxu0 0.0
    %2935 = vmatpush1.msra.mxu0 %v1981
    %2936 = vmatprep.subr.mxu0 0.0
    %2937 = vmatpush1.msra.mxu0 %v1984
    %2938 = vmatprep.subr.mxu0 0.0
    %2939 = vmatpush1.msra.mxu0 %v1987
    %2940 = vmatprep.subr.mxu0 0.0
    %2941 = vmatpush1.msra.mxu0 %v1990
    %2942 = vmatprep.subr.mxu0 0.0
    %2943 = vmatpush1.msra.mxu0 %v1993
    %2944 = vmatprep.subr.mxu0 0.0
    %2945 = vmatpush1.msra.mxu0 %v1996
    %2946 = vmatprep.subr.mxu0 0.0
    %2947 = vmatpush1.msra.mxu0 %v1999
    %2948 = vmatprep.subr.mxu0 0.0
    %2949 = vmatpush1.msra.mxu0 %v2002
    %2950 = vmatprep.subr.mxu0 0.0
    %2951 = vmatpush1.msra.mxu0 %v2005
    %2952 = vmatprep.subr.mxu0 0.0
    %2953 = vmatpush1.msra.mxu0 %v2008
    %2954 = vmatprep.subr.mxu0 0.0
    %2955 = vmatpush1.msra.mxu0 0.0
    %2956 = vmatprep.subr.mxu0 0.0
    %2957 = vmatpush1.msra.mxu0 0.0
    %2958 = vmatprep.subr.mxu0 0.0
    %2959 = vmatpush1.msra.mxu0 0.0
    %2960 = vmatprep.subr.mxu0 0.0
    %2961 = vmatpush1.msra.mxu0 0.0
    %2962 = vmatprep.mubr.f32.mxu0 %v2664
    %2963 = vmatmul.mubr.f32.gmra.mrb[0].mxu0 %v1819
    %v2964 = vpop.f32.mrb[0].mxu0
    %v2965 = vadd.f32 %v2890, %v2964
    %v2966 = vpop.f32.mrb[0].mxu0
    %2967 = vmatprep.mubr.f32.mxu0 %v2667
    %2968 = vmatmul.mubr.f32.gmra.mrb[0].mxu0 %v1825
    %v2969 = vpop.f32.mrb[0].mxu0
    %v2970 = vadd.f32 %v2895, %v2969
    %v2971 = vpop.f32.mrb[0].mxu0
    %2972 = vdwg.mxu0
    %s2973 = scalar_lea.vmem %s11, 32
    %v2974 = vld [vmem:[%s2973] sm:$0xff]
    %v2975 = vld [vmem:[%s2973 + $0x8] sm:$0xf]
    %v2977 = vsel %vm1655, %v2974, 0
    %v2980 = vsel %vm1655, %v2975, 0
    %2982 = vmatprep.subr.mxu0 %v1638
    %2983 = vmatpush1.msra.mxu0 %v1637
    %2984 = vmatprep.subr.mxu0 %v1642
    %2985 = vmatpush1.msra.mxu0 %v1641
    %2986 = vmatprep.subr.mxu0 %v1646
    %2987 = vmatpush1.msra.mxu0 %v1645
    %2988 = vmatprep.subr.mxu0 %v1667
    %2989 = vmatpush1.msra.mxu0 %v1664
    %2990 = vmatprep.subr.mxu0 0.0
    %2991 = vmatpush1.msra.mxu0 0.0
    %2992 = vmatprep.subr.mxu0 0.0
    %2993 = vmatpush1.msra.mxu0 0.0
    %2994 = vmatprep.subr.mxu0 0.0
    %2995 = vmatpush1.msra.mxu0 0.0
    %2996 = vmatprep.subr.mxu0 0.0
    %2997 = vmatpush1.msra.mxu0 0.0
    %2998 = vmatprep.subr.mxu0 0.0
    %2999 = vmatpush1.msra.mxu0 0.0
    %3000 = vmatprep.subr.mxu0 0.0
    %3001 = vmatpush1.msra.mxu0 0.0
    %3002 = vmatprep.subr.mxu0 0.0
    %3003 = vmatpush1.msra.mxu0 0.0
    %3004 = vmatprep.subr.mxu0 0.0
    %3005 = vmatpush1.msra.mxu0 0.0
    %3006 = vmatprep.subr.mxu0 0.0
    %3007 = vmatpush1.msra.mxu0 0.0
    %3008 = vmatprep.subr.mxu0 0.0
    %3009 = vmatpush1.msra.mxu0 0.0
    %3010 = vmatprep.subr.mxu0 0.0
    %3011 = vmatpush1.msra.mxu0 0.0
    %3012 = vmatprep.subr.mxu0 0.0
    %3013 = vmatpush1.msra.mxu0 0.0
    %3014 = vmatprep.subr.mxu0 0.0
    %3015 = vmatpush1.msra.mxu0 0.0
    %3016 = vmatprep.subr.mxu0 0.0
    %3017 = vmatpush1.msra.mxu0 0.0
    %3018 = vmatprep.subr.mxu0 0.0
    %3019 = vmatpush1.msra.mxu0 0.0
    %3020 = vmatprep.subr.mxu0 0.0
    %3021 = vmatpush1.msra.mxu0 0.0
    %3022 = vmatprep.subr.mxu0 0.0
    %3023 = vmatpush1.msra.mxu0 0.0
    %3024 = vmatprep.subr.mxu0 0.0
    %3025 = vmatpush1.msra.mxu0 0.0
    %3026 = vmatprep.subr.mxu0 0.0
    %3027 = vmatpush1.msra.mxu0 0.0
    %3028 = vmatprep.subr.mxu0 0.0
    %3029 = vmatpush1.msra.mxu0 0.0
    %3030 = vmatprep.subr.mxu0 0.0
    %3031 = vmatpush1.msra.mxu0 0.0
    %3032 = vmatprep.subr.mxu0 0.0
    %3033 = vmatpush1.msra.mxu0 0.0
    %3034 = vmatprep.subr.mxu0 0.0
    %3035 = vmatpush1.msra.mxu0 0.0
    %3036 = vmatprep.subr.mxu0 0.0
    %3037 = vmatpush1.msra.mxu0 0.0
    %3038 = vmatprep.subr.mxu0 0.0
    %3039 = vmatpush1.msra.mxu0 0.0
    %3040 = vmatprep.subr.mxu0 0.0
    %3041 = vmatpush1.msra.mxu0 0.0
    %3042 = vmatprep.subr.mxu0 0.0
    %3043 = vmatpush1.msra.mxu0 0.0
    %3044 = vmatprep.subr.mxu0 0.0
    %3045 = vmatpush1.msra.mxu0 0.0
    %3046 = vmatprep.mubr.f32.mxu0 0.0
    %3047 = vmatmul.mubr.f32.gmra.mrb[0].mxu0 %v2977
    %v3048 = vpop.f32.mrb[0].mxu0
    %v3049 = vadd.f32 0.0, %v3048
    %v3050 = vpop.f32.mrb[0].mxu0
    %v3051 = vadd.f32 0.0, %v3050
    %3052 = vmatprep.mubr.f32.mxu0 0.0
    %3053 = vmatmul.mubr.f32.gmra.mrb[0].mxu0 %v2980
    %v3054 = vpop.f32.mrb[0].mxu0
    %v3055 = vadd.f32 0.0, %v3054
    %v3056 = vpop.f32.mrb[0].mxu0
    %v3057 = vadd.f32 0.0, %v3056
    %3058 = vdwg.mxu0
    %3059 = vmatprep.subr.mxu0 %v1640
    %3060 = vmatpush1.msra.mxu0 %v1639
    %3061 = vmatprep.subr.mxu0 %v1644
    %3062 = vmatpush1.msra.mxu0 %v1643
    %3063 = vmatprep.subr.mxu0 %v1648
    %3064 = vmatpush1.msra.mxu0 %v1647
    %3065 = vmatprep.subr.mxu0 %v1673
    %3066 = vmatpush1.msra.mxu0 %v1670
    %3067 = vmatprep.subr.mxu0 0.0
    %3068 = vmatpush1.msra.mxu0 0.0
    %3069 = vmatprep.subr.mxu0 0.0
    %3070 = vmatpush1.msra.mxu0 0.0
    %3071 = vmatprep.subr.mxu0 0.0
    %3072 = vmatpush1.msra.mxu0 0.0
    %3073 = vmatprep.subr.mxu0 0.0
    %3074 = vmatpush1.msra.mxu0 0.0
    %3075 = vmatprep.subr.mxu0 0.0
    %3076 = vmatpush1.msra.mxu0 0.0
    %3077 = vmatprep.subr.mxu0 0.0
    %3078 = vmatpush1.msra.mxu0 0.0
    %3079 = vmatprep.subr.mxu0 0.0
    %3080 = vmatpush1.msra.mxu0 0.0
    %3081 = vmatprep.subr.mxu0 0.0
    %3082 = vmatpush1.msra.mxu0 0.0
    %3083 = vmatprep.subr.mxu0 0.0
    %3084 = vmatpush1.msra.mxu0 0.0
    %3085 = vmatprep.subr.mxu0 0.0
    %3086 = vmatpush1.msra.mxu0 0.0
    %3087 = vmatprep.subr.mxu0 0.0
    %3088 = vmatpush1.msra.mxu0 0.0
    %3089 = vmatprep.subr.mxu0 0.0
    %3090 = vmatpush1.msra.mxu0 0.0
    %3091 = vmatprep.subr.mxu0 0.0
    %3092 = vmatpush1.msra.mxu0 0.0
    %3093 = vmatprep.subr.mxu0 0.0
    %3094 = vmatpush1.msra.mxu0 0.0
    %3095 = vmatprep.subr.mxu0 0.0
    %3096 = vmatpush1.msra.mxu0 0.0
    %3097 = vmatprep.subr.mxu0 0.0
    %3098 = vmatpush1.msra.mxu0 0.0
    %3099 = vmatprep.subr.mxu0 0.0
    %3100 = vmatpush1.msra.mxu0 0.0
    %3101 = vmatprep.subr.mxu0 0.0
    %3102 = vmatpush1.msra.mxu0 0.0
    %3103 = vmatprep.subr.mxu0 0.0
    %3104 = vmatpush1.msra.mxu0 0.0
    %3105 = vmatprep.subr.mxu0 0.0
    %3106 = vmatpush1.msra.mxu0 0.0
    %3107 = vmatprep.subr.mxu0 0.0
    %3108 = vmatpush1.msra.mxu0 0.0
    %3109 = vmatprep.subr.mxu0 0.0
    %3110 = vmatpush1.msra.mxu0 0.0
    %3111 = vmatprep.subr.mxu0 0.0
    %3112 = vmatpush1.msra.mxu0 0.0
    %3113 = vmatprep.subr.mxu0 0.0
    %3114 = vmatpush1.msra.mxu0 0.0
    %3115 = vmatprep.subr.mxu0 0.0
    %3116 = vmatpush1.msra.mxu0 0.0
    %3117 = vmatprep.subr.mxu0 0.0
    %3118 = vmatpush1.msra.mxu0 0.0
    %3119 = vmatprep.subr.mxu0 0.0
    %3120 = vmatpush1.msra.mxu0 0.0
    %3121 = vmatprep.subr.mxu0 0.0
    %3122 = vmatpush1.msra.mxu0 0.0
    %3123 = vmatprep.mubr.f32.mxu0 0.0
    %3124 = vmatmul.mubr.f32.gmra.mrb[0].mxu0 %v2977
    %v3125 = vpop.f32.mrb[0].mxu0
    %v3126 = vadd.f32 0.0, %v3125
    %v3127 = vpop.f32.mrb[0].mxu0
    %v3128 = vadd.f32 0.0, %v3127
    %3129 = vmatprep.mubr.f32.mxu0 0.0
    %3130 = vmatmul.mubr.f32.gmra.mrb[0].mxu0 %v2980
    %v3131 = vpop.f32.mrb[0].mxu0
    %v3132 = vadd.f32 0.0, %v3131
    %v3133 = vpop.f32.mrb[0].mxu0
    %v3134 = vadd.f32 0.0, %v3133
    %3135 = vdwg.mxu0
    %s3136 = scalar_lea.vmem %s13, 2880
    %v3137 = vld [vmem:[%s3136] sm:$0xff]
    %v3138 = vld [vmem:[%s3136 + $0x8] sm:$0xff]
    %v3139 = vld [vmem:[%s3136 + $0x10] sm:$0xff]
    %v3140 = vld [vmem:[%s3136 + $0x18] sm:$0xff]
    %v3141 = vld [vmem:[%s3136 + $0x20] sm:$0xff]
    %v3142 = vld [vmem:[%s3136 + $0x28] sm:$0xff]
    %v3143 = vld [vmem:[%s3136 + $0x30] sm:$0xff]
    %v3144 = vld [vmem:[%s3136 + $0x38] sm:$0xff]
    %v3145 = vld [vmem:[%s3136 + $0x40] sm:$0xff]
    %v3146 = vld [vmem:[%s3136 + $0x48] sm:$0xff]
    %v3147 = vld [vmem:[%s3136 + $0x50] sm:$0xff]
    %v3148 = vld [vmem:[%s3136 + $0x58] sm:$0xff]
    %v3149 = vld [vmem:[%s3136 + $0x60] sm:$0xff]
    %v3150 = vld [vmem:[%s3136 + $0x68] sm:$0xff]
    %v3151 = vld [vmem:[%s3136 + $0x70] sm:$0xff]
    %v3152 = vld [vmem:[%s3136 + $0x78] sm:$0xff]
    %v3153 = vld [vmem:[%s3136 + $0x80] sm:$0xff]
    %v3154 = vld [vmem:[%s3136 + $0x88] sm:$0xff]
    %v3155 = vld [vmem:[%s3136 + $0x90] sm:$0xff]
    %v3156 = vld [vmem:[%s3136 + $0x98] sm:$0xff]
    %v3157 = vld [vmem:[%s3136 + $0xa0] sm:$0xff]
    %v3158 = vld [vmem:[%s3136 + $0xa8] sm:$0xff]
    %v3159 = vld [vmem:[%s3136 + $0xb0] sm:$0xff]
    %v3160 = vld [vmem:[%s3136 + $0xb8] sm:$0xff]
    %v3161 = vld [vmem:[%s3136 + $0xc0] sm:$0xff]
    %v3162 = vld [vmem:[%s3136 + $0xc8] sm:$0xff]
    %v3163 = vld [vmem:[%s3136 + $0xd0] sm:$0xff]
    %v3164 = vld [vmem:[%s3136 + $0xd8] sm:$0xff]
    %v3165 = vld [vmem:[%s3136 + $0xe0] sm:$0xff]
    %v3166 = vld [vmem:[%s3136 + $0xe8] sm:$0xff]
    %v3167 = vld [vmem:[%s3136 + $0xf0] sm:$0xff]
    %v3168 = vld [vmem:[%s3136 + $0xf8] sm:$0xff]
    %v3169 = vld [vmem:[%s3136 + $0x100] sm:$0xff]
    %v3170 = vld [vmem:[%s3136 + $0x108] sm:$0xff]
    %v3171 = vld [vmem:[%s3136 + $0x110] sm:$0xff]
    %v3172 = vld [vmem:[%s3136 + $0x118] sm:$0xff]
    %v3173 = vld [vmem:[%s3136 + $0x120] sm:$0xff]
    %v3174 = vld [vmem:[%s3136 + $0x128] sm:$0xff]
    %v3175 = vld [vmem:[%s3136 + $0x130] sm:$0xff]
    %v3176 = vld [vmem:[%s3136 + $0x138] sm:$0xff]
    %v3177 = vld [vmem:[%s3136 + $0x140] sm:$0xff]
    %v3178 = vld [vmem:[%s3136 + $0x148] sm:$0xff]
    %v3179 = vld [vmem:[%s3136 + $0x150] sm:$0xff]
    %v3180 = vld [vmem:[%s3136 + $0x158] sm:$0xff]
    %v3181 = vld [vmem:[%s3136 + $0x160] sm:$0xff]
    %v3182 = vld [vmem:[%s3136 + $0x168] sm:$0xff]
    %v3183 = vld [vmem:[%s3136 + $0x170] sm:$0xff]
    %v3184 = vld [vmem:[%s3136 + $0x178] sm:$0xff]
    %v3185 = vld [vmem:[%s3136 + $0x180] sm:$0xff]
    %v3186 = vld [vmem:[%s3136 + $0x188] sm:$0xff]
    %v3187 = vld [vmem:[%s3136 + $0x190] sm:$0xff]
    %v3188 = vld [vmem:[%s3136 + $0x198] sm:$0xff]
    %v3189 = vld [vmem:[%s3136 + $0x1a0] sm:$0xff]
    %v3190 = vld [vmem:[%s3136 + $0x1a8] sm:$0xff]
    %v3191 = vld [vmem:[%s3136 + $0x1b0] sm:$0xff]
    %v3192 = vld [vmem:[%s3136 + $0x1b8] sm:$0xff]
    %v3193 = vld [vmem:[%s3136 + $0x1c0] sm:$0xff]
    %v3194 = vld [vmem:[%s3136 + $0x1c8] sm:$0xff]
    %v3195 = vld [vmem:[%s3136 + $0x1d0] sm:$0xff]
    %v3196 = vld [vmem:[%s3136 + $0x1d8] sm:$0xff]
    %v3197 = vld [vmem:[%s3136 + $0x1e0] sm:$0xff]
    %v3198 = vld [vmem:[%s3136 + $0x1e8] sm:$0xff]
    %v3199 = vld [vmem:[%s3136 + $0x1f0] sm:$0xff]
    %v3200 = vld [vmem:[%s3136 + $0x1f8] sm:$0xff]
    %v3201 = vld [vmem:[%s3136 + $0x200] sm:$0xff]
    %v3202 = vld [vmem:[%s3136 + $0x208] sm:$0xff]
    %v3203 = vld [vmem:[%s3136 + $0x210] sm:$0xff]
    %v3204 = vld [vmem:[%s3136 + $0x218] sm:$0xff]
    %v3205 = vld [vmem:[%s3136 + $0x220] sm:$0xff]
    %v3206 = vld [vmem:[%s3136 + $0x228] sm:$0xff]
    %v3207 = vld [vmem:[%s3136 + $0x230] sm:$0xff]
    %v3208 = vld [vmem:[%s3136 + $0x238] sm:$0xff]
    %v3209 = vld [vmem:[%s3136 + $0x240] sm:$0xff]
    %v3210 = vld [vmem:[%s3136 + $0x248] sm:$0xff]
    %v3211 = vld [vmem:[%s3136 + $0x250] sm:$0xff]
    %v3212 = vld [vmem:[%s3136 + $0x258] sm:$0xff]
    %v3213 = vld [vmem:[%s3136 + $0x260] sm:$0xff]
    %v3214 = vld [vmem:[%s3136 + $0x268] sm:$0xff]
    %v3215 = vld [vmem:[%s3136 + $0x270] sm:$0xff]
    %v3216 = vld [vmem:[%s3136 + $0x278] sm:$0xff]
    %v3217 = vld [vmem:[%s3136 + $0x280] sm:$0xff]
    %v3218 = vld [vmem:[%s3136 + $0x288] sm:$0xff]
    %v3219 = vld [vmem:[%s3136 + $0x290] sm:$0xff]
    %v3220 = vld [vmem:[%s3136 + $0x298] sm:$0xff]
    %v3221 = vld [vmem:[%s3136 + $0x2a0] sm:$0xff]
    %v3222 = vld [vmem:[%s3136 + $0x2a8] sm:$0xff]
    %v3223 = vld [vmem:[%s3136 + $0x2b0] sm:$0xff]
    %v3224 = vld [vmem:[%s3136 + $0x2b8] sm:$0xff]
    %v3225 = vld [vmem:[%s3136 + $0x2c0] sm:$0xff]
    %v3226 = vld [vmem:[%s3136 + $0x2c8] sm:$0xff]
    %v3227 = vld [vmem:[%s3136 + $0x2d0] sm:$0xff]
    %v3228 = vld [vmem:[%s3136 + $0x2d8] sm:$0xff]
    %v3229 = vld [vmem:[%s3136 + $0x2e0] sm:$0xff]
    %v3230 = vld [vmem:[%s3136 + $0x2e8] sm:$0xff]
    %v3231 = vld [vmem:[%s3136 + $0x2f0] sm:$0xff]
    %v3232 = vld [vmem:[%s3136 + $0x2f8] sm:$0xff]
    %v3233 = vld [vmem:[%s3136 + $0x300] sm:$0xff]
    %v3234 = vld [vmem:[%s3136 + $0x308] sm:$0xff]
    %v3235 = vld [vmem:[%s3136 + $0x310] sm:$0xff]
    %v3236 = vld [vmem:[%s3136 + $0x318] sm:$0xff]
    %v3237 = vld [vmem:[%s3136 + $0x320] sm:$0xff]
    %v3238 = vld [vmem:[%s3136 + $0x328] sm:$0xff]
    %v3239 = vld [vmem:[%s3136 + $0x330] sm:$0xff]
    %v3240 = vld [vmem:[%s3136 + $0x338] sm:$0xff]
    %v3241 = vld [vmem:[%s3136 + $0x340] sm:$0xff]
    %v3242 = vld [vmem:[%s3136 + $0x348] sm:$0xff]
    %v3243 = vld [vmem:[%s3136 + $0x350] sm:$0xff]
    %v3244 = vld [vmem:[%s3136 + $0x358] sm:$0xff]
    %v3245 = vld [vmem:[%s3136 + $0x360] sm:$0xff]
    %v3246 = vld [vmem:[%s3136 + $0x368] sm:$0xff]
    %v3247 = vld [vmem:[%s3136 + $0x370] sm:$0xff]
    %v3248 = vld [vmem:[%s3136 + $0x378] sm:$0xff]
    %v3249 = vld [vmem:[%s3136 + $0x380] sm:$0xff]
    %v3250 = vld [vmem:[%s3136 + $0x388] sm:$0xff]
    %v3251 = vld [vmem:[%s3136 + $0x390] sm:$0xff]
    %v3252 = vld [vmem:[%s3136 + $0x398] sm:$0xff]
    %v3253 = vld [vmem:[%s3136 + $0x3a0] sm:$0xff]
    %v3254 = vld [vmem:[%s3136 + $0x3a8] sm:$0xff]
    %v3255 = vld [vmem:[%s3136 + $0x3b0] sm:$0xff]
    %v3256 = vld [vmem:[%s3136 + $0x3b8] sm:$0xff]
    %v3257 = vld [vmem:[%s3136 + $0x3c0] sm:$0xff]
    %v3258 = vld [vmem:[%s3136 + $0x3c8] sm:$0xff]
    %v3259 = vld [vmem:[%s3136 + $0x3d0] sm:$0xff]
    %v3260 = vld [vmem:[%s3136 + $0x3d8] sm:$0xff]
    %v3261 = vld [vmem:[%s3136 + $0x3e0] sm:$0xff]
    %v3262 = vld [vmem:[%s3136 + $0x3e8] sm:$0xff]
    %v3263 = vld [vmem:[%s3136 + $0x3f0] sm:$0xff]
    %v3264 = vld [vmem:[%s3136 + $0x3f8] sm:$0xff]
    %v3265 = vld [vmem:[%s3136 + $0x400] sm:$0xff]
    %v3266 = vld [vmem:[%s3136 + $0x408] sm:$0xff]
    %v3267 = vld [vmem:[%s3136 + $0x410] sm:$0xff]
    %v3268 = vld [vmem:[%s3136 + $0x418] sm:$0xff]
    %v3269 = vld [vmem:[%s3136 + $0x420] sm:$0xff]
    %v3270 = vld [vmem:[%s3136 + $0x428] sm:$0xff]
    %v3271 = vld [vmem:[%s3136 + $0x430] sm:$0xff]
    %v3272 = vld [vmem:[%s3136 + $0x438] sm:$0xff]
    %v3273 = vld [vmem:[%s3136 + $0x440] sm:$0xff]
    %v3274 = vld [vmem:[%s3136 + $0x448] sm:$0xff]
    %v3275 = vld [vmem:[%s3136 + $0x450] sm:$0xff]
    %v3276 = vld [vmem:[%s3136 + $0x458] sm:$0xff]
    %v3277 = vld [vmem:[%s3136 + $0x460] sm:$0xff]
    %v3278 = vld [vmem:[%s3136 + $0x468] sm:$0xff]
    %v3279 = vld [vmem:[%s3136 + $0x470] sm:$0xff]
    %v3280 = vld [vmem:[%s3136 + $0x478] sm:$0xff]
    %v3281 = vld [vmem:[%s3136 + $0x480] sm:$0xff]
    %v3282 = vld [vmem:[%s3136 + $0x488] sm:$0xff]
    %v3283 = vld [vmem:[%s3136 + $0x490] sm:$0xff]
    %v3284 = vld [vmem:[%s3136 + $0x498] sm:$0xff]
    %v3285 = vld [vmem:[%s3136 + $0x4a0] sm:$0xff]
    %v3286 = vld [vmem:[%s3136 + $0x4a8] sm:$0xff]
    %v3287 = vld [vmem:[%s3136 + $0x4b0] sm:$0xff]
    %v3288 = vld [vmem:[%s3136 + $0x4b8] sm:$0xff]
    %v3289 = vld [vmem:[%s3136 + $0x4c0] sm:$0xff]
    %v3290 = vld [vmem:[%s3136 + $0x4c8] sm:$0xff]
    %v3291 = vld [vmem:[%s3136 + $0x4d0] sm:$0xff]
    %v3292 = vld [vmem:[%s3136 + $0x4d8] sm:$0xff]
    %v3293 = vld [vmem:[%s3136 + $0x4e0] sm:$0xff]
    %v3294 = vld [vmem:[%s3136 + $0x4e8] sm:$0xff]
    %v3295 = vld [vmem:[%s3136 + $0x4f0] sm:$0xff]
    %v3296 = vld [vmem:[%s3136 + $0x4f8] sm:$0xff]
    %v3297 = vld [vmem:[%s3136 + $0x500] sm:$0xff]
    %v3298 = vld [vmem:[%s3136 + $0x508] sm:$0xff]
    %v3299 = vld [vmem:[%s3136 + $0x510] sm:$0xff]
    %v3300 = vld [vmem:[%s3136 + $0x518] sm:$0xff]
    %v3301 = vld [vmem:[%s3136 + $0x520] sm:$0xff]
    %v3302 = vld [vmem:[%s3136 + $0x528] sm:$0xff]
    %v3303 = vld [vmem:[%s3136 + $0x530] sm:$0xff]
    %v3304 = vld [vmem:[%s3136 + $0x538] sm:$0xff]
    %v3305 = vld [vmem:[%s3136 + $0x540] sm:$0xff]
    %v3306 = vld [vmem:[%s3136 + $0x548] sm:$0xff]
    %v3307 = vld [vmem:[%s3136 + $0x550] sm:$0xff]
    %v3308 = vld [vmem:[%s3136 + $0x558] sm:$0xff]
    %v3309 = vld [vmem:[%s3136 + $0x560] sm:$0xff]
    %v3310 = vld [vmem:[%s3136 + $0x568] sm:$0xff]
    %v3311 = vld [vmem:[%s3136 + $0x570] sm:$0xff]
    %v3312 = vld [vmem:[%s3136 + $0x578] sm:$0xff]
    %v3313 = vld [vmem:[%s3136 + $0x580] sm:$0xff]
    %v3314 = vld [vmem:[%s3136 + $0x588] sm:$0xff]
    %v3315 = vld [vmem:[%s3136 + $0x590] sm:$0xff]
    %v3316 = vld [vmem:[%s3136 + $0x598] sm:$0xff]
    %v3318 = vsel %vm504, %v3128, 0
    %v3321 = vsel %vm504, %v3134, 0
    %3323 = vmatprep.subr.mxu0 %v3138
    %3324 = vmatpush1.msra.mxu0 %v3137
    %3325 = vmatprep.subr.mxu0 %v3141
    %3326 = vmatpush1.msra.mxu0 %v3140
    %3327 = vmatprep.subr.mxu0 %v3144
    %3328 = vmatpush1.msra.mxu0 %v3143
    %3329 = vmatprep.subr.mxu0 %v3147
    %3330 = vmatpush1.msra.mxu0 %v3146
    %3331 = vmatprep.subr.mxu0 %v3150
    %3332 = vmatpush1.msra.mxu0 %v3149
    %3333 = vmatprep.subr.mxu0 %v3153
    %3334 = vmatpush1.msra.mxu0 %v3152
    %3335 = vmatprep.subr.mxu0 %v3156
    %3336 = vmatpush1.msra.mxu0 %v3155
    %3337 = vmatprep.subr.mxu0 %v3159
    %3338 = vmatpush1.msra.mxu0 %v3158
    %3339 = vmatprep.subr.mxu0 %v3162
    %3340 = vmatpush1.msra.mxu0 %v3161
    %3341 = vmatprep.subr.mxu0 %v3165
    %3342 = vmatpush1.msra.mxu0 %v3164
    %3343 = vmatprep.subr.mxu0 %v3168
    %3344 = vmatpush1.msra.mxu0 %v3167
    %3345 = vmatprep.subr.mxu0 %v3171
    %3346 = vmatpush1.msra.mxu0 %v3170
    %3347 = vmatprep.subr.mxu0 %v3174
    %3348 = vmatpush1.msra.mxu0 %v3173
    %3349 = vmatprep.subr.mxu0 %v3177
    %3350 = vmatpush1.msra.mxu0 %v3176
    %3351 = vmatprep.subr.mxu0 %v3180
    %3352 = vmatpush1.msra.mxu0 %v3179
    %3353 = vmatprep.subr.mxu0 %v3183
    %3354 = vmatpush1.msra.mxu0 %v3182
    %3355 = vmatprep.subr.mxu0 %v3186
    %3356 = vmatpush1.msra.mxu0 %v3185
    %3357 = vmatprep.subr.mxu0 %v3189
    %3358 = vmatpush1.msra.mxu0 %v3188
    %3359 = vmatprep.subr.mxu0 %v3192
    %3360 = vmatpush1.msra.mxu0 %v3191
    %3361 = vmatprep.subr.mxu0 %v3195
    %3362 = vmatpush1.msra.mxu0 %v3194
    %3363 = vmatprep.subr.mxu0 %v3198
    %3364 = vmatpush1.msra.mxu0 %v3197
    %3365 = vmatprep.subr.mxu0 %v3201
    %3366 = vmatpush1.msra.mxu0 %v3200
    %3367 = vmatprep.subr.mxu0 %v3204
    %3368 = vmatpush1.msra.mxu0 %v3203
    %3369 = vmatprep.subr.mxu0 %v3207
    %3370 = vmatpush1.msra.mxu0 %v3206
    %3371 = vmatprep.subr.mxu0 %v3210
    %3372 = vmatpush1.msra.mxu0 %v3209
    %3373 = vmatprep.subr.mxu0 %v3213
    %3374 = vmatpush1.msra.mxu0 %v3212
    %3375 = vmatprep.subr.mxu0 %v3216
    %3376 = vmatpush1.msra.mxu0 %v3215
    %3377 = vmatprep.subr.mxu0 %v3219
    %3378 = vmatpush1.msra.mxu0 %v3218
    %3379 = vmatprep.subr.mxu0 %v3222
    %3380 = vmatpush1.msra.mxu0 %v3221
    %3381 = vmatprep.subr.mxu0 %v3225
    %3382 = vmatpush1.msra.mxu0 %v3224
    %3383 = vmatprep.subr.mxu0 %v3228
    %3384 = vmatpush1.msra.mxu0 %v3227
    %3385 = vmatprep.subr.mxu0 %v3231
    %3386 = vmatpush1.msra.mxu0 %v3230
    %3387 = vmatprep.mubr.f32.mxu0 %v3051
    %3388 = vmatmul.mubr.f32.gmra.mrb[0].mxu0 %v3049
    %v3389 = vpop.f32.mrb[0].mxu0
    %v3390 = vadd.f32 0.0, %v3389
    %v3391 = vpop.f32.mrb[0].mxu0
    %v3392 = vadd.f32 0.0, %v3391
    %3393 = vmatprep.mubr.f32.mxu0 %v3057
    %3394 = vmatmul.mubr.f32.gmra.mrb[0].mxu0 %v3055
    %v3395 = vpop.f32.mrb[0].mxu0
    %v3396 = vadd.f32 0.0, %v3395
    %v3397 = vpop.f32.mrb[0].mxu0
    %v3398 = vadd.f32 0.0, %v3397
    %3399 = vdwg.mxu0
    %3400 = vmatprep.subr.mxu0 %v3234
    %3401 = vmatpush1.msra.mxu0 %v3233
    %3402 = vmatprep.subr.mxu0 %v3237
    %3403 = vmatpush1.msra.mxu0 %v3236
    %3404 = vmatprep.subr.mxu0 %v3240
    %3405 = vmatpush1.msra.mxu0 %v3239
    %3406 = vmatprep.subr.mxu0 %v3243
    %3407 = vmatpush1.msra.mxu0 %v3242
    %3408 = vmatprep.subr.mxu0 %v3246
    %3409 = vmatpush1.msra.mxu0 %v3245
    %3410 = vmatprep.subr.mxu0 %v3249
    %3411 = vmatpush1.msra.mxu0 %v3248
    %3412 = vmatprep.subr.mxu0 %v3252
    %3413 = vmatpush1.msra.mxu0 %v3251
    %3414 = vmatprep.subr.mxu0 %v3255
    %3415 = vmatpush1.msra.mxu0 %v3254
    %3416 = vmatprep.subr.mxu0 %v3258
    %3417 = vmatpush1.msra.mxu0 %v3257
    %3418 = vmatprep.subr.mxu0 %v3261
    %3419 = vmatpush1.msra.mxu0 %v3260
    %3420 = vmatprep.subr.mxu0 %v3264
    %3421 = vmatpush1.msra.mxu0 %v3263
    %3422 = vmatprep.subr.mxu0 %v3267
    %3423 = vmatpush1.msra.mxu0 %v3266
    %3424 = vmatprep.subr.mxu0 %v3270
    %3425 = vmatpush1.msra.mxu0 %v3269
    %3426 = vmatprep.subr.mxu0 %v3273
    %3427 = vmatpush1.msra.mxu0 %v3272
    %3428 = vmatprep.subr.mxu0 %v3276
    %3429 = vmatpush1.msra.mxu0 %v3275
    %3430 = vmatprep.subr.mxu0 %v3279
    %3431 = vmatpush1.msra.mxu0 %v3278
    %3432 = vmatprep.subr.mxu0 %v3282
    %3433 = vmatpush1.msra.mxu0 %v3281
    %3434 = vmatprep.subr.mxu0 %v3285
    %3435 = vmatpush1.msra.mxu0 %v3284
    %3436 = vmatprep.subr.mxu0 %v3288
    %3437 = vmatpush1.msra.mxu0 %v3287
    %3438 = vmatprep.subr.mxu0 %v3291
    %3439 = vmatpush1.msra.mxu0 %v3290
    %3440 = vmatprep.subr.mxu0 %v3294
    %3441 = vmatpush1.msra.mxu0 %v3293
    %3442 = vmatprep.subr.mxu0 %v3297
    %3443 = vmatpush1.msra.mxu0 %v3296
    %3444 = vmatprep.subr.mxu0 %v3300
    %3445 = vmatpush1.msra.mxu0 %v3299
    %3446 = vmatprep.subr.mxu0 %v3303
    %3447 = vmatpush1.msra.mxu0 %v3302
    %3448 = vmatprep.subr.mxu0 %v3306
    %3449 = vmatpush1.msra.mxu0 %v3305
    %3450 = vmatprep.subr.mxu0 %v3309
    %3451 = vmatpush1.msra.mxu0 %v3308
    %3452 = vmatprep.subr.mxu0 %v3312
    %3453 = vmatpush1.msra.mxu0 %v3311
    %3454 = vmatprep.subr.mxu0 %v3315
    %3455 = vmatpush1.msra.mxu0 %v3314
    %3456 = vmatprep.subr.mxu0 0.0
    %3457 = vmatpush1.msra.mxu0 0.0
    %3458 = vmatprep.subr.mxu0 0.0
    %3459 = vmatpush1.msra.mxu0 0.0
    %3460 = vmatprep.subr.mxu0 0.0
    %3461 = vmatpush1.msra.mxu0 0.0
    %3462 = vmatprep.subr.mxu0 0.0
    %3463 = vmatpush1.msra.mxu0 0.0
    %3464 = vmatprep.mubr.f32.mxu0 %v3318
    %3465 = vmatmul.mubr.f32.gmra.mrb[0].mxu0 %v3126
    %v3466 = vpop.f32.mrb[0].mxu0
    %v3467 = vadd.f32 %v3390, %v3466
    %v3468 = vpop.f32.mrb[0].mxu0
    %v3469 = vadd.f32 %v3392, %v3468
    %3470 = vmatprep.mubr.f32.mxu0 %v3321
    %3471 = vmatmul.mubr.f32.gmra.mrb[0].mxu0 %v3132
    %v3472 = vpop.f32.mrb[0].mxu0
    %v3473 = vadd.f32 %v3396, %v3472
    %v3474 = vpop.f32.mrb[0].mxu0
    %v3475 = vadd.f32 %v3398, %v3474
    %3476 = vdwg.mxu0
    %3477 = vmatprep.subr.mxu0 0.0
    %3478 = vmatpush1.msra.mxu0 %v3139
    %3479 = vmatprep.subr.mxu0 0.0
    %3480 = vmatpush1.msra.mxu0 %v3142
    %3481 = vmatprep.subr.mxu0 0.0
    %3482 = vmatpush1.msra.mxu0 %v3145
    %3483 = vmatprep.subr.mxu0 0.0
    %3484 = vmatpush1.msra.mxu0 %v3148
    %3485 = vmatprep.subr.mxu0 0.0
    %3486 = vmatpush1.msra.mxu0 %v3151
    %3487 = vmatprep.subr.mxu0 0.0
    %3488 = vmatpush1.msra.mxu0 %v3154
    %3489 = vmatprep.subr.mxu0 0.0
    %3490 = vmatpush1.msra.mxu0 %v3157
    %3491 = vmatprep.subr.mxu0 0.0
    %3492 = vmatpush1.msra.mxu0 %v3160
    %3493 = vmatprep.subr.mxu0 0.0
    %3494 = vmatpush1.msra.mxu0 %v3163
    %3495 = vmatprep.subr.mxu0 0.0
    %3496 = vmatpush1.msra.mxu0 %v3166
    %3497 = vmatprep.subr.mxu0 0.0
    %3498 = vmatpush1.msra.mxu0 %v3169
    %3499 = vmatprep.subr.mxu0 0.0
    %3500 = vmatpush1.msra.mxu0 %v3172
    %3501 = vmatprep.subr.mxu0 0.0
    %3502 = vmatpush1.msra.mxu0 %v3175
    %3503 = vmatprep.subr.mxu0 0.0
    %3504 = vmatpush1.msra.mxu0 %v3178
    %3505 = vmatprep.subr.mxu0 0.0
    %3506 = vmatpush1.msra.mxu0 %v3181
    %3507 = vmatprep.subr.mxu0 0.0
    %3508 = vmatpush1.msra.mxu0 %v3184
    %3509 = vmatprep.subr.mxu0 0.0
    %3510 = vmatpush1.msra.mxu0 %v3187
    %3511 = vmatprep.subr.mxu0 0.0
    %3512 = vmatpush1.msra.mxu0 %v3190
    %3513 = vmatprep.subr.mxu0 0.0
    %3514 = vmatpush1.msra.mxu0 %v3193
    %3515 = vmatprep.subr.mxu0 0.0
    %3516 = vmatpush1.msra.mxu0 %v3196
    %3517 = vmatprep.subr.mxu0 0.0
    %3518 = vmatpush1.msra.mxu0 %v3199
    %3519 = vmatprep.subr.mxu0 0.0
    %3520 = vmatpush1.msra.mxu0 %v3202
    %3521 = vmatprep.subr.mxu0 0.0
    %3522 = vmatpush1.msra.mxu0 %v3205
    %3523 = vmatprep.subr.mxu0 0.0
    %3524 = vmatpush1.msra.mxu0 %v3208
    %3525 = vmatprep.subr.mxu0 0.0
    %3526 = vmatpush1.msra.mxu0 %v3211
    %3527 = vmatprep.subr.mxu0 0.0
    %3528 = vmatpush1.msra.mxu0 %v3214
    %3529 = vmatprep.subr.mxu0 0.0
    %3530 = vmatpush1.msra.mxu0 %v3217
    %3531 = vmatprep.subr.mxu0 0.0
    %3532 = vmatpush1.msra.mxu0 %v3220
    %3533 = vmatprep.subr.mxu0 0.0
    %3534 = vmatpush1.msra.mxu0 %v3223
    %3535 = vmatprep.subr.mxu0 0.0
    %3536 = vmatpush1.msra.mxu0 %v3226
    %3537 = vmatprep.subr.mxu0 0.0
    %3538 = vmatpush1.msra.mxu0 %v3229
    %3539 = vmatprep.subr.mxu0 0.0
    %3540 = vmatpush1.msra.mxu0 %v3232
    %3541 = vmatprep.mubr.f32.mxu0 %v3051
    %3542 = vmatmul.mubr.f32.gmra.mrb[0].mxu0 %v3049
    %v3543 = vpop.f32.mrb[0].mxu0
    %v3544 = vadd.f32 0.0, %v3543
    %v3545 = vpop.f32.mrb[0].mxu0
    %3546 = vmatprep.mubr.f32.mxu0 %v3057
    %3547 = vmatmul.mubr.f32.gmra.mrb[0].mxu0 %v3055
    %v3548 = vpop.f32.mrb[0].mxu0
    %v3549 = vadd.f32 0.0, %v3548
    %v3550 = vpop.f32.mrb[0].mxu0
    %3551 = vdwg.mxu0
    %3552 = vmatprep.subr.mxu0 0.0
    %3553 = vmatpush1.msra.mxu0 %v3235
    %3554 = vmatprep.subr.mxu0 0.0
    %3555 = vmatpush1.msra.mxu0 %v3238
    %3556 = vmatprep.subr.mxu0 0.0
    %3557 = vmatpush1.msra.mxu0 %v3241
    %3558 = vmatprep.subr.mxu0 0.0
    %3559 = vmatpush1.msra.mxu0 %v3244
    %3560 = vmatprep.subr.mxu0 0.0
    %3561 = vmatpush1.msra.mxu0 %v3247
    %3562 = vmatprep.subr.mxu0 0.0
    %3563 = vmatpush1.msra.mxu0 %v3250
    %3564 = vmatprep.subr.mxu0 0.0
    %3565 = vmatpush1.msra.mxu0 %v3253
    %3566 = vmatprep.subr.mxu0 0.0
    %3567 = vmatpush1.msra.mxu0 %v3256
    %3568 = vmatprep.subr.mxu0 0.0
    %3569 = vmatpush1.msra.mxu0 %v3259
    %3570 = vmatprep.subr.mxu0 0.0
    %3571 = vmatpush1.msra.mxu0 %v3262
    %3572 = vmatprep.subr.mxu0 0.0
    %3573 = vmatpush1.msra.mxu0 %v3265
    %3574 = vmatprep.subr.mxu0 0.0
    %3575 = vmatpush1.msra.mxu0 %v3268
    %3576 = vmatprep.subr.mxu0 0.0
    %3577 = vmatpush1.msra.mxu0 %v3271
    %3578 = vmatprep.subr.mxu0 0.0
    %3579 = vmatpush1.msra.mxu0 %v3274
    %3580 = vmatprep.subr.mxu0 0.0
    %3581 = vmatpush1.msra.mxu0 %v3277
    %3582 = vmatprep.subr.mxu0 0.0
    %3583 = vmatpush1.msra.mxu0 %v3280
    %3584 = vmatprep.subr.mxu0 0.0
    %3585 = vmatpush1.msra.mxu0 %v3283
    %3586 = vmatprep.subr.mxu0 0.0
    %3587 = vmatpush1.msra.mxu0 %v3286
    %3588 = vmatprep.subr.mxu0 0.0
    %3589 = vmatpush1.msra.mxu0 %v3289
    %3590 = vmatprep.subr.mxu0 0.0
    %3591 = vmatpush1.msra.mxu0 %v3292
    %3592 = vmatprep.subr.mxu0 0.0
    %3593 = vmatpush1.msra.mxu0 %v3295
    %3594 = vmatprep.subr.mxu0 0.0
    %3595 = vmatpush1.msra.mxu0 %v3298
    %3596 = vmatprep.subr.mxu0 0.0
    %3597 = vmatpush1.msra.mxu0 %v3301
    %3598 = vmatprep.subr.mxu0 0.0
    %3599 = vmatpush1.msra.mxu0 %v3304
    %3600 = vmatprep.subr.mxu0 0.0
    %3601 = vmatpush1.msra.mxu0 %v3307
    %3602 = vmatprep.subr.mxu0 0.0
    %3603 = vmatpush1.msra.mxu0 %v3310
    %3604 = vmatprep.subr.mxu0 0.0
    %3605 = vmatpush1.msra.mxu0 %v3313
    %3606 = vmatprep.subr.mxu0 0.0
    %3607 = vmatpush1.msra.mxu0 %v3316
    %3608 = vmatprep.subr.mxu0 0.0
    %3609 = vmatpush1.msra.mxu0 0.0
    %3610 = vmatprep.subr.mxu0 0.0
    %3611 = vmatpush1.msra.mxu0 0.0
    %3612 = vmatprep.subr.mxu0 0.0
    %3613 = vmatpush1.msra.mxu0 0.0
    %3614 = vmatprep.subr.mxu0 0.0
    %3615 = vmatpush1.msra.mxu0 0.0
    %3616 = vmatprep.mubr.f32.mxu0 %v3318
    %3617 = vmatmul.mubr.f32.gmra.mrb[0].mxu0 %v3126
    %v3618 = vpop.f32.mrb[0].mxu0
    %v3619 = vadd.f32 %v3544, %v3618
    %v3620 = vpop.f32.mrb[0].mxu0
    %3621 = vmatprep.mubr.f32.mxu0 %v3321
    %3622 = vmatmul.mubr.f32.gmra.mrb[0].mxu0 %v3132
    %v3623 = vpop.f32.mrb[0].mxu0
    %v3624 = vadd.f32 %v3549, %v3623
    %v3625 = vpop.f32.mrb[0].mxu0
    %3626 = vdwg.mxu0
    %v3627 = vadd.f32 %v2813, %v3467
    %v3628 = vadd.f32 %v2815, %v3469
    %v3629 = vadd.f32 %v2965, %v3619
    %v3630 = vadd.f32 %v2819, %v3473
    %v3631 = vadd.f32 %v2821, %v3475
    %v3632 = vadd.f32 %v2970, %v3624
    %s3633 = scalar_lea.vmem %s11, 48
    %v3634 = vld [vmem:[%s3633] sm:$0xff]
    %v3635 = vld [vmem:[%s3633 + $0x8] sm:$0xf]
    %v3637 = vsel %vm1655, %v3634, 0
    %v3640 = vsel %vm1655, %v3635, 0
    %3642 = vmatprep.subr.mxu0 %v1638
    %3643 = vmatpush1.msra.mxu0 %v1637
    %3644 = vmatprep.subr.mxu0 %v1642
    %3645 = vmatpush1.msra.mxu0 %v1641
    %3646 = vmatprep.subr.mxu0 %v1646
    %3647 = vmatpush1.msra.mxu0 %v1645
    %3648 = vmatprep.subr.mxu0 %v1667
    %3649 = vmatpush1.msra.mxu0 %v1664
    %3650 = vmatprep.subr.mxu0 0.0
    %3651 = vmatpush1.msra.mxu0 0.0
    %3652 = vmatprep.subr.mxu0 0.0
    %3653 = vmatpush1.msra.mxu0 0.0
    %3654 = vmatprep.subr.mxu0 0.0
    %3655 = vmatpush1.msra.mxu0 0.0
    %3656 = vmatprep.subr.mxu0 0.0
    %3657 = vmatpush1.msra.mxu0 0.0
    %3658 = vmatprep.subr.mxu0 0.0
    %3659 = vmatpush1.msra.mxu0 0.0
    %3660 = vmatprep.subr.mxu0 0.0
    %3661 = vmatpush1.msra.mxu0 0.0
    %3662 = vmatprep.subr.mxu0 0.0
    %3663 = vmatpush1.msra.mxu0 0.0
    %3664 = vmatprep.subr.mxu0 0.0
    %3665 = vmatpush1.msra.mxu0 0.0
    %3666 = vmatprep.subr.mxu0 0.0
    %3667 = vmatpush1.msra.mxu0 0.0
    %3668 = vmatprep.subr.mxu0 0.0
    %3669 = vmatpush1.msra.mxu0 0.0
    %3670 = vmatprep.subr.mxu0 0.0
    %3671 = vmatpush1.msra.mxu0 0.0
    %3672 = vmatprep.subr.mxu0 0.0
    %3673 = vmatpush1.msra.mxu0 0.0
    %3674 = vmatprep.subr.mxu0 0.0
    %3675 = vmatpush1.msra.mxu0 0.0
    %3676 = vmatprep.subr.mxu0 0.0
    %3677 = vmatpush1.msra.mxu0 0.0
    %3678 = vmatprep.subr.mxu0 0.0
    %3679 = vmatpush1.msra.mxu0 0.0
    %3680 = vmatprep.subr.mxu0 0.0
    %3681 = vmatpush1.msra.mxu0 0.0
    %3682 = vmatprep.subr.mxu0 0.0
    %3683 = vmatpush1.msra.mxu0 0.0
    %3684 = vmatprep.subr.mxu0 0.0
    %3685 = vmatpush1.msra.mxu0 0.0
    %3686 = vmatprep.subr.mxu0 0.0
    %3687 = vmatpush1.msra.mxu0 0.0
    %3688 = vmatprep.subr.mxu0 0.0
    %3689 = vmatpush1.msra.mxu0 0.0
    %3690 = vmatprep.subr.mxu0 0.0
    %3691 = vmatpush1.msra.mxu0 0.0
    %3692 = vmatprep.subr.mxu0 0.0
    %3693 = vmatpush1.msra.mxu0 0.0
    %3694 = vmatprep.subr.mxu0 0.0
    %3695 = vmatpush1.msra.mxu0 0.0
    %3696 = vmatprep.subr.mxu0 0.0
    %3697 = vmatpush1.msra.mxu0 0.0
    %3698 = vmatprep.subr.mxu0 0.0
    %3699 = vmatpush1.msra.mxu0 0.0
    %3700 = vmatprep.subr.mxu0 0.0
    %3701 = vmatpush1.msra.mxu0 0.0
    %3702 = vmatprep.subr.mxu0 0.0
    %3703 = vmatpush1.msra.mxu0 0.0
    %3704 = vmatprep.subr.mxu0 0.0
    %3705 = vmatpush1.msra.mxu0 0.0
    %3706 = vmatprep.mubr.f32.mxu0 0.0
    %3707 = vmatmul.mubr.f32.gmra.mrb[0].mxu0 %v3637
    %v3708 = vpop.f32.mrb[0].mxu0
    %v3709 = vadd.f32 0.0, %v3708
    %v3710 = vpop.f32.mrb[0].mxu0
    %v3711 = vadd.f32 0.0, %v3710
    %3712 = vmatprep.mubr.f32.mxu0 0.0
    %3713 = vmatmul.mubr.f32.gmra.mrb[0].mxu0 %v3640
    %v3714 = vpop.f32.mrb[0].mxu0
    %v3715 = vadd.f32 0.0, %v3714
    %v3716 = vpop.f32.mrb[0].mxu0
    %v3717 = vadd.f32 0.0, %v3716
    %3718 = vdwg.mxu0
    %3719 = vmatprep.subr.mxu0 %v1640
    %3720 = vmatpush1.msra.mxu0 %v1639
    %3721 = vmatprep.subr.mxu0 %v1644
    %3722 = vmatpush1.msra.mxu0 %v1643
    %3723 = vmatprep.subr.mxu0 %v1648
    %3724 = vmatpush1.msra.mxu0 %v1647
    %3725 = vmatprep.subr.mxu0 %v1673
    %3726 = vmatpush1.msra.mxu0 %v1670
    %3727 = vmatprep.subr.mxu0 0.0
    %3728 = vmatpush1.msra.mxu0 0.0
    %3729 = vmatprep.subr.mxu0 0.0
    %3730 = vmatpush1.msra.mxu0 0.0
    %3731 = vmatprep.subr.mxu0 0.0
    %3732 = vmatpush1.msra.mxu0 0.0
    %3733 = vmatprep.subr.mxu0 0.0
    %3734 = vmatpush1.msra.mxu0 0.0
    %3735 = vmatprep.subr.mxu0 0.0
    %3736 = vmatpush1.msra.mxu0 0.0
    %3737 = vmatprep.subr.mxu0 0.0
    %3738 = vmatpush1.msra.mxu0 0.0
    %3739 = vmatprep.subr.mxu0 0.0
    %3740 = vmatpush1.msra.mxu0 0.0
    %3741 = vmatprep.subr.mxu0 0.0
    %3742 = vmatpush1.msra.mxu0 0.0
    %3743 = vmatprep.subr.mxu0 0.0
    %3744 = vmatpush1.msra.mxu0 0.0
    %3745 = vmatprep.subr.mxu0 0.0
    %3746 = vmatpush1.msra.mxu0 0.0
    %3747 = vmatprep.subr.mxu0 0.0
    %3748 = vmatpush1.msra.mxu0 0.0
    %3749 = vmatprep.subr.mxu0 0.0
    %3750 = vmatpush1.msra.mxu0 0.0
    %3751 = vmatprep.subr.mxu0 0.0
    %3752 = vmatpush1.msra.mxu0 0.0
    %3753 = vmatprep.subr.mxu0 0.0
    %3754 = vmatpush1.msra.mxu0 0.0
    %3755 = vmatprep.subr.mxu0 0.0
    %3756 = vmatpush1.msra.mxu0 0.0
    %3757 = vmatprep.subr.mxu0 0.0
    %3758 = vmatpush1.msra.mxu0 0.0
    %3759 = vmatprep.subr.mxu0 0.0
    %3760 = vmatpush1.msra.mxu0 0.0
    %3761 = vmatprep.subr.mxu0 0.0
    %3762 = vmatpush1.msra.mxu0 0.0
    %3763 = vmatprep.subr.mxu0 0.0
    %3764 = vmatpush1.msra.mxu0 0.0
    %3765 = vmatprep.subr.mxu0 0.0
    %3766 = vmatpush1.msra.mxu0 0.0
    %3767 = vmatprep.subr.mxu0 0.0
    %3768 = vmatpush1.msra.mxu0 0.0
    %3769 = vmatprep.subr.mxu0 0.0
    %3770 = vmatpush1.msra.mxu0 0.0
    %3771 = vmatprep.subr.mxu0 0.0
    %3772 = vmatpush1.msra.mxu0 0.0
    %3773 = vmatprep.subr.mxu0 0.0
    %3774 = vmatpush1.msra.mxu0 0.0
    %3775 = vmatprep.subr.mxu0 0.0
    %3776 = vmatpush1.msra.mxu0 0.0
    %3777 = vmatprep.subr.mxu0 0.0
    %3778 = vmatpush1.msra.mxu0 0.0
    %3779 = vmatprep.subr.mxu0 0.0
    %3780 = vmatpush1.msra.mxu0 0.0
    %3781 = vmatprep.subr.mxu0 0.0
    %3782 = vmatpush1.msra.mxu0 0.0
    %3783 = vmatprep.mubr.f32.mxu0 0.0
    %3784 = vmatmul.mubr.f32.gmra.mrb[0].mxu0 %v3637
    %v3785 = vpop.f32.mrb[0].mxu0
    %v3786 = vadd.f32 0.0, %v3785
    %v3787 = vpop.f32.mrb[0].mxu0
    %v3788 = vadd.f32 0.0, %v3787
    %3789 = vmatprep.mubr.f32.mxu0 0.0
    %3790 = vmatmul.mubr.f32.gmra.mrb[0].mxu0 %v3640
    %v3791 = vpop.f32.mrb[0].mxu0
    %v3792 = vadd.f32 0.0, %v3791
    %v3793 = vpop.f32.mrb[0].mxu0
    %v3794 = vadd.f32 0.0, %v3793
    %3795 = vdwg.mxu0
    %s3796 = scalar_lea.vmem %s13, 4320
    %v3797 = vld [vmem:[%s3796] sm:$0xff]
    %v3798 = vld [vmem:[%s3796 + $0x8] sm:$0xff]
    %v3799 = vld [vmem:[%s3796 + $0x10] sm:$0xff]
    %v3800 = vld [vmem:[%s3796 + $0x18] sm:$0xff]
    %v3801 = vld [vmem:[%s3796 + $0x20] sm:$0xff]
    %v3802 = vld [vmem:[%s3796 + $0x28] sm:$0xff]
    %v3803 = vld [vmem:[%s3796 + $0x30] sm:$0xff]
    %v3804 = vld [vmem:[%s3796 + $0x38] sm:$0xff]
    %v3805 = vld [vmem:[%s3796 + $0x40] sm:$0xff]
    %v3806 = vld [vmem:[%s3796 + $0x48] sm:$0xff]
    %v3807 = vld [vmem:[%s3796 + $0x50] sm:$0xff]
    %v3808 = vld [vmem:[%s3796 + $0x58] sm:$0xff]
    %v3809 = vld [vmem:[%s3796 + $0x60] sm:$0xff]
    %v3810 = vld [vmem:[%s3796 + $0x68] sm:$0xff]
    %v3811 = vld [vmem:[%s3796 + $0x70] sm:$0xff]
    %v3812 = vld [vmem:[%s3796 + $0x78] sm:$0xff]
    %v3813 = vld [vmem:[%s3796 + $0x80] sm:$0xff]
    %v3814 = vld [vmem:[%s3796 + $0x88] sm:$0xff]
    %v3815 = vld [vmem:[%s3796 + $0x90] sm:$0xff]
    %v3816 = vld [vmem:[%s3796 + $0x98] sm:$0xff]
    %v3817 = vld [vmem:[%s3796 + $0xa0] sm:$0xff]
    %v3818 = vld [vmem:[%s3796 + $0xa8] sm:$0xff]
    %v3819 = vld [vmem:[%s3796 + $0xb0] sm:$0xff]
    %v3820 = vld [vmem:[%s3796 + $0xb8] sm:$0xff]
    %v3821 = vld [vmem:[%s3796 + $0xc0] sm:$0xff]
    %v3822 = vld [vmem:[%s3796 + $0xc8] sm:$0xff]
    %v3823 = vld [vmem:[%s3796 + $0xd0] sm:$0xff]
    %v3824 = vld [vmem:[%s3796 + $0xd8] sm:$0xff]
    %v3825 = vld [vmem:[%s3796 + $0xe0] sm:$0xff]
    %v3826 = vld [vmem:[%s3796 + $0xe8] sm:$0xff]
    %v3827 = vld [vmem:[%s3796 + $0xf0] sm:$0xff]
    %v3828 = vld [vmem:[%s3796 + $0xf8] sm:$0xff]
    %v3829 = vld [vmem:[%s3796 + $0x100] sm:$0xff]
    %v3830 = vld [vmem:[%s3796 + $0x108] sm:$0xff]
    %v3831 = vld [vmem:[%s3796 + $0x110] sm:$0xff]
    %v3832 = vld [vmem:[%s3796 + $0x118] sm:$0xff]
    %v3833 = vld [vmem:[%s3796 + $0x120] sm:$0xff]
    %v3834 = vld [vmem:[%s3796 + $0x128] sm:$0xff]
    %v3835 = vld [vmem:[%s3796 + $0x130] sm:$0xff]
    %v3836 = vld [vmem:[%s3796 + $0x138] sm:$0xff]
    %v3837 = vld [vmem:[%s3796 + $0x140] sm:$0xff]
    %v3838 = vld [vmem:[%s3796 + $0x148] sm:$0xff]
    %v3839 = vld [vmem:[%s3796 + $0x150] sm:$0xff]
    %v3840 = vld [vmem:[%s3796 + $0x158] sm:$0xff]
    %v3841 = vld [vmem:[%s3796 + $0x160] sm:$0xff]
    %v3842 = vld [vmem:[%s3796 + $0x168] sm:$0xff]
    %v3843 = vld [vmem:[%s3796 + $0x170] sm:$0xff]
    %v3844 = vld [vmem:[%s3796 + $0x178] sm:$0xff]
    %v3845 = vld [vmem:[%s3796 + $0x180] sm:$0xff]
    %v3846 = vld [vmem:[%s3796 + $0x188] sm:$0xff]
    %v3847 = vld [vmem:[%s3796 + $0x190] sm:$0xff]
    %v3848 = vld [vmem:[%s3796 + $0x198] sm:$0xff]
    %v3849 = vld [vmem:[%s3796 + $0x1a0] sm:$0xff]
    %v3850 = vld [vmem:[%s3796 + $0x1a8] sm:$0xff]
    %v3851 = vld [vmem:[%s3796 + $0x1b0] sm:$0xff]
    %v3852 = vld [vmem:[%s3796 + $0x1b8] sm:$0xff]
    %v3853 = vld [vmem:[%s3796 + $0x1c0] sm:$0xff]
    %v3854 = vld [vmem:[%s3796 + $0x1c8] sm:$0xff]
    %v3855 = vld [vmem:[%s3796 + $0x1d0] sm:$0xff]
    %v3856 = vld [vmem:[%s3796 + $0x1d8] sm:$0xff]
    %v3857 = vld [vmem:[%s3796 + $0x1e0] sm:$0xff]
    %v3858 = vld [vmem:[%s3796 + $0x1e8] sm:$0xff]
    %v3859 = vld [vmem:[%s3796 + $0x1f0] sm:$0xff]
    %v3860 = vld [vmem:[%s3796 + $0x1f8] sm:$0xff]
    %v3861 = vld [vmem:[%s3796 + $0x200] sm:$0xff]
    %v3862 = vld [vmem:[%s3796 + $0x208] sm:$0xff]
    %v3863 = vld [vmem:[%s3796 + $0x210] sm:$0xff]
    %v3864 = vld [vmem:[%s3796 + $0x218] sm:$0xff]
    %v3865 = vld [vmem:[%s3796 + $0x220] sm:$0xff]
    %v3866 = vld [vmem:[%s3796 + $0x228] sm:$0xff]
    %v3867 = vld [vmem:[%s3796 + $0x230] sm:$0xff]
    %v3868 = vld [vmem:[%s3796 + $0x238] sm:$0xff]
    %v3869 = vld [vmem:[%s3796 + $0x240] sm:$0xff]
    %v3870 = vld [vmem:[%s3796 + $0x248] sm:$0xff]
    %v3871 = vld [vmem:[%s3796 + $0x250] sm:$0xff]
    %v3872 = vld [vmem:[%s3796 + $0x258] sm:$0xff]
    %v3873 = vld [vmem:[%s3796 + $0x260] sm:$0xff]
    %v3874 = vld [vmem:[%s3796 + $0x268] sm:$0xff]
    %v3875 = vld [vmem:[%s3796 + $0x270] sm:$0xff]
    %v3876 = vld [vmem:[%s3796 + $0x278] sm:$0xff]
    %v3877 = vld [vmem:[%s3796 + $0x280] sm:$0xff]
    %v3878 = vld [vmem:[%s3796 + $0x288] sm:$0xff]
    %v3879 = vld [vmem:[%s3796 + $0x290] sm:$0xff]
    %v3880 = vld [vmem:[%s3796 + $0x298] sm:$0xff]
    %v3881 = vld [vmem:[%s3796 + $0x2a0] sm:$0xff]
    %v3882 = vld [vmem:[%s3796 + $0x2a8] sm:$0xff]
    %v3883 = vld [vmem:[%s3796 + $0x2b0] sm:$0xff]
    %v3884 = vld [vmem:[%s3796 + $0x2b8] sm:$0xff]
    %v3885 = vld [vmem:[%s3796 + $0x2c0] sm:$0xff]
    %v3886 = vld [vmem:[%s3796 + $0x2c8] sm:$0xff]
    %v3887 = vld [vmem:[%s3796 + $0x2d0] sm:$0xff]
    %v3888 = vld [vmem:[%s3796 + $0x2d8] sm:$0xff]
    %v3889 = vld [vmem:[%s3796 + $0x2e0] sm:$0xff]
    %v3890 = vld [vmem:[%s3796 + $0x2e8] sm:$0xff]
    %v3891 = vld [vmem:[%s3796 + $0x2f0] sm:$0xff]
    %v3892 = vld [vmem:[%s3796 + $0x2f8] sm:$0xff]
    %v3893 = vld [vmem:[%s3796 + $0x300] sm:$0xff]
    %v3894 = vld [vmem:[%s3796 + $0x308] sm:$0xff]
    %v3895 = vld [vmem:[%s3796 + $0x310] sm:$0xff]
    %v3896 = vld [vmem:[%s3796 + $0x318] sm:$0xff]
    %v3897 = vld [vmem:[%s3796 + $0x320] sm:$0xff]
    %v3898 = vld [vmem:[%s3796 + $0x328] sm:$0xff]
    %v3899 = vld [vmem:[%s3796 + $0x330] sm:$0xff]
    %v3900 = vld [vmem:[%s3796 + $0x338] sm:$0xff]
    %v3901 = vld [vmem:[%s3796 + $0x340] sm:$0xff]
    %v3902 = vld [vmem:[%s3796 + $0x348] sm:$0xff]
    %v3903 = vld [vmem:[%s3796 + $0x350] sm:$0xff]
    %v3904 = vld [vmem:[%s3796 + $0x358] sm:$0xff]
    %v3905 = vld [vmem:[%s3796 + $0x360] sm:$0xff]
    %v3906 = vld [vmem:[%s3796 + $0x368] sm:$0xff]
    %v3907 = vld [vmem:[%s3796 + $0x370] sm:$0xff]
    %v3908 = vld [vmem:[%s3796 + $0x378] sm:$0xff]
    %v3909 = vld [vmem:[%s3796 + $0x380] sm:$0xff]
    %v3910 = vld [vmem:[%s3796 + $0x388] sm:$0xff]
    %v3911 = vld [vmem:[%s3796 + $0x390] sm:$0xff]
    %v3912 = vld [vmem:[%s3796 + $0x398] sm:$0xff]
    %v3913 = vld [vmem:[%s3796 + $0x3a0] sm:$0xff]
    %v3914 = vld [vmem:[%s3796 + $0x3a8] sm:$0xff]
    %v3915 = vld [vmem:[%s3796 + $0x3b0] sm:$0xff]
    %v3916 = vld [vmem:[%s3796 + $0x3b8] sm:$0xff]
    %v3917 = vld [vmem:[%s3796 + $0x3c0] sm:$0xff]
    %v3918 = vld [vmem:[%s3796 + $0x3c8] sm:$0xff]
    %v3919 = vld [vmem:[%s3796 + $0x3d0] sm:$0xff]
    %v3920 = vld [vmem:[%s3796 + $0x3d8] sm:$0xff]
    %v3921 = vld [vmem:[%s3796 + $0x3e0] sm:$0xff]
    %v3922 = vld [vmem:[%s3796 + $0x3e8] sm:$0xff]
    %v3923 = vld [vmem:[%s3796 + $0x3f0] sm:$0xff]
    %v3924 = vld [vmem:[%s3796 + $0x3f8] sm:$0xff]
    %v3925 = vld [vmem:[%s3796 + $0x400] sm:$0xff]
    %v3926 = vld [vmem:[%s3796 + $0x408] sm:$0xff]
    %v3927 = vld [vmem:[%s3796 + $0x410] sm:$0xff]
    %v3928 = vld [vmem:[%s3796 + $0x418] sm:$0xff]
    %v3929 = vld [vmem:[%s3796 + $0x420] sm:$0xff]
    %v3930 = vld [vmem:[%s3796 + $0x428] sm:$0xff]
    %v3931 = vld [vmem:[%s3796 + $0x430] sm:$0xff]
    %v3932 = vld [vmem:[%s3796 + $0x438] sm:$0xff]
    %v3933 = vld [vmem:[%s3796 + $0x440] sm:$0xff]
    %v3934 = vld [vmem:[%s3796 + $0x448] sm:$0xff]
    %v3935 = vld [vmem:[%s3796 + $0x450] sm:$0xff]
    %v3936 = vld [vmem:[%s3796 + $0x458] sm:$0xff]
    %v3937 = vld [vmem:[%s3796 + $0x460] sm:$0xff]
    %v3938 = vld [vmem:[%s3796 + $0x468] sm:$0xff]
    %v3939 = vld [vmem:[%s3796 + $0x470] sm:$0xff]
    %v3940 = vld [vmem:[%s3796 + $0x478] sm:$0xff]
    %v3941 = vld [vmem:[%s3796 + $0x480] sm:$0xff]
    %v3942 = vld [vmem:[%s3796 + $0x488] sm:$0xff]
    %v3943 = vld [vmem:[%s3796 + $0x490] sm:$0xff]
    %v3944 = vld [vmem:[%s3796 + $0x498] sm:$0xff]
    %v3945 = vld [vmem:[%s3796 + $0x4a0] sm:$0xff]
    %v3946 = vld [vmem:[%s3796 + $0x4a8] sm:$0xff]
    %v3947 = vld [vmem:[%s3796 + $0x4b0] sm:$0xff]
    %v3948 = vld [vmem:[%s3796 + $0x4b8] sm:$0xff]
    %v3949 = vld [vmem:[%s3796 + $0x4c0] sm:$0xff]
    %v3950 = vld [vmem:[%s3796 + $0x4c8] sm:$0xff]
    %v3951 = vld [vmem:[%s3796 + $0x4d0] sm:$0xff]
    %v3952 = vld [vmem:[%s3796 + $0x4d8] sm:$0xff]
    %v3953 = vld [vmem:[%s3796 + $0x4e0] sm:$0xff]
    %v3954 = vld [vmem:[%s3796 + $0x4e8] sm:$0xff]
    %v3955 = vld [vmem:[%s3796 + $0x4f0] sm:$0xff]
    %v3956 = vld [vmem:[%s3796 + $0x4f8] sm:$0xff]
    %v3957 = vld [vmem:[%s3796 + $0x500] sm:$0xff]
    %v3958 = vld [vmem:[%s3796 + $0x508] sm:$0xff]
    %v3959 = vld [vmem:[%s3796 + $0x510] sm:$0xff]
    %v3960 = vld [vmem:[%s3796 + $0x518] sm:$0xff]
    %v3961 = vld [vmem:[%s3796 + $0x520] sm:$0xff]
    %v3962 = vld [vmem:[%s3796 + $0x528] sm:$0xff]
    %v3963 = vld [vmem:[%s3796 + $0x530] sm:$0xff]
    %v3964 = vld [vmem:[%s3796 + $0x538] sm:$0xff]
    %v3965 = vld [vmem:[%s3796 + $0x540] sm:$0xff]
    %v3966 = vld [vmem:[%s3796 + $0x548] sm:$0xff]
    %v3967 = vld [vmem:[%s3796 + $0x550] sm:$0xff]
    %v3968 = vld [vmem:[%s3796 + $0x558] sm:$0xff]
    %v3969 = vld [vmem:[%s3796 + $0x560] sm:$0xff]
    %v3970 = vld [vmem:[%s3796 + $0x568] sm:$0xff]
    %v3971 = vld [vmem:[%s3796 + $0x570] sm:$0xff]
    %v3972 = vld [vmem:[%s3796 + $0x578] sm:$0xff]
    %v3973 = vld [vmem:[%s3796 + $0x580] sm:$0xff]
    %v3974 = vld [vmem:[%s3796 + $0x588] sm:$0xff]
    %v3975 = vld [vmem:[%s3796 + $0x590] sm:$0xff]
    %v3976 = vld [vmem:[%s3796 + $0x598] sm:$0xff]
    %v3978 = vsel %vm504, %v3788, 0
    %v3981 = vsel %vm504, %v3794, 0
    %3983 = vmatprep.subr.mxu0 %v3798
    %3984 = vmatpush1.msra.mxu0 %v3797
    %3985 = vmatprep.subr.mxu0 %v3801
    %3986 = vmatpush1.msra.mxu0 %v3800
    %3987 = vmatprep.subr.mxu0 %v3804
    %3988 = vmatpush1.msra.mxu0 %v3803
    %3989 = vmatprep.subr.mxu0 %v3807
    %3990 = vmatpush1.msra.mxu0 %v3806
    %3991 = vmatprep.subr.mxu0 %v3810
    %3992 = vmatpush1.msra.mxu0 %v3809
    %3993 = vmatprep.subr.mxu0 %v3813
    %3994 = vmatpush1.msra.mxu0 %v3812
    %3995 = vmatprep.subr.mxu0 %v3816
    %3996 = vmatpush1.msra.mxu0 %v3815
    %3997 = vmatprep.subr.mxu0 %v3819
    %3998 = vmatpush1.msra.mxu0 %v3818
    %3999 = vmatprep.subr.mxu0 %v3822
    %4000 = vmatpush1.msra.mxu0 %v3821
    %4001 = vmatprep.subr.mxu0 %v3825
    %4002 = vmatpush1.msra.mxu0 %v3824
    %4003 = vmatprep.subr.mxu0 %v3828
    %4004 = vmatpush1.msra.mxu0 %v3827
    %4005 = vmatprep.subr.mxu0 %v3831
    %4006 = vmatpush1.msra.mxu0 %v3830
    %4007 = vmatprep.subr.mxu0 %v3834
    %4008 = vmatpush1.msra.mxu0 %v3833
    %4009 = vmatprep.subr.mxu0 %v3837
    %4010 = vmatpush1.msra.mxu0 %v3836
    %4011 = vmatprep.subr.mxu0 %v3840
    %4012 = vmatpush1.msra.mxu0 %v3839
    %4013 = vmatprep.subr.mxu0 %v3843
    %4014 = vmatpush1.msra.mxu0 %v3842
    %4015 = vmatprep.subr.mxu0 %v3846
    %4016 = vmatpush1.msra.mxu0 %v3845
    %4017 = vmatprep.subr.mxu0 %v3849
    %4018 = vmatpush1.msra.mxu0 %v3848
    %4019 = vmatprep.subr.mxu0 %v3852
    %4020 = vmatpush1.msra.mxu0 %v3851
    %4021 = vmatprep.subr.mxu0 %v3855
    %4022 = vmatpush1.msra.mxu0 %v3854
    %4023 = vmatprep.subr.mxu0 %v3858
    %4024 = vmatpush1.msra.mxu0 %v3857
    %4025 = vmatprep.subr.mxu0 %v3861
    %4026 = vmatpush1.msra.mxu0 %v3860
    %4027 = vmatprep.subr.mxu0 %v3864
    %4028 = vmatpush1.msra.mxu0 %v3863
    %4029 = vmatprep.subr.mxu0 %v3867
    %4030 = vmatpush1.msra.mxu0 %v3866
    %4031 = vmatprep.subr.mxu0 %v3870
    %4032 = vmatpush1.msra.mxu0 %v3869
    %4033 = vmatprep.subr.mxu0 %v3873
    %4034 = vmatpush1.msra.mxu0 %v3872
    %4035 = vmatprep.subr.mxu0 %v3876
    %4036 = vmatpush1.msra.mxu0 %v3875
    %4037 = vmatprep.subr.mxu0 %v3879
    %4038 = vmatpush1.msra.mxu0 %v3878
    %4039 = vmatprep.subr.mxu0 %v3882
    %4040 = vmatpush1.msra.mxu0 %v3881
    %4041 = vmatprep.subr.mxu0 %v3885
    %4042 = vmatpush1.msra.mxu0 %v3884
    %4043 = vmatprep.subr.mxu0 %v3888
    %4044 = vmatpush1.msra.mxu0 %v3887
    %4045 = vmatprep.subr.mxu0 %v3891
    %4046 = vmatpush1.msra.mxu0 %v3890
    %4047 = vmatprep.mubr.f32.mxu0 %v3711
    %4048 = vmatmul.mubr.f32.gmra.mrb[0].mxu0 %v3709
    %v4049 = vpop.f32.mrb[0].mxu0
    %v4050 = vadd.f32 0.0, %v4049
    %v4051 = vpop.f32.mrb[0].mxu0
    %v4052 = vadd.f32 0.0, %v4051
    %4053 = vmatprep.mubr.f32.mxu0 %v3717
    %4054 = vmatmul.mubr.f32.gmra.mrb[0].mxu0 %v3715
    %v4055 = vpop.f32.mrb[0].mxu0
    %v4056 = vadd.f32 0.0, %v4055
    %v4057 = vpop.f32.mrb[0].mxu0
    %v4058 = vadd.f32 0.0, %v4057
    %4059 = vdwg.mxu0
    %4060 = vmatprep.subr.mxu0 %v3894
    %4061 = vmatpush1.msra.mxu0 %v3893
    %4062 = vmatprep.subr.mxu0 %v3897
    %4063 = vmatpush1.msra.mxu0 %v3896
    %4064 = vmatprep.subr.mxu0 %v3900
    %4065 = vmatpush1.msra.mxu0 %v3899
    %4066 = vmatprep.subr.mxu0 %v3903
    %4067 = vmatpush1.msra.mxu0 %v3902
    %4068 = vmatprep.subr.mxu0 %v3906
    %4069 = vmatpush1.msra.mxu0 %v3905
    %4070 = vmatprep.subr.mxu0 %v3909
    %4071 = vmatpush1.msra.mxu0 %v3908
    %4072 = vmatprep.subr.mxu0 %v3912
    %4073 = vmatpush1.msra.mxu0 %v3911
    %4074 = vmatprep.subr.mxu0 %v3915
    %4075 = vmatpush1.msra.mxu0 %v3914
    %4076 = vmatprep.subr.mxu0 %v3918
    %4077 = vmatpush1.msra.mxu0 %v3917
    %4078 = vmatprep.subr.mxu0 %v3921
    %4079 = vmatpush1.msra.mxu0 %v3920
    %4080 = vmatprep.subr.mxu0 %v3924
    %4081 = vmatpush1.msra.mxu0 %v3923
    %4082 = vmatprep.subr.mxu0 %v3927
    %4083 = vmatpush1.msra.mxu0 %v3926
    %4084 = vmatprep.subr.mxu0 %v3930
    %4085 = vmatpush1.msra.mxu0 %v3929
    %4086 = vmatprep.subr.mxu0 %v3933
    %4087 = vmatpush1.msra.mxu0 %v3932
    %4088 = vmatprep.subr.mxu0 %v3936
    %4089 = vmatpush1.msra.mxu0 %v3935
    %4090 = vmatprep.subr.mxu0 %v3939
    %4091 = vmatpush1.msra.mxu0 %v3938
    %4092 = vmatprep.subr.mxu0 %v3942
    %4093 = vmatpush1.msra.mxu0 %v3941
    %4094 = vmatprep.subr.mxu0 %v3945
    %4095 = vmatpush1.msra.mxu0 %v3944
    %4096 = vmatprep.subr.mxu0 %v3948
    %4097 = vmatpush1.msra.mxu0 %v3947
    %4098 = vmatprep.subr.mxu0 %v3951
    %4099 = vmatpush1.msra.mxu0 %v3950
    %4100 = vmatprep.subr.mxu0 %v3954
    %4101 = vmatpush1.msra.mxu0 %v3953
    %4102 = vmatprep.subr.mxu0 %v3957
    %4103 = vmatpush1.msra.mxu0 %v3956
    %4104 = vmatprep.subr.mxu0 %v3960
    %4105 = vmatpush1.msra.mxu0 %v3959
    %4106 = vmatprep.subr.mxu0 %v3963
    %4107 = vmatpush1.msra.mxu0 %v3962
    %4108 = vmatprep.subr.mxu0 %v3966
    %4109 = vmatpush1.msra.mxu0 %v3965
    %4110 = vmatprep.subr.mxu0 %v3969
    %4111 = vmatpush1.msra.mxu0 %v3968
    %4112 = vmatprep.subr.mxu0 %v3972
    %4113 = vmatpush1.msra.mxu0 %v3971
    %4114 = vmatprep.subr.mxu0 %v3975
    %4115 = vmatpush1.msra.mxu0 %v3974
    %4116 = vmatprep.subr.mxu0 0.0
    %4117 = vmatpush1.msra.mxu0 0.0
    %4118 = vmatprep.subr.mxu0 0.0
    %4119 = vmatpush1.msra.mxu0 0.0
    %4120 = vmatprep.subr.mxu0 0.0
    %4121 = vmatpush1.msra.mxu0 0.0
    %4122 = vmatprep.subr.mxu0 0.0
    %4123 = vmatpush1.msra.mxu0 0.0
    %4124 = vmatprep.mubr.f32.mxu0 %v3978
    %4125 = vmatmul.mubr.f32.gmra.mrb[0].mxu0 %v3786
    %v4126 = vpop.f32.mrb[0].mxu0
    %v4127 = vadd.f32 %v4050, %v4126
    %v4128 = vpop.f32.mrb[0].mxu0
    %v4129 = vadd.f32 %v4052, %v4128
    %4130 = vmatprep.mubr.f32.mxu0 %v3981
    %4131 = vmatmul.mubr.f32.gmra.mrb[0].mxu0 %v3792
    %v4132 = vpop.f32.mrb[0].mxu0
    %v4133 = vadd.f32 %v4056, %v4132
    %v4134 = vpop.f32.mrb[0].mxu0
    %v4135 = vadd.f32 %v4058, %v4134
    %4136 = vdwg.mxu0
    %4137 = vmatprep.subr.mxu0 0.0
    %4138 = vmatpush1.msra.mxu0 %v3799
    %4139 = vmatprep.subr.mxu0 0.0
    %4140 = vmatpush1.msra.mxu0 %v3802
    %4141 = vmatprep.subr.mxu0 0.0
    %4142 = vmatpush1.msra.mxu0 %v3805
    %4143 = vmatprep.subr.mxu0 0.0
    %4144 = vmatpush1.msra.mxu0 %v3808
    %4145 = vmatprep.subr.mxu0 0.0
    %4146 = vmatpush1.msra.mxu0 %v3811
    %4147 = vmatprep.subr.mxu0 0.0
    %4148 = vmatpush1.msra.mxu0 %v3814
    %4149 = vmatprep.subr.mxu0 0.0
    %4150 = vmatpush1.msra.mxu0 %v3817
    %4151 = vmatprep.subr.mxu0 0.0
    %4152 = vmatpush1.msra.mxu0 %v3820
    %4153 = vmatprep.subr.mxu0 0.0
    %4154 = vmatpush1.msra.mxu0 %v3823
    %4155 = vmatprep.subr.mxu0 0.0
    %4156 = vmatpush1.msra.mxu0 %v3826
    %4157 = vmatprep.subr.mxu0 0.0
    %4158 = vmatpush1.msra.mxu0 %v3829
    %4159 = vmatprep.subr.mxu0 0.0
    %4160 = vmatpush1.msra.mxu0 %v3832
    %4161 = vmatprep.subr.mxu0 0.0
    %4162 = vmatpush1.msra.mxu0 %v3835
    %4163 = vmatprep.subr.mxu0 0.0
    %4164 = vmatpush1.msra.mxu0 %v3838
    %4165 = vmatprep.subr.mxu0 0.0
    %4166 = vmatpush1.msra.mxu0 %v3841
    %4167 = vmatprep.subr.mxu0 0.0
    %4168 = vmatpush1.msra.mxu0 %v3844
    %4169 = vmatprep.subr.mxu0 0.0
    %4170 = vmatpush1.msra.mxu0 %v3847
    %4171 = vmatprep.subr.mxu0 0.0
    %4172 = vmatpush1.msra.mxu0 %v3850
    %4173 = vmatprep.subr.mxu0 0.0
    %4174 = vmatpush1.msra.mxu0 %v3853
    %4175 = vmatprep.subr.mxu0 0.0
    %4176 = vmatpush1.msra.mxu0 %v3856
    %4177 = vmatprep.subr.mxu0 0.0
    %4178 = vmatpush1.msra.mxu0 %v3859
    %4179 = vmatprep.subr.mxu0 0.0
    %4180 = vmatpush1.msra.mxu0 %v3862
    %4181 = vmatprep.subr.mxu0 0.0
    %4182 = vmatpush1.msra.mxu0 %v3865
    %4183 = vmatprep.subr.mxu0 0.0
    %4184 = vmatpush1.msra.mxu0 %v3868
    %4185 = vmatprep.subr.mxu0 0.0
    %4186 = vmatpush1.msra.mxu0 %v3871
    %4187 = vmatprep.subr.mxu0 0.0
    %4188 = vmatpush1.msra.mxu0 %v3874
    %4189 = vmatprep.subr.mxu0 0.0
    %4190 = vmatpush1.msra.mxu0 %v3877
    %4191 = vmatprep.subr.mxu0 0.0
    %4192 = vmatpush1.msra.mxu0 %v3880
    %4193 = vmatprep.subr.mxu0 0.0
    %4194 = vmatpush1.msra.mxu0 %v3883
    %4195 = vmatprep.subr.mxu0 0.0
    %4196 = vmatpush1.msra.mxu0 %v3886
    %4197 = vmatprep.subr.mxu0 0.0
    %4198 = vmatpush1.msra.mxu0 %v3889
    %4199 = vmatprep.subr.mxu0 0.0
    %4200 = vmatpush1.msra.mxu0 %v3892
    %4201 = vmatprep.mubr.f32.mxu0 %v3711
    %4202 = vmatmul.mubr.f32.gmra.mrb[0].mxu0 %v3709
    %v4203 = vpop.f32.mrb[0].mxu0
    %v4204 = vadd.f32 0.0, %v4203
    %v4205 = vpop.f32.mrb[0].mxu0
    %4206 = vmatprep.mubr.f32.mxu0 %v3717
    %4207 = vmatmul.mubr.f32.gmra.mrb[0].mxu0 %v3715
    %v4208 = vpop.f32.mrb[0].mxu0
    %v4209 = vadd.f32 0.0, %v4208
    %v4210 = vpop.f32.mrb[0].mxu0
    %4211 = vdwg.mxu0
    %4212 = vmatprep.subr.mxu0 0.0
    %4213 = vmatpush1.msra.mxu0 %v3895
    %4214 = vmatprep.subr.mxu0 0.0
    %4215 = vmatpush1.msra.mxu0 %v3898
    %4216 = vmatprep.subr.mxu0 0.0
    %4217 = vmatpush1.msra.mxu0 %v3901
    %4218 = vmatprep.subr.mxu0 0.0
    %4219 = vmatpush1.msra.mxu0 %v3904
    %4220 = vmatprep.subr.mxu0 0.0
    %4221 = vmatpush1.msra.mxu0 %v3907
    %4222 = vmatprep.subr.mxu0 0.0
    %4223 = vmatpush1.msra.mxu0 %v3910
    %4224 = vmatprep.subr.mxu0 0.0
    %4225 = vmatpush1.msra.mxu0 %v3913
    %4226 = vmatprep.subr.mxu0 0.0
    %4227 = vmatpush1.msra.mxu0 %v3916
    %4228 = vmatprep.subr.mxu0 0.0
    %4229 = vmatpush1.msra.mxu0 %v3919
    %4230 = vmatprep.subr.mxu0 0.0
    %4231 = vmatpush1.msra.mxu0 %v3922
    %4232 = vmatprep.subr.mxu0 0.0
    %4233 = vmatpush1.msra.mxu0 %v3925
    %4234 = vmatprep.subr.mxu0 0.0
    %4235 = vmatpush1.msra.mxu0 %v3928
    %4236 = vmatprep.subr.mxu0 0.0
    %4237 = vmatpush1.msra.mxu0 %v3931
    %4238 = vmatprep.subr.mxu0 0.0
    %4239 = vmatpush1.msra.mxu0 %v3934
    %4240 = vmatprep.subr.mxu0 0.0
    %4241 = vmatpush1.msra.mxu0 %v3937
    %4242 = vmatprep.subr.mxu0 0.0
    %4243 = vmatpush1.msra.mxu0 %v3940
    %4244 = vmatprep.subr.mxu0 0.0
    %4245 = vmatpush1.msra.mxu0 %v3943
    %4246 = vmatprep.subr.mxu0 0.0
    %4247 = vmatpush1.msra.mxu0 %v3946
    %4248 = vmatprep.subr.mxu0 0.0
    %4249 = vmatpush1.msra.mxu0 %v3949
    %4250 = vmatprep.subr.mxu0 0.0
    %4251 = vmatpush1.msra.mxu0 %v3952
    %4252 = vmatprep.subr.mxu0 0.0
    %4253 = vmatpush1.msra.mxu0 %v3955
    %4254 = vmatprep.subr.mxu0 0.0
    %4255 = vmatpush1.msra.mxu0 %v3958
    %4256 = vmatprep.subr.mxu0 0.0
    %4257 = vmatpush1.msra.mxu0 %v3961
    %4258 = vmatprep.subr.mxu0 0.0
    %4259 = vmatpush1.msra.mxu0 %v3964
    %4260 = vmatprep.subr.mxu0 0.0
    %4261 = vmatpush1.msra.mxu0 %v3967
    %4262 = vmatprep.subr.mxu0 0.0
    %4263 = vmatpush1.msra.mxu0 %v3970
    %4264 = vmatprep.subr.mxu0 0.0
    %4265 = vmatpush1.msra.mxu0 %v3973
    %4266 = vmatprep.subr.mxu0 0.0
    %4267 = vmatpush1.msra.mxu0 %v3976
    %4268 = vmatprep.subr.mxu0 0.0
    %4269 = vmatpush1.msra.mxu0 0.0
    %4270 = vmatprep.subr.mxu0 0.0
    %4271 = vmatpush1.msra.mxu0 0.0
    %4272 = vmatprep.subr.mxu0 0.0
    %4273 = vmatpush1.msra.mxu0 0.0
    %4274 = vmatprep.subr.mxu0 0.0
    %4275 = vmatpush1.msra.mxu0 0.0
    %4276 = vmatprep.mubr.f32.mxu0 %v3978
    %4277 = vmatmul.mubr.f32.gmra.mrb[0].mxu0 %v3786
    %v4278 = vpop.f32.mrb[0].mxu0
    %v4279 = vadd.f32 %v4204, %v4278
    %v4280 = vpop.f32.mrb[0].mxu0
    %4281 = vmatprep.mubr.f32.mxu0 %v3981
    %4282 = vmatmul.mubr.f32.gmra.mrb[0].mxu0 %v3792
    %v4283 = vpop.f32.mrb[0].mxu0
    %v4284 = vadd.f32 %v4209, %v4283
    %v4285 = vpop.f32.mrb[0].mxu0
    %4286 = vdwg.mxu0
    %v4287 = vadd.f32 %v3627, %v4127
    %v4288 = vadd.f32 %v3628, %v4129
    %v4289 = vadd.f32 %v3629, %v4279
    %v4290 = vadd.f32 %v3630, %v4133
    %v4291 = vadd.f32 %v3631, %v4135
    %v4292 = vadd.f32 %v3632, %v4284
    %v4293 = vld [vmem:[%s15] sm:$0x7]
    %v4295 = vlaneseq
    %v4296 = vshrl.u32 %v4295, 7
    %v4297 = vsub.s32 0, %v4296
    %v4298 = vrot.slane %v4293, %v4297
    %v4299 = vlaneseq
    %v4300 = vshrl.u32 %v4299, 7
    %v4301 = vsub.s32 1, %v4300
    %v4302 = vrot.slane %v4293, %v4301
    %v4303 = vlaneseq
    %v4304 = vshrl.u32 %v4303, 7
    %v4305 = vsub.s32 2, %v4304
    %v4306 = vrot.slane %v4293, %v4305
    %v4310 = vadd.f32 %v4287, %v4298
    %v4311 = vadd.f32 %v4288, %v4302
    %v4312 = vadd.f32 %v4289, %v4306
    %v4313 = vadd.f32 %v4290, %v4298
    %v4314 = vadd.f32 %v4291, %v4302
    %v4315 = vadd.f32 %v4292, %v4306
    %v4316 = vmax.f32 %v4310, 0.0
    %v4317 = vmax.f32 %v4311, 0.0
    %v4318 = vmax.f32 %v4312, 0.0
    %v4319 = vmax.f32 %v4313, 0.0
    %v4320 = vmax.f32 %v4314, 0.0
    %v4321 = vmax.f32 %v4315, 0.0
    %v4322 = vld [vmem:[%s17] sm:$0xf]
    %vm4323 = vcmask 97280
    %v4325 = vsel %vm4323, %v4322, 0
    %vm4327 = vcmask 1043456
    %v4329 = vsel %vm4327, %v4319, 0
    %v4332 = vsel %vm4327, %v4320, 0
    %v4335 = vsel %vm4327, %v4321, 0
    %4337 = vmatprep.subr.mxu0 %v4317
    %4338 = vmatpush1.msra.mxu0 %v4316
    %4339 = vmatprep.subr.mxu0 %v4332
    %4340 = vmatpush1.msra.mxu0 %v4329
    %4341 = vmatprep.subr.mxu0 0.0
    %4342 = vmatpush1.msra.mxu0 0.0
    %4343 = vmatprep.subr.mxu0 0.0
    %4344 = vmatpush1.msra.mxu0 0.0
    %4345 = vmatprep.subr.mxu0 0.0
    %4346 = vmatpush1.msra.mxu0 0.0
    %4347 = vmatprep.subr.mxu0 0.0
    %4348 = vmatpush1.msra.mxu0 0.0
    %4349 = vmatprep.subr.mxu0 0.0
    %4350 = vmatpush1.msra.mxu0 0.0
    %4351 = vmatprep.subr.mxu0 0.0
    %4352 = vmatpush1.msra.mxu0 0.0
    %4353 = vmatprep.subr.mxu0 0.0
    %4354 = vmatpush1.msra.mxu0 0.0
    %4355 = vmatprep.subr.mxu0 0.0
    %4356 = vmatpush1.msra.mxu0 0.0
    %4357 = vmatprep.subr.mxu0 0.0
    %4358 = vmatpush1.msra.mxu0 0.0
    %4359 = vmatprep.subr.mxu0 0.0
    %4360 = vmatpush1.msra.mxu0 0.0
    %4361 = vmatprep.subr.mxu0 0.0
    %4362 = vmatpush1.msra.mxu0 0.0
    %4363 = vmatprep.subr.mxu0 0.0
    %4364 = vmatpush1.msra.mxu0 0.0
    %4365 = vmatprep.subr.mxu0 0.0
    %4366 = vmatpush1.msra.mxu0 0.0
    %4367 = vmatprep.subr.mxu0 0.0
    %4368 = vmatpush1.msra.mxu0 0.0
    %4369 = vmatprep.subr.mxu0 0.0
    %4370 = vmatpush1.msra.mxu0 0.0
    %4371 = vmatprep.subr.mxu0 0.0
    %4372 = vmatpush1.msra.mxu0 0.0
    %4373 = vmatprep.subr.mxu0 0.0
    %4374 = vmatpush1.msra.mxu0 0.0
    %4375 = vmatprep.subr.mxu0 0.0
    %4376 = vmatpush1.msra.mxu0 0.0
    %4377 = vmatprep.subr.mxu0 0.0
    %4378 = vmatpush1.msra.mxu0 0.0
    %4379 = vmatprep.subr.mxu0 0.0
    %4380 = vmatpush1.msra.mxu0 0.0
    %4381 = vmatprep.subr.mxu0 0.0
    %4382 = vmatpush1.msra.mxu0 0.0
    %4383 = vmatprep.subr.mxu0 0.0
    %4384 = vmatpush1.msra.mxu0 0.0
    %4385 = vmatprep.subr.mxu0 0.0
    %4386 = vmatpush1.msra.mxu0 0.0
    %4387 = vmatprep.subr.mxu0 0.0
    %4388 = vmatpush1.msra.mxu0 0.0
    %4389 = vmatprep.subr.mxu0 0.0
    %4390 = vmatpush1.msra.mxu0 0.0
    %4391 = vmatprep.subr.mxu0 0.0
    %4392 = vmatpush1.msra.mxu0 0.0
    %4393 = vmatprep.subr.mxu0 0.0
    %4394 = vmatpush1.msra.mxu0 0.0
    %4395 = vmatprep.subr.mxu0 0.0
    %4396 = vmatpush1.msra.mxu0 0.0
    %4397 = vmatprep.subr.mxu0 0.0
    %4398 = vmatpush1.msra.mxu0 0.0
    %4399 = vmatprep.subr.mxu0 0.0
    %4400 = vmatpush1.msra.mxu0 0.0
    %4401 = vmatprep.mubr.f32.mxu0 0.0
    %4402 = vmatmul.mubr.f32.gmra.mrb[0].mxu0 %v4325
    %v4403 = vpop.f32.mrb[0].mxu0
    %v4404 = vadd.f32 0.0, %v4403
    %v4405 = vpop.f32.mrb[0].mxu0
    %v4406 = vadd.f32 0.0, %v4405
    %4407 = vdwg.mxu0
    %4408 = vmatprep.subr.mxu0 0.0
    %4409 = vmatpush1.msra.mxu0 %v4318
    %4410 = vmatprep.subr.mxu0 0.0
    %4411 = vmatpush1.msra.mxu0 %v4335
    %4412 = vmatprep.subr.mxu0 0.0
    %4413 = vmatpush1.msra.mxu0 0.0
    %4414 = vmatprep.subr.mxu0 0.0
    %4415 = vmatpush1.msra.mxu0 0.0
    %4416 = vmatprep.subr.mxu0 0.0
    %4417 = vmatpush1.msra.mxu0 0.0
    %4418 = vmatprep.subr.mxu0 0.0
    %4419 = vmatpush1.msra.mxu0 0.0
    %4420 = vmatprep.subr.mxu0 0.0
    %4421 = vmatpush1.msra.mxu0 0.0
    %4422 = vmatprep.subr.mxu0 0.0
    %4423 = vmatpush1.msra.mxu0 0.0
    %4424 = vmatprep.subr.mxu0 0.0
    %4425 = vmatpush1.msra.mxu0 0.0
    %4426 = vmatprep.subr.mxu0 0.0
    %4427 = vmatpush1.msra.mxu0 0.0
    %4428 = vmatprep.subr.mxu0 0.0
    %4429 = vmatpush1.msra.mxu0 0.0
    %4430 = vmatprep.subr.mxu0 0.0
    %4431 = vmatpush1.msra.mxu0 0.0
    %4432 = vmatprep.subr.mxu0 0.0
    %4433 = vmatpush1.msra.mxu0 0.0
    %4434 = vmatprep.subr.mxu0 0.0
    %4435 = vmatpush1.msra.mxu0 0.0
    %4436 = vmatprep.subr.mxu0 0.0
    %4437 = vmatpush1.msra.mxu0 0.0
    %4438 = vmatprep.subr.mxu0 0.0
    %4439 = vmatpush1.msra.mxu0 0.0
    %4440 = vmatprep.subr.mxu0 0.0
    %4441 = vmatpush1.msra.mxu0 0.0
    %4442 = vmatprep.subr.mxu0 0.0
    %4443 = vmatpush1.msra.mxu0 0.0
    %4444 = vmatprep.subr.mxu0 0.0
    %4445 = vmatpush1.msra.mxu0 0.0
    %4446 = vmatprep.subr.mxu0 0.0
    %4447 = vmatpush1.msra.mxu0 0.0
    %4448 = vmatprep.subr.mxu0 0.0
    %4449 = vmatpush1.msra.mxu0 0.0
    %4450 = vmatprep.subr.mxu0 0.0
    %4451 = vmatpush1.msra.mxu0 0.0
    %4452 = vmatprep.subr.mxu0 0.0
    %4453 = vmatpush1.msra.mxu0 0.0
    %4454 = vmatprep.subr.mxu0 0.0
    %4455 = vmatpush1.msra.mxu0 0.0
    %4456 = vmatprep.subr.mxu0 0.0
    %4457 = vmatpush1.msra.mxu0 0.0
    %4458 = vmatprep.subr.mxu0 0.0
    %4459 = vmatpush1.msra.mxu0 0.0
    %4460 = vmatprep.subr.mxu0 0.0
    %4461 = vmatpush1.msra.mxu0 0.0
    %4462 = vmatprep.subr.mxu0 0.0
    %4463 = vmatpush1.msra.mxu0 0.0
    %4464 = vmatprep.subr.mxu0 0.0
    %4465 = vmatpush1.msra.mxu0 0.0
    %4466 = vmatprep.subr.mxu0 0.0
    %4467 = vmatpush1.msra.mxu0 0.0
    %4468 = vmatprep.subr.mxu0 0.0
    %4469 = vmatpush1.msra.mxu0 0.0
    %4470 = vmatprep.subr.mxu0 0.0
    %4471 = vmatpush1.msra.mxu0 0.0
    %4472 = vmatprep.mubr.f32.mxu0 0.0
    %4473 = vmatmul.mubr.f32.gmra.mrb[0].mxu0 %v4325
    %v4474 = vpop.f32.mrb[0].mxu0
    %v4475 = vadd.f32 0.0, %v4474
    %v4476 = vpop.f32.mrb[0].mxu0
    %4477 = vdwg.mxu0
    %v4478 = vld [vmem:[%s19] sm:$0xff]
    %v4479 = vld [vmem:[%s19 + $0x8] sm:$0xff]
    %v4480 = vld [vmem:[%s19 + $0x10] sm:$0xff]
    %v4481 = vld [vmem:[%s19 + $0x18] sm:$0xff]
    %v4482 = vld [vmem:[%s19 + $0x20] sm:$0xff]
    %v4483 = vld [vmem:[%s19 + $0x28] sm:$0xff]
    %v4484 = vld [vmem:[%s19 + $0x30] sm:$0xff]
    %v4485 = vld [vmem:[%s19 + $0x38] sm:$0xff]
    %v4486 = vld [vmem:[%s19 + $0x40] sm:$0xff]
    %v4487 = vld [vmem:[%s19 + $0x48] sm:$0xff]
    %v4488 = vld [vmem:[%s19 + $0x50] sm:$0xff]
    %v4489 = vld [vmem:[%s19 + $0x58] sm:$0xff]
    %v4490 = vld [vmem:[%s19 + $0x60] sm:$0xff]
    %v4491 = vld [vmem:[%s19 + $0x68] sm:$0xff]
    %v4492 = vld [vmem:[%s19 + $0x70] sm:$0xff]
    %v4493 = vld [vmem:[%s19 + $0x78] sm:$0xff]
    %v4494 = vld [vmem:[%s19 + $0x80] sm:$0xff]
    %v4495 = vld [vmem:[%s19 + $0x88] sm:$0xff]
    %v4496 = vld [vmem:[%s19 + $0x90] sm:$0xff]
    %v4497 = vld [vmem:[%s19 + $0x98] sm:$0xff]
    %v4498 = vld [vmem:[%s19 + $0xa0] sm:$0xff]
    %v4499 = vld [vmem:[%s19 + $0xa8] sm:$0xff]
    %v4500 = vld [vmem:[%s19 + $0xb0] sm:$0xff]
    %v4501 = vld [vmem:[%s19 + $0xb8] sm:$0xff]
    %v4502 = vld [vmem:[%s19 + $0xc0] sm:$0xff]
    %v4503 = vld [vmem:[%s19 + $0xc8] sm:$0xff]
    %v4504 = vld [vmem:[%s19 + $0xd0] sm:$0xff]
    %v4505 = vld [vmem:[%s19 + $0xd8] sm:$0xff]
    %v4506 = vld [vmem:[%s19 + $0xe0] sm:$0xff]
    %v4507 = vld [vmem:[%s19 + $0xe8] sm:$0xff]
    %v4508 = vld [vmem:[%s19 + $0xf0] sm:$0xff]
    %v4509 = vld [vmem:[%s19 + $0xf8] sm:$0xff]
    %v4510 = vld [vmem:[%s19 + $0x100] sm:$0xff]
    %v4511 = vld [vmem:[%s19 + $0x108] sm:$0xff]
    %v4512 = vld [vmem:[%s19 + $0x110] sm:$0xff]
    %v4513 = vld [vmem:[%s19 + $0x118] sm:$0xff]
    %v4514 = vld [vmem:[%s19 + $0x120] sm:$0xff]
    %v4515 = vld [vmem:[%s19 + $0x128] sm:$0xff]
    %v4516 = vld [vmem:[%s19 + $0x130] sm:$0xff]
    %v4517 = vld [vmem:[%s19 + $0x138] sm:$0xff]
    %v4518 = vld [vmem:[%s19 + $0x140] sm:$0xff]
    %v4519 = vld [vmem:[%s19 + $0x148] sm:$0xff]
    %v4520 = vld [vmem:[%s19 + $0x150] sm:$0xff]
    %v4521 = vld [vmem:[%s19 + $0x158] sm:$0xff]
    %v4522 = vld [vmem:[%s19 + $0x160] sm:$0xff]
    %v4523 = vld [vmem:[%s19 + $0x168] sm:$0xff]
    %v4524 = vld [vmem:[%s19 + $0x170] sm:$0xff]
    %v4525 = vld [vmem:[%s19 + $0x178] sm:$0xff]
    %v4526 = vld [vmem:[%s19 + $0x180] sm:$0xff]
    %v4527 = vld [vmem:[%s19 + $0x188] sm:$0xff]
    %v4528 = vld [vmem:[%s19 + $0x190] sm:$0xff]
    %v4529 = vld [vmem:[%s19 + $0x198] sm:$0xff]
    %v4530 = vld [vmem:[%s19 + $0x1a0] sm:$0xff]
    %v4531 = vld [vmem:[%s19 + $0x1a8] sm:$0xff]
    %v4532 = vld [vmem:[%s19 + $0x1b0] sm:$0xff]
    %v4533 = vld [vmem:[%s19 + $0x1b8] sm:$0xff]
    %v4534 = vld [vmem:[%s19 + $0x1c0] sm:$0xff]
    %v4535 = vld [vmem:[%s19 + $0x1c8] sm:$0xff]
    %v4536 = vld [vmem:[%s19 + $0x1d0] sm:$0xff]
    %v4537 = vld [vmem:[%s19 + $0x1d8] sm:$0xff]
    %v4538 = vld [vmem:[%s19 + $0x1e0] sm:$0xff]
    %v4539 = vld [vmem:[%s19 + $0x1e8] sm:$0xff]
    %v4540 = vld [vmem:[%s19 + $0x1f0] sm:$0xff]
    %v4541 = vld [vmem:[%s19 + $0x1f8] sm:$0xff]
    %v4542 = vld [vmem:[%s19 + $0x200] sm:$0xff]
    %v4543 = vld [vmem:[%s19 + $0x208] sm:$0xff]
    %v4544 = vld [vmem:[%s19 + $0x210] sm:$0xff]
    %v4545 = vld [vmem:[%s19 + $0x218] sm:$0xff]
    %v4546 = vld [vmem:[%s19 + $0x220] sm:$0xff]
    %v4547 = vld [vmem:[%s19 + $0x228] sm:$0xff]
    %v4548 = vld [vmem:[%s19 + $0x230] sm:$0xff]
    %v4549 = vld [vmem:[%s19 + $0x238] sm:$0xff]
    %v4550 = vld [vmem:[%s19 + $0x240] sm:$0xff]
    %v4551 = vld [vmem:[%s19 + $0x248] sm:$0xff]
    %v4552 = vld [vmem:[%s19 + $0x250] sm:$0xff]
    %v4553 = vld [vmem:[%s19 + $0x258] sm:$0xff]
    %v4554 = vld [vmem:[%s19 + $0x260] sm:$0xff]
    %v4555 = vld [vmem:[%s19 + $0x268] sm:$0xff]
    %v4556 = vld [vmem:[%s19 + $0x270] sm:$0xff]
    %v4557 = vld [vmem:[%s19 + $0x278] sm:$0xff]
    %v4558 = vld [vmem:[%s19 + $0x280] sm:$0xff]
    %v4559 = vld [vmem:[%s19 + $0x288] sm:$0xff]
    %v4560 = vld [vmem:[%s19 + $0x290] sm:$0xff]
    %v4561 = vld [vmem:[%s19 + $0x298] sm:$0xff]
    %v4562 = vld [vmem:[%s19 + $0x2a0] sm:$0xff]
    %v4563 = vld [vmem:[%s19 + $0x2a8] sm:$0xff]
    %v4564 = vld [vmem:[%s19 + $0x2b0] sm:$0xff]
    %v4565 = vld [vmem:[%s19 + $0x2b8] sm:$0xff]
    %v4566 = vld [vmem:[%s19 + $0x2c0] sm:$0xff]
    %v4567 = vld [vmem:[%s19 + $0x2c8] sm:$0xff]
    %v4568 = vld [vmem:[%s19 + $0x2d0] sm:$0xff]
    %v4569 = vld [vmem:[%s19 + $0x2d8] sm:$0xff]
    %v4570 = vld [vmem:[%s19 + $0x2e0] sm:$0xff]
    %v4571 = vld [vmem:[%s19 + $0x2e8] sm:$0xff]
    %v4572 = vld [vmem:[%s19 + $0x2f0] sm:$0xff]
    %v4573 = vld [vmem:[%s19 + $0x2f8] sm:$0xff]
    %s4574 = scalar_lea.vmem %s17, 4
    %v4575 = vld [vmem:[%s4574] sm:$0xf]
    %v4577 = vsel %vm4323, %v4575, 0
    %4579 = vmatprep.subr.mxu0 %v4317
    %4580 = vmatpush1.msra.mxu0 %v4316
    %4581 = vmatprep.subr.mxu0 %v4332
    %4582 = vmatpush1.msra.mxu0 %v4329
    %4583 = vmatprep.subr.mxu0 0.0
    %4584 = vmatpush1.msra.mxu0 0.0
    %4585 = vmatprep.subr.mxu0 0.0
    %4586 = vmatpush1.msra.mxu0 0.0
    %4587 = vmatprep.subr.mxu0 0.0
    %4588 = vmatpush1.msra.mxu0 0.0
    %4589 = vmatprep.subr.mxu0 0.0
    %4590 = vmatpush1.msra.mxu0 0.0
    %4591 = vmatprep.subr.mxu0 0.0
    %4592 = vmatpush1.msra.mxu0 0.0
    %4593 = vmatprep.subr.mxu0 0.0
    %4594 = vmatpush1.msra.mxu0 0.0
    %4595 = vmatprep.subr.mxu0 0.0
    %4596 = vmatpush1.msra.mxu0 0.0
    %4597 = vmatprep.subr.mxu0 0.0
    %4598 = vmatpush1.msra.mxu0 0.0
    %4599 = vmatprep.subr.mxu0 0.0
    %4600 = vmatpush1.msra.mxu0 0.0
    %4601 = vmatprep.subr.mxu0 0.0
    %4602 = vmatpush1.msra.mxu0 0.0
    %4603 = vmatprep.subr.mxu0 0.0
    %4604 = vmatpush1.msra.mxu0 0.0
    %4605 = vmatprep.subr.mxu0 0.0
    %4606 = vmatpush1.msra.mxu0 0.0
    %4607 = vmatprep.subr.mxu0 0.0
    %4608 = vmatpush1.msra.mxu0 0.0
    %4609 = vmatprep.subr.mxu0 0.0
    %4610 = vmatpush1.msra.mxu0 0.0
    %4611 = vmatprep.subr.mxu0 0.0
    %4612 = vmatpush1.msra.mxu0 0.0
    %4613 = vmatprep.subr.mxu0 0.0
    %4614 = vmatpush1.msra.mxu0 0.0
    %4615 = vmatprep.subr.mxu0 0.0
    %4616 = vmatpush1.msra.mxu0 0.0
    %4617 = vmatprep.subr.mxu0 0.0
    %4618 = vmatpush1.msra.mxu0 0.0
    %4619 = vmatprep.subr.mxu0 0.0
    %4620 = vmatpush1.msra.mxu0 0.0
    %4621 = vmatprep.subr.mxu0 0.0
    %4622 = vmatpush1.msra.mxu0 0.0
    %4623 = vmatprep.subr.mxu0 0.0
    %4624 = vmatpush1.msra.mxu0 0.0
    %4625 = vmatprep.subr.mxu0 0.0
    %4626 = vmatpush1.msra.mxu0 0.0
    %4627 = vmatprep.subr.mxu0 0.0
    %4628 = vmatpush1.msra.mxu0 0.0
    %4629 = vmatprep.subr.mxu0 0.0
    %4630 = vmatpush1.msra.mxu0 0.0
    %4631 = vmatprep.subr.mxu0 0.0
    %4632 = vmatpush1.msra.mxu0 0.0
    %4633 = vmatprep.subr.mxu0 0.0
    %4634 = vmatpush1.msra.mxu0 0.0
    %4635 = vmatprep.subr.mxu0 0.0
    %4636 = vmatpush1.msra.mxu0 0.0
    %4637 = vmatprep.subr.mxu0 0.0
    %4638 = vmatpush1.msra.mxu0 0.0
    %4639 = vmatprep.subr.mxu0 0.0
    %4640 = vmatpush1.msra.mxu0 0.0
    %4641 = vmatprep.subr.mxu0 0.0
    %4642 = vmatpush1.msra.mxu0 0.0
    %4643 = vmatprep.mubr.f32.mxu0 0.0
    %4644 = vmatmul.mubr.f32.gmra.mrb[0].mxu0 %v4577
    %v4645 = vpop.f32.mrb[0].mxu0
    %v4646 = vadd.f32 0.0, %v4645
    %v4647 = vpop.f32.mrb[0].mxu0
    %v4648 = vadd.f32 0.0, %v4647
    %4649 = vdwg.mxu0
    %4650 = vmatprep.subr.mxu0 0.0
    %4651 = vmatpush1.msra.mxu0 %v4318
    %4652 = vmatprep.subr.mxu0 0.0
    %4653 = vmatpush1.msra.mxu0 %v4335
    %4654 = vmatprep.subr.mxu0 0.0
    %4655 = vmatpush1.msra.mxu0 0.0
    %4656 = vmatprep.subr.mxu0 0.0
    %4657 = vmatpush1.msra.mxu0 0.0
    %4658 = vmatprep.subr.mxu0 0.0
    %4659 = vmatpush1.msra.mxu0 0.0
    %4660 = vmatprep.subr.mxu0 0.0
    %4661 = vmatpush1.msra.mxu0 0.0
    %4662 = vmatprep.subr.mxu0 0.0
    %4663 = vmatpush1.msra.mxu0 0.0
    %4664 = vmatprep.subr.mxu0 0.0
    %4665 = vmatpush1.msra.mxu0 0.0
    %4666 = vmatprep.subr.mxu0 0.0
    %4667 = vmatpush1.msra.mxu0 0.0
    %4668 = vmatprep.subr.mxu0 0.0
    %4669 = vmatpush1.msra.mxu0 0.0
    %4670 = vmatprep.subr.mxu0 0.0
    %4671 = vmatpush1.msra.mxu0 0.0
    %4672 = vmatprep.subr.mxu0 0.0
    %4673 = vmatpush1.msra.mxu0 0.0
    %4674 = vmatprep.subr.mxu0 0.0
    %4675 = vmatpush1.msra.mxu0 0.0
    %4676 = vmatprep.subr.mxu0 0.0
    %4677 = vmatpush1.msra.mxu0 0.0
    %4678 = vmatprep.subr.mxu0 0.0
    %4679 = vmatpush1.msra.mxu0 0.0
    %4680 = vmatprep.subr.mxu0 0.0
    %4681 = vmatpush1.msra.mxu0 0.0
    %4682 = vmatprep.subr.mxu0 0.0
    %4683 = vmatpush1.msra.mxu0 0.0
    %4684 = vmatprep.subr.mxu0 0.0
    %4685 = vmatpush1.msra.mxu0 0.0
    %4686 = vmatprep.subr.mxu0 0.0
    %4687 = vmatpush1.msra.mxu0 0.0
    %4688 = vmatprep.subr.mxu0 0.0
    %4689 = vmatpush1.msra.mxu0 0.0
    %4690 = vmatprep.subr.mxu0 0.0
    %4691 = vmatpush1.msra.mxu0 0.0
    %4692 = vmatprep.subr.mxu0 0.0
    %4693 = vmatpush1.msra.mxu0 0.0
    %4694 = vmatprep.subr.mxu0 0.0
    %4695 = vmatpush1.msra.mxu0 0.0
    %4696 = vmatprep.subr.mxu0 0.0
    %4697 = vmatpush1.msra.mxu0 0.0
    %4698 = vmatprep.subr.mxu0 0.0
    %4699 = vmatpush1.msra.mxu0 0.0
    %4700 = vmatprep.subr.mxu0 0.0
    %4701 = vmatpush1.msra.mxu0 0.0
    %4702 = vmatprep.subr.mxu0 0.0
    %4703 = vmatpush1.msra.mxu0 0.0
    %4704 = vmatprep.subr.mxu0 0.0
    %4705 = vmatpush1.msra.mxu0 0.0
    %4706 = vmatprep.subr.mxu0 0.0
    %4707 = vmatpush1.msra.mxu0 0.0
    %4708 = vmatprep.subr.mxu0 0.0
    %4709 = vmatpush1.msra.mxu0 0.0
    %4710 = vmatprep.subr.mxu0 0.0
    %4711 = vmatpush1.msra.mxu0 0.0
    %4712 = vmatprep.subr.mxu0 0.0
    %4713 = vmatpush1.msra.mxu0 0.0
    %4714 = vmatprep.mubr.f32.mxu0 0.0
    %4715 = vmatmul.mubr.f32.gmra.mrb[0].mxu0 %v4577
    %v4716 = vpop.f32.mrb[0].mxu0
    %v4717 = vadd.f32 0.0, %v4716
    %v4718 = vpop.f32.mrb[0].mxu0
    %4719 = vdwg.mxu0
    %s4720 = scalar_lea.vmem %s19, 768
    %v4721 = vld [vmem:[%s4720] sm:$0xff]
    %v4722 = vld [vmem:[%s4720 + $0x8] sm:$0xff]
    %v4723 = vld [vmem:[%s4720 + $0x10] sm:$0xff]
    %v4724 = vld [vmem:[%s4720 + $0x18] sm:$0xff]
    %v4725 = vld [vmem:[%s4720 + $0x20] sm:$0xff]
    %v4726 = vld [vmem:[%s4720 + $0x28] sm:$0xff]
    %v4727 = vld [vmem:[%s4720 + $0x30] sm:$0xff]
    %v4728 = vld [vmem:[%s4720 + $0x38] sm:$0xff]
    %v4729 = vld [vmem:[%s4720 + $0x40] sm:$0xff]
    %v4730 = vld [vmem:[%s4720 + $0x48] sm:$0xff]
    %v4731 = vld [vmem:[%s4720 + $0x50] sm:$0xff]
    %v4732 = vld [vmem:[%s4720 + $0x58] sm:$0xff]
    %v4733 = vld [vmem:[%s4720 + $0x60] sm:$0xff]
    %v4734 = vld [vmem:[%s4720 + $0x68] sm:$0xff]
    %v4735 = vld [vmem:[%s4720 + $0x70] sm:$0xff]
    %v4736 = vld [vmem:[%s4720 + $0x78] sm:$0xff]
    %v4737 = vld [vmem:[%s4720 + $0x80] sm:$0xff]
    %v4738 = vld [vmem:[%s4720 + $0x88] sm:$0xff]
    %v4739 = vld [vmem:[%s4720 + $0x90] sm:$0xff]
    %v4740 = vld [vmem:[%s4720 + $0x98] sm:$0xff]
    %v4741 = vld [vmem:[%s4720 + $0xa0] sm:$0xff]
    %v4742 = vld [vmem:[%s4720 + $0xa8] sm:$0xff]
    %v4743 = vld [vmem:[%s4720 + $0xb0] sm:$0xff]
    %v4744 = vld [vmem:[%s4720 + $0xb8] sm:$0xff]
    %v4745 = vld [vmem:[%s4720 + $0xc0] sm:$0xff]
    %v4746 = vld [vmem:[%s4720 + $0xc8] sm:$0xff]
    %v4747 = vld [vmem:[%s4720 + $0xd0] sm:$0xff]
    %v4748 = vld [vmem:[%s4720 + $0xd8] sm:$0xff]
    %v4749 = vld [vmem:[%s4720 + $0xe0] sm:$0xff]
    %v4750 = vld [vmem:[%s4720 + $0xe8] sm:$0xff]
    %v4751 = vld [vmem:[%s4720 + $0xf0] sm:$0xff]
    %v4752 = vld [vmem:[%s4720 + $0xf8] sm:$0xff]
    %v4753 = vld [vmem:[%s4720 + $0x100] sm:$0xff]
    %v4754 = vld [vmem:[%s4720 + $0x108] sm:$0xff]
    %v4755 = vld [vmem:[%s4720 + $0x110] sm:$0xff]
    %v4756 = vld [vmem:[%s4720 + $0x118] sm:$0xff]
    %v4757 = vld [vmem:[%s4720 + $0x120] sm:$0xff]
    %v4758 = vld [vmem:[%s4720 + $0x128] sm:$0xff]
    %v4759 = vld [vmem:[%s4720 + $0x130] sm:$0xff]
    %v4760 = vld [vmem:[%s4720 + $0x138] sm:$0xff]
    %v4761 = vld [vmem:[%s4720 + $0x140] sm:$0xff]
    %v4762 = vld [vmem:[%s4720 + $0x148] sm:$0xff]
    %v4763 = vld [vmem:[%s4720 + $0x150] sm:$0xff]
    %v4764 = vld [vmem:[%s4720 + $0x158] sm:$0xff]
    %v4765 = vld [vmem:[%s4720 + $0x160] sm:$0xff]
    %v4766 = vld [vmem:[%s4720 + $0x168] sm:$0xff]
    %v4767 = vld [vmem:[%s4720 + $0x170] sm:$0xff]
    %v4768 = vld [vmem:[%s4720 + $0x178] sm:$0xff]
    %v4769 = vld [vmem:[%s4720 + $0x180] sm:$0xff]
    %v4770 = vld [vmem:[%s4720 + $0x188] sm:$0xff]
    %v4771 = vld [vmem:[%s4720 + $0x190] sm:$0xff]
    %v4772 = vld [vmem:[%s4720 + $0x198] sm:$0xff]
    %v4773 = vld [vmem:[%s4720 + $0x1a0] sm:$0xff]
    %v4774 = vld [vmem:[%s4720 + $0x1a8] sm:$0xff]
    %v4775 = vld [vmem:[%s4720 + $0x1b0] sm:$0xff]
    %v4776 = vld [vmem:[%s4720 + $0x1b8] sm:$0xff]
    %v4777 = vld [vmem:[%s4720 + $0x1c0] sm:$0xff]
    %v4778 = vld [vmem:[%s4720 + $0x1c8] sm:$0xff]
    %v4779 = vld [vmem:[%s4720 + $0x1d0] sm:$0xff]
    %v4780 = vld [vmem:[%s4720 + $0x1d8] sm:$0xff]
    %v4781 = vld [vmem:[%s4720 + $0x1e0] sm:$0xff]
    %v4782 = vld [vmem:[%s4720 + $0x1e8] sm:$0xff]
    %v4783 = vld [vmem:[%s4720 + $0x1f0] sm:$0xff]
    %v4784 = vld [vmem:[%s4720 + $0x1f8] sm:$0xff]
    %v4785 = vld [vmem:[%s4720 + $0x200] sm:$0xff]
    %v4786 = vld [vmem:[%s4720 + $0x208] sm:$0xff]
    %v4787 = vld [vmem:[%s4720 + $0x210] sm:$0xff]
    %v4788 = vld [vmem:[%s4720 + $0x218] sm:$0xff]
    %v4789 = vld [vmem:[%s4720 + $0x220] sm:$0xff]
    %v4790 = vld [vmem:[%s4720 + $0x228] sm:$0xff]
    %v4791 = vld [vmem:[%s4720 + $0x230] sm:$0xff]
    %v4792 = vld [vmem:[%s4720 + $0x238] sm:$0xff]
    %v4793 = vld [vmem:[%s4720 + $0x240] sm:$0xff]
    %v4794 = vld [vmem:[%s4720 + $0x248] sm:$0xff]
    %v4795 = vld [vmem:[%s4720 + $0x250] sm:$0xff]
    %v4796 = vld [vmem:[%s4720 + $0x258] sm:$0xff]
    %v4797 = vld [vmem:[%s4720 + $0x260] sm:$0xff]
    %v4798 = vld [vmem:[%s4720 + $0x268] sm:$0xff]
    %v4799 = vld [vmem:[%s4720 + $0x270] sm:$0xff]
    %v4800 = vld [vmem:[%s4720 + $0x278] sm:$0xff]
    %v4801 = vld [vmem:[%s4720 + $0x280] sm:$0xff]
    %v4802 = vld [vmem:[%s4720 + $0x288] sm:$0xff]
    %v4803 = vld [vmem:[%s4720 + $0x290] sm:$0xff]
    %v4804 = vld [vmem:[%s4720 + $0x298] sm:$0xff]
    %v4805 = vld [vmem:[%s4720 + $0x2a0] sm:$0xff]
    %v4806 = vld [vmem:[%s4720 + $0x2a8] sm:$0xff]
    %v4807 = vld [vmem:[%s4720 + $0x2b0] sm:$0xff]
    %v4808 = vld [vmem:[%s4720 + $0x2b8] sm:$0xff]
    %v4809 = vld [vmem:[%s4720 + $0x2c0] sm:$0xff]
    %v4810 = vld [vmem:[%s4720 + $0x2c8] sm:$0xff]
    %v4811 = vld [vmem:[%s4720 + $0x2d0] sm:$0xff]
    %v4812 = vld [vmem:[%s4720 + $0x2d8] sm:$0xff]
    %v4813 = vld [vmem:[%s4720 + $0x2e0] sm:$0xff]
    %v4814 = vld [vmem:[%s4720 + $0x2e8] sm:$0xff]
    %v4815 = vld [vmem:[%s4720 + $0x2f0] sm:$0xff]
    %v4816 = vld [vmem:[%s4720 + $0x2f8] sm:$0xff]
    %4817 = vmatprep.subr.mxu0 %v4722
    %4818 = vmatpush1.msra.mxu0 %v4721
    %4819 = vmatprep.subr.mxu0 %v4724
    %4820 = vmatpush1.msra.mxu0 %v4723
    %4821 = vmatprep.subr.mxu0 %v4726
    %4822 = vmatpush1.msra.mxu0 %v4725
    %4823 = vmatprep.subr.mxu0 %v4728
    %4824 = vmatpush1.msra.mxu0 %v4727
    %4825 = vmatprep.subr.mxu0 %v4730
    %4826 = vmatpush1.msra.mxu0 %v4729
    %4827 = vmatprep.subr.mxu0 %v4732
    %4828 = vmatpush1.msra.mxu0 %v4731
    %4829 = vmatprep.subr.mxu0 %v4734
    %4830 = vmatpush1.msra.mxu0 %v4733
    %4831 = vmatprep.subr.mxu0 %v4736
    %4832 = vmatpush1.msra.mxu0 %v4735
    %4833 = vmatprep.subr.mxu0 %v4738
    %4834 = vmatpush1.msra.mxu0 %v4737
    %4835 = vmatprep.subr.mxu0 %v4740
    %4836 = vmatpush1.msra.mxu0 %v4739
    %4837 = vmatprep.subr.mxu0 %v4742
    %4838 = vmatpush1.msra.mxu0 %v4741
    %4839 = vmatprep.subr.mxu0 %v4744
    %4840 = vmatpush1.msra.mxu0 %v4743
    %4841 = vmatprep.subr.mxu0 %v4746
    %4842 = vmatpush1.msra.mxu0 %v4745
    %4843 = vmatprep.subr.mxu0 %v4748
    %4844 = vmatpush1.msra.mxu0 %v4747
    %4845 = vmatprep.subr.mxu0 %v4750
    %4846 = vmatpush1.msra.mxu0 %v4749
    %4847 = vmatprep.subr.mxu0 %v4752
    %4848 = vmatpush1.msra.mxu0 %v4751
    %4849 = vmatprep.subr.mxu0 %v4754
    %4850 = vmatpush1.msra.mxu0 %v4753
    %4851 = vmatprep.subr.mxu0 %v4756
    %4852 = vmatpush1.msra.mxu0 %v4755
    %4853 = vmatprep.subr.mxu0 %v4758
    %4854 = vmatpush1.msra.mxu0 %v4757
    %4855 = vmatprep.subr.mxu0 %v4760
    %4856 = vmatpush1.msra.mxu0 %v4759
    %4857 = vmatprep.subr.mxu0 %v4762
    %4858 = vmatpush1.msra.mxu0 %v4761
    %4859 = vmatprep.subr.mxu0 %v4764
    %4860 = vmatpush1.msra.mxu0 %v4763
    %4861 = vmatprep.subr.mxu0 %v4766
    %4862 = vmatpush1.msra.mxu0 %v4765
    %4863 = vmatprep.subr.mxu0 %v4768
    %4864 = vmatpush1.msra.mxu0 %v4767
    %4865 = vmatprep.subr.mxu0 %v4770
    %4866 = vmatpush1.msra.mxu0 %v4769
    %4867 = vmatprep.subr.mxu0 %v4772
    %4868 = vmatpush1.msra.mxu0 %v4771
    %4869 = vmatprep.subr.mxu0 %v4774
    %4870 = vmatpush1.msra.mxu0 %v4773
    %4871 = vmatprep.subr.mxu0 %v4776
    %4872 = vmatpush1.msra.mxu0 %v4775
    %4873 = vmatprep.subr.mxu0 %v4778
    %4874 = vmatpush1.msra.mxu0 %v4777
    %4875 = vmatprep.subr.mxu0 %v4780
    %4876 = vmatpush1.msra.mxu0 %v4779
    %4877 = vmatprep.subr.mxu0 %v4782
    %4878 = vmatpush1.msra.mxu0 %v4781
    %4879 = vmatprep.subr.mxu0 %v4784
    %4880 = vmatpush1.msra.mxu0 %v4783
    %4881 = vmatprep.mubr.f32.mxu0 %v4648
    %4882 = vmatmul.mubr.f32.gmra.mrb[0].mxu0 %v4646
    %v4883 = vpop.f32.mrb[0].mxu0
    %v4884 = vadd.f32 0.0, %v4883
    %v4885 = vpop.f32.mrb[0].mxu0
    %v4886 = vadd.f32 0.0, %v4885
    %4887 = vdwg.mxu0
    %4888 = vmatprep.subr.mxu0 %v4786
    %4889 = vmatpush1.msra.mxu0 %v4785
    %4890 = vmatprep.subr.mxu0 %v4788
    %4891 = vmatpush1.msra.mxu0 %v4787
    %4892 = vmatprep.subr.mxu0 %v4790
    %4893 = vmatpush1.msra.mxu0 %v4789
    %4894 = vmatprep.subr.mxu0 %v4792
    %4895 = vmatpush1.msra.mxu0 %v4791
    %4896 = vmatprep.subr.mxu0 %v4794
    %4897 = vmatpush1.msra.mxu0 %v4793
    %4898 = vmatprep.subr.mxu0 %v4796
    %4899 = vmatpush1.msra.mxu0 %v4795
    %4900 = vmatprep.subr.mxu0 %v4798
    %4901 = vmatpush1.msra.mxu0 %v4797
    %4902 = vmatprep.subr.mxu0 %v4800
    %4903 = vmatpush1.msra.mxu0 %v4799
    %4904 = vmatprep.subr.mxu0 %v4802
    %4905 = vmatpush1.msra.mxu0 %v4801
    %4906 = vmatprep.subr.mxu0 %v4804
    %4907 = vmatpush1.msra.mxu0 %v4803
    %4908 = vmatprep.subr.mxu0 %v4806
    %4909 = vmatpush1.msra.mxu0 %v4805
    %4910 = vmatprep.subr.mxu0 %v4808
    %4911 = vmatpush1.msra.mxu0 %v4807
    %4912 = vmatprep.subr.mxu0 %v4810
    %4913 = vmatpush1.msra.mxu0 %v4809
    %4914 = vmatprep.subr.mxu0 %v4812
    %4915 = vmatpush1.msra.mxu0 %v4811
    %4916 = vmatprep.subr.mxu0 %v4814
    %4917 = vmatpush1.msra.mxu0 %v4813
    %4918 = vmatprep.subr.mxu0 %v4816
    %4919 = vmatpush1.msra.mxu0 %v4815
    %4920 = vmatprep.subr.mxu0 0.0
    %4921 = vmatpush1.msra.mxu0 0.0
    %4922 = vmatprep.subr.mxu0 0.0
    %4923 = vmatpush1.msra.mxu0 0.0
    %4924 = vmatprep.subr.mxu0 0.0
    %4925 = vmatpush1.msra.mxu0 0.0
    %4926 = vmatprep.subr.mxu0 0.0
    %4927 = vmatpush1.msra.mxu0 0.0
    %4928 = vmatprep.subr.mxu0 0.0
    %4929 = vmatpush1.msra.mxu0 0.0
    %4930 = vmatprep.subr.mxu0 0.0
    %4931 = vmatpush1.msra.mxu0 0.0
    %4932 = vmatprep.subr.mxu0 0.0
    %4933 = vmatpush1.msra.mxu0 0.0
    %4934 = vmatprep.subr.mxu0 0.0
    %4935 = vmatpush1.msra.mxu0 0.0
    %4936 = vmatprep.subr.mxu0 0.0
    %4937 = vmatpush1.msra.mxu0 0.0
    %4938 = vmatprep.subr.mxu0 0.0
    %4939 = vmatpush1.msra.mxu0 0.0
    %4940 = vmatprep.subr.mxu0 0.0
    %4941 = vmatpush1.msra.mxu0 0.0
    %4942 = vmatprep.subr.mxu0 0.0
    %4943 = vmatpush1.msra.mxu0 0.0
    %4944 = vmatprep.subr.mxu0 0.0
    %4945 = vmatpush1.msra.mxu0 0.0
    %4946 = vmatprep.subr.mxu0 0.0
    %4947 = vmatpush1.msra.mxu0 0.0
    %4948 = vmatprep.subr.mxu0 0.0
    %4949 = vmatpush1.msra.mxu0 0.0
    %4950 = vmatprep.subr.mxu0 0.0
    %4951 = vmatpush1.msra.mxu0 0.0
    %4952 = vmatprep.mubr.f32.mxu0 0.0
    %4953 = vmatmul.mubr.f32.gmra.mrb[0].mxu0 %v4717
    %v4954 = vpop.f32.mrb[0].mxu0
    %v4955 = vadd.f32 %v4884, %v4954
    %v4956 = vpop.f32.mrb[0].mxu0
    %v4957 = vadd.f32 %v4886, %v4956
    %4958 = vdwg.mxu0
    %4959 = vmatprep.subr.mxu0 %v4479
    %4960 = vmatpush1.msra.mxu0 %v4478
    %4961 = vmatprep.subr.mxu0 %v4481
    %4962 = vmatpush1.msra.mxu0 %v4480
    %4963 = vmatprep.subr.mxu0 %v4483
    %4964 = vmatpush1.msra.mxu0 %v4482
    %4965 = vmatprep.subr.mxu0 %v4485
    %4966 = vmatpush1.msra.mxu0 %v4484
    %4967 = vmatprep.subr.mxu0 %v4487
    %4968 = vmatpush1.msra.mxu0 %v4486
    %4969 = vmatprep.subr.mxu0 %v4489
    %4970 = vmatpush1.msra.mxu0 %v4488
    %4971 = vmatprep.subr.mxu0 %v4491
    %4972 = vmatpush1.msra.mxu0 %v4490
    %4973 = vmatprep.subr.mxu0 %v4493
    %4974 = vmatpush1.msra.mxu0 %v4492
    %4975 = vmatprep.subr.mxu0 %v4495
    %4976 = vmatpush1.msra.mxu0 %v4494
    %4977 = vmatprep.subr.mxu0 %v4497
    %4978 = vmatpush1.msra.mxu0 %v4496
    %4979 = vmatprep.subr.mxu0 %v4499
    %4980 = vmatpush1.msra.mxu0 %v4498
    %4981 = vmatprep.subr.mxu0 %v4501
    %4982 = vmatpush1.msra.mxu0 %v4500
    %4983 = vmatprep.subr.mxu0 %v4503
    %4984 = vmatpush1.msra.mxu0 %v4502
    %4985 = vmatprep.subr.mxu0 %v4505
    %4986 = vmatpush1.msra.mxu0 %v4504
    %4987 = vmatprep.subr.mxu0 %v4507
    %4988 = vmatpush1.msra.mxu0 %v4506
    %4989 = vmatprep.subr.mxu0 %v4509
    %4990 = vmatpush1.msra.mxu0 %v4508
    %4991 = vmatprep.subr.mxu0 %v4511
    %4992 = vmatpush1.msra.mxu0 %v4510
    %4993 = vmatprep.subr.mxu0 %v4513
    %4994 = vmatpush1.msra.mxu0 %v4512
    %4995 = vmatprep.subr.mxu0 %v4515
    %4996 = vmatpush1.msra.mxu0 %v4514
    %4997 = vmatprep.subr.mxu0 %v4517
    %4998 = vmatpush1.msra.mxu0 %v4516
    %4999 = vmatprep.subr.mxu0 %v4519
    %5000 = vmatpush1.msra.mxu0 %v4518
    %5001 = vmatprep.subr.mxu0 %v4521
    %5002 = vmatpush1.msra.mxu0 %v4520
    %5003 = vmatprep.subr.mxu0 %v4523
    %5004 = vmatpush1.msra.mxu0 %v4522
    %5005 = vmatprep.subr.mxu0 %v4525
    %5006 = vmatpush1.msra.mxu0 %v4524
    %5007 = vmatprep.subr.mxu0 %v4527
    %5008 = vmatpush1.msra.mxu0 %v4526
    %5009 = vmatprep.subr.mxu0 %v4529
    %5010 = vmatpush1.msra.mxu0 %v4528
    %5011 = vmatprep.subr.mxu0 %v4531
    %5012 = vmatpush1.msra.mxu0 %v4530
    %5013 = vmatprep.subr.mxu0 %v4533
    %5014 = vmatpush1.msra.mxu0 %v4532
    %5015 = vmatprep.subr.mxu0 %v4535
    %5016 = vmatpush1.msra.mxu0 %v4534
    %5017 = vmatprep.subr.mxu0 %v4537
    %5018 = vmatpush1.msra.mxu0 %v4536
    %5019 = vmatprep.subr.mxu0 %v4539
    %5020 = vmatpush1.msra.mxu0 %v4538
    %5021 = vmatprep.subr.mxu0 %v4541
    %5022 = vmatpush1.msra.mxu0 %v4540
    %5023 = vmatprep.mubr.f32.mxu0 %v4406
    %5024 = vmatmul.mubr.f32.gmra.mrb[0].mxu0 %v4404
    %v5025 = vpop.f32.mrb[0].mxu0
    %v5026 = vadd.f32 %v4955, %v5025
    %v5027 = vpop.f32.mrb[0].mxu0
    %v5028 = vadd.f32 %v4957, %v5027
    %5029 = vdwg.mxu0
    %5030 = vmatprep.subr.mxu0 %v4543
    %5031 = vmatpush1.msra.mxu0 %v4542
    %5032 = vmatprep.subr.mxu0 %v4545
    %5033 = vmatpush1.msra.mxu0 %v4544
    %5034 = vmatprep.subr.mxu0 %v4547
    %5035 = vmatpush1.msra.mxu0 %v4546
    %5036 = vmatprep.subr.mxu0 %v4549
    %5037 = vmatpush1.msra.mxu0 %v4548
    %5038 = vmatprep.subr.mxu0 %v4551
    %5039 = vmatpush1.msra.mxu0 %v4550
    %5040 = vmatprep.subr.mxu0 %v4553
    %5041 = vmatpush1.msra.mxu0 %v4552
    %5042 = vmatprep.subr.mxu0 %v4555
    %5043 = vmatpush1.msra.mxu0 %v4554
    %5044 = vmatprep.subr.mxu0 %v4557
    %5045 = vmatpush1.msra.mxu0 %v4556
    %5046 = vmatprep.subr.mxu0 %v4559
    %5047 = vmatpush1.msra.mxu0 %v4558
    %5048 = vmatprep.subr.mxu0 %v4561
    %5049 = vmatpush1.msra.mxu0 %v4560
    %5050 = vmatprep.subr.mxu0 %v4563
    %5051 = vmatpush1.msra.mxu0 %v4562
    %5052 = vmatprep.subr.mxu0 %v4565
    %5053 = vmatpush1.msra.mxu0 %v4564
    %5054 = vmatprep.subr.mxu0 %v4567
    %5055 = vmatpush1.msra.mxu0 %v4566
    %5056 = vmatprep.subr.mxu0 %v4569
    %5057 = vmatpush1.msra.mxu0 %v4568
    %5058 = vmatprep.subr.mxu0 %v4571
    %5059 = vmatpush1.msra.mxu0 %v4570
    %5060 = vmatprep.subr.mxu0 %v4573
    %5061 = vmatpush1.msra.mxu0 %v4572
    %5062 = vmatprep.subr.mxu0 0.0
    %5063 = vmatpush1.msra.mxu0 0.0
    %5064 = vmatprep.subr.mxu0 0.0
    %5065 = vmatpush1.msra.mxu0 0.0
    %5066 = vmatprep.subr.mxu0 0.0
    %5067 = vmatpush1.msra.mxu0 0.0
    %5068 = vmatprep.subr.mxu0 0.0
    %5069 = vmatpush1.msra.mxu0 0.0
    %5070 = vmatprep.subr.mxu0 0.0
    %5071 = vmatpush1.msra.mxu0 0.0
    %5072 = vmatprep.subr.mxu0 0.0
    %5073 = vmatpush1.msra.mxu0 0.0
    %5074 = vmatprep.subr.mxu0 0.0
    %5075 = vmatpush1.msra.mxu0 0.0
    %5076 = vmatprep.subr.mxu0 0.0
    %5077 = vmatpush1.msra.mxu0 0.0
    %5078 = vmatprep.subr.mxu0 0.0
    %5079 = vmatpush1.msra.mxu0 0.0
    %5080 = vmatprep.subr.mxu0 0.0
    %5081 = vmatpush1.msra.mxu0 0.0
    %5082 = vmatprep.subr.mxu0 0.0
    %5083 = vmatpush1.msra.mxu0 0.0
    %5084 = vmatprep.subr.mxu0 0.0
    %5085 = vmatpush1.msra.mxu0 0.0
    %5086 = vmatprep.subr.mxu0 0.0
    %5087 = vmatpush1.msra.mxu0 0.0
    %5088 = vmatprep.subr.mxu0 0.0
    %5089 = vmatpush1.msra.mxu0 0.0
    %5090 = vmatprep.subr.mxu0 0.0
    %5091 = vmatpush1.msra.mxu0 0.0
    %5092 = vmatprep.subr.mxu0 0.0
    %5093 = vmatpush1.msra.mxu0 0.0
    %5094 = vmatprep.mubr.f32.mxu0 0.0
    %5095 = vmatmul.mubr.f32.gmra.mrb[0].mxu0 %v4475
    %v5096 = vpop.f32.mrb[0].mxu0
    %v5097 = vadd.f32 %v5026, %v5096
    %v5098 = vpop.f32.mrb[0].mxu0
    %v5099 = vadd.f32 %v5028, %v5098
    %5100 = vdwg.mxu0
    %s5101 = scalar_lea.vmem %s17, 8
    %v5102 = vld [vmem:[%s5101] sm:$0xf]
    %v5104 = vsel %vm4323, %v5102, 0
    %5106 = vmatprep.subr.mxu0 %v4317
    %5107 = vmatpush1.msra.mxu0 %v4316
    %5108 = vmatprep.subr.mxu0 %v4332
    %5109 = vmatpush1.msra.mxu0 %v4329
    %5110 = vmatprep.subr.mxu0 0.0
    %5111 = vmatpush1.msra.mxu0 0.0
    %5112 = vmatprep.subr.mxu0 0.0
    %5113 = vmatpush1.msra.mxu0 0.0
    %5114 = vmatprep.subr.mxu0 0.0
    %5115 = vmatpush1.msra.mxu0 0.0
    %5116 = vmatprep.subr.mxu0 0.0
    %5117 = vmatpush1.msra.mxu0 0.0
    %5118 = vmatprep.subr.mxu0 0.0
    %5119 = vmatpush1.msra.mxu0 0.0
    %5120 = vmatprep.subr.mxu0 0.0
    %5121 = vmatpush1.msra.mxu0 0.0
    %5122 = vmatprep.subr.mxu0 0.0
    %5123 = vmatpush1.msra.mxu0 0.0
    %5124 = vmatprep.subr.mxu0 0.0
    %5125 = vmatpush1.msra.mxu0 0.0
    %5126 = vmatprep.subr.mxu0 0.0
    %5127 = vmatpush1.msra.mxu0 0.0
    %5128 = vmatprep.subr.mxu0 0.0
    %5129 = vmatpush1.msra.mxu0 0.0
    %5130 = vmatprep.subr.mxu0 0.0
    %5131 = vmatpush1.msra.mxu0 0.0
    %5132 = vmatprep.subr.mxu0 0.0
    %5133 = vmatpush1.msra.mxu0 0.0
    %5134 = vmatprep.subr.mxu0 0.0
    %5135 = vmatpush1.msra.mxu0 0.0
    %5136 = vmatprep.subr.mxu0 0.0
    %5137 = vmatpush1.msra.mxu0 0.0
    %5138 = vmatprep.subr.mxu0 0.0
    %5139 = vmatpush1.msra.mxu0 0.0
    %5140 = vmatprep.subr.mxu0 0.0
    %5141 = vmatpush1.msra.mxu0 0.0
    %5142 = vmatprep.subr.mxu0 0.0
    %5143 = vmatpush1.msra.mxu0 0.0
    %5144 = vmatprep.subr.mxu0 0.0
    %5145 = vmatpush1.msra.mxu0 0.0
    %5146 = vmatprep.subr.mxu0 0.0
    %5147 = vmatpush1.msra.mxu0 0.0
    %5148 = vmatprep.subr.mxu0 0.0
    %5149 = vmatpush1.msra.mxu0 0.0
    %5150 = vmatprep.subr.mxu0 0.0
    %5151 = vmatpush1.msra.mxu0 0.0
    %5152 = vmatprep.subr.mxu0 0.0
    %5153 = vmatpush1.msra.mxu0 0.0
    %5154 = vmatprep.subr.mxu0 0.0
    %5155 = vmatpush1.msra.mxu0 0.0
    %5156 = vmatprep.subr.mxu0 0.0
    %5157 = vmatpush1.msra.mxu0 0.0
    %5158 = vmatprep.subr.mxu0 0.0
    %5159 = vmatpush1.msra.mxu0 0.0
    %5160 = vmatprep.subr.mxu0 0.0
    %5161 = vmatpush1.msra.mxu0 0.0
    %5162 = vmatprep.subr.mxu0 0.0
    %5163 = vmatpush1.msra.mxu0 0.0
    %5164 = vmatprep.subr.mxu0 0.0
    %5165 = vmatpush1.msra.mxu0 0.0
    %5166 = vmatprep.subr.mxu0 0.0
    %5167 = vmatpush1.msra.mxu0 0.0
    %5168 = vmatprep.subr.mxu0 0.0
    %5169 = vmatpush1.msra.mxu0 0.0
    %5170 = vmatprep.mubr.f32.mxu0 0.0
    %5171 = vmatmul.mubr.f32.gmra.mrb[0].mxu0 %v5104
    %v5172 = vpop.f32.mrb[0].mxu0
    %v5173 = vadd.f32 0.0, %v5172
    %v5174 = vpop.f32.mrb[0].mxu0
    %v5175 = vadd.f32 0.0, %v5174
    %5176 = vdwg.mxu0
    %5177 = vmatprep.subr.mxu0 0.0
    %5178 = vmatpush1.msra.mxu0 %v4318
    %5179 = vmatprep.subr.mxu0 0.0
    %5180 = vmatpush1.msra.mxu0 %v4335
    %5181 = vmatprep.subr.mxu0 0.0
    %5182 = vmatpush1.msra.mxu0 0.0
    %5183 = vmatprep.subr.mxu0 0.0
    %5184 = vmatpush1.msra.mxu0 0.0
    %5185 = vmatprep.subr.mxu0 0.0
    %5186 = vmatpush1.msra.mxu0 0.0
    %5187 = vmatprep.subr.mxu0 0.0
    %5188 = vmatpush1.msra.mxu0 0.0
    %5189 = vmatprep.subr.mxu0 0.0
    %5190 = vmatpush1.msra.mxu0 0.0
    %5191 = vmatprep.subr.mxu0 0.0
    %5192 = vmatpush1.msra.mxu0 0.0
    %5193 = vmatprep.subr.mxu0 0.0
    %5194 = vmatpush1.msra.mxu0 0.0
    %5195 = vmatprep.subr.mxu0 0.0
    %5196 = vmatpush1.msra.mxu0 0.0
    %5197 = vmatprep.subr.mxu0 0.0
    %5198 = vmatpush1.msra.mxu0 0.0
    %5199 = vmatprep.subr.mxu0 0.0
    %5200 = vmatpush1.msra.mxu0 0.0
    %5201 = vmatprep.subr.mxu0 0.0
    %5202 = vmatpush1.msra.mxu0 0.0
    %5203 = vmatprep.subr.mxu0 0.0
    %5204 = vmatpush1.msra.mxu0 0.0
    %5205 = vmatprep.subr.mxu0 0.0
    %5206 = vmatpush1.msra.mxu0 0.0
    %5207 = vmatprep.subr.mxu0 0.0
    %5208 = vmatpush1.msra.mxu0 0.0
    %5209 = vmatprep.subr.mxu0 0.0
    %5210 = vmatpush1.msra.mxu0 0.0
    %5211 = vmatprep.subr.mxu0 0.0
    %5212 = vmatpush1.msra.mxu0 0.0
    %5213 = vmatprep.subr.mxu0 0.0
    %5214 = vmatpush1.msra.mxu0 0.0
    %5215 = vmatprep.subr.mxu0 0.0
    %5216 = vmatpush1.msra.mxu0 0.0
    %5217 = vmatprep.subr.mxu0 0.0
    %5218 = vmatpush1.msra.mxu0 0.0
    %5219 = vmatprep.subr.mxu0 0.0
    %5220 = vmatpush1.msra.mxu0 0.0
    %5221 = vmatprep.subr.mxu0 0.0
    %5222 = vmatpush1.msra.mxu0 0.0
    %5223 = vmatprep.subr.mxu0 0.0
    %5224 = vmatpush1.msra.mxu0 0.0
    %5225 = vmatprep.subr.mxu0 0.0
    %5226 = vmatpush1.msra.mxu0 0.0
    %5227 = vmatprep.subr.mxu0 0.0
    %5228 = vmatpush1.msra.mxu0 0.0
    %5229 = vmatprep.subr.mxu0 0.0
    %5230 = vmatpush1.msra.mxu0 0.0
    %5231 = vmatprep.subr.mxu0 0.0
    %5232 = vmatpush1.msra.mxu0 0.0
    %5233 = vmatprep.subr.mxu0 0.0
    %5234 = vmatpush1.msra.mxu0 0.0
    %5235 = vmatprep.subr.mxu0 0.0
    %5236 = vmatpush1.msra.mxu0 0.0
    %5237 = vmatprep.subr.mxu0 0.0
    %5238 = vmatpush1.msra.mxu0 0.0
    %5239 = vmatprep.subr.mxu0 0.0
    %5240 = vmatpush1.msra.mxu0 0.0
    %5241 = vmatprep.mubr.f32.mxu0 0.0
    %5242 = vmatmul.mubr.f32.gmra.mrb[0].mxu0 %v5104
    %v5243 = vpop.f32.mrb[0].mxu0
    %v5244 = vadd.f32 0.0, %v5243
    %v5245 = vpop.f32.mrb[0].mxu0
    %5246 = vdwg.mxu0
    %s5247 = scalar_lea.vmem %s19, 1536
    %v5248 = vld [vmem:[%s5247] sm:$0xff]
    %v5249 = vld [vmem:[%s5247 + $0x8] sm:$0xff]
    %v5250 = vld [vmem:[%s5247 + $0x10] sm:$0xff]
    %v5251 = vld [vmem:[%s5247 + $0x18] sm:$0xff]
    %v5252 = vld [vmem:[%s5247 + $0x20] sm:$0xff]
    %v5253 = vld [vmem:[%s5247 + $0x28] sm:$0xff]
    %v5254 = vld [vmem:[%s5247 + $0x30] sm:$0xff]
    %v5255 = vld [vmem:[%s5247 + $0x38] sm:$0xff]
    %v5256 = vld [vmem:[%s5247 + $0x40] sm:$0xff]
    %v5257 = vld [vmem:[%s5247 + $0x48] sm:$0xff]
    %v5258 = vld [vmem:[%s5247 + $0x50] sm:$0xff]
    %v5259 = vld [vmem:[%s5247 + $0x58] sm:$0xff]
    %v5260 = vld [vmem:[%s5247 + $0x60] sm:$0xff]
    %v5261 = vld [vmem:[%s5247 + $0x68] sm:$0xff]
    %v5262 = vld [vmem:[%s5247 + $0x70] sm:$0xff]
    %v5263 = vld [vmem:[%s5247 + $0x78] sm:$0xff]
    %v5264 = vld [vmem:[%s5247 + $0x80] sm:$0xff]
    %v5265 = vld [vmem:[%s5247 + $0x88] sm:$0xff]
    %v5266 = vld [vmem:[%s5247 + $0x90] sm:$0xff]
    %v5267 = vld [vmem:[%s5247 + $0x98] sm:$0xff]
    %v5268 = vld [vmem:[%s5247 + $0xa0] sm:$0xff]
    %v5269 = vld [vmem:[%s5247 + $0xa8] sm:$0xff]
    %v5270 = vld [vmem:[%s5247 + $0xb0] sm:$0xff]
    %v5271 = vld [vmem:[%s5247 + $0xb8] sm:$0xff]
    %v5272 = vld [vmem:[%s5247 + $0xc0] sm:$0xff]
    %v5273 = vld [vmem:[%s5247 + $0xc8] sm:$0xff]
    %v5274 = vld [vmem:[%s5247 + $0xd0] sm:$0xff]
    %v5275 = vld [vmem:[%s5247 + $0xd8] sm:$0xff]
    %v5276 = vld [vmem:[%s5247 + $0xe0] sm:$0xff]
    %v5277 = vld [vmem:[%s5247 + $0xe8] sm:$0xff]
    %v5278 = vld [vmem:[%s5247 + $0xf0] sm:$0xff]
    %v5279 = vld [vmem:[%s5247 + $0xf8] sm:$0xff]
    %v5280 = vld [vmem:[%s5247 + $0x100] sm:$0xff]
    %v5281 = vld [vmem:[%s5247 + $0x108] sm:$0xff]
    %v5282 = vld [vmem:[%s5247 + $0x110] sm:$0xff]
    %v5283 = vld [vmem:[%s5247 + $0x118] sm:$0xff]
    %v5284 = vld [vmem:[%s5247 + $0x120] sm:$0xff]
    %v5285 = vld [vmem:[%s5247 + $0x128] sm:$0xff]
    %v5286 = vld [vmem:[%s5247 + $0x130] sm:$0xff]
    %v5287 = vld [vmem:[%s5247 + $0x138] sm:$0xff]
    %v5288 = vld [vmem:[%s5247 + $0x140] sm:$0xff]
    %v5289 = vld [vmem:[%s5247 + $0x148] sm:$0xff]
    %v5290 = vld [vmem:[%s5247 + $0x150] sm:$0xff]
    %v5291 = vld [vmem:[%s5247 + $0x158] sm:$0xff]
    %v5292 = vld [vmem:[%s5247 + $0x160] sm:$0xff]
    %v5293 = vld [vmem:[%s5247 + $0x168] sm:$0xff]
    %v5294 = vld [vmem:[%s5247 + $0x170] sm:$0xff]
    %v5295 = vld [vmem:[%s5247 + $0x178] sm:$0xff]
    %v5296 = vld [vmem:[%s5247 + $0x180] sm:$0xff]
    %v5297 = vld [vmem:[%s5247 + $0x188] sm:$0xff]
    %v5298 = vld [vmem:[%s5247 + $0x190] sm:$0xff]
    %v5299 = vld [vmem:[%s5247 + $0x198] sm:$0xff]
    %v5300 = vld [vmem:[%s5247 + $0x1a0] sm:$0xff]
    %v5301 = vld [vmem:[%s5247 + $0x1a8] sm:$0xff]
    %v5302 = vld [vmem:[%s5247 + $0x1b0] sm:$0xff]
    %v5303 = vld [vmem:[%s5247 + $0x1b8] sm:$0xff]
    %v5304 = vld [vmem:[%s5247 + $0x1c0] sm:$0xff]
    %v5305 = vld [vmem:[%s5247 + $0x1c8] sm:$0xff]
    %v5306 = vld [vmem:[%s5247 + $0x1d0] sm:$0xff]
    %v5307 = vld [vmem:[%s5247 + $0x1d8] sm:$0xff]
    %v5308 = vld [vmem:[%s5247 + $0x1e0] sm:$0xff]
    %v5309 = vld [vmem:[%s5247 + $0x1e8] sm:$0xff]
    %v5310 = vld [vmem:[%s5247 + $0x1f0] sm:$0xff]
    %v5311 = vld [vmem:[%s5247 + $0x1f8] sm:$0xff]
    %v5312 = vld [vmem:[%s5247 + $0x200] sm:$0xff]
    %v5313 = vld [vmem:[%s5247 + $0x208] sm:$0xff]
    %v5314 = vld [vmem:[%s5247 + $0x210] sm:$0xff]
    %v5315 = vld [vmem:[%s5247 + $0x218] sm:$0xff]
    %v5316 = vld [vmem:[%s5247 + $0x220] sm:$0xff]
    %v5317 = vld [vmem:[%s5247 + $0x228] sm:$0xff]
    %v5318 = vld [vmem:[%s5247 + $0x230] sm:$0xff]
    %v5319 = vld [vmem:[%s5247 + $0x238] sm:$0xff]
    %v5320 = vld [vmem:[%s5247 + $0x240] sm:$0xff]
    %v5321 = vld [vmem:[%s5247 + $0x248] sm:$0xff]
    %v5322 = vld [vmem:[%s5247 + $0x250] sm:$0xff]
    %v5323 = vld [vmem:[%s5247 + $0x258] sm:$0xff]
    %v5324 = vld [vmem:[%s5247 + $0x260] sm:$0xff]
    %v5325 = vld [vmem:[%s5247 + $0x268] sm:$0xff]
    %v5326 = vld [vmem:[%s5247 + $0x270] sm:$0xff]
    %v5327 = vld [vmem:[%s5247 + $0x278] sm:$0xff]
    %v5328 = vld [vmem:[%s5247 + $0x280] sm:$0xff]
    %v5329 = vld [vmem:[%s5247 + $0x288] sm:$0xff]
    %v5330 = vld [vmem:[%s5247 + $0x290] sm:$0xff]
    %v5331 = vld [vmem:[%s5247 + $0x298] sm:$0xff]
    %v5332 = vld [vmem:[%s5247 + $0x2a0] sm:$0xff]
    %v5333 = vld [vmem:[%s5247 + $0x2a8] sm:$0xff]
    %v5334 = vld [vmem:[%s5247 + $0x2b0] sm:$0xff]
    %v5335 = vld [vmem:[%s5247 + $0x2b8] sm:$0xff]
    %v5336 = vld [vmem:[%s5247 + $0x2c0] sm:$0xff]
    %v5337 = vld [vmem:[%s5247 + $0x2c8] sm:$0xff]
    %v5338 = vld [vmem:[%s5247 + $0x2d0] sm:$0xff]
    %v5339 = vld [vmem:[%s5247 + $0x2d8] sm:$0xff]
    %v5340 = vld [vmem:[%s5247 + $0x2e0] sm:$0xff]
    %v5341 = vld [vmem:[%s5247 + $0x2e8] sm:$0xff]
    %v5342 = vld [vmem:[%s5247 + $0x2f0] sm:$0xff]
    %v5343 = vld [vmem:[%s5247 + $0x2f8] sm:$0xff]
    %5344 = vmatprep.subr.mxu0 %v5249
    %5345 = vmatpush1.msra.mxu0 %v5248
    %5346 = vmatprep.subr.mxu0 %v5251
    %5347 = vmatpush1.msra.mxu0 %v5250
    %5348 = vmatprep.subr.mxu0 %v5253
    %5349 = vmatpush1.msra.mxu0 %v5252
    %5350 = vmatprep.subr.mxu0 %v5255
    %5351 = vmatpush1.msra.mxu0 %v5254
    %5352 = vmatprep.subr.mxu0 %v5257
    %5353 = vmatpush1.msra.mxu0 %v5256
    %5354 = vmatprep.subr.mxu0 %v5259
    %5355 = vmatpush1.msra.mxu0 %v5258
    %5356 = vmatprep.subr.mxu0 %v5261
    %5357 = vmatpush1.msra.mxu0 %v5260
    %5358 = vmatprep.subr.mxu0 %v5263
    %5359 = vmatpush1.msra.mxu0 %v5262
    %5360 = vmatprep.subr.mxu0 %v5265
    %5361 = vmatpush1.msra.mxu0 %v5264
    %5362 = vmatprep.subr.mxu0 %v5267
    %5363 = vmatpush1.msra.mxu0 %v5266
    %5364 = vmatprep.subr.mxu0 %v5269
    %5365 = vmatpush1.msra.mxu0 %v5268
    %5366 = vmatprep.subr.mxu0 %v5271
    %5367 = vmatpush1.msra.mxu0 %v5270
    %5368 = vmatprep.subr.mxu0 %v5273
    %5369 = vmatpush1.msra.mxu0 %v5272
    %5370 = vmatprep.subr.mxu0 %v5275
    %5371 = vmatpush1.msra.mxu0 %v5274
    %5372 = vmatprep.subr.mxu0 %v5277
    %5373 = vmatpush1.msra.mxu0 %v5276
    %5374 = vmatprep.subr.mxu0 %v5279
    %5375 = vmatpush1.msra.mxu0 %v5278
    %5376 = vmatprep.subr.mxu0 %v5281
    %5377 = vmatpush1.msra.mxu0 %v5280
    %5378 = vmatprep.subr.mxu0 %v5283
    %5379 = vmatpush1.msra.mxu0 %v5282
    %5380 = vmatprep.subr.mxu0 %v5285
    %5381 = vmatpush1.msra.mxu0 %v5284
    %5382 = vmatprep.subr.mxu0 %v5287
    %5383 = vmatpush1.msra.mxu0 %v5286
    %5384 = vmatprep.subr.mxu0 %v5289
    %5385 = vmatpush1.msra.mxu0 %v5288
    %5386 = vmatprep.subr.mxu0 %v5291
    %5387 = vmatpush1.msra.mxu0 %v5290
    %5388 = vmatprep.subr.mxu0 %v5293
    %5389 = vmatpush1.msra.mxu0 %v5292
    %5390 = vmatprep.subr.mxu0 %v5295
    %5391 = vmatpush1.msra.mxu0 %v5294
    %5392 = vmatprep.subr.mxu0 %v5297
    %5393 = vmatpush1.msra.mxu0 %v5296
    %5394 = vmatprep.subr.mxu0 %v5299
    %5395 = vmatpush1.msra.mxu0 %v5298
    %5396 = vmatprep.subr.mxu0 %v5301
    %5397 = vmatpush1.msra.mxu0 %v5300
    %5398 = vmatprep.subr.mxu0 %v5303
    %5399 = vmatpush1.msra.mxu0 %v5302
    %5400 = vmatprep.subr.mxu0 %v5305
    %5401 = vmatpush1.msra.mxu0 %v5304
    %5402 = vmatprep.subr.mxu0 %v5307
    %5403 = vmatpush1.msra.mxu0 %v5306
    %5404 = vmatprep.subr.mxu0 %v5309
    %5405 = vmatpush1.msra.mxu0 %v5308
    %5406 = vmatprep.subr.mxu0 %v5311
    %5407 = vmatpush1.msra.mxu0 %v5310
    %5408 = vmatprep.mubr.f32.mxu0 %v5175
    %5409 = vmatmul.mubr.f32.gmra.mrb[0].mxu0 %v5173
    %v5410 = vpop.f32.mrb[0].mxu0
    %v5411 = vadd.f32 0.0, %v5410
    %v5412 = vpop.f32.mrb[0].mxu0
    %v5413 = vadd.f32 0.0, %v5412
    %5414 = vdwg.mxu0
    %5415 = vmatprep.subr.mxu0 %v5313
    %5416 = vmatpush1.msra.mxu0 %v5312
    %5417 = vmatprep.subr.mxu0 %v5315
    %5418 = vmatpush1.msra.mxu0 %v5314
    %5419 = vmatprep.subr.mxu0 %v5317
    %5420 = vmatpush1.msra.mxu0 %v5316
    %5421 = vmatprep.subr.mxu0 %v5319
    %5422 = vmatpush1.msra.mxu0 %v5318
    %5423 = vmatprep.subr.mxu0 %v5321
    %5424 = vmatpush1.msra.mxu0 %v5320
    %5425 = vmatprep.subr.mxu0 %v5323
    %5426 = vmatpush1.msra.mxu0 %v5322
    %5427 = vmatprep.subr.mxu0 %v5325
    %5428 = vmatpush1.msra.mxu0 %v5324
    %5429 = vmatprep.subr.mxu0 %v5327
    %5430 = vmatpush1.msra.mxu0 %v5326
    %5431 = vmatprep.subr.mxu0 %v5329
    %5432 = vmatpush1.msra.mxu0 %v5328
    %5433 = vmatprep.subr.mxu0 %v5331
    %5434 = vmatpush1.msra.mxu0 %v5330
    %5435 = vmatprep.subr.mxu0 %v5333
    %5436 = vmatpush1.msra.mxu0 %v5332
    %5437 = vmatprep.subr.mxu0 %v5335
    %5438 = vmatpush1.msra.mxu0 %v5334
    %5439 = vmatprep.subr.mxu0 %v5337
    %5440 = vmatpush1.msra.mxu0 %v5336
    %5441 = vmatprep.subr.mxu0 %v5339
    %5442 = vmatpush1.msra.mxu0 %v5338
    %5443 = vmatprep.subr.mxu0 %v5341
    %5444 = vmatpush1.msra.mxu0 %v5340
    %5445 = vmatprep.subr.mxu0 %v5343
    %5446 = vmatpush1.msra.mxu0 %v5342
    %5447 = vmatprep.subr.mxu0 0.0
    %5448 = vmatpush1.msra.mxu0 0.0
    %5449 = vmatprep.subr.mxu0 0.0
    %5450 = vmatpush1.msra.mxu0 0.0
    %5451 = vmatprep.subr.mxu0 0.0
    %5452 = vmatpush1.msra.mxu0 0.0
    %5453 = vmatprep.subr.mxu0 0.0
    %5454 = vmatpush1.msra.mxu0 0.0
    %5455 = vmatprep.subr.mxu0 0.0
    %5456 = vmatpush1.msra.mxu0 0.0
    %5457 = vmatprep.subr.mxu0 0.0
    %5458 = vmatpush1.msra.mxu0 0.0
    %5459 = vmatprep.subr.mxu0 0.0
    %5460 = vmatpush1.msra.mxu0 0.0
    %5461 = vmatprep.subr.mxu0 0.0
    %5462 = vmatpush1.msra.mxu0 0.0
    %5463 = vmatprep.subr.mxu0 0.0
    %5464 = vmatpush1.msra.mxu0 0.0
    %5465 = vmatprep.subr.mxu0 0.0
    %5466 = vmatpush1.msra.mxu0 0.0
    %5467 = vmatprep.subr.mxu0 0.0
    %5468 = vmatpush1.msra.mxu0 0.0
    %5469 = vmatprep.subr.mxu0 0.0
    %5470 = vmatpush1.msra.mxu0 0.0
    %5471 = vmatprep.subr.mxu0 0.0
    %5472 = vmatpush1.msra.mxu0 0.0
    %5473 = vmatprep.subr.mxu0 0.0
    %5474 = vmatpush1.msra.mxu0 0.0
    %5475 = vmatprep.subr.mxu0 0.0
    %5476 = vmatpush1.msra.mxu0 0.0
    %5477 = vmatprep.subr.mxu0 0.0
    %5478 = vmatpush1.msra.mxu0 0.0
    %5479 = vmatprep.mubr.f32.mxu0 0.0
    %5480 = vmatmul.mubr.f32.gmra.mrb[0].mxu0 %v5244
    %v5481 = vpop.f32.mrb[0].mxu0
    %v5482 = vadd.f32 %v5411, %v5481
    %v5483 = vpop.f32.mrb[0].mxu0
    %v5484 = vadd.f32 %v5413, %v5483
    %5485 = vdwg.mxu0
    %v5486 = vadd.f32 %v5097, %v5482
    %v5487 = vadd.f32 %v5099, %v5484
    %s5488 = scalar_lea.vmem %s17, 12
    %v5489 = vld [vmem:[%s5488] sm:$0xf]
    %v5491 = vsel %vm4323, %v5489, 0
    %5493 = vmatprep.subr.mxu0 %v4317
    %5494 = vmatpush1.msra.mxu0 %v4316
    %5495 = vmatprep.subr.mxu0 %v4332
    %5496 = vmatpush1.msra.mxu0 %v4329
    %5497 = vmatprep.subr.mxu0 0.0
    %5498 = vmatpush1.msra.mxu0 0.0
    %5499 = vmatprep.subr.mxu0 0.0
    %5500 = vmatpush1.msra.mxu0 0.0
    %5501 = vmatprep.subr.mxu0 0.0
    %5502 = vmatpush1.msra.mxu0 0.0
    %5503 = vmatprep.subr.mxu0 0.0
    %5504 = vmatpush1.msra.mxu0 0.0
    %5505 = vmatprep.subr.mxu0 0.0
    %5506 = vmatpush1.msra.mxu0 0.0
    %5507 = vmatprep.subr.mxu0 0.0
    %5508 = vmatpush1.msra.mxu0 0.0
    %5509 = vmatprep.subr.mxu0 0.0
    %5510 = vmatpush1.msra.mxu0 0.0
    %5511 = vmatprep.subr.mxu0 0.0
    %5512 = vmatpush1.msra.mxu0 0.0
    %5513 = vmatprep.subr.mxu0 0.0
    %5514 = vmatpush1.msra.mxu0 0.0
    %5515 = vmatprep.subr.mxu0 0.0
    %5516 = vmatpush1.msra.mxu0 0.0
    %5517 = vmatprep.subr.mxu0 0.0
    %5518 = vmatpush1.msra.mxu0 0.0
    %5519 = vmatprep.subr.mxu0 0.0
    %5520 = vmatpush1.msra.mxu0 0.0
    %5521 = vmatprep.subr.mxu0 0.0
    %5522 = vmatpush1.msra.mxu0 0.0
    %5523 = vmatprep.subr.mxu0 0.0
    %5524 = vmatpush1.msra.mxu0 0.0
    %5525 = vmatprep.subr.mxu0 0.0
    %5526 = vmatpush1.msra.mxu0 0.0
    %5527 = vmatprep.subr.mxu0 0.0
    %5528 = vmatpush1.msra.mxu0 0.0
    %5529 = vmatprep.subr.mxu0 0.0
    %5530 = vmatpush1.msra.mxu0 0.0
    %5531 = vmatprep.subr.mxu0 0.0
    %5532 = vmatpush1.msra.mxu0 0.0
    %5533 = vmatprep.subr.mxu0 0.0
    %5534 = vmatpush1.msra.mxu0 0.0
    %5535 = vmatprep.subr.mxu0 0.0
    %5536 = vmatpush1.msra.mxu0 0.0
    %5537 = vmatprep.subr.mxu0 0.0
    %5538 = vmatpush1.msra.mxu0 0.0
    %5539 = vmatprep.subr.mxu0 0.0
    %5540 = vmatpush1.msra.mxu0 0.0
    %5541 = vmatprep.subr.mxu0 0.0
    %5542 = vmatpush1.msra.mxu0 0.0
    %5543 = vmatprep.subr.mxu0 0.0
    %5544 = vmatpush1.msra.mxu0 0.0
    %5545 = vmatprep.subr.mxu0 0.0
    %5546 = vmatpush1.msra.mxu0 0.0
    %5547 = vmatprep.subr.mxu0 0.0
    %5548 = vmatpush1.msra.mxu0 0.0
    %5549 = vmatprep.subr.mxu0 0.0
    %5550 = vmatpush1.msra.mxu0 0.0
    %5551 = vmatprep.subr.mxu0 0.0
    %5552 = vmatpush1.msra.mxu0 0.0
    %5553 = vmatprep.subr.mxu0 0.0
    %5554 = vmatpush1.msra.mxu0 0.0
    %5555 = vmatprep.subr.mxu0 0.0
    %5556 = vmatpush1.msra.mxu0 0.0
    %5557 = vmatprep.mubr.f32.mxu0 0.0
    %5558 = vmatmul.mubr.f32.gmra.mrb[0].mxu0 %v5491
    %v5559 = vpop.f32.mrb[0].mxu0
    %v5560 = vadd.f32 0.0, %v5559
    %v5561 = vpop.f32.mrb[0].mxu0
    %v5562 = vadd.f32 0.0, %v5561
    %5563 = vdwg.mxu0
    %5564 = vmatprep.subr.mxu0 0.0
    %5565 = vmatpush1.msra.mxu0 %v4318
    %5566 = vmatprep.subr.mxu0 0.0
    %5567 = vmatpush1.msra.mxu0 %v4335
    %5568 = vmatprep.subr.mxu0 0.0
    %5569 = vmatpush1.msra.mxu0 0.0
    %5570 = vmatprep.subr.mxu0 0.0
    %5571 = vmatpush1.msra.mxu0 0.0
    %5572 = vmatprep.subr.mxu0 0.0
    %5573 = vmatpush1.msra.mxu0 0.0
    %5574 = vmatprep.subr.mxu0 0.0
    %5575 = vmatpush1.msra.mxu0 0.0
    %5576 = vmatprep.subr.mxu0 0.0
    %5577 = vmatpush1.msra.mxu0 0.0
    %5578 = vmatprep.subr.mxu0 0.0
    %5579 = vmatpush1.msra.mxu0 0.0
    %5580 = vmatprep.subr.mxu0 0.0
    %5581 = vmatpush1.msra.mxu0 0.0
    %5582 = vmatprep.subr.mxu0 0.0
    %5583 = vmatpush1.msra.mxu0 0.0
    %5584 = vmatprep.subr.mxu0 0.0
    %5585 = vmatpush1.msra.mxu0 0.0
    %5586 = vmatprep.subr.mxu0 0.0
    %5587 = vmatpush1.msra.mxu0 0.0
    %5588 = vmatprep.subr.mxu0 0.0
    %5589 = vmatpush1.msra.mxu0 0.0
    %5590 = vmatprep.subr.mxu0 0.0
    %5591 = vmatpush1.msra.mxu0 0.0
    %5592 = vmatprep.subr.mxu0 0.0
    %5593 = vmatpush1.msra.mxu0 0.0
    %5594 = vmatprep.subr.mxu0 0.0
    %5595 = vmatpush1.msra.mxu0 0.0
    %5596 = vmatprep.subr.mxu0 0.0
    %5597 = vmatpush1.msra.mxu0 0.0
    %5598 = vmatprep.subr.mxu0 0.0
    %5599 = vmatpush1.msra.mxu0 0.0
    %5600 = vmatprep.subr.mxu0 0.0
    %5601 = vmatpush1.msra.mxu0 0.0
    %5602 = vmatprep.subr.mxu0 0.0
    %5603 = vmatpush1.msra.mxu0 0.0
    %5604 = vmatprep.subr.mxu0 0.0
    %5605 = vmatpush1.msra.mxu0 0.0
    %5606 = vmatprep.subr.mxu0 0.0
    %5607 = vmatpush1.msra.mxu0 0.0
    %5608 = vmatprep.subr.mxu0 0.0
    %5609 = vmatpush1.msra.mxu0 0.0
    %5610 = vmatprep.subr.mxu0 0.0
    %5611 = vmatpush1.msra.mxu0 0.0
    %5612 = vmatprep.subr.mxu0 0.0
    %5613 = vmatpush1.msra.mxu0 0.0
    %5614 = vmatprep.subr.mxu0 0.0
    %5615 = vmatpush1.msra.mxu0 0.0
    %5616 = vmatprep.subr.mxu0 0.0
    %5617 = vmatpush1.msra.mxu0 0.0
    %5618 = vmatprep.subr.mxu0 0.0
    %5619 = vmatpush1.msra.mxu0 0.0
    %5620 = vmatprep.subr.mxu0 0.0
    %5621 = vmatpush1.msra.mxu0 0.0
    %5622 = vmatprep.subr.mxu0 0.0
    %5623 = vmatpush1.msra.mxu0 0.0
    %5624 = vmatprep.subr.mxu0 0.0
    %5625 = vmatpush1.msra.mxu0 0.0
    %5626 = vmatprep.subr.mxu0 0.0
    %5627 = vmatpush1.msra.mxu0 0.0
    %5628 = vmatprep.mubr.f32.mxu0 0.0
    %5629 = vmatmul.mubr.f32.gmra.mrb[0].mxu0 %v5491
    %v5630 = vpop.f32.mrb[0].mxu0
    %v5631 = vadd.f32 0.0, %v5630
    %v5632 = vpop.f32.mrb[0].mxu0
    %5633 = vdwg.mxu0
    %s5634 = scalar_lea.vmem %s19, 2304
    %v5635 = vld [vmem:[%s5634] sm:$0xff]
    %v5636 = vld [vmem:[%s5634 + $0x8] sm:$0xff]
    %v5637 = vld [vmem:[%s5634 + $0x10] sm:$0xff]
    %v5638 = vld [vmem:[%s5634 + $0x18] sm:$0xff]
    %v5639 = vld [vmem:[%s5634 + $0x20] sm:$0xff]
    %v5640 = vld [vmem:[%s5634 + $0x28] sm:$0xff]
    %v5641 = vld [vmem:[%s5634 + $0x30] sm:$0xff]
    %v5642 = vld [vmem:[%s5634 + $0x38] sm:$0xff]
    %v5643 = vld [vmem:[%s5634 + $0x40] sm:$0xff]
    %v5644 = vld [vmem:[%s5634 + $0x48] sm:$0xff]
    %v5645 = vld [vmem:[%s5634 + $0x50] sm:$0xff]
    %v5646 = vld [vmem:[%s5634 + $0x58] sm:$0xff]
    %v5647 = vld [vmem:[%s5634 + $0x60] sm:$0xff]
    %v5648 = vld [vmem:[%s5634 + $0x68] sm:$0xff]
    %v5649 = vld [vmem:[%s5634 + $0x70] sm:$0xff]
    %v5650 = vld [vmem:[%s5634 + $0x78] sm:$0xff]
    %v5651 = vld [vmem:[%s5634 + $0x80] sm:$0xff]
    %v5652 = vld [vmem:[%s5634 + $0x88] sm:$0xff]
    %v5653 = vld [vmem:[%s5634 + $0x90] sm:$0xff]
    %v5654 = vld [vmem:[%s5634 + $0x98] sm:$0xff]
    %v5655 = vld [vmem:[%s5634 + $0xa0] sm:$0xff]
    %v5656 = vld [vmem:[%s5634 + $0xa8] sm:$0xff]
    %v5657 = vld [vmem:[%s5634 + $0xb0] sm:$0xff]
    %v5658 = vld [vmem:[%s5634 + $0xb8] sm:$0xff]
    %v5659 = vld [vmem:[%s5634 + $0xc0] sm:$0xff]
    %v5660 = vld [vmem:[%s5634 + $0xc8] sm:$0xff]
    %v5661 = vld [vmem:[%s5634 + $0xd0] sm:$0xff]
    %v5662 = vld [vmem:[%s5634 + $0xd8] sm:$0xff]
    %v5663 = vld [vmem:[%s5634 + $0xe0] sm:$0xff]
    %v5664 = vld [vmem:[%s5634 + $0xe8] sm:$0xff]
    %v5665 = vld [vmem:[%s5634 + $0xf0] sm:$0xff]
    %v5666 = vld [vmem:[%s5634 + $0xf8] sm:$0xff]
    %v5667 = vld [vmem:[%s5634 + $0x100] sm:$0xff]
    %v5668 = vld [vmem:[%s5634 + $0x108] sm:$0xff]
    %v5669 = vld [vmem:[%s5634 + $0x110] sm:$0xff]
    %v5670 = vld [vmem:[%s5634 + $0x118] sm:$0xff]
    %v5671 = vld [vmem:[%s5634 + $0x120] sm:$0xff]
    %v5672 = vld [vmem:[%s5634 + $0x128] sm:$0xff]
    %v5673 = vld [vmem:[%s5634 + $0x130] sm:$0xff]
    %v5674 = vld [vmem:[%s5634 + $0x138] sm:$0xff]
    %v5675 = vld [vmem:[%s5634 + $0x140] sm:$0xff]
    %v5676 = vld [vmem:[%s5634 + $0x148] sm:$0xff]
    %v5677 = vld [vmem:[%s5634 + $0x150] sm:$0xff]
    %v5678 = vld [vmem:[%s5634 + $0x158] sm:$0xff]
    %v5679 = vld [vmem:[%s5634 + $0x160] sm:$0xff]
    %v5680 = vld [vmem:[%s5634 + $0x168] sm:$0xff]
    %v5681 = vld [vmem:[%s5634 + $0x170] sm:$0xff]
    %v5682 = vld [vmem:[%s5634 + $0x178] sm:$0xff]
    %v5683 = vld [vmem:[%s5634 + $0x180] sm:$0xff]
    %v5684 = vld [vmem:[%s5634 + $0x188] sm:$0xff]
    %v5685 = vld [vmem:[%s5634 + $0x190] sm:$0xff]
    %v5686 = vld [vmem:[%s5634 + $0x198] sm:$0xff]
    %v5687 = vld [vmem:[%s5634 + $0x1a0] sm:$0xff]
    %v5688 = vld [vmem:[%s5634 + $0x1a8] sm:$0xff]
    %v5689 = vld [vmem:[%s5634 + $0x1b0] sm:$0xff]
    %v5690 = vld [vmem:[%s5634 + $0x1b8] sm:$0xff]
    %v5691 = vld [vmem:[%s5634 + $0x1c0] sm:$0xff]
    %v5692 = vld [vmem:[%s5634 + $0x1c8] sm:$0xff]
    %v5693 = vld [vmem:[%s5634 + $0x1d0] sm:$0xff]
    %v5694 = vld [vmem:[%s5634 + $0x1d8] sm:$0xff]
    %v5695 = vld [vmem:[%s5634 + $0x1e0] sm:$0xff]
    %v5696 = vld [vmem:[%s5634 + $0x1e8] sm:$0xff]
    %v5697 = vld [vmem:[%s5634 + $0x1f0] sm:$0xff]
    %v5698 = vld [vmem:[%s5634 + $0x1f8] sm:$0xff]
    %v5699 = vld [vmem:[%s5634 + $0x200] sm:$0xff]
    %v5700 = vld [vmem:[%s5634 + $0x208] sm:$0xff]
    %v5701 = vld [vmem:[%s5634 + $0x210] sm:$0xff]
    %v5702 = vld [vmem:[%s5634 + $0x218] sm:$0xff]
    %v5703 = vld [vmem:[%s5634 + $0x220] sm:$0xff]
    %v5704 = vld [vmem:[%s5634 + $0x228] sm:$0xff]
    %v5705 = vld [vmem:[%s5634 + $0x230] sm:$0xff]
    %v5706 = vld [vmem:[%s5634 + $0x238] sm:$0xff]
    %v5707 = vld [vmem:[%s5634 + $0x240] sm:$0xff]
    %v5708 = vld [vmem:[%s5634 + $0x248] sm:$0xff]
    %v5709 = vld [vmem:[%s5634 + $0x250] sm:$0xff]
    %v5710 = vld [vmem:[%s5634 + $0x258] sm:$0xff]
    %v5711 = vld [vmem:[%s5634 + $0x260] sm:$0xff]
    %v5712 = vld [vmem:[%s5634 + $0x268] sm:$0xff]
    %v5713 = vld [vmem:[%s5634 + $0x270] sm:$0xff]
    %v5714 = vld [vmem:[%s5634 + $0x278] sm:$0xff]
    %v5715 = vld [vmem:[%s5634 + $0x280] sm:$0xff]
    %v5716 = vld [vmem:[%s5634 + $0x288] sm:$0xff]
    %v5717 = vld [vmem:[%s5634 + $0x290] sm:$0xff]
    %v5718 = vld [vmem:[%s5634 + $0x298] sm:$0xff]
    %v5719 = vld [vmem:[%s5634 + $0x2a0] sm:$0xff]
    %v5720 = vld [vmem:[%s5634 + $0x2a8] sm:$0xff]
    %v5721 = vld [vmem:[%s5634 + $0x2b0] sm:$0xff]
    %v5722 = vld [vmem:[%s5634 + $0x2b8] sm:$0xff]
    %v5723 = vld [vmem:[%s5634 + $0x2c0] sm:$0xff]
    %v5724 = vld [vmem:[%s5634 + $0x2c8] sm:$0xff]
    %v5725 = vld [vmem:[%s5634 + $0x2d0] sm:$0xff]
    %v5726 = vld [vmem:[%s5634 + $0x2d8] sm:$0xff]
    %v5727 = vld [vmem:[%s5634 + $0x2e0] sm:$0xff]
    %v5728 = vld [vmem:[%s5634 + $0x2e8] sm:$0xff]
    %v5729 = vld [vmem:[%s5634 + $0x2f0] sm:$0xff]
    %v5730 = vld [vmem:[%s5634 + $0x2f8] sm:$0xff]
    %5731 = vmatprep.subr.mxu0 %v5636
    %5732 = vmatpush1.msra.mxu0 %v5635
    %5733 = vmatprep.subr.mxu0 %v5638
    %5734 = vmatpush1.msra.mxu0 %v5637
    %5735 = vmatprep.subr.mxu0 %v5640
    %5736 = vmatpush1.msra.mxu0 %v5639
    %5737 = vmatprep.subr.mxu0 %v5642
    %5738 = vmatpush1.msra.mxu0 %v5641
    %5739 = vmatprep.subr.mxu0 %v5644
    %5740 = vmatpush1.msra.mxu0 %v5643
    %5741 = vmatprep.subr.mxu0 %v5646
    %5742 = vmatpush1.msra.mxu0 %v5645
    %5743 = vmatprep.subr.mxu0 %v5648
    %5744 = vmatpush1.msra.mxu0 %v5647
    %5745 = vmatprep.subr.mxu0 %v5650
    %5746 = vmatpush1.msra.mxu0 %v5649
    %5747 = vmatprep.subr.mxu0 %v5652
    %5748 = vmatpush1.msra.mxu0 %v5651
    %5749 = vmatprep.subr.mxu0 %v5654
    %5750 = vmatpush1.msra.mxu0 %v5653
    %5751 = vmatprep.subr.mxu0 %v5656
    %5752 = vmatpush1.msra.mxu0 %v5655
    %5753 = vmatprep.subr.mxu0 %v5658
    %5754 = vmatpush1.msra.mxu0 %v5657
    %5755 = vmatprep.subr.mxu0 %v5660
    %5756 = vmatpush1.msra.mxu0 %v5659
    %5757 = vmatprep.subr.mxu0 %v5662
    %5758 = vmatpush1.msra.mxu0 %v5661
    %5759 = vmatprep.subr.mxu0 %v5664
    %5760 = vmatpush1.msra.mxu0 %v5663
    %5761 = vmatprep.subr.mxu0 %v5666
    %5762 = vmatpush1.msra.mxu0 %v5665
    %5763 = vmatprep.subr.mxu0 %v5668
    %5764 = vmatpush1.msra.mxu0 %v5667
    %5765 = vmatprep.subr.mxu0 %v5670
    %5766 = vmatpush1.msra.mxu0 %v5669
    %5767 = vmatprep.subr.mxu0 %v5672
    %5768 = vmatpush1.msra.mxu0 %v5671
    %5769 = vmatprep.subr.mxu0 %v5674
    %5770 = vmatpush1.msra.mxu0 %v5673
    %5771 = vmatprep.subr.mxu0 %v5676
    %5772 = vmatpush1.msra.mxu0 %v5675
    %5773 = vmatprep.subr.mxu0 %v5678
    %5774 = vmatpush1.msra.mxu0 %v5677
    %5775 = vmatprep.subr.mxu0 %v5680
    %5776 = vmatpush1.msra.mxu0 %v5679
    %5777 = vmatprep.subr.mxu0 %v5682
    %5778 = vmatpush1.msra.mxu0 %v5681
    %5779 = vmatprep.subr.mxu0 %v5684
    %5780 = vmatpush1.msra.mxu0 %v5683
    %5781 = vmatprep.subr.mxu0 %v5686
    %5782 = vmatpush1.msra.mxu0 %v5685
    %5783 = vmatprep.subr.mxu0 %v5688
    %5784 = vmatpush1.msra.mxu0 %v5687
    %5785 = vmatprep.subr.mxu0 %v5690
    %5786 = vmatpush1.msra.mxu0 %v5689
    %5787 = vmatprep.subr.mxu0 %v5692
    %5788 = vmatpush1.msra.mxu0 %v5691
    %5789 = vmatprep.subr.mxu0 %v5694
    %5790 = vmatpush1.msra.mxu0 %v5693
    %5791 = vmatprep.subr.mxu0 %v5696
    %5792 = vmatpush1.msra.mxu0 %v5695
    %5793 = vmatprep.subr.mxu0 %v5698
    %5794 = vmatpush1.msra.mxu0 %v5697
    %5795 = vmatprep.mubr.f32.mxu0 %v5562
    %5796 = vmatmul.mubr.f32.gmra.mrb[0].mxu0 %v5560
    %v5797 = vpop.f32.mrb[0].mxu0
    %v5798 = vadd.f32 0.0, %v5797
    %v5799 = vpop.f32.mrb[0].mxu0
    %v5800 = vadd.f32 0.0, %v5799
    %5801 = vdwg.mxu0
    %5802 = vmatprep.subr.mxu0 %v5700
    %5803 = vmatpush1.msra.mxu0 %v5699
    %5804 = vmatprep.subr.mxu0 %v5702
    %5805 = vmatpush1.msra.mxu0 %v5701
    %5806 = vmatprep.subr.mxu0 %v5704
    %5807 = vmatpush1.msra.mxu0 %v5703
    %5808 = vmatprep.subr.mxu0 %v5706
    %5809 = vmatpush1.msra.mxu0 %v5705
    %5810 = vmatprep.subr.mxu0 %v5708
    %5811 = vmatpush1.msra.mxu0 %v5707
    %5812 = vmatprep.subr.mxu0 %v5710
    %5813 = vmatpush1.msra.mxu0 %v5709
    %5814 = vmatprep.subr.mxu0 %v5712
    %5815 = vmatpush1.msra.mxu0 %v5711
    %5816 = vmatprep.subr.mxu0 %v5714
    %5817 = vmatpush1.msra.mxu0 %v5713
    %5818 = vmatprep.subr.mxu0 %v5716
    %5819 = vmatpush1.msra.mxu0 %v5715
    %5820 = vmatprep.subr.mxu0 %v5718
    %5821 = vmatpush1.msra.mxu0 %v5717
    %5822 = vmatprep.subr.mxu0 %v5720
    %5823 = vmatpush1.msra.mxu0 %v5719
    %5824 = vmatprep.subr.mxu0 %v5722
    %5825 = vmatpush1.msra.mxu0 %v5721
    %5826 = vmatprep.subr.mxu0 %v5724
    %5827 = vmatpush1.msra.mxu0 %v5723
    %5828 = vmatprep.subr.mxu0 %v5726
    %5829 = vmatpush1.msra.mxu0 %v5725
    %5830 = vmatprep.subr.mxu0 %v5728
    %5831 = vmatpush1.msra.mxu0 %v5727
    %5832 = vmatprep.subr.mxu0 %v5730
    %5833 = vmatpush1.msra.mxu0 %v5729
    %5834 = vmatprep.subr.mxu0 0.0
    %5835 = vmatpush1.msra.mxu0 0.0
    %5836 = vmatprep.subr.mxu0 0.0
    %5837 = vmatpush1.msra.mxu0 0.0
    %5838 = vmatprep.subr.mxu0 0.0
    %5839 = vmatpush1.msra.mxu0 0.0
    %5840 = vmatprep.subr.mxu0 0.0
    %5841 = vmatpush1.msra.mxu0 0.0
    %5842 = vmatprep.subr.mxu0 0.0
    %5843 = vmatpush1.msra.mxu0 0.0
    %5844 = vmatprep.subr.mxu0 0.0
    %5845 = vmatpush1.msra.mxu0 0.0
    %5846 = vmatprep.subr.mxu0 0.0
    %5847 = vmatpush1.msra.mxu0 0.0
    %5848 = vmatprep.subr.mxu0 0.0
    %5849 = vmatpush1.msra.mxu0 0.0
    %5850 = vmatprep.subr.mxu0 0.0
    %5851 = vmatpush1.msra.mxu0 0.0
    %5852 = vmatprep.subr.mxu0 0.0
    %5853 = vmatpush1.msra.mxu0 0.0
    %5854 = vmatprep.subr.mxu0 0.0
    %5855 = vmatpush1.msra.mxu0 0.0
    %5856 = vmatprep.subr.mxu0 0.0
    %5857 = vmatpush1.msra.mxu0 0.0
    %5858 = vmatprep.subr.mxu0 0.0
    %5859 = vmatpush1.msra.mxu0 0.0
    %5860 = vmatprep.subr.mxu0 0.0
    %5861 = vmatpush1.msra.mxu0 0.0
    %5862 = vmatprep.subr.mxu0 0.0
    %5863 = vmatpush1.msra.mxu0 0.0
    %5864 = vmatprep.subr.mxu0 0.0
    %5865 = vmatpush1.msra.mxu0 0.0
    %5866 = vmatprep.mubr.f32.mxu0 0.0
    %5867 = vmatmul.mubr.f32.gmra.mrb[0].mxu0 %v5631
    %v5868 = vpop.f32.mrb[0].mxu0
    %v5869 = vadd.f32 %v5798, %v5868
    %v5870 = vpop.f32.mrb[0].mxu0
    %v5871 = vadd.f32 %v5800, %v5870
    %5872 = vdwg.mxu0
    %v5873 = vadd.f32 %v5486, %v5869
    %v5874 = vadd.f32 %v5487, %v5871
    %v5875 = vld [vmem:[%s21] sm:$0x3]
    %v5877 = vlaneseq
    %v5878 = vshrl.u32 %v5877, 7
    %v5879 = vsub.s32 0, %v5878
    %v5880 = vrot.slane %v5875, %v5879
    %v5881 = vlaneseq
    %v5882 = vshrl.u32 %v5881, 7
    %v5883 = vsub.s32 1, %v5882
    %v5884 = vrot.slane %v5875, %v5883
    %v5887 = vadd.f32 %v5873, %v5880
    %v5888 = vadd.f32 %v5874, %v5884
    %v5889 = vld [vmem:[%s27] sm:$0x3]
    %v5890 = vld [vmem:[%s23] sm:$0x3]
    %vm5891 = vcmask 31744
    %v5893 = vsel %vm5891, %v5890, 0
    %v5896 = vsel %vm4327, %v5887, 0
    %v5899 = vsel %vm4327, %v5888, 0
    %5901 = vmatprep.subr.mxu0 %v5899
    %5902 = vmatpush1.msra.mxu0 %v5896
    %5903 = vmatprep.subr.mxu0 0.0
    %5904 = vmatpush1.msra.mxu0 0.0
    %5905 = vmatprep.subr.mxu0 0.0
    %5906 = vmatpush1.msra.mxu0 0.0
    %5907 = vmatprep.subr.mxu0 0.0
    %5908 = vmatpush1.msra.mxu0 0.0
    %5909 = vmatprep.subr.mxu0 0.0
    %5910 = vmatpush1.msra.mxu0 0.0
    %5911 = vmatprep.subr.mxu0 0.0
    %5912 = vmatpush1.msra.mxu0 0.0
    %5913 = vmatprep.subr.mxu0 0.0
    %5914 = vmatpush1.msra.mxu0 0.0
    %5915 = vmatprep.subr.mxu0 0.0
    %5916 = vmatpush1.msra.mxu0 0.0
    %5917 = vmatprep.subr.mxu0 0.0
    %5918 = vmatpush1.msra.mxu0 0.0
    %5919 = vmatprep.subr.mxu0 0.0
    %5920 = vmatpush1.msra.mxu0 0.0
    %5921 = vmatprep.subr.mxu0 0.0
    %5922 = vmatpush1.msra.mxu0 0.0
    %5923 = vmatprep.subr.mxu0 0.0
    %5924 = vmatpush1.msra.mxu0 0.0
    %5925 = vmatprep.subr.mxu0 0.0
    %5926 = vmatpush1.msra.mxu0 0.0
    %5927 = vmatprep.subr.mxu0 0.0
    %5928 = vmatpush1.msra.mxu0 0.0
    %5929 = vmatprep.subr.mxu0 0.0
    %5930 = vmatpush1.msra.mxu0 0.0
    %5931 = vmatprep.subr.mxu0 0.0
    %5932 = vmatpush1.msra.mxu0 0.0
    %5933 = vmatprep.subr.mxu0 0.0
    %5934 = vmatpush1.msra.mxu0 0.0
    %5935 = vmatprep.subr.mxu0 0.0
    %5936 = vmatpush1.msra.mxu0 0.0
    %5937 = vmatprep.subr.mxu0 0.0
    %5938 = vmatpush1.msra.mxu0 0.0
    %5939 = vmatprep.subr.mxu0 0.0
    %5940 = vmatpush1.msra.mxu0 0.0
    %5941 = vmatprep.subr.mxu0 0.0
    %5942 = vmatpush1.msra.mxu0 0.0
    %5943 = vmatprep.subr.mxu0 0.0
    %5944 = vmatpush1.msra.mxu0 0.0
    %5945 = vmatprep.subr.mxu0 0.0
    %5946 = vmatpush1.msra.mxu0 0.0
    %5947 = vmatprep.subr.mxu0 0.0
    %5948 = vmatpush1.msra.mxu0 0.0
    %5949 = vmatprep.subr.mxu0 0.0
    %5950 = vmatpush1.msra.mxu0 0.0
    %5951 = vmatprep.subr.mxu0 0.0
    %5952 = vmatpush1.msra.mxu0 0.0
    %5953 = vmatprep.subr.mxu0 0.0
    %5954 = vmatpush1.msra.mxu0 0.0
    %5955 = vmatprep.subr.mxu0 0.0
    %5956 = vmatpush1.msra.mxu0 0.0
    %5957 = vmatprep.subr.mxu0 0.0
    %5958 = vmatpush1.msra.mxu0 0.0
    %5959 = vmatprep.subr.mxu0 0.0
    %5960 = vmatpush1.msra.mxu0 0.0
    %5961 = vmatprep.subr.mxu0 0.0
    %5962 = vmatpush1.msra.mxu0 0.0
    %5963 = vmatprep.subr.mxu0 0.0
    %5964 = vmatpush1.msra.mxu0 0.0
    %5965 = vmatprep.mubr.f32.mxu0 0.0
    %5966 = vmatmul.mubr.f32.gmra.mrb[0].mxu0 %v5893
    %v5967 = vpop.f32.mrb[0].mxu0
    %v5968 = vadd.f32 0.0, %v5967
    %v5969 = vpop.f32.mrb[0].mxu0
    %v5970 = vadd.f32 0.0, %v5969
    %5971 = vdwg.mxu0
    %v5972 = vld [vmem:[#allocation5] sm:$0xff]
    %v5973 = vld [vmem:[#allocation5 + $0x8] sm:$0xff]
    %v5974 = vld [vmem:[#allocation5 + $0x10] sm:$0xff]
    %v5975 = vld [vmem:[#allocation5 + $0x18] sm:$0xff]
    %v5976 = vld [vmem:[#allocation5 + $0x20] sm:$0xff]
    %v5977 = vld [vmem:[#allocation5 + $0x28] sm:$0xff]
    %v5978 = vld [vmem:[#allocation5 + $0x30] sm:$0xff]
    %v5979 = vld [vmem:[#allocation5 + $0x38] sm:$0xff]
    %v5980 = vld [vmem:[#allocation5 + $0x40] sm:$0xff]
    %v5981 = vld [vmem:[#allocation5 + $0x48] sm:$0xff]
    %v5982 = vld [vmem:[#allocation5 + $0x50] sm:$0xff]
    %v5983 = vld [vmem:[#allocation5 + $0x58] sm:$0xff]
    %v5984 = vld [vmem:[#allocation5 + $0x60] sm:$0xff]
    %v5985 = vld [vmem:[#allocation5 + $0x68] sm:$0xff]
    %v5986 = vld [vmem:[#allocation5 + $0x70] sm:$0xff]
    %v5987 = vld [vmem:[#allocation5 + $0x78] sm:$0xff]
    %v5988 = vld [vmem:[#allocation5 + $0x80] sm:$0xff]
    %v5989 = vld [vmem:[#allocation5 + $0x88] sm:$0xff]
    %v5990 = vld [vmem:[#allocation5 + $0x90] sm:$0xff]
    %v5991 = vld [vmem:[#allocation5 + $0x98] sm:$0xff]
    %v5992 = vld [vmem:[#allocation5 + $0xa0] sm:$0xff]
    %v5993 = vld [vmem:[#allocation5 + $0xa8] sm:$0xff]
    %v5994 = vld [vmem:[#allocation5 + $0xb0] sm:$0xff]
    %v5995 = vld [vmem:[#allocation5 + $0xb8] sm:$0xff]
    %v5996 = vld [vmem:[#allocation5 + $0xc0] sm:$0xff]
    %v5997 = vld [vmem:[#allocation5 + $0xc8] sm:$0xff]
    %v5998 = vld [vmem:[#allocation5 + $0xd0] sm:$0xff]
    %v5999 = vld [vmem:[#allocation5 + $0xd8] sm:$0xff]
    %v6000 = vld [vmem:[#allocation5 + $0xe0] sm:$0xff]
    %v6001 = vld [vmem:[#allocation5 + $0xe8] sm:$0xff]
    %v6002 = vld [vmem:[#allocation5 + $0xf0] sm:$0xff]
    %v6003 = vld [vmem:[#allocation5 + $0xf8] sm:$0xff]
    %v6004 = vld [vmem:[#allocation5 + $0x100] sm:$0xff]
    %v6005 = vld [vmem:[#allocation5 + $0x108] sm:$0xff]
    %v6006 = vld [vmem:[#allocation5 + $0x110] sm:$0xff]
    %v6007 = vld [vmem:[#allocation5 + $0x118] sm:$0xff]
    %v6008 = vld [vmem:[#allocation5 + $0x120] sm:$0xff]
    %v6009 = vld [vmem:[#allocation5 + $0x128] sm:$0xff]
    %v6010 = vld [vmem:[#allocation5 + $0x130] sm:$0xff]
    %v6011 = vld [vmem:[#allocation5 + $0x138] sm:$0xff]
    %v6012 = vld [vmem:[#allocation5 + $0x140] sm:$0xff]
    %v6013 = vld [vmem:[#allocation5 + $0x148] sm:$0xff]
    %v6014 = vld [vmem:[#allocation5 + $0x150] sm:$0xff]
    %v6015 = vld [vmem:[#allocation5 + $0x158] sm:$0xff]
    %v6016 = vld [vmem:[#allocation5 + $0x160] sm:$0xff]
    %v6017 = vld [vmem:[#allocation5 + $0x168] sm:$0xff]
    %v6018 = vld [vmem:[#allocation5 + $0x170] sm:$0xff]
    %v6019 = vld [vmem:[#allocation5 + $0x178] sm:$0xff]
    %v6020 = vld [vmem:[#allocation5 + $0x180] sm:$0xff]
    %v6021 = vld [vmem:[#allocation5 + $0x188] sm:$0xff]
    %v6022 = vld [vmem:[#allocation5 + $0x190] sm:$0xff]
    %v6023 = vld [vmem:[#allocation5 + $0x198] sm:$0xff]
    %v6024 = vld [vmem:[#allocation5 + $0x1a0] sm:$0xff]
    %v6025 = vld [vmem:[#allocation5 + $0x1a8] sm:$0xff]
    %v6026 = vld [vmem:[#allocation5 + $0x1b0] sm:$0xff]
    %v6027 = vld [vmem:[#allocation5 + $0x1b8] sm:$0xff]
    %v6028 = vld [vmem:[#allocation5 + $0x1c0] sm:$0xff]
    %v6029 = vld [vmem:[#allocation5 + $0x1c8] sm:$0xff]
    %v6030 = vld [vmem:[#allocation5 + $0x1d0] sm:$0xff]
    %v6031 = vld [vmem:[#allocation5 + $0x1d8] sm:$0xff]
    %v6032 = vld [vmem:[#allocation5 + $0x1e0] sm:$0xff]
    %v6033 = vld [vmem:[#allocation5 + $0x1e8] sm:$0xff]
    %v6034 = vld [vmem:[#allocation5 + $0x1f0] sm:$0xff]
    %v6035 = vld [vmem:[#allocation5 + $0x1f8] sm:$0xff]
    %6036 = vmatprep.subr.mxu0 %v5973
    %6037 = vmatpush1.msra.mxu0 %v5972
    %6038 = vmatprep.subr.mxu0 %v5975
    %6039 = vmatpush1.msra.mxu0 %v5974
    %6040 = vmatprep.subr.mxu0 %v5977
    %6041 = vmatpush1.msra.mxu0 %v5976
    %6042 = vmatprep.subr.mxu0 %v5979
    %6043 = vmatpush1.msra.mxu0 %v5978
    %6044 = vmatprep.subr.mxu0 %v5981
    %6045 = vmatpush1.msra.mxu0 %v5980
    %6046 = vmatprep.subr.mxu0 %v5983
    %6047 = vmatpush1.msra.mxu0 %v5982
    %6048 = vmatprep.subr.mxu0 %v5985
    %6049 = vmatpush1.msra.mxu0 %v5984
    %6050 = vmatprep.subr.mxu0 %v5987
    %6051 = vmatpush1.msra.mxu0 %v5986
    %6052 = vmatprep.subr.mxu0 %v5989
    %6053 = vmatpush1.msra.mxu0 %v5988
    %6054 = vmatprep.subr.mxu0 %v5991
    %6055 = vmatpush1.msra.mxu0 %v5990
    %6056 = vmatprep.subr.mxu0 %v5993
    %6057 = vmatpush1.msra.mxu0 %v5992
    %6058 = vmatprep.subr.mxu0 %v5995
    %6059 = vmatpush1.msra.mxu0 %v5994
    %6060 = vmatprep.subr.mxu0 %v5997
    %6061 = vmatpush1.msra.mxu0 %v5996
    %6062 = vmatprep.subr.mxu0 %v5999
    %6063 = vmatpush1.msra.mxu0 %v5998
    %6064 = vmatprep.subr.mxu0 %v6001
    %6065 = vmatpush1.msra.mxu0 %v6000
    %6066 = vmatprep.subr.mxu0 %v6003
    %6067 = vmatpush1.msra.mxu0 %v6002
    %6068 = vmatprep.subr.mxu0 %v6005
    %6069 = vmatpush1.msra.mxu0 %v6004
    %6070 = vmatprep.subr.mxu0 %v6007
    %6071 = vmatpush1.msra.mxu0 %v6006
    %6072 = vmatprep.subr.mxu0 %v6009
    %6073 = vmatpush1.msra.mxu0 %v6008
    %6074 = vmatprep.subr.mxu0 %v6011
    %6075 = vmatpush1.msra.mxu0 %v6010
    %6076 = vmatprep.subr.mxu0 %v6013
    %6077 = vmatpush1.msra.mxu0 %v6012
    %6078 = vmatprep.subr.mxu0 %v6015
    %6079 = vmatpush1.msra.mxu0 %v6014
    %6080 = vmatprep.subr.mxu0 %v6017
    %6081 = vmatpush1.msra.mxu0 %v6016
    %6082 = vmatprep.subr.mxu0 %v6019
    %6083 = vmatpush1.msra.mxu0 %v6018
    %6084 = vmatprep.subr.mxu0 %v6021
    %6085 = vmatpush1.msra.mxu0 %v6020
    %6086 = vmatprep.subr.mxu0 %v6023
    %6087 = vmatpush1.msra.mxu0 %v6022
    %6088 = vmatprep.subr.mxu0 %v6025
    %6089 = vmatpush1.msra.mxu0 %v6024
    %6090 = vmatprep.subr.mxu0 %v6027
    %6091 = vmatpush1.msra.mxu0 %v6026
    %6092 = vmatprep.subr.mxu0 %v6029
    %6093 = vmatpush1.msra.mxu0 %v6028
    %6094 = vmatprep.subr.mxu0 %v6031
    %6095 = vmatpush1.msra.mxu0 %v6030
    %6096 = vmatprep.subr.mxu0 %v6033
    %6097 = vmatpush1.msra.mxu0 %v6032
    %6098 = vmatprep.subr.mxu0 %v6035
    %6099 = vmatpush1.msra.mxu0 %v6034
    %6100 = vmatprep.mubr.f32.mxu0 %v5970
    %6101 = vmatmul.mubr.f32.gmra.mrb[0].mxu0 %v5968
    %v6102 = vpop.f32.mrb[0].mxu0
    %v6103 = vadd.f32 0.0, %v6102
    %v6104 = vpop.f32.mrb[0].mxu0
    %v6105 = vadd.f32 0.0, %v6104
    %6106 = vdwg.mxu0
    %v6108 = vlaneseq
    %v6109 = vshrl.u32 %v6108, 7
    %v6110 = vsub.s32 0, %v6109
    %v6111 = vrot.slane %v5889, %v6110
    %v6112 = vlaneseq
    %v6113 = vshrl.u32 %v6112, 7
    %v6114 = vsub.s32 1, %v6113
    %v6115 = vrot.slane %v5889, %v6114
    %v6118 = vadd.f32 %v6111, %v6103
    %v6119 = vadd.f32 %v6115, %v6105
    %s6120 = scalar_lea.vmem %s23, 2
    %v6121 = vld [vmem:[%s6120] sm:$0x3]
    %v6123 = vsel %vm5891, %v6121, 0
    %6125 = vmatprep.subr.mxu0 %v5899
    %6126 = vmatpush1.msra.mxu0 %v5896
    %6127 = vmatprep.subr.mxu0 0.0
    %6128 = vmatpush1.msra.mxu0 0.0
    %6129 = vmatprep.subr.mxu0 0.0
    %6130 = vmatpush1.msra.mxu0 0.0
    %6131 = vmatprep.subr.mxu0 0.0
    %6132 = vmatpush1.msra.mxu0 0.0
    %6133 = vmatprep.subr.mxu0 0.0
    %6134 = vmatpush1.msra.mxu0 0.0
    %6135 = vmatprep.subr.mxu0 0.0
    %6136 = vmatpush1.msra.mxu0 0.0
    %6137 = vmatprep.subr.mxu0 0.0
    %6138 = vmatpush1.msra.mxu0 0.0
    %6139 = vmatprep.subr.mxu0 0.0
    %6140 = vmatpush1.msra.mxu0 0.0
    %6141 = vmatprep.subr.mxu0 0.0
    %6142 = vmatpush1.msra.mxu0 0.0
    %6143 = vmatprep.subr.mxu0 0.0
    %6144 = vmatpush1.msra.mxu0 0.0
    %6145 = vmatprep.subr.mxu0 0.0
    %6146 = vmatpush1.msra.mxu0 0.0
    %6147 = vmatprep.subr.mxu0 0.0
    %6148 = vmatpush1.msra.mxu0 0.0
    %6149 = vmatprep.subr.mxu0 0.0
    %6150 = vmatpush1.msra.mxu0 0.0
    %6151 = vmatprep.subr.mxu0 0.0
    %6152 = vmatpush1.msra.mxu0 0.0
    %6153 = vmatprep.subr.mxu0 0.0
    %6154 = vmatpush1.msra.mxu0 0.0
    %6155 = vmatprep.subr.mxu0 0.0
    %6156 = vmatpush1.msra.mxu0 0.0
    %6157 = vmatprep.subr.mxu0 0.0
    %6158 = vmatpush1.msra.mxu0 0.0
    %6159 = vmatprep.subr.mxu0 0.0
    %6160 = vmatpush1.msra.mxu0 0.0
    %6161 = vmatprep.subr.mxu0 0.0
    %6162 = vmatpush1.msra.mxu0 0.0
    %6163 = vmatprep.subr.mxu0 0.0
    %6164 = vmatpush1.msra.mxu0 0.0
    %6165 = vmatprep.subr.mxu0 0.0
    %6166 = vmatpush1.msra.mxu0 0.0
    %6167 = vmatprep.subr.mxu0 0.0
    %6168 = vmatpush1.msra.mxu0 0.0
    %6169 = vmatprep.subr.mxu0 0.0
    %6170 = vmatpush1.msra.mxu0 0.0
    %6171 = vmatprep.subr.mxu0 0.0
    %6172 = vmatpush1.msra.mxu0 0.0
    %6173 = vmatprep.subr.mxu0 0.0
    %6174 = vmatpush1.msra.mxu0 0.0
    %6175 = vmatprep.subr.mxu0 0.0
    %6176 = vmatpush1.msra.mxu0 0.0
    %6177 = vmatprep.subr.mxu0 0.0
    %6178 = vmatpush1.msra.mxu0 0.0
    %6179 = vmatprep.subr.mxu0 0.0
    %6180 = vmatpush1.msra.mxu0 0.0
    %6181 = vmatprep.subr.mxu0 0.0
    %6182 = vmatpush1.msra.mxu0 0.0
    %6183 = vmatprep.subr.mxu0 0.0
    %6184 = vmatpush1.msra.mxu0 0.0
    %6185 = vmatprep.subr.mxu0 0.0
    %6186 = vmatpush1.msra.mxu0 0.0
    %6187 = vmatprep.subr.mxu0 0.0
    %6188 = vmatpush1.msra.mxu0 0.0
    %6189 = vmatprep.mubr.f32.mxu0 0.0
    %6190 = vmatmul.mubr.f32.gmra.mrb[0].mxu0 %v6123
    %v6191 = vpop.f32.mrb[0].mxu0
    %v6192 = vadd.f32 0.0, %v6191
    %v6193 = vpop.f32.mrb[0].mxu0
    %v6194 = vadd.f32 0.0, %v6193
    %6195 = vdwg.mxu0
    %s6196 = scalar_lea.vmem [#allocation5], 512
    %v6197 = vld [vmem:[%s6196] sm:$0xff]
    %v6198 = vld [vmem:[%s6196 + $0x8] sm:$0xff]
    %v6199 = vld [vmem:[%s6196 + $0x10] sm:$0xff]
    %v6200 = vld [vmem:[%s6196 + $0x18] sm:$0xff]
    %v6201 = vld [vmem:[%s6196 + $0x20] sm:$0xff]
    %v6202 = vld [vmem:[%s6196 + $0x28] sm:$0xff]
    %v6203 = vld [vmem:[%s6196 + $0x30] sm:$0xff]
    %v6204 = vld [vmem:[%s6196 + $0x38] sm:$0xff]
    %v6205 = vld [vmem:[%s6196 + $0x40] sm:$0xff]
    %v6206 = vld [vmem:[%s6196 + $0x48] sm:$0xff]
    %v6207 = vld [vmem:[%s6196 + $0x50] sm:$0xff]
    %v6208 = vld [vmem:[%s6196 + $0x58] sm:$0xff]
    %v6209 = vld [vmem:[%s6196 + $0x60] sm:$0xff]
    %v6210 = vld [vmem:[%s6196 + $0x68] sm:$0xff]
    %v6211 = vld [vmem:[%s6196 + $0x70] sm:$0xff]
    %v6212 = vld [vmem:[%s6196 + $0x78] sm:$0xff]
    %v6213 = vld [vmem:[%s6196 + $0x80] sm:$0xff]
    %v6214 = vld [vmem:[%s6196 + $0x88] sm:$0xff]
    %v6215 = vld [vmem:[%s6196 + $0x90] sm:$0xff]
    %v6216 = vld [vmem:[%s6196 + $0x98] sm:$0xff]
    %v6217 = vld [vmem:[%s6196 + $0xa0] sm:$0xff]
    %v6218 = vld [vmem:[%s6196 + $0xa8] sm:$0xff]
    %v6219 = vld [vmem:[%s6196 + $0xb0] sm:$0xff]
    %v6220 = vld [vmem:[%s6196 + $0xb8] sm:$0xff]
    %v6221 = vld [vmem:[%s6196 + $0xc0] sm:$0xff]
    %v6222 = vld [vmem:[%s6196 + $0xc8] sm:$0xff]
    %v6223 = vld [vmem:[%s6196 + $0xd0] sm:$0xff]
    %v6224 = vld [vmem:[%s6196 + $0xd8] sm:$0xff]
    %v6225 = vld [vmem:[%s6196 + $0xe0] sm:$0xff]
    %v6226 = vld [vmem:[%s6196 + $0xe8] sm:$0xff]
    %v6227 = vld [vmem:[%s6196 + $0xf0] sm:$0xff]
    %v6228 = vld [vmem:[%s6196 + $0xf8] sm:$0xff]
    %v6229 = vld [vmem:[%s6196 + $0x100] sm:$0xff]
    %v6230 = vld [vmem:[%s6196 + $0x108] sm:$0xff]
    %v6231 = vld [vmem:[%s6196 + $0x110] sm:$0xff]
    %v6232 = vld [vmem:[%s6196 + $0x118] sm:$0xff]
    %v6233 = vld [vmem:[%s6196 + $0x120] sm:$0xff]
    %v6234 = vld [vmem:[%s6196 + $0x128] sm:$0xff]
    %v6235 = vld [vmem:[%s6196 + $0x130] sm:$0xff]
    %v6236 = vld [vmem:[%s6196 + $0x138] sm:$0xff]
    %v6237 = vld [vmem:[%s6196 + $0x140] sm:$0xff]
    %v6238 = vld [vmem:[%s6196 + $0x148] sm:$0xff]
    %v6239 = vld [vmem:[%s6196 + $0x150] sm:$0xff]
    %v6240 = vld [vmem:[%s6196 + $0x158] sm:$0xff]
    %v6241 = vld [vmem:[%s6196 + $0x160] sm:$0xff]
    %v6242 = vld [vmem:[%s6196 + $0x168] sm:$0xff]
    %v6243 = vld [vmem:[%s6196 + $0x170] sm:$0xff]
    %v6244 = vld [vmem:[%s6196 + $0x178] sm:$0xff]
    %v6245 = vld [vmem:[%s6196 + $0x180] sm:$0xff]
    %v6246 = vld [vmem:[%s6196 + $0x188] sm:$0xff]
    %v6247 = vld [vmem:[%s6196 + $0x190] sm:$0xff]
    %v6248 = vld [vmem:[%s6196 + $0x198] sm:$0xff]
    %v6249 = vld [vmem:[%s6196 + $0x1a0] sm:$0xff]
    %v6250 = vld [vmem:[%s6196 + $0x1a8] sm:$0xff]
    %v6251 = vld [vmem:[%s6196 + $0x1b0] sm:$0xff]
    %v6252 = vld [vmem:[%s6196 + $0x1b8] sm:$0xff]
    %v6253 = vld [vmem:[%s6196 + $0x1c0] sm:$0xff]
    %v6254 = vld [vmem:[%s6196 + $0x1c8] sm:$0xff]
    %v6255 = vld [vmem:[%s6196 + $0x1d0] sm:$0xff]
    %v6256 = vld [vmem:[%s6196 + $0x1d8] sm:$0xff]
    %v6257 = vld [vmem:[%s6196 + $0x1e0] sm:$0xff]
    %v6258 = vld [vmem:[%s6196 + $0x1e8] sm:$0xff]
    %v6259 = vld [vmem:[%s6196 + $0x1f0] sm:$0xff]
    %v6260 = vld [vmem:[%s6196 + $0x1f8] sm:$0xff]
    %6261 = vmatprep.subr.mxu0 %v6198
    %6262 = vmatpush1.msra.mxu0 %v6197
    %6263 = vmatprep.subr.mxu0 %v6200
    %6264 = vmatpush1.msra.mxu0 %v6199
    %6265 = vmatprep.subr.mxu0 %v6202
    %6266 = vmatpush1.msra.mxu0 %v6201
    %6267 = vmatprep.subr.mxu0 %v6204
    %6268 = vmatpush1.msra.mxu0 %v6203
    %6269 = vmatprep.subr.mxu0 %v6206
    %6270 = vmatpush1.msra.mxu0 %v6205
    %6271 = vmatprep.subr.mxu0 %v6208
    %6272 = vmatpush1.msra.mxu0 %v6207
    %6273 = vmatprep.subr.mxu0 %v6210
    %6274 = vmatpush1.msra.mxu0 %v6209
    %6275 = vmatprep.subr.mxu0 %v6212
    %6276 = vmatpush1.msra.mxu0 %v6211
    %6277 = vmatprep.subr.mxu0 %v6214
    %6278 = vmatpush1.msra.mxu0 %v6213
    %6279 = vmatprep.subr.mxu0 %v6216
    %6280 = vmatpush1.msra.mxu0 %v6215
    %6281 = vmatprep.subr.mxu0 %v6218
    %6282 = vmatpush1.msra.mxu0 %v6217
    %6283 = vmatprep.subr.mxu0 %v6220
    %6284 = vmatpush1.msra.mxu0 %v6219
    %6285 = vmatprep.subr.mxu0 %v6222
    %6286 = vmatpush1.msra.mxu0 %v6221
    %6287 = vmatprep.subr.mxu0 %v6224
    %6288 = vmatpush1.msra.mxu0 %v6223
    %6289 = vmatprep.subr.mxu0 %v6226
    %6290 = vmatpush1.msra.mxu0 %v6225
    %6291 = vmatprep.subr.mxu0 %v6228
    %6292 = vmatpush1.msra.mxu0 %v6227
    %6293 = vmatprep.subr.mxu0 %v6230
    %6294 = vmatpush1.msra.mxu0 %v6229
    %6295 = vmatprep.subr.mxu0 %v6232
    %6296 = vmatpush1.msra.mxu0 %v6231
    %6297 = vmatprep.subr.mxu0 %v6234
    %6298 = vmatpush1.msra.mxu0 %v6233
    %6299 = vmatprep.subr.mxu0 %v6236
    %6300 = vmatpush1.msra.mxu0 %v6235
    %6301 = vmatprep.subr.mxu0 %v6238
    %6302 = vmatpush1.msra.mxu0 %v6237
    %6303 = vmatprep.subr.mxu0 %v6240
    %6304 = vmatpush1.msra.mxu0 %v6239
    %6305 = vmatprep.subr.mxu0 %v6242
    %6306 = vmatpush1.msra.mxu0 %v6241
    %6307 = vmatprep.subr.mxu0 %v6244
    %6308 = vmatpush1.msra.mxu0 %v6243
    %6309 = vmatprep.subr.mxu0 %v6246
    %6310 = vmatpush1.msra.mxu0 %v6245
    %6311 = vmatprep.subr.mxu0 %v6248
    %6312 = vmatpush1.msra.mxu0 %v6247
    %6313 = vmatprep.subr.mxu0 %v6250
    %6314 = vmatpush1.msra.mxu0 %v6249
    %6315 = vmatprep.subr.mxu0 %v6252
    %6316 = vmatpush1.msra.mxu0 %v6251
    %6317 = vmatprep.subr.mxu0 %v6254
    %6318 = vmatpush1.msra.mxu0 %v6253
    %6319 = vmatprep.subr.mxu0 %v6256
    %6320 = vmatpush1.msra.mxu0 %v6255
    %6321 = vmatprep.subr.mxu0 %v6258
    %6322 = vmatpush1.msra.mxu0 %v6257
    %6323 = vmatprep.subr.mxu0 %v6260
    %6324 = vmatpush1.msra.mxu0 %v6259
    %6325 = vmatprep.mubr.f32.mxu0 %v6194
    %6326 = vmatmul.mubr.f32.gmra.mrb[0].mxu0 %v6192
    %v6327 = vpop.f32.mrb[0].mxu0
    %v6328 = vadd.f32 0.0, %v6327
    %v6329 = vpop.f32.mrb[0].mxu0
    %v6330 = vadd.f32 0.0, %v6329
    %6331 = vdwg.mxu0
    %v6332 = vadd.f32 %v6118, %v6328
    %v6333 = vadd.f32 %v6119, %v6330
    %v6334 = vmul.f32 %v6333, 0.5
    %v6335 = vmul.f32 %v6334, 1.442695
    %v6336 = vpow.pop %v6335
    %v6337 = vld [vmem:[%s3] sm:$0x3]
    %v6338 = vmul.f32 %v6336, %v6337
    %v6339 = vadd.f32 %v6332, %v6338
    %6340 = vst [vmem:[#allocation11] sm:$0x3] %v6339
    %v6341 = vadd.f32 %v6333, 1.0
    %v6342 = vmul.f32 %v6332, %v6332
    %v6343 = vsub.f32 %v6341, %v6342
    %v6344 = vmul.f32 %v6333, 1.442695
    %v6345 = vpow.pop %v6344
    %v6346 = vsub.f32 %v6343, %v6345
    %vm6347 = vcmask 1041408
    %v6348 = vsel %vm6347, %v6346, 0.0
    %6349 = vadd.xlane.f32.xlu0 %v6348
    %v6350 = vpop.xlane.xlu0 %6349
    %v6351 = vrcp.pop 128.0
    %v6352 = vmul.f32 %v6350, %v6351
    %v6353 = vmul.f32 %v6352, -0.5
    %v6354 = vmax.f32 %v6353, 0.5
    %vm6355 = vcmask 1024
    %v6356 = vsel %vm6355, %v6354, 0.0
    %6357 = vadd.xlane.f32.xlu0 %v6356
    %v6358 = vpop.xlane.xlu0 %6357
    %v6359 = vrot.slane %v6358, 4
    %v6360 = vadd.f32 %v6358, %v6359
    %v6361 = vrot.slane %v6360, 2
    %v6362 = vadd.f32 %v6360, %v6361
    %v6363 = vrot.slane %v6362, 1
    %v6364 = vadd.f32 %v6362, %v6363
    %s6365 = vtos %v6364
    %v6366 = vrcp.pop 2.0
    %s6367 = vtos %v6366
    %s6368 = smul.f32 %s6365, %s6367
    %v6369 = vstv %s6368
    %vm6370 = vcmask 0
    %6371 = vst.msk [vmem:[#allocation14] sm:$0x1] %vm6370, %v6369
    %v6372 = vld [vmem:[#allocation7] sm:$0xff]
    %v6373 = vld [vmem:[#allocation7 + $0x8] sm:$0xff]
    %v6374 = vld [vmem:[#allocation7 + $0x10] sm:$0xff]
    %v6375 = vld [vmem:[#allocation7 + $0x18] sm:$0xff]
    %v6376 = vld [vmem:[#allocation7 + $0x20] sm:$0xff]
    %v6377 = vld [vmem:[#allocation7 + $0x28] sm:$0xff]
    %v6378 = vld [vmem:[#allocation7 + $0x30] sm:$0xff]
    %v6379 = vld [vmem:[#allocation7 + $0x38] sm:$0xff]
    %v6380 = vld [vmem:[#allocation7 + $0x40] sm:$0xff]
    %v6381 = vld [vmem:[#allocation7 + $0x48] sm:$0xff]
    %v6382 = vld [vmem:[#allocation7 + $0x50] sm:$0xff]
    %v6383 = vld [vmem:[#allocation7 + $0x58] sm:$0xff]
    %v6384 = vld [vmem:[#allocation7 + $0x60] sm:$0xff]
    %v6385 = vld [vmem:[#allocation7 + $0x68] sm:$0xff]
    %v6386 = vld [vmem:[#allocation7 + $0x70] sm:$0xff]
    %v6387 = vld [vmem:[#allocation7 + $0x78] sm:$0xff]
    %v6388 = vld [vmem:[#allocation7 + $0x80] sm:$0xff]
    %v6389 = vld [vmem:[#allocation7 + $0x88] sm:$0xff]
    %v6390 = vld [vmem:[#allocation7 + $0x90] sm:$0xff]
    %v6391 = vld [vmem:[#allocation7 + $0x98] sm:$0xff]
    %v6392 = vld [vmem:[#allocation7 + $0xa0] sm:$0xff]
    %v6393 = vld [vmem:[#allocation7 + $0xa8] sm:$0xff]
    %v6394 = vld [vmem:[#allocation7 + $0xb0] sm:$0xff]
    %v6395 = vld [vmem:[#allocation7 + $0xb8] sm:$0xff]
    %v6396 = vld [vmem:[#allocation7 + $0xc0] sm:$0xff]
    %v6397 = vld [vmem:[#allocation7 + $0xc8] sm:$0xff]
    %v6398 = vld [vmem:[#allocation7 + $0xd0] sm:$0xff]
    %v6399 = vld [vmem:[#allocation7 + $0xd8] sm:$0xff]
    %v6400 = vld [vmem:[#allocation7 + $0xe0] sm:$0xff]
    %v6401 = vld [vmem:[#allocation7 + $0xe8] sm:$0xff]
    %v6402 = vld [vmem:[#allocation7 + $0xf0] sm:$0xff]
    %v6403 = vld [vmem:[#allocation7 + $0xf8] sm:$0xff]
    %v6404 = vld [vmem:[#allocation7 + $0x100] sm:$0xff]
    %v6405 = vld [vmem:[#allocation7 + $0x108] sm:$0xff]
    %v6406 = vld [vmem:[#allocation7 + $0x110] sm:$0xff]
    %v6407 = vld [vmem:[#allocation7 + $0x118] sm:$0xff]
    %v6408 = vld [vmem:[#allocation7 + $0x120] sm:$0xff]
    %v6409 = vld [vmem:[#allocation7 + $0x128] sm:$0xff]
    %v6410 = vld [vmem:[#allocation7 + $0x130] sm:$0xff]
    %v6411 = vld [vmem:[#allocation7 + $0x138] sm:$0xff]
    %v6412 = vld [vmem:[#allocation7 + $0x140] sm:$0xff]
    %v6413 = vld [vmem:[#allocation7 + $0x148] sm:$0xff]
    %v6414 = vld [vmem:[#allocation7 + $0x150] sm:$0xff]
    %v6415 = vld [vmem:[#allocation7 + $0x158] sm:$0xff]
    %v6416 = vld [vmem:[#allocation7 + $0x160] sm:$0xff]
    %v6417 = vld [vmem:[#allocation7 + $0x168] sm:$0xff]
    %v6418 = vld [vmem:[#allocation7 + $0x170] sm:$0xff]
    %v6419 = vld [vmem:[#allocation7 + $0x178] sm:$0xff]
    %v6420 = vld [vmem:[#allocation7 + $0x180] sm:$0xff]
    %v6421 = vld [vmem:[#allocation7 + $0x188] sm:$0xff]
    %v6422 = vld [vmem:[#allocation7 + $0x190] sm:$0xff]
    %v6423 = vld [vmem:[#allocation7 + $0x198] sm:$0xff]
    %v6424 = vld [vmem:[#allocation7 + $0x1a0] sm:$0xff]
    %v6425 = vld [vmem:[#allocation7 + $0x1a8] sm:$0xff]
    %v6426 = vld [vmem:[#allocation7 + $0x1b0] sm:$0xff]
    %v6427 = vld [vmem:[#allocation7 + $0x1b8] sm:$0xff]
    %v6428 = vld [vmem:[#allocation7 + $0x1c0] sm:$0xff]
    %v6429 = vld [vmem:[#allocation7 + $0x1c8] sm:$0xff]
    %v6430 = vld [vmem:[#allocation7 + $0x1d0] sm:$0xff]
    %v6431 = vld [vmem:[#allocation7 + $0x1d8] sm:$0xff]
    %v6432 = vld [vmem:[#allocation7 + $0x1e0] sm:$0xff]
    %v6433 = vld [vmem:[#allocation7 + $0x1e8] sm:$0xff]
    %v6434 = vld [vmem:[#allocation7 + $0x1f0] sm:$0xff]
    %v6435 = vld [vmem:[#allocation7 + $0x1f8] sm:$0xff]
    %v6436 = vld [vmem:[%s31] sm:$0xf]
    %v6438 = vlaneseq
    %v6439 = vshrl.u32 %v6438, 7
    %v6440 = vsub.s32 0, %v6439
    %v6441 = vrot.slane %v6436, %v6440
    %v6442 = vlaneseq
    %v6443 = vshrl.u32 %v6442, 7
    %v6444 = vsub.s32 1, %v6443
    %v6445 = vrot.slane %v6436, %v6444
    %v6446 = vlaneseq
    %v6447 = vshrl.u32 %v6446, 7
    %v6448 = vsub.s32 2, %v6447
    %v6449 = vrot.slane %v6436, %v6448
    %v6450 = vlaneseq
    %v6451 = vshrl.u32 %v6450, 7
    %v6452 = vsub.s32 3, %v6451
    %v6453 = vrot.slane %v6436, %v6452
    %6458 = vmatprep.subr.mxu0 %v6373
    %6459 = vmatpush1.msra.mxu0 %v6372
    %6460 = vmatprep.subr.mxu0 %v6377
    %6461 = vmatpush1.msra.mxu0 %v6376
    %6462 = vmatprep.subr.mxu0 %v6381
    %6463 = vmatpush1.msra.mxu0 %v6380
    %6464 = vmatprep.subr.mxu0 %v6385
    %6465 = vmatpush1.msra.mxu0 %v6384
    %6466 = vmatprep.subr.mxu0 %v6389
    %6467 = vmatpush1.msra.mxu0 %v6388
    %6468 = vmatprep.subr.mxu0 %v6393
    %6469 = vmatpush1.msra.mxu0 %v6392
    %6470 = vmatprep.subr.mxu0 %v6397
    %6471 = vmatpush1.msra.mxu0 %v6396
    %6472 = vmatprep.subr.mxu0 %v6401
    %6473 = vmatpush1.msra.mxu0 %v6400
    %6474 = vmatprep.subr.mxu0 %v6405
    %6475 = vmatpush1.msra.mxu0 %v6404
    %6476 = vmatprep.subr.mxu0 %v6409
    %6477 = vmatpush1.msra.mxu0 %v6408
    %6478 = vmatprep.subr.mxu0 %v6413
    %6479 = vmatpush1.msra.mxu0 %v6412
    %6480 = vmatprep.subr.mxu0 %v6417
    %6481 = vmatpush1.msra.mxu0 %v6416
    %6482 = vmatprep.subr.mxu0 %v6421
    %6483 = vmatpush1.msra.mxu0 %v6420
    %6484 = vmatprep.subr.mxu0 %v6425
    %6485 = vmatpush1.msra.mxu0 %v6424
    %6486 = vmatprep.subr.mxu0 %v6429
    %6487 = vmatpush1.msra.mxu0 %v6428
    %6488 = vmatprep.subr.mxu0 %v6433
    %6489 = vmatpush1.msra.mxu0 %v6432
    %6490 = vmatprep.subr.mxu0 0.0
    %6491 = vmatpush1.msra.mxu0 0.0
    %6492 = vmatprep.subr.mxu0 0.0
    %6493 = vmatpush1.msra.mxu0 0.0
    %6494 = vmatprep.subr.mxu0 0.0
    %6495 = vmatpush1.msra.mxu0 0.0
    %6496 = vmatprep.subr.mxu0 0.0
    %6497 = vmatpush1.msra.mxu0 0.0
    %6498 = vmatprep.subr.mxu0 0.0
    %6499 = vmatpush1.msra.mxu0 0.0
    %6500 = vmatprep.subr.mxu0 0.0
    %6501 = vmatpush1.msra.mxu0 0.0
    %6502 = vmatprep.subr.mxu0 0.0
    %6503 = vmatpush1.msra.mxu0 0.0
    %6504 = vmatprep.subr.mxu0 0.0
    %6505 = vmatpush1.msra.mxu0 0.0
    %6506 = vmatprep.subr.mxu0 0.0
    %6507 = vmatpush1.msra.mxu0 0.0
    %6508 = vmatprep.subr.mxu0 0.0
    %6509 = vmatpush1.msra.mxu0 0.0
    %6510 = vmatprep.subr.mxu0 0.0
    %6511 = vmatpush1.msra.mxu0 0.0
    %6512 = vmatprep.subr.mxu0 0.0
    %6513 = vmatpush1.msra.mxu0 0.0
    %6514 = vmatprep.subr.mxu0 0.0
    %6515 = vmatpush1.msra.mxu0 0.0
    %6516 = vmatprep.subr.mxu0 0.0
    %6517 = vmatpush1.msra.mxu0 0.0
    %6518 = vmatprep.subr.mxu0 0.0
    %6519 = vmatpush1.msra.mxu0 0.0
    %6520 = vmatprep.subr.mxu0 0.0
    %6521 = vmatpush1.msra.mxu0 0.0
    %6522 = vmatprep.mubr.f32.mxu0 0.0
    %6523 = vmatmul.mubr.f32.gmra.mrb[0].mxu0 %v6339
    %v6524 = vpop.f32.mrb[0].mxu0
    %v6525 = vadd.f32 %v6441, %v6524
    %v6526 = vpop.f32.mrb[0].mxu0
    %v6527 = vadd.f32 %v6445, %v6526
    %6528 = vdwg.mxu0
    %6529 = vmatprep.subr.mxu0 %v6375
    %6530 = vmatpush1.msra.mxu0 %v6374
    %6531 = vmatprep.subr.mxu0 %v6379
    %6532 = vmatpush1.msra.mxu0 %v6378
    %6533 = vmatprep.subr.mxu0 %v6383
    %6534 = vmatpush1.msra.mxu0 %v6382
    %6535 = vmatprep.subr.mxu0 %v6387
    %6536 = vmatpush1.msra.mxu0 %v6386
    %6537 = vmatprep.subr.mxu0 %v6391
    %6538 = vmatpush1.msra.mxu0 %v6390
    %6539 = vmatprep.subr.mxu0 %v6395
    %6540 = vmatpush1.msra.mxu0 %v6394
    %6541 = vmatprep.subr.mxu0 %v6399
    %6542 = vmatpush1.msra.mxu0 %v6398
    %6543 = vmatprep.subr.mxu0 %v6403
    %6544 = vmatpush1.msra.mxu0 %v6402
    %6545 = vmatprep.subr.mxu0 %v6407
    %6546 = vmatpush1.msra.mxu0 %v6406
    %6547 = vmatprep.subr.mxu0 %v6411
    %6548 = vmatpush1.msra.mxu0 %v6410
    %6549 = vmatprep.subr.mxu0 %v6415
    %6550 = vmatpush1.msra.mxu0 %v6414
    %6551 = vmatprep.subr.mxu0 %v6419
    %6552 = vmatpush1.msra.mxu0 %v6418
    %6553 = vmatprep.subr.mxu0 %v6423
    %6554 = vmatpush1.msra.mxu0 %v6422
    %6555 = vmatprep.subr.mxu0 %v6427
    %6556 = vmatpush1.msra.mxu0 %v6426
    %6557 = vmatprep.subr.mxu0 %v6431
    %6558 = vmatpush1.msra.mxu0 %v6430
    %6559 = vmatprep.subr.mxu0 %v6435
    %6560 = vmatpush1.msra.mxu0 %v6434
    %6561 = vmatprep.subr.mxu0 0.0
    %6562 = vmatpush1.msra.mxu0 0.0
    %6563 = vmatprep.subr.mxu0 0.0
    %6564 = vmatpush1.msra.mxu0 0.0
    %6565 = vmatprep.subr.mxu0 0.0
    %6566 = vmatpush1.msra.mxu0 0.0
    %6567 = vmatprep.subr.mxu0 0.0
    %6568 = vmatpush1.msra.mxu0 0.0
    %6569 = vmatprep.subr.mxu0 0.0
    %6570 = vmatpush1.msra.mxu0 0.0
    %6571 = vmatprep.subr.mxu0 0.0
    %6572 = vmatpush1.msra.mxu0 0.0
    %6573 = vmatprep.subr.mxu0 0.0
    %6574 = vmatpush1.msra.mxu0 0.0
    %6575 = vmatprep.subr.mxu0 0.0
    %6576 = vmatpush1.msra.mxu0 0.0
    %6577 = vmatprep.subr.mxu0 0.0
    %6578 = vmatpush1.msra.mxu0 0.0
    %6579 = vmatprep.subr.mxu0 0.0
    %6580 = vmatpush1.msra.mxu0 0.0
    %6581 = vmatprep.subr.mxu0 0.0
    %6582 = vmatpush1.msra.mxu0 0.0
    %6583 = vmatprep.subr.mxu0 0.0
    %6584 = vmatpush1.msra.mxu0 0.0
    %6585 = vmatprep.subr.mxu0 0.0
    %6586 = vmatpush1.msra.mxu0 0.0
    %6587 = vmatprep.subr.mxu0 0.0
    %6588 = vmatpush1.msra.mxu0 0.0
    %6589 = vmatprep.subr.mxu0 0.0
    %6590 = vmatpush1.msra.mxu0 0.0
    %6591 = vmatprep.subr.mxu0 0.0
    %6592 = vmatpush1.msra.mxu0 0.0
    %6593 = vmatprep.mubr.f32.mxu0 0.0
    %6594 = vmatmul.mubr.f32.gmra.mrb[0].mxu0 %v6339
    %v6595 = vpop.f32.mrb[0].mxu0
    %v6596 = vadd.f32 %v6449, %v6595
    %v6597 = vpop.f32.mrb[0].mxu0
    %v6598 = vadd.f32 %v6453, %v6597
    %6599 = vdwg.mxu0
    %v6600 = vld [vmem:[%s33] sm:$0x3f]
    %v6601 = vld [vmem:[%s35] sm:$0xff]
    %v6602 = vld [vmem:[%s35 + $0x8] sm:$0xff]
    %v6603 = vld [vmem:[%s35 + $0x10] sm:$0xff]
    %v6604 = vld [vmem:[%s35 + $0x18] sm:$0xff]
    %v6605 = vld [vmem:[%s35 + $0x20] sm:$0xff]
    %v6606 = vld [vmem:[%s35 + $0x28] sm:$0xff]
    %v6607 = vld [vmem:[%s35 + $0x30] sm:$0xff]
    %v6608 = vld [vmem:[%s35 + $0x38] sm:$0xff]
    %v6609 = vld [vmem:[%s35 + $0x40] sm:$0xff]
    %v6610 = vld [vmem:[%s35 + $0x48] sm:$0xff]
    %v6611 = vld [vmem:[%s35 + $0x50] sm:$0xff]
    %v6612 = vld [vmem:[%s35 + $0x58] sm:$0xff]
    %v6613 = vld [vmem:[%s35 + $0x60] sm:$0xff]
    %v6614 = vld [vmem:[%s35 + $0x68] sm:$0xff]
    %v6615 = vld [vmem:[%s35 + $0x70] sm:$0xff]
    %v6616 = vld [vmem:[%s35 + $0x78] sm:$0xff]
    %v6617 = vld [vmem:[%s35 + $0x80] sm:$0xff]
    %v6618 = vld [vmem:[%s35 + $0x88] sm:$0xff]
    %v6619 = vld [vmem:[%s35 + $0x90] sm:$0xff]
    %v6620 = vld [vmem:[%s35 + $0x98] sm:$0xff]
    %v6621 = vld [vmem:[%s35 + $0xa0] sm:$0xff]
    %v6622 = vld [vmem:[%s35 + $0xa8] sm:$0xff]
    %v6623 = vld [vmem:[%s35 + $0xb0] sm:$0xff]
    %v6624 = vld [vmem:[%s35 + $0xb8] sm:$0xff]
    %v6625 = vld [vmem:[%s35 + $0xc0] sm:$0xff]
    %v6626 = vld [vmem:[%s35 + $0xc8] sm:$0xff]
    %v6627 = vld [vmem:[%s35 + $0xd0] sm:$0xff]
    %v6628 = vld [vmem:[%s35 + $0xd8] sm:$0xff]
    %v6629 = vld [vmem:[%s35 + $0xe0] sm:$0xff]
    %v6630 = vld [vmem:[%s35 + $0xe8] sm:$0xff]
    %v6631 = vld [vmem:[%s35 + $0xf0] sm:$0xff]
    %v6632 = vld [vmem:[%s35 + $0xf8] sm:$0xff]
    %v6633 = vld [vmem:[%s35 + $0x100] sm:$0xff]
    %v6634 = vld [vmem:[%s35 + $0x108] sm:$0xff]
    %v6635 = vld [vmem:[%s35 + $0x110] sm:$0xff]
    %v6636 = vld [vmem:[%s35 + $0x118] sm:$0xff]
    %v6637 = vld [vmem:[%s35 + $0x120] sm:$0xff]
    %v6638 = vld [vmem:[%s35 + $0x128] sm:$0xff]
    %v6639 = vld [vmem:[%s35 + $0x130] sm:$0xff]
    %v6640 = vld [vmem:[%s35 + $0x138] sm:$0xff]
    %v6641 = vld [vmem:[%s35 + $0x140] sm:$0xff]
    %v6642 = vld [vmem:[%s35 + $0x148] sm:$0xff]
    %v6643 = vld [vmem:[%s35 + $0x150] sm:$0xff]
    %v6644 = vld [vmem:[%s35 + $0x158] sm:$0xff]
    %v6645 = vld [vmem:[%s35 + $0x160] sm:$0xff]
    %v6646 = vld [vmem:[%s35 + $0x168] sm:$0xff]
    %v6647 = vld [vmem:[%s35 + $0x170] sm:$0xff]
    %v6648 = vld [vmem:[%s35 + $0x178] sm:$0xff]
    %v6649 = vld [vmem:[%s35 + $0x180] sm:$0xff]
    %v6650 = vld [vmem:[%s35 + $0x188] sm:$0xff]
    %v6651 = vld [vmem:[%s35 + $0x190] sm:$0xff]
    %v6652 = vld [vmem:[%s35 + $0x198] sm:$0xff]
    %v6653 = vld [vmem:[%s35 + $0x1a0] sm:$0xff]
    %v6654 = vld [vmem:[%s35 + $0x1a8] sm:$0xff]
    %v6655 = vld [vmem:[%s35 + $0x1b0] sm:$0xff]
    %v6656 = vld [vmem:[%s35 + $0x1b8] sm:$0xff]
    %v6657 = vld [vmem:[%s35 + $0x1c0] sm:$0xff]
    %v6658 = vld [vmem:[%s35 + $0x1c8] sm:$0xff]
    %v6659 = vld [vmem:[%s35 + $0x1d0] sm:$0xff]
    %v6660 = vld [vmem:[%s35 + $0x1d8] sm:$0xff]
    %v6661 = vld [vmem:[%s35 + $0x1e0] sm:$0xff]
    %v6662 = vld [vmem:[%s35 + $0x1e8] sm:$0xff]
    %v6663 = vld [vmem:[%s35 + $0x1f0] sm:$0xff]
    %v6664 = vld [vmem:[%s35 + $0x1f8] sm:$0xff]
    %v6665 = vld [vmem:[%s35 + $0x200] sm:$0xff]
    %v6666 = vld [vmem:[%s35 + $0x208] sm:$0xff]
    %v6667 = vld [vmem:[%s35 + $0x210] sm:$0xff]
    %v6668 = vld [vmem:[%s35 + $0x218] sm:$0xff]
    %v6669 = vld [vmem:[%s35 + $0x220] sm:$0xff]
    %v6670 = vld [vmem:[%s35 + $0x228] sm:$0xff]
    %v6671 = vld [vmem:[%s35 + $0x230] sm:$0xff]
    %v6672 = vld [vmem:[%s35 + $0x238] sm:$0xff]
    %v6673 = vld [vmem:[%s35 + $0x240] sm:$0xff]
    %v6674 = vld [vmem:[%s35 + $0x248] sm:$0xff]
    %v6675 = vld [vmem:[%s35 + $0x250] sm:$0xff]
    %v6676 = vld [vmem:[%s35 + $0x258] sm:$0xff]
    %v6677 = vld [vmem:[%s35 + $0x260] sm:$0xff]
    %v6678 = vld [vmem:[%s35 + $0x268] sm:$0xff]
    %v6679 = vld [vmem:[%s35 + $0x270] sm:$0xff]
    %v6680 = vld [vmem:[%s35 + $0x278] sm:$0xff]
    %v6681 = vld [vmem:[%s35 + $0x280] sm:$0xff]
    %v6682 = vld [vmem:[%s35 + $0x288] sm:$0xff]
    %v6683 = vld [vmem:[%s35 + $0x290] sm:$0xff]
    %v6684 = vld [vmem:[%s35 + $0x298] sm:$0xff]
    %v6685 = vld [vmem:[%s35 + $0x2a0] sm:$0xff]
    %v6686 = vld [vmem:[%s35 + $0x2a8] sm:$0xff]
    %v6687 = vld [vmem:[%s35 + $0x2b0] sm:$0xff]
    %v6688 = vld [vmem:[%s35 + $0x2b8] sm:$0xff]
    %v6689 = vld [vmem:[%s35 + $0x2c0] sm:$0xff]
    %v6690 = vld [vmem:[%s35 + $0x2c8] sm:$0xff]
    %v6691 = vld [vmem:[%s35 + $0x2d0] sm:$0xff]
    %v6692 = vld [vmem:[%s35 + $0x2d8] sm:$0xff]
    %v6693 = vld [vmem:[%s35 + $0x2e0] sm:$0xff]
    %v6694 = vld [vmem:[%s35 + $0x2e8] sm:$0xff]
    %v6695 = vld [vmem:[%s35 + $0x2f0] sm:$0xff]
    %v6696 = vld [vmem:[%s35 + $0x2f8] sm:$0xff]
    %v6697 = vld [vmem:[%s35 + $0x300] sm:$0xff]
    %v6698 = vld [vmem:[%s35 + $0x308] sm:$0xff]
    %v6699 = vld [vmem:[%s35 + $0x310] sm:$0xff]
    %v6700 = vld [vmem:[%s35 + $0x318] sm:$0xff]
    %v6701 = vld [vmem:[%s35 + $0x320] sm:$0xff]
    %v6702 = vld [vmem:[%s35 + $0x328] sm:$0xff]
    %v6703 = vld [vmem:[%s35 + $0x330] sm:$0xff]
    %v6704 = vld [vmem:[%s35 + $0x338] sm:$0xff]
    %v6705 = vld [vmem:[%s35 + $0x340] sm:$0xff]
    %v6706 = vld [vmem:[%s35 + $0x348] sm:$0xff]
    %v6707 = vld [vmem:[%s35 + $0x350] sm:$0xff]
    %v6708 = vld [vmem:[%s35 + $0x358] sm:$0xff]
    %v6709 = vld [vmem:[%s35 + $0x360] sm:$0xff]
    %v6710 = vld [vmem:[%s35 + $0x368] sm:$0xff]
    %v6711 = vld [vmem:[%s35 + $0x370] sm:$0xff]
    %v6712 = vld [vmem:[%s35 + $0x378] sm:$0xff]
    %v6713 = vld [vmem:[%s35 + $0x380] sm:$0xff]
    %v6714 = vld [vmem:[%s35 + $0x388] sm:$0xff]
    %v6715 = vld [vmem:[%s35 + $0x390] sm:$0xff]
    %v6716 = vld [vmem:[%s35 + $0x398] sm:$0xff]
    %v6717 = vld [vmem:[%s35 + $0x3a0] sm:$0xff]
    %v6718 = vld [vmem:[%s35 + $0x3a8] sm:$0xff]
    %v6719 = vld [vmem:[%s35 + $0x3b0] sm:$0xff]
    %v6720 = vld [vmem:[%s35 + $0x3b8] sm:$0xff]
    %v6721 = vld [vmem:[%s35 + $0x3c0] sm:$0xff]
    %v6722 = vld [vmem:[%s35 + $0x3c8] sm:$0xff]
    %v6723 = vld [vmem:[%s35 + $0x3d0] sm:$0xff]
    %v6724 = vld [vmem:[%s35 + $0x3d8] sm:$0xff]
    %v6725 = vld [vmem:[%s35 + $0x3e0] sm:$0xff]
    %v6726 = vld [vmem:[%s35 + $0x3e8] sm:$0xff]
    %v6727 = vld [vmem:[%s35 + $0x3f0] sm:$0xff]
    %v6728 = vld [vmem:[%s35 + $0x3f8] sm:$0xff]
    %6729 = vmatprep.subr.mxu0 %v6602
    %6730 = vmatpush1.msra.mxu0 %v6601
    %6731 = vmatprep.subr.mxu0 %v6604
    %6732 = vmatpush1.msra.mxu0 %v6603
    %6733 = vmatprep.subr.mxu0 %v6606
    %6734 = vmatpush1.msra.mxu0 %v6605
    %6735 = vmatprep.subr.mxu0 %v6608
    %6736 = vmatpush1.msra.mxu0 %v6607
    %6737 = vmatprep.subr.mxu0 %v6610
    %6738 = vmatpush1.msra.mxu0 %v6609
    %6739 = vmatprep.subr.mxu0 %v6612
    %6740 = vmatpush1.msra.mxu0 %v6611
    %6741 = vmatprep.subr.mxu0 %v6614
    %6742 = vmatpush1.msra.mxu0 %v6613
    %6743 = vmatprep.subr.mxu0 %v6616
    %6744 = vmatpush1.msra.mxu0 %v6615
    %6745 = vmatprep.subr.mxu0 %v6618
    %6746 = vmatpush1.msra.mxu0 %v6617
    %6747 = vmatprep.subr.mxu0 %v6620
    %6748 = vmatpush1.msra.mxu0 %v6619
    %6749 = vmatprep.subr.mxu0 %v6622
    %6750 = vmatpush1.msra.mxu0 %v6621
    %6751 = vmatprep.subr.mxu0 %v6624
    %6752 = vmatpush1.msra.mxu0 %v6623
    %6753 = vmatprep.subr.mxu0 %v6626
    %6754 = vmatpush1.msra.mxu0 %v6625
    %6755 = vmatprep.subr.mxu0 %v6628
    %6756 = vmatpush1.msra.mxu0 %v6627
    %6757 = vmatprep.subr.mxu0 %v6630
    %6758 = vmatpush1.msra.mxu0 %v6629
    %6759 = vmatprep.subr.mxu0 %v6632
    %6760 = vmatpush1.msra.mxu0 %v6631
    %6761 = vmatprep.subr.mxu0 %v6634
    %6762 = vmatpush1.msra.mxu0 %v6633
    %6763 = vmatprep.subr.mxu0 %v6636
    %6764 = vmatpush1.msra.mxu0 %v6635
    %6765 = vmatprep.subr.mxu0 %v6638
    %6766 = vmatpush1.msra.mxu0 %v6637
    %6767 = vmatprep.subr.mxu0 %v6640
    %6768 = vmatpush1.msra.mxu0 %v6639
    %6769 = vmatprep.subr.mxu0 %v6642
    %6770 = vmatpush1.msra.mxu0 %v6641
    %6771 = vmatprep.subr.mxu0 %v6644
    %6772 = vmatpush1.msra.mxu0 %v6643
    %6773 = vmatprep.subr.mxu0 %v6646
    %6774 = vmatpush1.msra.mxu0 %v6645
    %6775 = vmatprep.subr.mxu0 %v6648
    %6776 = vmatpush1.msra.mxu0 %v6647
    %6777 = vmatprep.subr.mxu0 %v6650
    %6778 = vmatpush1.msra.mxu0 %v6649
    %6779 = vmatprep.subr.mxu0 %v6652
    %6780 = vmatpush1.msra.mxu0 %v6651
    %6781 = vmatprep.subr.mxu0 %v6654
    %6782 = vmatpush1.msra.mxu0 %v6653
    %6783 = vmatprep.subr.mxu0 %v6656
    %6784 = vmatpush1.msra.mxu0 %v6655
    %6785 = vmatprep.subr.mxu0 %v6658
    %6786 = vmatpush1.msra.mxu0 %v6657
    %6787 = vmatprep.subr.mxu0 %v6660
    %6788 = vmatpush1.msra.mxu0 %v6659
    %6789 = vmatprep.subr.mxu0 %v6662
    %6790 = vmatpush1.msra.mxu0 %v6661
    %6791 = vmatprep.subr.mxu0 %v6664
    %6792 = vmatpush1.msra.mxu0 %v6663
    %6793 = vmatprep.mubr.f32.mxu0 %v6527
    %6794 = vmatmul.mubr.f32.gmra.mrb[0].mxu0 %v6525
    %v6795 = vpop.f32.mrb[0].mxu0
    %v6796 = vadd.f32 0.0, %v6795
    %v6797 = vpop.f32.mrb[0].mxu0
    %v6798 = vadd.f32 0.0, %v6797
    %6799 = vdwg.mxu0
    %6800 = vmatprep.subr.mxu0 %v6666
    %6801 = vmatpush1.msra.mxu0 %v6665
    %6802 = vmatprep.subr.mxu0 %v6668
    %6803 = vmatpush1.msra.mxu0 %v6667
    %6804 = vmatprep.subr.mxu0 %v6670
    %6805 = vmatpush1.msra.mxu0 %v6669
    %6806 = vmatprep.subr.mxu0 %v6672
    %6807 = vmatpush1.msra.mxu0 %v6671
    %6808 = vmatprep.subr.mxu0 %v6674
    %6809 = vmatpush1.msra.mxu0 %v6673
    %6810 = vmatprep.subr.mxu0 %v6676
    %6811 = vmatpush1.msra.mxu0 %v6675
    %6812 = vmatprep.subr.mxu0 %v6678
    %6813 = vmatpush1.msra.mxu0 %v6677
    %6814 = vmatprep.subr.mxu0 %v6680
    %6815 = vmatpush1.msra.mxu0 %v6679
    %6816 = vmatprep.subr.mxu0 %v6682
    %6817 = vmatpush1.msra.mxu0 %v6681
    %6818 = vmatprep.subr.mxu0 %v6684
    %6819 = vmatpush1.msra.mxu0 %v6683
    %6820 = vmatprep.subr.mxu0 %v6686
    %6821 = vmatpush1.msra.mxu0 %v6685
    %6822 = vmatprep.subr.mxu0 %v6688
    %6823 = vmatpush1.msra.mxu0 %v6687
    %6824 = vmatprep.subr.mxu0 %v6690
    %6825 = vmatpush1.msra.mxu0 %v6689
    %6826 = vmatprep.subr.mxu0 %v6692
    %6827 = vmatpush1.msra.mxu0 %v6691
    %6828 = vmatprep.subr.mxu0 %v6694
    %6829 = vmatpush1.msra.mxu0 %v6693
    %6830 = vmatprep.subr.mxu0 %v6696
    %6831 = vmatpush1.msra.mxu0 %v6695
    %6832 = vmatprep.subr.mxu0 %v6698
    %6833 = vmatpush1.msra.mxu0 %v6697
    %6834 = vmatprep.subr.mxu0 %v6700
    %6835 = vmatpush1.msra.mxu0 %v6699
    %6836 = vmatprep.subr.mxu0 %v6702
    %6837 = vmatpush1.msra.mxu0 %v6701
    %6838 = vmatprep.subr.mxu0 %v6704
    %6839 = vmatpush1.msra.mxu0 %v6703
    %6840 = vmatprep.subr.mxu0 %v6706
    %6841 = vmatpush1.msra.mxu0 %v6705
    %6842 = vmatprep.subr.mxu0 %v6708
    %6843 = vmatpush1.msra.mxu0 %v6707
    %6844 = vmatprep.subr.mxu0 %v6710
    %6845 = vmatpush1.msra.mxu0 %v6709
    %6846 = vmatprep.subr.mxu0 %v6712
    %6847 = vmatpush1.msra.mxu0 %v6711
    %6848 = vmatprep.subr.mxu0 %v6714
    %6849 = vmatpush1.msra.mxu0 %v6713
    %6850 = vmatprep.subr.mxu0 %v6716
    %6851 = vmatpush1.msra.mxu0 %v6715
    %6852 = vmatprep.subr.mxu0 %v6718
    %6853 = vmatpush1.msra.mxu0 %v6717
    %6854 = vmatprep.subr.mxu0 %v6720
    %6855 = vmatpush1.msra.mxu0 %v6719
    %6856 = vmatprep.subr.mxu0 %v6722
    %6857 = vmatpush1.msra.mxu0 %v6721
    %6858 = vmatprep.subr.mxu0 %v6724
    %6859 = vmatpush1.msra.mxu0 %v6723
    %6860 = vmatprep.subr.mxu0 %v6726
    %6861 = vmatpush1.msra.mxu0 %v6725
    %6862 = vmatprep.subr.mxu0 %v6728
    %6863 = vmatpush1.msra.mxu0 %v6727
    %6864 = vmatprep.mubr.f32.mxu0 %v6598
    %6865 = vmatmul.mubr.f32.gmra.mrb[0].mxu0 %v6596
    %v6866 = vpop.f32.mrb[0].mxu0
    %v6867 = vadd.f32 %v6796, %v6866
    %v6868 = vpop.f32.mrb[0].mxu0
    %v6869 = vadd.f32 %v6798, %v6868
    %6870 = vdwg.mxu0
    %s6871 = scalar_lea.vmem %s33, 8
    %v6872 = vld [vmem:[%s6871] sm:$0x3f]
    %s6873 = scalar_lea.vmem %s35, 1024
    %v6874 = vld [vmem:[%s6873] sm:$0xff]
    %v6875 = vld [vmem:[%s6873 + $0x8] sm:$0xff]
    %v6876 = vld [vmem:[%s6873 + $0x10] sm:$0xff]
    %v6877 = vld [vmem:[%s6873 + $0x18] sm:$0xff]
    %v6878 = vld [vmem:[%s6873 + $0x20] sm:$0xff]
    %v6879 = vld [vmem:[%s6873 + $0x28] sm:$0xff]
    %v6880 = vld [vmem:[%s6873 + $0x30] sm:$0xff]
    %v6881 = vld [vmem:[%s6873 + $0x38] sm:$0xff]
    %v6882 = vld [vmem:[%s6873 + $0x40] sm:$0xff]
    %v6883 = vld [vmem:[%s6873 + $0x48] sm:$0xff]
    %v6884 = vld [vmem:[%s6873 + $0x50] sm:$0xff]
    %v6885 = vld [vmem:[%s6873 + $0x58] sm:$0xff]
    %v6886 = vld [vmem:[%s6873 + $0x60] sm:$0xff]
    %v6887 = vld [vmem:[%s6873 + $0x68] sm:$0xff]
    %v6888 = vld [vmem:[%s6873 + $0x70] sm:$0xff]
    %v6889 = vld [vmem:[%s6873 + $0x78] sm:$0xff]
    %v6890 = vld [vmem:[%s6873 + $0x80] sm:$0xff]
    %v6891 = vld [vmem:[%s6873 + $0x88] sm:$0xff]
    %v6892 = vld [vmem:[%s6873 + $0x90] sm:$0xff]
    %v6893 = vld [vmem:[%s6873 + $0x98] sm:$0xff]
    %v6894 = vld [vmem:[%s6873 + $0xa0] sm:$0xff]
    %v6895 = vld [vmem:[%s6873 + $0xa8] sm:$0xff]
    %v6896 = vld [vmem:[%s6873 + $0xb0] sm:$0xff]
    %v6897 = vld [vmem:[%s6873 + $0xb8] sm:$0xff]
    %v6898 = vld [vmem:[%s6873 + $0xc0] sm:$0xff]
    %v6899 = vld [vmem:[%s6873 + $0xc8] sm:$0xff]
    %v6900 = vld [vmem:[%s6873 + $0xd0] sm:$0xff]
    %v6901 = vld [vmem:[%s6873 + $0xd8] sm:$0xff]
    %v6902 = vld [vmem:[%s6873 + $0xe0] sm:$0xff]
    %v6903 = vld [vmem:[%s6873 + $0xe8] sm:$0xff]
    %v6904 = vld [vmem:[%s6873 + $0xf0] sm:$0xff]
    %v6905 = vld [vmem:[%s6873 + $0xf8] sm:$0xff]
    %v6906 = vld [vmem:[%s6873 + $0x100] sm:$0xff]
    %v6907 = vld [vmem:[%s6873 + $0x108] sm:$0xff]
    %v6908 = vld [vmem:[%s6873 + $0x110] sm:$0xff]
    %v6909 = vld [vmem:[%s6873 + $0x118] sm:$0xff]
    %v6910 = vld [vmem:[%s6873 + $0x120] sm:$0xff]
    %v6911 = vld [vmem:[%s6873 + $0x128] sm:$0xff]
    %v6912 = vld [vmem:[%s6873 + $0x130] sm:$0xff]
    %v6913 = vld [vmem:[%s6873 + $0x138] sm:$0xff]
    %v6914 = vld [vmem:[%s6873 + $0x140] sm:$0xff]
    %v6915 = vld [vmem:[%s6873 + $0x148] sm:$0xff]
    %v6916 = vld [vmem:[%s6873 + $0x150] sm:$0xff]
    %v6917 = vld [vmem:[%s6873 + $0x158] sm:$0xff]
    %v6918 = vld [vmem:[%s6873 + $0x160] sm:$0xff]
    %v6919 = vld [vmem:[%s6873 + $0x168] sm:$0xff]
    %v6920 = vld [vmem:[%s6873 + $0x170] sm:$0xff]
    %v6921 = vld [vmem:[%s6873 + $0x178] sm:$0xff]
    %v6922 = vld [vmem:[%s6873 + $0x180] sm:$0xff]
    %v6923 = vld [vmem:[%s6873 + $0x188] sm:$0xff]
    %v6924 = vld [vmem:[%s6873 + $0x190] sm:$0xff]
    %v6925 = vld [vmem:[%s6873 + $0x198] sm:$0xff]
    %v6926 = vld [vmem:[%s6873 + $0x1a0] sm:$0xff]
    %v6927 = vld [vmem:[%s6873 + $0x1a8] sm:$0xff]
    %v6928 = vld [vmem:[%s6873 + $0x1b0] sm:$0xff]
    %v6929 = vld [vmem:[%s6873 + $0x1b8] sm:$0xff]
    %v6930 = vld [vmem:[%s6873 + $0x1c0] sm:$0xff]
    %v6931 = vld [vmem:[%s6873 + $0x1c8] sm:$0xff]
    %v6932 = vld [vmem:[%s6873 + $0x1d0] sm:$0xff]
    %v6933 = vld [vmem:[%s6873 + $0x1d8] sm:$0xff]
    %v6934 = vld [vmem:[%s6873 + $0x1e0] sm:$0xff]
    %v6935 = vld [vmem:[%s6873 + $0x1e8] sm:$0xff]
    %v6936 = vld [vmem:[%s6873 + $0x1f0] sm:$0xff]
    %v6937 = vld [vmem:[%s6873 + $0x1f8] sm:$0xff]
    %v6938 = vld [vmem:[%s6873 + $0x200] sm:$0xff]
    %v6939 = vld [vmem:[%s6873 + $0x208] sm:$0xff]
    %v6940 = vld [vmem:[%s6873 + $0x210] sm:$0xff]
    %v6941 = vld [vmem:[%s6873 + $0x218] sm:$0xff]
    %v6942 = vld [vmem:[%s6873 + $0x220] sm:$0xff]
    %v6943 = vld [vmem:[%s6873 + $0x228] sm:$0xff]
    %v6944 = vld [vmem:[%s6873 + $0x230] sm:$0xff]
    %v6945 = vld [vmem:[%s6873 + $0x238] sm:$0xff]
    %v6946 = vld [vmem:[%s6873 + $0x240] sm:$0xff]
    %v6947 = vld [vmem:[%s6873 + $0x248] sm:$0xff]
    %v6948 = vld [vmem:[%s6873 + $0x250] sm:$0xff]
    %v6949 = vld [vmem:[%s6873 + $0x258] sm:$0xff]
    %v6950 = vld [vmem:[%s6873 + $0x260] sm:$0xff]
    %v6951 = vld [vmem:[%s6873 + $0x268] sm:$0xff]
    %v6952 = vld [vmem:[%s6873 + $0x270] sm:$0xff]
    %v6953 = vld [vmem:[%s6873 + $0x278] sm:$0xff]
    %v6954 = vld [vmem:[%s6873 + $0x280] sm:$0xff]
    %v6955 = vld [vmem:[%s6873 + $0x288] sm:$0xff]
    %v6956 = vld [vmem:[%s6873 + $0x290] sm:$0xff]
    %v6957 = vld [vmem:[%s6873 + $0x298] sm:$0xff]
    %v6958 = vld [vmem:[%s6873 + $0x2a0] sm:$0xff]
    %v6959 = vld [vmem:[%s6873 + $0x2a8] sm:$0xff]
    %v6960 = vld [vmem:[%s6873 + $0x2b0] sm:$0xff]
    %v6961 = vld [vmem:[%s6873 + $0x2b8] sm:$0xff]
    %v6962 = vld [vmem:[%s6873 + $0x2c0] sm:$0xff]
    %v6963 = vld [vmem:[%s6873 + $0x2c8] sm:$0xff]
    %v6964 = vld [vmem:[%s6873 + $0x2d0] sm:$0xff]
    %v6965 = vld [vmem:[%s6873 + $0x2d8] sm:$0xff]
    %v6966 = vld [vmem:[%s6873 + $0x2e0] sm:$0xff]
    %v6967 = vld [vmem:[%s6873 + $0x2e8] sm:$0xff]
    %v6968 = vld [vmem:[%s6873 + $0x2f0] sm:$0xff]
    %v6969 = vld [vmem:[%s6873 + $0x2f8] sm:$0xff]
    %v6970 = vld [vmem:[%s6873 + $0x300] sm:$0xff]
    %v6971 = vld [vmem:[%s6873 + $0x308] sm:$0xff]
    %v6972 = vld [vmem:[%s6873 + $0x310] sm:$0xff]
    %v6973 = vld [vmem:[%s6873 + $0x318] sm:$0xff]
    %v6974 = vld [vmem:[%s6873 + $0x320] sm:$0xff]
    %v6975 = vld [vmem:[%s6873 + $0x328] sm:$0xff]
    %v6976 = vld [vmem:[%s6873 + $0x330] sm:$0xff]
    %v6977 = vld [vmem:[%s6873 + $0x338] sm:$0xff]
    %v6978 = vld [vmem:[%s6873 + $0x340] sm:$0xff]
    %v6979 = vld [vmem:[%s6873 + $0x348] sm:$0xff]
    %v6980 = vld [vmem:[%s6873 + $0x350] sm:$0xff]
    %v6981 = vld [vmem:[%s6873 + $0x358] sm:$0xff]
    %v6982 = vld [vmem:[%s6873 + $0x360] sm:$0xff]
    %v6983 = vld [vmem:[%s6873 + $0x368] sm:$0xff]
    %v6984 = vld [vmem:[%s6873 + $0x370] sm:$0xff]
    %v6985 = vld [vmem:[%s6873 + $0x378] sm:$0xff]
    %v6986 = vld [vmem:[%s6873 + $0x380] sm:$0xff]
    %v6987 = vld [vmem:[%s6873 + $0x388] sm:$0xff]
    %v6988 = vld [vmem:[%s6873 + $0x390] sm:$0xff]
    %v6989 = vld [vmem:[%s6873 + $0x398] sm:$0xff]
    %v6990 = vld [vmem:[%s6873 + $0x3a0] sm:$0xff]
    %v6991 = vld [vmem:[%s6873 + $0x3a8] sm:$0xff]
    %v6992 = vld [vmem:[%s6873 + $0x3b0] sm:$0xff]
    %v6993 = vld [vmem:[%s6873 + $0x3b8] sm:$0xff]
    %v6994 = vld [vmem:[%s6873 + $0x3c0] sm:$0xff]
    %v6995 = vld [vmem:[%s6873 + $0x3c8] sm:$0xff]
    %v6996 = vld [vmem:[%s6873 + $0x3d0] sm:$0xff]
    %v6997 = vld [vmem:[%s6873 + $0x3d8] sm:$0xff]
    %v6998 = vld [vmem:[%s6873 + $0x3e0] sm:$0xff]
    %v6999 = vld [vmem:[%s6873 + $0x3e8] sm:$0xff]
    %v7000 = vld [vmem:[%s6873 + $0x3f0] sm:$0xff]
    %v7001 = vld [vmem:[%s6873 + $0x3f8] sm:$0xff]
    %7002 = vmatprep.subr.mxu0 %v6875
    %7003 = vmatpush1.msra.mxu0 %v6874
    %7004 = vmatprep.subr.mxu0 %v6877
    %7005 = vmatpush1.msra.mxu0 %v6876
    %7006 = vmatprep.subr.mxu0 %v6879
    %7007 = vmatpush1.msra.mxu0 %v6878
    %7008 = vmatprep.subr.mxu0 %v6881
    %7009 = vmatpush1.msra.mxu0 %v6880
    %7010 = vmatprep.subr.mxu0 %v6883
    %7011 = vmatpush1.msra.mxu0 %v6882
    %7012 = vmatprep.subr.mxu0 %v6885
    %7013 = vmatpush1.msra.mxu0 %v6884
    %7014 = vmatprep.subr.mxu0 %v6887
    %7015 = vmatpush1.msra.mxu0 %v6886
    %7016 = vmatprep.subr.mxu0 %v6889
    %7017 = vmatpush1.msra.mxu0 %v6888
    %7018 = vmatprep.subr.mxu0 %v6891
    %7019 = vmatpush1.msra.mxu0 %v6890
    %7020 = vmatprep.subr.mxu0 %v6893
    %7021 = vmatpush1.msra.mxu0 %v6892
    %7022 = vmatprep.subr.mxu0 %v6895
    %7023 = vmatpush1.msra.mxu0 %v6894
    %7024 = vmatprep.subr.mxu0 %v6897
    %7025 = vmatpush1.msra.mxu0 %v6896
    %7026 = vmatprep.subr.mxu0 %v6899
    %7027 = vmatpush1.msra.mxu0 %v6898
    %7028 = vmatprep.subr.mxu0 %v6901
    %7029 = vmatpush1.msra.mxu0 %v6900
    %7030 = vmatprep.subr.mxu0 %v6903
    %7031 = vmatpush1.msra.mxu0 %v6902
    %7032 = vmatprep.subr.mxu0 %v6905
    %7033 = vmatpush1.msra.mxu0 %v6904
    %7034 = vmatprep.subr.mxu0 %v6907
    %7035 = vmatpush1.msra.mxu0 %v6906
    %7036 = vmatprep.subr.mxu0 %v6909
    %7037 = vmatpush1.msra.mxu0 %v6908
    %7038 = vmatprep.subr.mxu0 %v6911
    %7039 = vmatpush1.msra.mxu0 %v6910
    %7040 = vmatprep.subr.mxu0 %v6913
    %7041 = vmatpush1.msra.mxu0 %v6912
    %7042 = vmatprep.subr.mxu0 %v6915
    %7043 = vmatpush1.msra.mxu0 %v6914
    %7044 = vmatprep.subr.mxu0 %v6917
    %7045 = vmatpush1.msra.mxu0 %v6916
    %7046 = vmatprep.subr.mxu0 %v6919
    %7047 = vmatpush1.msra.mxu0 %v6918
    %7048 = vmatprep.subr.mxu0 %v6921
    %7049 = vmatpush1.msra.mxu0 %v6920
    %7050 = vmatprep.subr.mxu0 %v6923
    %7051 = vmatpush1.msra.mxu0 %v6922
    %7052 = vmatprep.subr.mxu0 %v6925
    %7053 = vmatpush1.msra.mxu0 %v6924
    %7054 = vmatprep.subr.mxu0 %v6927
    %7055 = vmatpush1.msra.mxu0 %v6926
    %7056 = vmatprep.subr.mxu0 %v6929
    %7057 = vmatpush1.msra.mxu0 %v6928
    %7058 = vmatprep.subr.mxu0 %v6931
    %7059 = vmatpush1.msra.mxu0 %v6930
    %7060 = vmatprep.subr.mxu0 %v6933
    %7061 = vmatpush1.msra.mxu0 %v6932
    %7062 = vmatprep.subr.mxu0 %v6935
    %7063 = vmatpush1.msra.mxu0 %v6934
    %7064 = vmatprep.subr.mxu0 %v6937
    %7065 = vmatpush1.msra.mxu0 %v6936
    %7066 = vmatprep.mubr.f32.mxu0 %v6527
    %7067 = vmatmul.mubr.f32.gmra.mrb[0].mxu0 %v6525
    %v7068 = vpop.f32.mrb[0].mxu0
    %v7069 = vadd.f32 0.0, %v7068
    %v7070 = vpop.f32.mrb[0].mxu0
    %v7071 = vadd.f32 0.0, %v7070
    %7072 = vdwg.mxu0
    %7073 = vmatprep.subr.mxu0 %v6939
    %7074 = vmatpush1.msra.mxu0 %v6938
    %7075 = vmatprep.subr.mxu0 %v6941
    %7076 = vmatpush1.msra.mxu0 %v6940
    %7077 = vmatprep.subr.mxu0 %v6943
    %7078 = vmatpush1.msra.mxu0 %v6942
    %7079 = vmatprep.subr.mxu0 %v6945
    %7080 = vmatpush1.msra.mxu0 %v6944
    %7081 = vmatprep.subr.mxu0 %v6947
    %7082 = vmatpush1.msra.mxu0 %v6946
    %7083 = vmatprep.subr.mxu0 %v6949
    %7084 = vmatpush1.msra.mxu0 %v6948
    %7085 = vmatprep.subr.mxu0 %v6951
    %7086 = vmatpush1.msra.mxu0 %v6950
    %7087 = vmatprep.subr.mxu0 %v6953
    %7088 = vmatpush1.msra.mxu0 %v6952
    %7089 = vmatprep.subr.mxu0 %v6955
    %7090 = vmatpush1.msra.mxu0 %v6954
    %7091 = vmatprep.subr.mxu0 %v6957
    %7092 = vmatpush1.msra.mxu0 %v6956
    %7093 = vmatprep.subr.mxu0 %v6959
    %7094 = vmatpush1.msra.mxu0 %v6958
    %7095 = vmatprep.subr.mxu0 %v6961
    %7096 = vmatpush1.msra.mxu0 %v6960
    %7097 = vmatprep.subr.mxu0 %v6963
    %7098 = vmatpush1.msra.mxu0 %v6962
    %7099 = vmatprep.subr.mxu0 %v6965
    %7100 = vmatpush1.msra.mxu0 %v6964
    %7101 = vmatprep.subr.mxu0 %v6967
    %7102 = vmatpush1.msra.mxu0 %v6966
    %7103 = vmatprep.subr.mxu0 %v6969
    %7104 = vmatpush1.msra.mxu0 %v6968
    %7105 = vmatprep.subr.mxu0 %v6971
    %7106 = vmatpush1.msra.mxu0 %v6970
    %7107 = vmatprep.subr.mxu0 %v6973
    %7108 = vmatpush1.msra.mxu0 %v6972
    %7109 = vmatprep.subr.mxu0 %v6975
    %7110 = vmatpush1.msra.mxu0 %v6974
    %7111 = vmatprep.subr.mxu0 %v6977
    %7112 = vmatpush1.msra.mxu0 %v6976
    %7113 = vmatprep.subr.mxu0 %v6979
    %7114 = vmatpush1.msra.mxu0 %v6978
    %7115 = vmatprep.subr.mxu0 %v6981
    %7116 = vmatpush1.msra.mxu0 %v6980
    %7117 = vmatprep.subr.mxu0 %v6983
    %7118 = vmatpush1.msra.mxu0 %v6982
    %7119 = vmatprep.subr.mxu0 %v6985
    %7120 = vmatpush1.msra.mxu0 %v6984
    %7121 = vmatprep.subr.mxu0 %v6987
    %7122 = vmatpush1.msra.mxu0 %v6986
    %7123 = vmatprep.subr.mxu0 %v6989
    %7124 = vmatpush1.msra.mxu0 %v6988
    %7125 = vmatprep.subr.mxu0 %v6991
    %7126 = vmatpush1.msra.mxu0 %v6990
    %7127 = vmatprep.subr.mxu0 %v6993
    %7128 = vmatpush1.msra.mxu0 %v6992
    %7129 = vmatprep.subr.mxu0 %v6995
    %7130 = vmatpush1.msra.mxu0 %v6994
    %7131 = vmatprep.subr.mxu0 %v6997
    %7132 = vmatpush1.msra.mxu0 %v6996
    %7133 = vmatprep.subr.mxu0 %v6999
    %7134 = vmatpush1.msra.mxu0 %v6998
    %7135 = vmatprep.subr.mxu0 %v7001
    %7136 = vmatpush1.msra.mxu0 %v7000
    %7137 = vmatprep.mubr.f32.mxu0 %v6598
    %7138 = vmatmul.mubr.f32.gmra.mrb[0].mxu0 %v6596
    %v7139 = vpop.f32.mrb[0].mxu0
    %v7140 = vadd.f32 %v7069, %v7139
    %v7141 = vpop.f32.mrb[0].mxu0
    %v7142 = vadd.f32 %v7071, %v7141
    %7143 = vdwg.mxu0
    %vm7144 = vcmask 15360
    %v7146 = vsel %vm7144, %v6872, 0
    %v7149 = vsel %vm6347, %v7140, 0
    %v7152 = vsel %vm6347, %v7142, 0
    %7154 = vmatprep.subr.mxu0 %v7152
    %7155 = vmatpush1.msra.mxu0 %v7149
    %7156 = vmatprep.subr.mxu0 0.0
    %7157 = vmatpush1.msra.mxu0 0.0
    %7158 = vmatprep.subr.mxu0 0.0
    %7159 = vmatpush1.msra.mxu0 0.0
    %7160 = vmatprep.subr.mxu0 0.0
    %7161 = vmatpush1.msra.mxu0 0.0
    %7162 = vmatprep.subr.mxu0 0.0
    %7163 = vmatpush1.msra.mxu0 0.0
    %7164 = vmatprep.subr.mxu0 0.0
    %7165 = vmatpush1.msra.mxu0 0.0
    %7166 = vmatprep.subr.mxu0 0.0
    %7167 = vmatpush1.msra.mxu0 0.0
    %7168 = vmatprep.subr.mxu0 0.0
    %7169 = vmatpush1.msra.mxu0 0.0
    %7170 = vmatprep.subr.mxu0 0.0
    %7171 = vmatpush1.msra.mxu0 0.0
    %7172 = vmatprep.subr.mxu0 0.0
    %7173 = vmatpush1.msra.mxu0 0.0
    %7174 = vmatprep.subr.mxu0 0.0
    %7175 = vmatpush1.msra.mxu0 0.0
    %7176 = vmatprep.subr.mxu0 0.0
    %7177 = vmatpush1.msra.mxu0 0.0
    %7178 = vmatprep.subr.mxu0 0.0
    %7179 = vmatpush1.msra.mxu0 0.0
    %7180 = vmatprep.subr.mxu0 0.0
    %7181 = vmatpush1.msra.mxu0 0.0
    %7182 = vmatprep.subr.mxu0 0.0
    %7183 = vmatpush1.msra.mxu0 0.0
    %7184 = vmatprep.subr.mxu0 0.0
    %7185 = vmatpush1.msra.mxu0 0.0
    %7186 = vmatprep.subr.mxu0 0.0
    %7187 = vmatpush1.msra.mxu0 0.0
    %7188 = vmatprep.subr.mxu0 0.0
    %7189 = vmatpush1.msra.mxu0 0.0
    %7190 = vmatprep.subr.mxu0 0.0
    %7191 = vmatpush1.msra.mxu0 0.0
    %7192 = vmatprep.subr.mxu0 0.0
    %7193 = vmatpush1.msra.mxu0 0.0
    %7194 = vmatprep.subr.mxu0 0.0
    %7195 = vmatpush1.msra.mxu0 0.0
    %7196 = vmatprep.subr.mxu0 0.0
    %7197 = vmatpush1.msra.mxu0 0.0
    %7198 = vmatprep.subr.mxu0 0.0
    %7199 = vmatpush1.msra.mxu0 0.0
    %7200 = vmatprep.subr.mxu0 0.0
    %7201 = vmatpush1.msra.mxu0 0.0
    %7202 = vmatprep.subr.mxu0 0.0
    %7203 = vmatpush1.msra.mxu0 0.0
    %7204 = vmatprep.subr.mxu0 0.0
    %7205 = vmatpush1.msra.mxu0 0.0
    %7206 = vmatprep.subr.mxu0 0.0
    %7207 = vmatpush1.msra.mxu0 0.0
    %7208 = vmatprep.subr.mxu0 0.0
    %7209 = vmatpush1.msra.mxu0 0.0
    %7210 = vmatprep.subr.mxu0 0.0
    %7211 = vmatpush1.msra.mxu0 0.0
    %7212 = vmatprep.subr.mxu0 0.0
    %7213 = vmatpush1.msra.mxu0 0.0
    %7214 = vmatprep.subr.mxu0 0.0
    %7215 = vmatpush1.msra.mxu0 0.0
    %7216 = vmatprep.subr.mxu0 0.0
    %7217 = vmatpush1.msra.mxu0 0.0
    %7218 = vmatprep.mubr.f32.mxu0 0.0
    %7219 = vmatmul.mubr.f32.gmra.mrb[0].mxu0 %v7146
    %v7220 = vpop.f32.mrb[0].mxu0
    %v7221 = vadd.f32 0.0, %v7220
    %v7222 = vpop.f32.mrb[0].mxu0
    %v7223 = vadd.f32 0.0, %v7222
    %7224 = vdwg.mxu0
    %v7226 = vsel %vm7144, %v6600, 0
    %v7229 = vsel %vm6347, %v6867, 0
    %v7232 = vsel %vm6347, %v6869, 0
    %7234 = vmatprep.subr.mxu0 %v7232
    %7235 = vmatpush1.msra.mxu0 %v7229
    %7236 = vmatprep.subr.mxu0 0.0
    %7237 = vmatpush1.msra.mxu0 0.0
    %7238 = vmatprep.subr.mxu0 0.0
    %7239 = vmatpush1.msra.mxu0 0.0
    %7240 = vmatprep.subr.mxu0 0.0
    %7241 = vmatpush1.msra.mxu0 0.0
    %7242 = vmatprep.subr.mxu0 0.0
    %7243 = vmatpush1.msra.mxu0 0.0
    %7244 = vmatprep.subr.mxu0 0.0
    %7245 = vmatpush1.msra.mxu0 0.0
    %7246 = vmatprep.subr.mxu0 0.0
    %7247 = vmatpush1.msra.mxu0 0.0
    %7248 = vmatprep.subr.mxu0 0.0
    %7249 = vmatpush1.msra.mxu0 0.0
    %7250 = vmatprep.subr.mxu0 0.0
    %7251 = vmatpush1.msra.mxu0 0.0
    %7252 = vmatprep.subr.mxu0 0.0
    %7253 = vmatpush1.msra.mxu0 0.0
    %7254 = vmatprep.subr.mxu0 0.0
    %7255 = vmatpush1.msra.mxu0 0.0
    %7256 = vmatprep.subr.mxu0 0.0
    %7257 = vmatpush1.msra.mxu0 0.0
    %7258 = vmatprep.subr.mxu0 0.0
    %7259 = vmatpush1.msra.mxu0 0.0
    %7260 = vmatprep.subr.mxu0 0.0
    %7261 = vmatpush1.msra.mxu0 0.0
    %7262 = vmatprep.subr.mxu0 0.0
    %7263 = vmatpush1.msra.mxu0 0.0
    %7264 = vmatprep.subr.mxu0 0.0
    %7265 = vmatpush1.msra.mxu0 0.0
    %7266 = vmatprep.subr.mxu0 0.0
    %7267 = vmatpush1.msra.mxu0 0.0
    %7268 = vmatprep.subr.mxu0 0.0
    %7269 = vmatpush1.msra.mxu0 0.0
    %7270 = vmatprep.subr.mxu0 0.0
    %7271 = vmatpush1.msra.mxu0 0.0
    %7272 = vmatprep.subr.mxu0 0.0
    %7273 = vmatpush1.msra.mxu0 0.0
    %7274 = vmatprep.subr.mxu0 0.0
    %7275 = vmatpush1.msra.mxu0 0.0
    %7276 = vmatprep.subr.mxu0 0.0
    %7277 = vmatpush1.msra.mxu0 0.0
    %7278 = vmatprep.subr.mxu0 0.0
    %7279 = vmatpush1.msra.mxu0 0.0
    %7280 = vmatprep.subr.mxu0 0.0
    %7281 = vmatpush1.msra.mxu0 0.0
    %7282 = vmatprep.subr.mxu0 0.0
    %7283 = vmatpush1.msra.mxu0 0.0
    %7284 = vmatprep.subr.mxu0 0.0
    %7285 = vmatpush1.msra.mxu0 0.0
    %7286 = vmatprep.subr.mxu0 0.0
    %7287 = vmatpush1.msra.mxu0 0.0
    %7288 = vmatprep.subr.mxu0 0.0
    %7289 = vmatpush1.msra.mxu0 0.0
    %7290 = vmatprep.subr.mxu0 0.0
    %7291 = vmatpush1.msra.mxu0 0.0
    %7292 = vmatprep.subr.mxu0 0.0
    %7293 = vmatpush1.msra.mxu0 0.0
    %7294 = vmatprep.subr.mxu0 0.0
    %7295 = vmatpush1.msra.mxu0 0.0
    %7296 = vmatprep.subr.mxu0 0.0
    %7297 = vmatpush1.msra.mxu0 0.0
    %7298 = vmatprep.mubr.f32.mxu0 0.0
    %7299 = vmatmul.mubr.f32.gmra.mrb[0].mxu0 %v7226
    %v7300 = vpop.f32.mrb[0].mxu0
    %v7301 = vadd.f32 %v7221, %v7300
    %v7302 = vpop.f32.mrb[0].mxu0
    %v7303 = vadd.f32 %v7223, %v7302
    %7304 = vdwg.mxu0
    %s7305 = scalar_lea.vmem %s33, 16
    %v7306 = vld [vmem:[%s7305] sm:$0x3f]
    %s7307 = scalar_lea.vmem %s35, 2048
    %v7308 = vld [vmem:[%s7307] sm:$0xff]
    %v7309 = vld [vmem:[%s7307 + $0x8] sm:$0xff]
    %v7310 = vld [vmem:[%s7307 + $0x10] sm:$0xff]
    %v7311 = vld [vmem:[%s7307 + $0x18] sm:$0xff]
    %v7312 = vld [vmem:[%s7307 + $0x20] sm:$0xff]
    %v7313 = vld [vmem:[%s7307 + $0x28] sm:$0xff]
    %v7314 = vld [vmem:[%s7307 + $0x30] sm:$0xff]
    %v7315 = vld [vmem:[%s7307 + $0x38] sm:$0xff]
    %v7316 = vld [vmem:[%s7307 + $0x40] sm:$0xff]
    %v7317 = vld [vmem:[%s7307 + $0x48] sm:$0xff]
    %v7318 = vld [vmem:[%s7307 + $0x50] sm:$0xff]
    %v7319 = vld [vmem:[%s7307 + $0x58] sm:$0xff]
    %v7320 = vld [vmem:[%s7307 + $0x60] sm:$0xff]
    %v7321 = vld [vmem:[%s7307 + $0x68] sm:$0xff]
    %v7322 = vld [vmem:[%s7307 + $0x70] sm:$0xff]
    %v7323 = vld [vmem:[%s7307 + $0x78] sm:$0xff]
    %v7324 = vld [vmem:[%s7307 + $0x80] sm:$0xff]
    %v7325 = vld [vmem:[%s7307 + $0x88] sm:$0xff]
    %v7326 = vld [vmem:[%s7307 + $0x90] sm:$0xff]
    %v7327 = vld [vmem:[%s7307 + $0x98] sm:$0xff]
    %v7328 = vld [vmem:[%s7307 + $0xa0] sm:$0xff]
    %v7329 = vld [vmem:[%s7307 + $0xa8] sm:$0xff]
    %v7330 = vld [vmem:[%s7307 + $0xb0] sm:$0xff]
    %v7331 = vld [vmem:[%s7307 + $0xb8] sm:$0xff]
    %v7332 = vld [vmem:[%s7307 + $0xc0] sm:$0xff]
    %v7333 = vld [vmem:[%s7307 + $0xc8] sm:$0xff]
    %v7334 = vld [vmem:[%s7307 + $0xd0] sm:$0xff]
    %v7335 = vld [vmem:[%s7307 + $0xd8] sm:$0xff]
    %v7336 = vld [vmem:[%s7307 + $0xe0] sm:$0xff]
    %v7337 = vld [vmem:[%s7307 + $0xe8] sm:$0xff]
    %v7338 = vld [vmem:[%s7307 + $0xf0] sm:$0xff]
    %v7339 = vld [vmem:[%s7307 + $0xf8] sm:$0xff]
    %v7340 = vld [vmem:[%s7307 + $0x100] sm:$0xff]
    %v7341 = vld [vmem:[%s7307 + $0x108] sm:$0xff]
    %v7342 = vld [vmem:[%s7307 + $0x110] sm:$0xff]
    %v7343 = vld [vmem:[%s7307 + $0x118] sm:$0xff]
    %v7344 = vld [vmem:[%s7307 + $0x120] sm:$0xff]
    %v7345 = vld [vmem:[%s7307 + $0x128] sm:$0xff]
    %v7346 = vld [vmem:[%s7307 + $0x130] sm:$0xff]
    %v7347 = vld [vmem:[%s7307 + $0x138] sm:$0xff]
    %v7348 = vld [vmem:[%s7307 + $0x140] sm:$0xff]
    %v7349 = vld [vmem:[%s7307 + $0x148] sm:$0xff]
    %v7350 = vld [vmem:[%s7307 + $0x150] sm:$0xff]
    %v7351 = vld [vmem:[%s7307 + $0x158] sm:$0xff]
    %v7352 = vld [vmem:[%s7307 + $0x160] sm:$0xff]
    %v7353 = vld [vmem:[%s7307 + $0x168] sm:$0xff]
    %v7354 = vld [vmem:[%s7307 + $0x170] sm:$0xff]
    %v7355 = vld [vmem:[%s7307 + $0x178] sm:$0xff]
    %v7356 = vld [vmem:[%s7307 + $0x180] sm:$0xff]
    %v7357 = vld [vmem:[%s7307 + $0x188] sm:$0xff]
    %v7358 = vld [vmem:[%s7307 + $0x190] sm:$0xff]
    %v7359 = vld [vmem:[%s7307 + $0x198] sm:$0xff]
    %v7360 = vld [vmem:[%s7307 + $0x1a0] sm:$0xff]
    %v7361 = vld [vmem:[%s7307 + $0x1a8] sm:$0xff]
    %v7362 = vld [vmem:[%s7307 + $0x1b0] sm:$0xff]
    %v7363 = vld [vmem:[%s7307 + $0x1b8] sm:$0xff]
    %v7364 = vld [vmem:[%s7307 + $0x1c0] sm:$0xff]
    %v7365 = vld [vmem:[%s7307 + $0x1c8] sm:$0xff]
    %v7366 = vld [vmem:[%s7307 + $0x1d0] sm:$0xff]
    %v7367 = vld [vmem:[%s7307 + $0x1d8] sm:$0xff]
    %v7368 = vld [vmem:[%s7307 + $0x1e0] sm:$0xff]
    %v7369 = vld [vmem:[%s7307 + $0x1e8] sm:$0xff]
    %v7370 = vld [vmem:[%s7307 + $0x1f0] sm:$0xff]
    %v7371 = vld [vmem:[%s7307 + $0x1f8] sm:$0xff]
    %v7372 = vld [vmem:[%s7307 + $0x200] sm:$0xff]
    %v7373 = vld [vmem:[%s7307 + $0x208] sm:$0xff]
    %v7374 = vld [vmem:[%s7307 + $0x210] sm:$0xff]
    %v7375 = vld [vmem:[%s7307 + $0x218] sm:$0xff]
    %v7376 = vld [vmem:[%s7307 + $0x220] sm:$0xff]
    %v7377 = vld [vmem:[%s7307 + $0x228] sm:$0xff]
    %v7378 = vld [vmem:[%s7307 + $0x230] sm:$0xff]
    %v7379 = vld [vmem:[%s7307 + $0x238] sm:$0xff]
    %v7380 = vld [vmem:[%s7307 + $0x240] sm:$0xff]
    %v7381 = vld [vmem:[%s7307 + $0x248] sm:$0xff]
    %v7382 = vld [vmem:[%s7307 + $0x250] sm:$0xff]
    %v7383 = vld [vmem:[%s7307 + $0x258] sm:$0xff]
    %v7384 = vld [vmem:[%s7307 + $0x260] sm:$0xff]
    %v7385 = vld [vmem:[%s7307 + $0x268] sm:$0xff]
    %v7386 = vld [vmem:[%s7307 + $0x270] sm:$0xff]
    %v7387 = vld [vmem:[%s7307 + $0x278] sm:$0xff]
    %v7388 = vld [vmem:[%s7307 + $0x280] sm:$0xff]
    %v7389 = vld [vmem:[%s7307 + $0x288] sm:$0xff]
    %v7390 = vld [vmem:[%s7307 + $0x290] sm:$0xff]
    %v7391 = vld [vmem:[%s7307 + $0x298] sm:$0xff]
    %v7392 = vld [vmem:[%s7307 + $0x2a0] sm:$0xff]
    %v7393 = vld [vmem:[%s7307 + $0x2a8] sm:$0xff]
    %v7394 = vld [vmem:[%s7307 + $0x2b0] sm:$0xff]
    %v7395 = vld [vmem:[%s7307 + $0x2b8] sm:$0xff]
    %v7396 = vld [vmem:[%s7307 + $0x2c0] sm:$0xff]
    %v7397 = vld [vmem:[%s7307 + $0x2c8] sm:$0xff]
    %v7398 = vld [vmem:[%s7307 + $0x2d0] sm:$0xff]
    %v7399 = vld [vmem:[%s7307 + $0x2d8] sm:$0xff]
    %v7400 = vld [vmem:[%s7307 + $0x2e0] sm:$0xff]
    %v7401 = vld [vmem:[%s7307 + $0x2e8] sm:$0xff]
    %v7402 = vld [vmem:[%s7307 + $0x2f0] sm:$0xff]
    %v7403 = vld [vmem:[%s7307 + $0x2f8] sm:$0xff]
    %v7404 = vld [vmem:[%s7307 + $0x300] sm:$0xff]
    %v7405 = vld [vmem:[%s7307 + $0x308] sm:$0xff]
    %v7406 = vld [vmem:[%s7307 + $0x310] sm:$0xff]
    %v7407 = vld [vmem:[%s7307 + $0x318] sm:$0xff]
    %v7408 = vld [vmem:[%s7307 + $0x320] sm:$0xff]
    %v7409 = vld [vmem:[%s7307 + $0x328] sm:$0xff]
    %v7410 = vld [vmem:[%s7307 + $0x330] sm:$0xff]
    %v7411 = vld [vmem:[%s7307 + $0x338] sm:$0xff]
    %v7412 = vld [vmem:[%s7307 + $0x340] sm:$0xff]
    %v7413 = vld [vmem:[%s7307 + $0x348] sm:$0xff]
    %v7414 = vld [vmem:[%s7307 + $0x350] sm:$0xff]
    %v7415 = vld [vmem:[%s7307 + $0x358] sm:$0xff]
    %v7416 = vld [vmem:[%s7307 + $0x360] sm:$0xff]
    %v7417 = vld [vmem:[%s7307 + $0x368] sm:$0xff]
    %v7418 = vld [vmem:[%s7307 + $0x370] sm:$0xff]
    %v7419 = vld [vmem:[%s7307 + $0x378] sm:$0xff]
    %v7420 = vld [vmem:[%s7307 + $0x380] sm:$0xff]
    %v7421 = vld [vmem:[%s7307 + $0x388] sm:$0xff]
    %v7422 = vld [vmem:[%s7307 + $0x390] sm:$0xff]
    %v7423 = vld [vmem:[%s7307 + $0x398] sm:$0xff]
    %v7424 = vld [vmem:[%s7307 + $0x3a0] sm:$0xff]
    %v7425 = vld [vmem:[%s7307 + $0x3a8] sm:$0xff]
    %v7426 = vld [vmem:[%s7307 + $0x3b0] sm:$0xff]
    %v7427 = vld [vmem:[%s7307 + $0x3b8] sm:$0xff]
    %v7428 = vld [vmem:[%s7307 + $0x3c0] sm:$0xff]
    %v7429 = vld [vmem:[%s7307 + $0x3c8] sm:$0xff]
    %v7430 = vld [vmem:[%s7307 + $0x3d0] sm:$0xff]
    %v7431 = vld [vmem:[%s7307 + $0x3d8] sm:$0xff]
    %v7432 = vld [vmem:[%s7307 + $0x3e0] sm:$0xff]
    %v7433 = vld [vmem:[%s7307 + $0x3e8] sm:$0xff]
    %v7434 = vld [vmem:[%s7307 + $0x3f0] sm:$0xff]
    %v7435 = vld [vmem:[%s7307 + $0x3f8] sm:$0xff]
    %7436 = vmatprep.subr.mxu0 %v7309
    %7437 = vmatpush1.msra.mxu0 %v7308
    %7438 = vmatprep.subr.mxu0 %v7311
    %7439 = vmatpush1.msra.mxu0 %v7310
    %7440 = vmatprep.subr.mxu0 %v7313
    %7441 = vmatpush1.msra.mxu0 %v7312
    %7442 = vmatprep.subr.mxu0 %v7315
    %7443 = vmatpush1.msra.mxu0 %v7314
    %7444 = vmatprep.subr.mxu0 %v7317
    %7445 = vmatpush1.msra.mxu0 %v7316
    %7446 = vmatprep.subr.mxu0 %v7319
    %7447 = vmatpush1.msra.mxu0 %v7318
    %7448 = vmatprep.subr.mxu0 %v7321
    %7449 = vmatpush1.msra.mxu0 %v7320
    %7450 = vmatprep.subr.mxu0 %v7323
    %7451 = vmatpush1.msra.mxu0 %v7322
    %7452 = vmatprep.subr.mxu0 %v7325
    %7453 = vmatpush1.msra.mxu0 %v7324
    %7454 = vmatprep.subr.mxu0 %v7327
    %7455 = vmatpush1.msra.mxu0 %v7326
    %7456 = vmatprep.subr.mxu0 %v7329
    %7457 = vmatpush1.msra.mxu0 %v7328
    %7458 = vmatprep.subr.mxu0 %v7331
    %7459 = vmatpush1.msra.mxu0 %v7330
    %7460 = vmatprep.subr.mxu0 %v7333
    %7461 = vmatpush1.msra.mxu0 %v7332
    %7462 = vmatprep.subr.mxu0 %v7335
    %7463 = vmatpush1.msra.mxu0 %v7334
    %7464 = vmatprep.subr.mxu0 %v7337
    %7465 = vmatpush1.msra.mxu0 %v7336
    %7466 = vmatprep.subr.mxu0 %v7339
    %7467 = vmatpush1.msra.mxu0 %v7338
    %7468 = vmatprep.subr.mxu0 %v7341
    %7469 = vmatpush1.msra.mxu0 %v7340
    %7470 = vmatprep.subr.mxu0 %v7343
    %7471 = vmatpush1.msra.mxu0 %v7342
    %7472 = vmatprep.subr.mxu0 %v7345
    %7473 = vmatpush1.msra.mxu0 %v7344
    %7474 = vmatprep.subr.mxu0 %v7347
    %7475 = vmatpush1.msra.mxu0 %v7346
    %7476 = vmatprep.subr.mxu0 %v7349
    %7477 = vmatpush1.msra.mxu0 %v7348
    %7478 = vmatprep.subr.mxu0 %v7351
    %7479 = vmatpush1.msra.mxu0 %v7350
    %7480 = vmatprep.subr.mxu0 %v7353
    %7481 = vmatpush1.msra.mxu0 %v7352
    %7482 = vmatprep.subr.mxu0 %v7355
    %7483 = vmatpush1.msra.mxu0 %v7354
    %7484 = vmatprep.subr.mxu0 %v7357
    %7485 = vmatpush1.msra.mxu0 %v7356
    %7486 = vmatprep.subr.mxu0 %v7359
    %7487 = vmatpush1.msra.mxu0 %v7358
    %7488 = vmatprep.subr.mxu0 %v7361
    %7489 = vmatpush1.msra.mxu0 %v7360
    %7490 = vmatprep.subr.mxu0 %v7363
    %7491 = vmatpush1.msra.mxu0 %v7362
    %7492 = vmatprep.subr.mxu0 %v7365
    %7493 = vmatpush1.msra.mxu0 %v7364
    %7494 = vmatprep.subr.mxu0 %v7367
    %7495 = vmatpush1.msra.mxu0 %v7366
    %7496 = vmatprep.subr.mxu0 %v7369
    %7497 = vmatpush1.msra.mxu0 %v7368
    %7498 = vmatprep.subr.mxu0 %v7371
    %7499 = vmatpush1.msra.mxu0 %v7370
    %7500 = vmatprep.mubr.f32.mxu0 %v6527
    %7501 = vmatmul.mubr.f32.gmra.mrb[0].mxu0 %v6525
    %v7502 = vpop.f32.mrb[0].mxu0
    %v7503 = vadd.f32 0.0, %v7502
    %v7504 = vpop.f32.mrb[0].mxu0
    %v7505 = vadd.f32 0.0, %v7504
    %7506 = vdwg.mxu0
    %7507 = vmatprep.subr.mxu0 %v7373
    %7508 = vmatpush1.msra.mxu0 %v7372
    %7509 = vmatprep.subr.mxu0 %v7375
    %7510 = vmatpush1.msra.mxu0 %v7374
    %7511 = vmatprep.subr.mxu0 %v7377
    %7512 = vmatpush1.msra.mxu0 %v7376
    %7513 = vmatprep.subr.mxu0 %v7379
    %7514 = vmatpush1.msra.mxu0 %v7378
    %7515 = vmatprep.subr.mxu0 %v7381
    %7516 = vmatpush1.msra.mxu0 %v7380
    %7517 = vmatprep.subr.mxu0 %v7383
    %7518 = vmatpush1.msra.mxu0 %v7382
    %7519 = vmatprep.subr.mxu0 %v7385
    %7520 = vmatpush1.msra.mxu0 %v7384
    %7521 = vmatprep.subr.mxu0 %v7387
    %7522 = vmatpush1.msra.mxu0 %v7386
    %7523 = vmatprep.subr.mxu0 %v7389
    %7524 = vmatpush1.msra.mxu0 %v7388
    %7525 = vmatprep.subr.mxu0 %v7391
    %7526 = vmatpush1.msra.mxu0 %v7390
    %7527 = vmatprep.subr.mxu0 %v7393
    %7528 = vmatpush1.msra.mxu0 %v7392
    %7529 = vmatprep.subr.mxu0 %v7395
    %7530 = vmatpush1.msra.mxu0 %v7394
    %7531 = vmatprep.subr.mxu0 %v7397
    %7532 = vmatpush1.msra.mxu0 %v7396
    %7533 = vmatprep.subr.mxu0 %v7399
    %7534 = vmatpush1.msra.mxu0 %v7398
    %7535 = vmatprep.subr.mxu0 %v7401
    %7536 = vmatpush1.msra.mxu0 %v7400
    %7537 = vmatprep.subr.mxu0 %v7403
    %7538 = vmatpush1.msra.mxu0 %v7402
    %7539 = vmatprep.subr.mxu0 %v7405
    %7540 = vmatpush1.msra.mxu0 %v7404
    %7541 = vmatprep.subr.mxu0 %v7407
    %7542 = vmatpush1.msra.mxu0 %v7406
    %7543 = vmatprep.subr.mxu0 %v7409
    %7544 = vmatpush1.msra.mxu0 %v7408
    %7545 = vmatprep.subr.mxu0 %v7411
    %7546 = vmatpush1.msra.mxu0 %v7410
    %7547 = vmatprep.subr.mxu0 %v7413
    %7548 = vmatpush1.msra.mxu0 %v7412
    %7549 = vmatprep.subr.mxu0 %v7415
    %7550 = vmatpush1.msra.mxu0 %v7414
    %7551 = vmatprep.subr.mxu0 %v7417
    %7552 = vmatpush1.msra.mxu0 %v7416
    %7553 = vmatprep.subr.mxu0 %v7419
    %7554 = vmatpush1.msra.mxu0 %v7418
    %7555 = vmatprep.subr.mxu0 %v7421
    %7556 = vmatpush1.msra.mxu0 %v7420
    %7557 = vmatprep.subr.mxu0 %v7423
    %7558 = vmatpush1.msra.mxu0 %v7422
    %7559 = vmatprep.subr.mxu0 %v7425
    %7560 = vmatpush1.msra.mxu0 %v7424
    %7561 = vmatprep.subr.mxu0 %v7427
    %7562 = vmatpush1.msra.mxu0 %v7426
    %7563 = vmatprep.subr.mxu0 %v7429
    %7564 = vmatpush1.msra.mxu0 %v7428
    %7565 = vmatprep.subr.mxu0 %v7431
    %7566 = vmatpush1.msra.mxu0 %v7430
    %7567 = vmatprep.subr.mxu0 %v7433
    %7568 = vmatpush1.msra.mxu0 %v7432
    %7569 = vmatprep.subr.mxu0 %v7435
    %7570 = vmatpush1.msra.mxu0 %v7434
    %7571 = vmatprep.mubr.f32.mxu0 %v6598
    %7572 = vmatmul.mubr.f32.gmra.mrb[0].mxu0 %v6596
    %v7573 = vpop.f32.mrb[0].mxu0
    %v7574 = vadd.f32 %v7503, %v7573
    %v7575 = vpop.f32.mrb[0].mxu0
    %v7576 = vadd.f32 %v7505, %v7575
    %7577 = vdwg.mxu0
    %v7579 = vsel %vm7144, %v7306, 0
    %v7582 = vsel %vm6347, %v7574, 0
    %v7585 = vsel %vm6347, %v7576, 0
    %7587 = vmatprep.subr.mxu0 %v7585
    %7588 = vmatpush1.msra.mxu0 %v7582
    %7589 = vmatprep.subr.mxu0 0.0
    %7590 = vmatpush1.msra.mxu0 0.0
    %7591 = vmatprep.subr.mxu0 0.0
    %7592 = vmatpush1.msra.mxu0 0.0
    %7593 = vmatprep.subr.mxu0 0.0
    %7594 = vmatpush1.msra.mxu0 0.0
    %7595 = vmatprep.subr.mxu0 0.0
    %7596 = vmatpush1.msra.mxu0 0.0
    %7597 = vmatprep.subr.mxu0 0.0
    %7598 = vmatpush1.msra.mxu0 0.0
    %7599 = vmatprep.subr.mxu0 0.0
    %7600 = vmatpush1.msra.mxu0 0.0
    %7601 = vmatprep.subr.mxu0 0.0
    %7602 = vmatpush1.msra.mxu0 0.0
    %7603 = vmatprep.subr.mxu0 0.0
    %7604 = vmatpush1.msra.mxu0 0.0
    %7605 = vmatprep.subr.mxu0 0.0
    %7606 = vmatpush1.msra.mxu0 0.0
    %7607 = vmatprep.subr.mxu0 0.0
    %7608 = vmatpush1.msra.mxu0 0.0
    %7609 = vmatprep.subr.mxu0 0.0
    %7610 = vmatpush1.msra.mxu0 0.0
    %7611 = vmatprep.subr.mxu0 0.0
    %7612 = vmatpush1.msra.mxu0 0.0
    %7613 = vmatprep.subr.mxu0 0.0
    %7614 = vmatpush1.msra.mxu0 0.0
    %7615 = vmatprep.subr.mxu0 0.0
    %7616 = vmatpush1.msra.mxu0 0.0
    %7617 = vmatprep.subr.mxu0 0.0
    %7618 = vmatpush1.msra.mxu0 0.0
    %7619 = vmatprep.subr.mxu0 0.0
    %7620 = vmatpush1.msra.mxu0 0.0
    %7621 = vmatprep.subr.mxu0 0.0
    %7622 = vmatpush1.msra.mxu0 0.0
    %7623 = vmatprep.subr.mxu0 0.0
    %7624 = vmatpush1.msra.mxu0 0.0
    %7625 = vmatprep.subr.mxu0 0.0
    %7626 = vmatpush1.msra.mxu0 0.0
    %7627 = vmatprep.subr.mxu0 0.0
    %7628 = vmatpush1.msra.mxu0 0.0
    %7629 = vmatprep.subr.mxu0 0.0
    %7630 = vmatpush1.msra.mxu0 0.0
    %7631 = vmatprep.subr.mxu0 0.0
    %7632 = vmatpush1.msra.mxu0 0.0
    %7633 = vmatprep.subr.mxu0 0.0
    %7634 = vmatpush1.msra.mxu0 0.0
    %7635 = vmatprep.subr.mxu0 0.0
    %7636 = vmatpush1.msra.mxu0 0.0
    %7637 = vmatprep.subr.mxu0 0.0
    %7638 = vmatpush1.msra.mxu0 0.0
    %7639 = vmatprep.subr.mxu0 0.0
    %7640 = vmatpush1.msra.mxu0 0.0
    %7641 = vmatprep.subr.mxu0 0.0
    %7642 = vmatpush1.msra.mxu0 0.0
    %7643 = vmatprep.subr.mxu0 0.0
    %7644 = vmatpush1.msra.mxu0 0.0
    %7645 = vmatprep.subr.mxu0 0.0
    %7646 = vmatpush1.msra.mxu0 0.0
    %7647 = vmatprep.subr.mxu0 0.0
    %7648 = vmatpush1.msra.mxu0 0.0
    %7649 = vmatprep.subr.mxu0 0.0
    %7650 = vmatpush1.msra.mxu0 0.0
    %7651 = vmatprep.mubr.f32.mxu0 0.0
    %7652 = vmatmul.mubr.f32.gmra.mrb[0].mxu0 %v7579
    %v7653 = vpop.f32.mrb[0].mxu0
    %v7654 = vadd.f32 0.0, %v7653
    %v7655 = vpop.f32.mrb[0].mxu0
    %v7656 = vadd.f32 0.0, %v7655
    %7657 = vdwg.mxu0
    %v7658 = vadd.f32 %v7301, %v7654
    %v7659 = vadd.f32 %v7303, %v7656
    %v7660 = vld [vmem:[%s37] sm:$0x3]
    %v7662 = vlaneseq
    %v7663 = vshrl.u32 %v7662, 7
    %v7664 = vsub.s32 0, %v7663
    %v7665 = vrot.slane %v7660, %v7664
    %v7666 = vlaneseq
    %v7667 = vshrl.u32 %v7666, 7
    %v7668 = vsub.s32 1, %v7667
    %v7669 = vrot.slane %v7660, %v7668
    %v7672 = vadd.f32 %v7658, %v7665
    %v7673 = vadd.f32 %v7659, %v7669
    %v7674 = vmax.f32 %v7672, 0.0
    %v7675 = vmax.f32 %v7673, 0.0
    %v7676 = vld [vmem:[%s39] sm:$0xff]
    %v7677 = vld [vmem:[%s39 + $0x8] sm:$0x3f]
    %v7678 = vld [vmem:[#allocation8] sm:$0xff]
    %v7679 = vld [vmem:[#allocation8 + $0x8] sm:$0xff]
    %v7680 = vld [vmem:[#allocation8 + $0x10] sm:$0xff]
    %v7681 = vld [vmem:[#allocation8 + $0x18] sm:$0xff]
    %v7682 = vld [vmem:[#allocation8 + $0x20] sm:$0xff]
    %v7683 = vld [vmem:[#allocation8 + $0x28] sm:$0xff]
    %v7684 = vld [vmem:[#allocation8 + $0x30] sm:$0xff]
    %v7685 = vld [vmem:[#allocation8 + $0x38] sm:$0xff]
    %v7686 = vld [vmem:[#allocation8 + $0x40] sm:$0xff]
    %v7687 = vld [vmem:[#allocation8 + $0x48] sm:$0xff]
    %v7688 = vld [vmem:[#allocation8 + $0x50] sm:$0xff]
    %v7689 = vld [vmem:[#allocation8 + $0x58] sm:$0xff]
    %v7690 = vld [vmem:[#allocation8 + $0x60] sm:$0xff]
    %v7691 = vld [vmem:[#allocation8 + $0x68] sm:$0xff]
    %v7692 = vld [vmem:[#allocation8 + $0x70] sm:$0xff]
    %v7693 = vld [vmem:[#allocation8 + $0x78] sm:$0xff]
    %v7694 = vld [vmem:[#allocation8 + $0x80] sm:$0xff]
    %v7695 = vld [vmem:[#allocation8 + $0x88] sm:$0xff]
    %v7696 = vld [vmem:[#allocation8 + $0x90] sm:$0xff]
    %v7697 = vld [vmem:[#allocation8 + $0x98] sm:$0xff]
    %v7698 = vld [vmem:[#allocation8 + $0xa0] sm:$0xff]
    %v7699 = vld [vmem:[#allocation8 + $0xa8] sm:$0xff]
    %v7700 = vld [vmem:[#allocation8 + $0xb0] sm:$0xff]
    %v7701 = vld [vmem:[#allocation8 + $0xb8] sm:$0xff]
    %v7702 = vld [vmem:[#allocation8 + $0xc0] sm:$0xff]
    %v7703 = vld [vmem:[#allocation8 + $0xc8] sm:$0xff]
    %v7704 = vld [vmem:[#allocation8 + $0xd0] sm:$0xff]
    %v7705 = vld [vmem:[#allocation8 + $0xd8] sm:$0xff]
    %v7706 = vld [vmem:[#allocation8 + $0xe0] sm:$0xff]
    %v7707 = vld [vmem:[#allocation8 + $0xe8] sm:$0xff]
    %v7708 = vld [vmem:[#allocation8 + $0xf0] sm:$0xff]
    %v7709 = vld [vmem:[#allocation8 + $0xf8] sm:$0xff]
    %v7710 = vld [vmem:[#allocation8 + $0x100] sm:$0xff]
    %v7711 = vld [vmem:[#allocation8 + $0x108] sm:$0xff]
    %v7712 = vld [vmem:[#allocation8 + $0x110] sm:$0xff]
    %v7713 = vld [vmem:[#allocation8 + $0x118] sm:$0xff]
    %v7714 = vld [vmem:[#allocation8 + $0x120] sm:$0xff]
    %v7715 = vld [vmem:[#allocation8 + $0x128] sm:$0xff]
    %v7716 = vld [vmem:[#allocation8 + $0x130] sm:$0xff]
    %v7717 = vld [vmem:[#allocation8 + $0x138] sm:$0xff]
    %v7718 = vld [vmem:[#allocation8 + $0x140] sm:$0xff]
    %v7719 = vld [vmem:[#allocation8 + $0x148] sm:$0xff]
    %v7720 = vld [vmem:[#allocation8 + $0x150] sm:$0xff]
    %v7721 = vld [vmem:[#allocation8 + $0x158] sm:$0xff]
    %v7722 = vld [vmem:[#allocation8 + $0x160] sm:$0xff]
    %v7723 = vld [vmem:[#allocation8 + $0x168] sm:$0xff]
    %v7724 = vld [vmem:[#allocation8 + $0x170] sm:$0xff]
    %v7725 = vld [vmem:[#allocation8 + $0x178] sm:$0xff]
    %v7727 = vsel %vm207, %v7675, 0
    %7729 = vmatprep.subr.mxu0 %v7679
    %7730 = vmatpush1.msra.mxu0 %v7678
    %7731 = vmatprep.subr.mxu0 %v7681
    %7732 = vmatpush1.msra.mxu0 %v7680
    %7733 = vmatprep.subr.mxu0 %v7683
    %7734 = vmatpush1.msra.mxu0 %v7682
    %7735 = vmatprep.subr.mxu0 %v7685
    %7736 = vmatpush1.msra.mxu0 %v7684
    %7737 = vmatprep.subr.mxu0 %v7687
    %7738 = vmatpush1.msra.mxu0 %v7686
    %7739 = vmatprep.subr.mxu0 %v7689
    %7740 = vmatpush1.msra.mxu0 %v7688
    %7741 = vmatprep.subr.mxu0 %v7691
    %7742 = vmatpush1.msra.mxu0 %v7690
    %7743 = vmatprep.subr.mxu0 %v7693
    %7744 = vmatpush1.msra.mxu0 %v7692
    %7745 = vmatprep.subr.mxu0 %v7695
    %7746 = vmatpush1.msra.mxu0 %v7694
    %7747 = vmatprep.subr.mxu0 %v7697
    %7748 = vmatpush1.msra.mxu0 %v7696
    %7749 = vmatprep.subr.mxu0 %v7699
    %7750 = vmatpush1.msra.mxu0 %v7698
    %7751 = vmatprep.subr.mxu0 %v7701
    %7752 = vmatpush1.msra.mxu0 %v7700
    %7753 = vmatprep.subr.mxu0 %v7703
    %7754 = vmatpush1.msra.mxu0 %v7702
    %7755 = vmatprep.subr.mxu0 %v7705
    %7756 = vmatpush1.msra.mxu0 %v7704
    %7757 = vmatprep.subr.mxu0 %v7707
    %7758 = vmatpush1.msra.mxu0 %v7706
    %7759 = vmatprep.subr.mxu0 %v7709
    %7760 = vmatpush1.msra.mxu0 %v7708
    %7761 = vmatprep.subr.mxu0 %v7711
    %7762 = vmatpush1.msra.mxu0 %v7710
    %7763 = vmatprep.subr.mxu0 %v7713
    %7764 = vmatpush1.msra.mxu0 %v7712
    %7765 = vmatprep.subr.mxu0 %v7715
    %7766 = vmatpush1.msra.mxu0 %v7714
    %7767 = vmatprep.subr.mxu0 %v7717
    %7768 = vmatpush1.msra.mxu0 %v7716
    %7769 = vmatprep.subr.mxu0 %v7719
    %7770 = vmatpush1.msra.mxu0 %v7718
    %7771 = vmatprep.subr.mxu0 %v7721
    %7772 = vmatpush1.msra.mxu0 %v7720
    %7773 = vmatprep.subr.mxu0 %v7723
    %7774 = vmatpush1.msra.mxu0 %v7722
    %7775 = vmatprep.subr.mxu0 %v7725
    %7776 = vmatpush1.msra.mxu0 %v7724
    %7777 = vmatprep.subr.mxu0 0.0
    %7778 = vmatpush1.msra.mxu0 0.0
    %7779 = vmatprep.subr.mxu0 0.0
    %7780 = vmatpush1.msra.mxu0 0.0
    %7781 = vmatprep.subr.mxu0 0.0
    %7782 = vmatpush1.msra.mxu0 0.0
    %7783 = vmatprep.subr.mxu0 0.0
    %7784 = vmatpush1.msra.mxu0 0.0
    %7785 = vmatprep.subr.mxu0 0.0
    %7786 = vmatpush1.msra.mxu0 0.0
    %7787 = vmatprep.subr.mxu0 0.0
    %7788 = vmatpush1.msra.mxu0 0.0
    %7789 = vmatprep.subr.mxu0 0.0
    %7790 = vmatpush1.msra.mxu0 0.0
    %7791 = vmatprep.subr.mxu0 0.0
    %7792 = vmatpush1.msra.mxu0 0.0
    %7793 = vmatprep.mubr.f32.mxu0 %v7727
    %7794 = vmatmul.mubr.f32.gmra.mrb[0].mxu0 %v7674
    %v7795 = vpop.f32.mrb[0].mxu0
    %v7796 = vadd.f32 0.0, %v7795
    %v7797 = vpop.f32.mrb[0].mxu0
    %v7798 = vadd.f32 0.0, %v7797
    %7799 = vdwg.mxu0
    %s7800 = scalar_lea.vmem %s39, 16
    %v7801 = vld [vmem:[%s7800] sm:$0xff]
    %v7802 = vld [vmem:[%s7800 + $0x8] sm:$0x3f]
    %s7803 = scalar_lea.vmem [#allocation8], 384
    %v7804 = vld [vmem:[%s7803] sm:$0xff]
    %v7805 = vld [vmem:[%s7803 + $0x8] sm:$0xff]
    %v7806 = vld [vmem:[%s7803 + $0x10] sm:$0xff]
    %v7807 = vld [vmem:[%s7803 + $0x18] sm:$0xff]
    %v7808 = vld [vmem:[%s7803 + $0x20] sm:$0xff]
    %v7809 = vld [vmem:[%s7803 + $0x28] sm:$0xff]
    %v7810 = vld [vmem:[%s7803 + $0x30] sm:$0xff]
    %v7811 = vld [vmem:[%s7803 + $0x38] sm:$0xff]
    %v7812 = vld [vmem:[%s7803 + $0x40] sm:$0xff]
    %v7813 = vld [vmem:[%s7803 + $0x48] sm:$0xff]
    %v7814 = vld [vmem:[%s7803 + $0x50] sm:$0xff]
    %v7815 = vld [vmem:[%s7803 + $0x58] sm:$0xff]
    %v7816 = vld [vmem:[%s7803 + $0x60] sm:$0xff]
    %v7817 = vld [vmem:[%s7803 + $0x68] sm:$0xff]
    %v7818 = vld [vmem:[%s7803 + $0x70] sm:$0xff]
    %v7819 = vld [vmem:[%s7803 + $0x78] sm:$0xff]
    %v7820 = vld [vmem:[%s7803 + $0x80] sm:$0xff]
    %v7821 = vld [vmem:[%s7803 + $0x88] sm:$0xff]
    %v7822 = vld [vmem:[%s7803 + $0x90] sm:$0xff]
    %v7823 = vld [vmem:[%s7803 + $0x98] sm:$0xff]
    %v7824 = vld [vmem:[%s7803 + $0xa0] sm:$0xff]
    %v7825 = vld [vmem:[%s7803 + $0xa8] sm:$0xff]
    %v7826 = vld [vmem:[%s7803 + $0xb0] sm:$0xff]
    %v7827 = vld [vmem:[%s7803 + $0xb8] sm:$0xff]
    %v7828 = vld [vmem:[%s7803 + $0xc0] sm:$0xff]
    %v7829 = vld [vmem:[%s7803 + $0xc8] sm:$0xff]
    %v7830 = vld [vmem:[%s7803 + $0xd0] sm:$0xff]
    %v7831 = vld [vmem:[%s7803 + $0xd8] sm:$0xff]
    %v7832 = vld [vmem:[%s7803 + $0xe0] sm:$0xff]
    %v7833 = vld [vmem:[%s7803 + $0xe8] sm:$0xff]
    %v7834 = vld [vmem:[%s7803 + $0xf0] sm:$0xff]
    %v7835 = vld [vmem:[%s7803 + $0xf8] sm:$0xff]
    %v7836 = vld [vmem:[%s7803 + $0x100] sm:$0xff]
    %v7837 = vld [vmem:[%s7803 + $0x108] sm:$0xff]
    %v7838 = vld [vmem:[%s7803 + $0x110] sm:$0xff]
    %v7839 = vld [vmem:[%s7803 + $0x118] sm:$0xff]
    %v7840 = vld [vmem:[%s7803 + $0x120] sm:$0xff]
    %v7841 = vld [vmem:[%s7803 + $0x128] sm:$0xff]
    %v7842 = vld [vmem:[%s7803 + $0x130] sm:$0xff]
    %v7843 = vld [vmem:[%s7803 + $0x138] sm:$0xff]
    %v7844 = vld [vmem:[%s7803 + $0x140] sm:$0xff]
    %v7845 = vld [vmem:[%s7803 + $0x148] sm:$0xff]
    %v7846 = vld [vmem:[%s7803 + $0x150] sm:$0xff]
    %v7847 = vld [vmem:[%s7803 + $0x158] sm:$0xff]
    %v7848 = vld [vmem:[%s7803 + $0x160] sm:$0xff]
    %v7849 = vld [vmem:[%s7803 + $0x168] sm:$0xff]
    %v7850 = vld [vmem:[%s7803 + $0x170] sm:$0xff]
    %v7851 = vld [vmem:[%s7803 + $0x178] sm:$0xff]
    %7852 = vmatprep.subr.mxu0 %v7805
    %7853 = vmatpush1.msra.mxu0 %v7804
    %7854 = vmatprep.subr.mxu0 %v7807
    %7855 = vmatpush1.msra.mxu0 %v7806
    %7856 = vmatprep.subr.mxu0 %v7809
    %7857 = vmatpush1.msra.mxu0 %v7808
    %7858 = vmatprep.subr.mxu0 %v7811
    %7859 = vmatpush1.msra.mxu0 %v7810
    %7860 = vmatprep.subr.mxu0 %v7813
    %7861 = vmatpush1.msra.mxu0 %v7812
    %7862 = vmatprep.subr.mxu0 %v7815
    %7863 = vmatpush1.msra.mxu0 %v7814
    %7864 = vmatprep.subr.mxu0 %v7817
    %7865 = vmatpush1.msra.mxu0 %v7816
    %7866 = vmatprep.subr.mxu0 %v7819
    %7867 = vmatpush1.msra.mxu0 %v7818
    %7868 = vmatprep.subr.mxu0 %v7821
    %7869 = vmatpush1.msra.mxu0 %v7820
    %7870 = vmatprep.subr.mxu0 %v7823
    %7871 = vmatpush1.msra.mxu0 %v7822
    %7872 = vmatprep.subr.mxu0 %v7825
    %7873 = vmatpush1.msra.mxu0 %v7824
    %7874 = vmatprep.subr.mxu0 %v7827
    %7875 = vmatpush1.msra.mxu0 %v7826
    %7876 = vmatprep.subr.mxu0 %v7829
    %7877 = vmatpush1.msra.mxu0 %v7828
    %7878 = vmatprep.subr.mxu0 %v7831
    %7879 = vmatpush1.msra.mxu0 %v7830
    %7880 = vmatprep.subr.mxu0 %v7833
    %7881 = vmatpush1.msra.mxu0 %v7832
    %7882 = vmatprep.subr.mxu0 %v7835
    %7883 = vmatpush1.msra.mxu0 %v7834
    %7884 = vmatprep.subr.mxu0 %v7837
    %7885 = vmatpush1.msra.mxu0 %v7836
    %7886 = vmatprep.subr.mxu0 %v7839
    %7887 = vmatpush1.msra.mxu0 %v7838
    %7888 = vmatprep.subr.mxu0 %v7841
    %7889 = vmatpush1.msra.mxu0 %v7840
    %7890 = vmatprep.subr.mxu0 %v7843
    %7891 = vmatpush1.msra.mxu0 %v7842
    %7892 = vmatprep.subr.mxu0 %v7845
    %7893 = vmatpush1.msra.mxu0 %v7844
    %7894 = vmatprep.subr.mxu0 %v7847
    %7895 = vmatpush1.msra.mxu0 %v7846
    %7896 = vmatprep.subr.mxu0 %v7849
    %7897 = vmatpush1.msra.mxu0 %v7848
    %7898 = vmatprep.subr.mxu0 %v7851
    %7899 = vmatpush1.msra.mxu0 %v7850
    %7900 = vmatprep.subr.mxu0 0.0
    %7901 = vmatpush1.msra.mxu0 0.0
    %7902 = vmatprep.subr.mxu0 0.0
    %7903 = vmatpush1.msra.mxu0 0.0
    %7904 = vmatprep.subr.mxu0 0.0
    %7905 = vmatpush1.msra.mxu0 0.0
    %7906 = vmatprep.subr.mxu0 0.0
    %7907 = vmatpush1.msra.mxu0 0.0
    %7908 = vmatprep.subr.mxu0 0.0
    %7909 = vmatpush1.msra.mxu0 0.0
    %7910 = vmatprep.subr.mxu0 0.0
    %7911 = vmatpush1.msra.mxu0 0.0
    %7912 = vmatprep.subr.mxu0 0.0
    %7913 = vmatpush1.msra.mxu0 0.0
    %7914 = vmatprep.subr.mxu0 0.0
    %7915 = vmatpush1.msra.mxu0 0.0
    %7916 = vmatprep.mubr.f32.mxu0 %v7727
    %7917 = vmatmul.mubr.f32.gmra.mrb[0].mxu0 %v7674
    %v7918 = vpop.f32.mrb[0].mxu0
    %v7919 = vadd.f32 0.0, %v7918
    %v7920 = vpop.f32.mrb[0].mxu0
    %v7921 = vadd.f32 0.0, %v7920
    %7922 = vdwg.mxu0
    %vm7923 = vcmask 48128
    %v7925 = vsel %vm7923, %v7801, 0
    %v7928 = vsel %vm7923, %v7802, 0
    %v7931 = vsel %vm1662, %v7919, 0
    %v7934 = vsel %vm1662, %v7921, 0
    %7936 = vmatprep.subr.mxu0 %v7934
    %7937 = vmatpush1.msra.mxu0 %v7931
    %7938 = vmatprep.subr.mxu0 0.0
    %7939 = vmatpush1.msra.mxu0 0.0
    %7940 = vmatprep.subr.mxu0 0.0
    %7941 = vmatpush1.msra.mxu0 0.0
    %7942 = vmatprep.subr.mxu0 0.0
    %7943 = vmatpush1.msra.mxu0 0.0
    %7944 = vmatprep.subr.mxu0 0.0
    %7945 = vmatpush1.msra.mxu0 0.0
    %7946 = vmatprep.subr.mxu0 0.0
    %7947 = vmatpush1.msra.mxu0 0.0
    %7948 = vmatprep.subr.mxu0 0.0
    %7949 = vmatpush1.msra.mxu0 0.0
    %7950 = vmatprep.subr.mxu0 0.0
    %7951 = vmatpush1.msra.mxu0 0.0
    %7952 = vmatprep.subr.mxu0 0.0
    %7953 = vmatpush1.msra.mxu0 0.0
    %7954 = vmatprep.subr.mxu0 0.0
    %7955 = vmatpush1.msra.mxu0 0.0
    %7956 = vmatprep.subr.mxu0 0.0
    %7957 = vmatpush1.msra.mxu0 0.0
    %7958 = vmatprep.subr.mxu0 0.0
    %7959 = vmatpush1.msra.mxu0 0.0
    %7960 = vmatprep.subr.mxu0 0.0
    %7961 = vmatpush1.msra.mxu0 0.0
    %7962 = vmatprep.subr.mxu0 0.0
    %7963 = vmatpush1.msra.mxu0 0.0
    %7964 = vmatprep.subr.mxu0 0.0
    %7965 = vmatpush1.msra.mxu0 0.0
    %7966 = vmatprep.subr.mxu0 0.0
    %7967 = vmatpush1.msra.mxu0 0.0
    %7968 = vmatprep.subr.mxu0 0.0
    %7969 = vmatpush1.msra.mxu0 0.0
    %7970 = vmatprep.subr.mxu0 0.0
    %7971 = vmatpush1.msra.mxu0 0.0
    %7972 = vmatprep.subr.mxu0 0.0
    %7973 = vmatpush1.msra.mxu0 0.0
    %7974 = vmatprep.subr.mxu0 0.0
    %7975 = vmatpush1.msra.mxu0 0.0
    %7976 = vmatprep.subr.mxu0 0.0
    %7977 = vmatpush1.msra.mxu0 0.0
    %7978 = vmatprep.subr.mxu0 0.0
    %7979 = vmatpush1.msra.mxu0 0.0
    %7980 = vmatprep.subr.mxu0 0.0
    %7981 = vmatpush1.msra.mxu0 0.0
    %7982 = vmatprep.subr.mxu0 0.0
    %7983 = vmatpush1.msra.mxu0 0.0
    %7984 = vmatprep.subr.mxu0 0.0
    %7985 = vmatpush1.msra.mxu0 0.0
    %7986 = vmatprep.subr.mxu0 0.0
    %7987 = vmatpush1.msra.mxu0 0.0
    %7988 = vmatprep.subr.mxu0 0.0
    %7989 = vmatpush1.msra.mxu0 0.0
    %7990 = vmatprep.subr.mxu0 0.0
    %7991 = vmatpush1.msra.mxu0 0.0
    %7992 = vmatprep.subr.mxu0 0.0
    %7993 = vmatpush1.msra.mxu0 0.0
    %7994 = vmatprep.subr.mxu0 0.0
    %7995 = vmatpush1.msra.mxu0 0.0
    %7996 = vmatprep.subr.mxu0 0.0
    %7997 = vmatpush1.msra.mxu0 0.0
    %7998 = vmatprep.subr.mxu0 0.0
    %7999 = vmatpush1.msra.mxu0 0.0
    %8000 = vmatprep.mubr.f32.mxu0 0.0
    %8001 = vmatmul.mubr.f32.gmra.mrb[0].mxu0 %v7925
    %v8002 = vpop.f32.mrb[0].mxu0
    %v8003 = vadd.f32 0.0, %v8002
    %v8004 = vpop.f32.mrb[0].mxu0
    %v8005 = vadd.f32 0.0, %v8004
    %8006 = vmatprep.mubr.f32.mxu0 0.0
    %8007 = vmatmul.mubr.f32.gmra.mrb[0].mxu0 %v7928
    %v8008 = vpop.f32.mrb[0].mxu0
    %v8009 = vadd.f32 0.0, %v8008
    %v8010 = vpop.f32.mrb[0].mxu0
    %v8011 = vadd.f32 0.0, %v8010
    %8012 = vdwg.mxu0
    %v8014 = vsel %vm7923, %v7676, 0
    %v8017 = vsel %vm7923, %v7677, 0
    %v8020 = vsel %vm1662, %v7796, 0
    %v8023 = vsel %vm1662, %v7798, 0
    %8025 = vmatprep.subr.mxu0 %v8023
    %8026 = vmatpush1.msra.mxu0 %v8020
    %8027 = vmatprep.subr.mxu0 0.0
    %8028 = vmatpush1.msra.mxu0 0.0
    %8029 = vmatprep.subr.mxu0 0.0
    %8030 = vmatpush1.msra.mxu0 0.0
    %8031 = vmatprep.subr.mxu0 0.0
    %8032 = vmatpush1.msra.mxu0 0.0
    %8033 = vmatprep.subr.mxu0 0.0
    %8034 = vmatpush1.msra.mxu0 0.0
    %8035 = vmatprep.subr.mxu0 0.0
    %8036 = vmatpush1.msra.mxu0 0.0
    %8037 = vmatprep.subr.mxu0 0.0
    %8038 = vmatpush1.msra.mxu0 0.0
    %8039 = vmatprep.subr.mxu0 0.0
    %8040 = vmatpush1.msra.mxu0 0.0
    %8041 = vmatprep.subr.mxu0 0.0
    %8042 = vmatpush1.msra.mxu0 0.0
    %8043 = vmatprep.subr.mxu0 0.0
    %8044 = vmatpush1.msra.mxu0 0.0
    %8045 = vmatprep.subr.mxu0 0.0
    %8046 = vmatpush1.msra.mxu0 0.0
    %8047 = vmatprep.subr.mxu0 0.0
    %8048 = vmatpush1.msra.mxu0 0.0
    %8049 = vmatprep.subr.mxu0 0.0
    %8050 = vmatpush1.msra.mxu0 0.0
    %8051 = vmatprep.subr.mxu0 0.0
    %8052 = vmatpush1.msra.mxu0 0.0
    %8053 = vmatprep.subr.mxu0 0.0
    %8054 = vmatpush1.msra.mxu0 0.0
    %8055 = vmatprep.subr.mxu0 0.0
    %8056 = vmatpush1.msra.mxu0 0.0
    %8057 = vmatprep.subr.mxu0 0.0
    %8058 = vmatpush1.msra.mxu0 0.0
    %8059 = vmatprep.subr.mxu0 0.0
    %8060 = vmatpush1.msra.mxu0 0.0
    %8061 = vmatprep.subr.mxu0 0.0
    %8062 = vmatpush1.msra.mxu0 0.0
    %8063 = vmatprep.subr.mxu0 0.0
    %8064 = vmatpush1.msra.mxu0 0.0
    %8065 = vmatprep.subr.mxu0 0.0
    %8066 = vmatpush1.msra.mxu0 0.0
    %8067 = vmatprep.subr.mxu0 0.0
    %8068 = vmatpush1.msra.mxu0 0.0
    %8069 = vmatprep.subr.mxu0 0.0
    %8070 = vmatpush1.msra.mxu0 0.0
    %8071 = vmatprep.subr.mxu0 0.0
    %8072 = vmatpush1.msra.mxu0 0.0
    %8073 = vmatprep.subr.mxu0 0.0
    %8074 = vmatpush1.msra.mxu0 0.0
    %8075 = vmatprep.subr.mxu0 0.0
    %8076 = vmatpush1.msra.mxu0 0.0
    %8077 = vmatprep.subr.mxu0 0.0
    %8078 = vmatpush1.msra.mxu0 0.0
    %8079 = vmatprep.subr.mxu0 0.0
    %8080 = vmatpush1.msra.mxu0 0.0
    %8081 = vmatprep.subr.mxu0 0.0
    %8082 = vmatpush1.msra.mxu0 0.0
    %8083 = vmatprep.subr.mxu0 0.0
    %8084 = vmatpush1.msra.mxu0 0.0
    %8085 = vmatprep.subr.mxu0 0.0
    %8086 = vmatpush1.msra.mxu0 0.0
    %8087 = vmatprep.subr.mxu0 0.0
    %8088 = vmatpush1.msra.mxu0 0.0
    %8089 = vmatprep.mubr.f32.mxu0 0.0
    %8090 = vmatmul.mubr.f32.gmra.mrb[0].mxu0 %v8014
    %v8091 = vpop.f32.mrb[0].mxu0
    %v8092 = vadd.f32 %v8003, %v8091
    %v8093 = vpop.f32.mrb[0].mxu0
    %v8094 = vadd.f32 %v8005, %v8093
    %8095 = vmatprep.mubr.f32.mxu0 0.0
    %8096 = vmatmul.mubr.f32.gmra.mrb[0].mxu0 %v8017
    %v8097 = vpop.f32.mrb[0].mxu0
    %v8098 = vadd.f32 %v8009, %v8097
    %v8099 = vpop.f32.mrb[0].mxu0
    %v8100 = vadd.f32 %v8011, %v8099
    %8101 = vdwg.mxu0
    %s8102 = scalar_lea.vmem %s39, 32
    %v8103 = vld [vmem:[%s8102] sm:$0xff]
    %v8104 = vld [vmem:[%s8102 + $0x8] sm:$0x3f]
    %s8105 = scalar_lea.vmem [#allocation8], 768
    %v8106 = vld [vmem:[%s8105] sm:$0xff]
    %v8107 = vld [vmem:[%s8105 + $0x8] sm:$0xff]
    %v8108 = vld [vmem:[%s8105 + $0x10] sm:$0xff]
    %v8109 = vld [vmem:[%s8105 + $0x18] sm:$0xff]
    %v8110 = vld [vmem:[%s8105 + $0x20] sm:$0xff]
    %v8111 = vld [vmem:[%s8105 + $0x28] sm:$0xff]
    %v8112 = vld [vmem:[%s8105 + $0x30] sm:$0xff]
    %v8113 = vld [vmem:[%s8105 + $0x38] sm:$0xff]
    %v8114 = vld [vmem:[%s8105 + $0x40] sm:$0xff]
    %v8115 = vld [vmem:[%s8105 + $0x48] sm:$0xff]
    %v8116 = vld [vmem:[%s8105 + $0x50] sm:$0xff]
    %v8117 = vld [vmem:[%s8105 + $0x58] sm:$0xff]
    %v8118 = vld [vmem:[%s8105 + $0x60] sm:$0xff]
    %v8119 = vld [vmem:[%s8105 + $0x68] sm:$0xff]
    %v8120 = vld [vmem:[%s8105 + $0x70] sm:$0xff]
    %v8121 = vld [vmem:[%s8105 + $0x78] sm:$0xff]
    %v8122 = vld [vmem:[%s8105 + $0x80] sm:$0xff]
    %v8123 = vld [vmem:[%s8105 + $0x88] sm:$0xff]
    %v8124 = vld [vmem:[%s8105 + $0x90] sm:$0xff]
    %v8125 = vld [vmem:[%s8105 + $0x98] sm:$0xff]
    %v8126 = vld [vmem:[%s8105 + $0xa0] sm:$0xff]
    %v8127 = vld [vmem:[%s8105 + $0xa8] sm:$0xff]
    %v8128 = vld [vmem:[%s8105 + $0xb0] sm:$0xff]
    %v8129 = vld [vmem:[%s8105 + $0xb8] sm:$0xff]
    %v8130 = vld [vmem:[%s8105 + $0xc0] sm:$0xff]
    %v8131 = vld [vmem:[%s8105 + $0xc8] sm:$0xff]
    %v8132 = vld [vmem:[%s8105 + $0xd0] sm:$0xff]
    %v8133 = vld [vmem:[%s8105 + $0xd8] sm:$0xff]
    %v8134 = vld [vmem:[%s8105 + $0xe0] sm:$0xff]
    %v8135 = vld [vmem:[%s8105 + $0xe8] sm:$0xff]
    %v8136 = vld [vmem:[%s8105 + $0xf0] sm:$0xff]
    %v8137 = vld [vmem:[%s8105 + $0xf8] sm:$0xff]
    %v8138 = vld [vmem:[%s8105 + $0x100] sm:$0xff]
    %v8139 = vld [vmem:[%s8105 + $0x108] sm:$0xff]
    %v8140 = vld [vmem:[%s8105 + $0x110] sm:$0xff]
    %v8141 = vld [vmem:[%s8105 + $0x118] sm:$0xff]
    %v8142 = vld [vmem:[%s8105 + $0x120] sm:$0xff]
    %v8143 = vld [vmem:[%s8105 + $0x128] sm:$0xff]
    %v8144 = vld [vmem:[%s8105 + $0x130] sm:$0xff]
    %v8145 = vld [vmem:[%s8105 + $0x138] sm:$0xff]
    %v8146 = vld [vmem:[%s8105 + $0x140] sm:$0xff]
    %v8147 = vld [vmem:[%s8105 + $0x148] sm:$0xff]
    %v8148 = vld [vmem:[%s8105 + $0x150] sm:$0xff]
    %v8149 = vld [vmem:[%s8105 + $0x158] sm:$0xff]
    %v8150 = vld [vmem:[%s8105 + $0x160] sm:$0xff]
    %v8151 = vld [vmem:[%s8105 + $0x168] sm:$0xff]
    %v8152 = vld [vmem:[%s8105 + $0x170] sm:$0xff]
    %v8153 = vld [vmem:[%s8105 + $0x178] sm:$0xff]
    %8154 = vmatprep.subr.mxu0 %v8107
    %8155 = vmatpush1.msra.mxu0 %v8106
    %8156 = vmatprep.subr.mxu0 %v8109
    %8157 = vmatpush1.msra.mxu0 %v8108
    %8158 = vmatprep.subr.mxu0 %v8111
    %8159 = vmatpush1.msra.mxu0 %v8110
    %8160 = vmatprep.subr.mxu0 %v8113
    %8161 = vmatpush1.msra.mxu0 %v8112
    %8162 = vmatprep.subr.mxu0 %v8115
    %8163 = vmatpush1.msra.mxu0 %v8114
    %8164 = vmatprep.subr.mxu0 %v8117
    %8165 = vmatpush1.msra.mxu0 %v8116
    %8166 = vmatprep.subr.mxu0 %v8119
    %8167 = vmatpush1.msra.mxu0 %v8118
    %8168 = vmatprep.subr.mxu0 %v8121
    %8169 = vmatpush1.msra.mxu0 %v8120
    %8170 = vmatprep.subr.mxu0 %v8123
    %8171 = vmatpush1.msra.mxu0 %v8122
    %8172 = vmatprep.subr.mxu0 %v8125
    %8173 = vmatpush1.msra.mxu0 %v8124
    %8174 = vmatprep.subr.mxu0 %v8127
    %8175 = vmatpush1.msra.mxu0 %v8126
    %8176 = vmatprep.subr.mxu0 %v8129
    %8177 = vmatpush1.msra.mxu0 %v8128
    %8178 = vmatprep.subr.mxu0 %v8131
    %8179 = vmatpush1.msra.mxu0 %v8130
    %8180 = vmatprep.subr.mxu0 %v8133
    %8181 = vmatpush1.msra.mxu0 %v8132
    %8182 = vmatprep.subr.mxu0 %v8135
    %8183 = vmatpush1.msra.mxu0 %v8134
    %8184 = vmatprep.subr.mxu0 %v8137
    %8185 = vmatpush1.msra.mxu0 %v8136
    %8186 = vmatprep.subr.mxu0 %v8139
    %8187 = vmatpush1.msra.mxu0 %v8138
    %8188 = vmatprep.subr.mxu0 %v8141
    %8189 = vmatpush1.msra.mxu0 %v8140
    %8190 = vmatprep.subr.mxu0 %v8143
    %8191 = vmatpush1.msra.mxu0 %v8142
    %8192 = vmatprep.subr.mxu0 %v8145
    %8193 = vmatpush1.msra.mxu0 %v8144
    %8194 = vmatprep.subr.mxu0 %v8147
    %8195 = vmatpush1.msra.mxu0 %v8146
    %8196 = vmatprep.subr.mxu0 %v8149
    %8197 = vmatpush1.msra.mxu0 %v8148
    %8198 = vmatprep.subr.mxu0 %v8151
    %8199 = vmatpush1.msra.mxu0 %v8150
    %8200 = vmatprep.subr.mxu0 %v8153
    %8201 = vmatpush1.msra.mxu0 %v8152
    %8202 = vmatprep.subr.mxu0 0.0
    %8203 = vmatpush1.msra.mxu0 0.0
    %8204 = vmatprep.subr.mxu0 0.0
    %8205 = vmatpush1.msra.mxu0 0.0
    %8206 = vmatprep.subr.mxu0 0.0
    %8207 = vmatpush1.msra.mxu0 0.0
    %8208 = vmatprep.subr.mxu0 0.0
    %8209 = vmatpush1.msra.mxu0 0.0
    %8210 = vmatprep.subr.mxu0 0.0
    %8211 = vmatpush1.msra.mxu0 0.0
    %8212 = vmatprep.subr.mxu0 0.0
    %8213 = vmatpush1.msra.mxu0 0.0
    %8214 = vmatprep.subr.mxu0 0.0
    %8215 = vmatpush1.msra.mxu0 0.0
    %8216 = vmatprep.subr.mxu0 0.0
    %8217 = vmatpush1.msra.mxu0 0.0
    %8218 = vmatprep.mubr.f32.mxu0 %v7727
    %8219 = vmatmul.mubr.f32.gmra.mrb[0].mxu0 %v7674
    %v8220 = vpop.f32.mrb[0].mxu0
    %v8221 = vadd.f32 0.0, %v8220
    %v8222 = vpop.f32.mrb[0].mxu0
    %v8223 = vadd.f32 0.0, %v8222
    %8224 = vdwg.mxu0
    %v8226 = vsel %vm7923, %v8103, 0
    %v8229 = vsel %vm7923, %v8104, 0
    %v8232 = vsel %vm1662, %v8221, 0
    %v8235 = vsel %vm1662, %v8223, 0
    %8237 = vmatprep.subr.mxu0 %v8235
    %8238 = vmatpush1.msra.mxu0 %v8232
    %8239 = vmatprep.subr.mxu0 0.0
    %8240 = vmatpush1.msra.mxu0 0.0
    %8241 = vmatprep.subr.mxu0 0.0
    %8242 = vmatpush1.msra.mxu0 0.0
    %8243 = vmatprep.subr.mxu0 0.0
    %8244 = vmatpush1.msra.mxu0 0.0
    %8245 = vmatprep.subr.mxu0 0.0
    %8246 = vmatpush1.msra.mxu0 0.0
    %8247 = vmatprep.subr.mxu0 0.0
    %8248 = vmatpush1.msra.mxu0 0.0
    %8249 = vmatprep.subr.mxu0 0.0
    %8250 = vmatpush1.msra.mxu0 0.0
    %8251 = vmatprep.subr.mxu0 0.0
    %8252 = vmatpush1.msra.mxu0 0.0
    %8253 = vmatprep.subr.mxu0 0.0
    %8254 = vmatpush1.msra.mxu0 0.0
    %8255 = vmatprep.subr.mxu0 0.0
    %8256 = vmatpush1.msra.mxu0 0.0
    %8257 = vmatprep.subr.mxu0 0.0
    %8258 = vmatpush1.msra.mxu0 0.0
    %8259 = vmatprep.subr.mxu0 0.0
    %8260 = vmatpush1.msra.mxu0 0.0
    %8261 = vmatprep.subr.mxu0 0.0
    %8262 = vmatpush1.msra.mxu0 0.0
    %8263 = vmatprep.subr.mxu0 0.0
    %8264 = vmatpush1.msra.mxu0 0.0
    %8265 = vmatprep.subr.mxu0 0.0
    %8266 = vmatpush1.msra.mxu0 0.0
    %8267 = vmatprep.subr.mxu0 0.0
    %8268 = vmatpush1.msra.mxu0 0.0
    %8269 = vmatprep.subr.mxu0 0.0
    %8270 = vmatpush1.msra.mxu0 0.0
    %8271 = vmatprep.subr.mxu0 0.0
    %8272 = vmatpush1.msra.mxu0 0.0
    %8273 = vmatprep.subr.mxu0 0.0
    %8274 = vmatpush1.msra.mxu0 0.0
    %8275 = vmatprep.subr.mxu0 0.0
    %8276 = vmatpush1.msra.mxu0 0.0
    %8277 = vmatprep.subr.mxu0 0.0
    %8278 = vmatpush1.msra.mxu0 0.0
    %8279 = vmatprep.subr.mxu0 0.0
    %8280 = vmatpush1.msra.mxu0 0.0
    %8281 = vmatprep.subr.mxu0 0.0
    %8282 = vmatpush1.msra.mxu0 0.0
    %8283 = vmatprep.subr.mxu0 0.0
    %8284 = vmatpush1.msra.mxu0 0.0
    %8285 = vmatprep.subr.mxu0 0.0
    %8286 = vmatpush1.msra.mxu0 0.0
    %8287 = vmatprep.subr.mxu0 0.0
    %8288 = vmatpush1.msra.mxu0 0.0
    %8289 = vmatprep.subr.mxu0 0.0
    %8290 = vmatpush1.msra.mxu0 0.0
    %8291 = vmatprep.subr.mxu0 0.0
    %8292 = vmatpush1.msra.mxu0 0.0
    %8293 = vmatprep.subr.mxu0 0.0
    %8294 = vmatpush1.msra.mxu0 0.0
    %8295 = vmatprep.subr.mxu0 0.0
    %8296 = vmatpush1.msra.mxu0 0.0
    %8297 = vmatprep.subr.mxu0 0.0
    %8298 = vmatpush1.msra.mxu0 0.0
    %8299 = vmatprep.subr.mxu0 0.0
    %8300 = vmatpush1.msra.mxu0 0.0
    %8301 = vmatprep.mubr.f32.mxu0 0.0
    %8302 = vmatmul.mubr.f32.gmra.mrb[0].mxu0 %v8226
    %v8303 = vpop.f32.mrb[0].mxu0
    %v8304 = vadd.f32 0.0, %v8303
    %v8305 = vpop.f32.mrb[0].mxu0
    %v8306 = vadd.f32 0.0, %v8305
    %8307 = vmatprep.mubr.f32.mxu0 0.0
    %8308 = vmatmul.mubr.f32.gmra.mrb[0].mxu0 %v8229
    %v8309 = vpop.f32.mrb[0].mxu0
    %v8310 = vadd.f32 0.0, %v8309
    %v8311 = vpop.f32.mrb[0].mxu0
    %v8312 = vadd.f32 0.0, %v8311
    %8313 = vdwg.mxu0
    %v8314 = vadd.f32 %v8092, %v8304
    %v8315 = vadd.f32 %v8094, %v8306
    %v8316 = vadd.f32 %v8098, %v8310
    %v8317 = vadd.f32 %v8100, %v8312
    %v8318 = vld [vmem:[%s43] sm:$0x3]
    %v8320 = vlaneseq
    %v8321 = vshrl.u32 %v8320, 7
    %v8322 = vsub.s32 0, %v8321
    %v8323 = vrot.slane %v8318, %v8322
    %v8324 = vlaneseq
    %v8325 = vshrl.u32 %v8324, 7
    %v8326 = vsub.s32 1, %v8325
    %v8327 = vrot.slane %v8318, %v8326
    %v8330 = vadd.f32 %v8314, %v8323
    %v8331 = vadd.f32 %v8315, %v8327
    %v8332 = vadd.f32 %v8316, %v8323
    %v8333 = vadd.f32 %v8317, %v8327
    %v8334 = vmax.f32 %v8330, 0.0
    %v8335 = vmax.f32 %v8331, 0.0
    %v8336 = vmax.f32 %v8332, 0.0
    %v8337 = vmax.f32 %v8333, 0.0
    %v8338 = vld [vmem:[%s45] sm:$0xff]
    %v8339 = vld [vmem:[%s45 + $0x8] sm:$0xff]
    %v8340 = vld [vmem:[%s45 + $0x10] sm:$0xff]
    %v8341 = vld [vmem:[%s45 + $0x18] sm:$0x3f]
    %v8342 = vld [vmem:[#allocation10] sm:$0xff]
    %v8343 = vld [vmem:[#allocation10 + $0x8] sm:$0xff]
    %v8344 = vld [vmem:[#allocation10 + $0x10] sm:$0xff]
    %v8345 = vld [vmem:[#allocation10 + $0x18] sm:$0xff]
    %v8346 = vld [vmem:[#allocation10 + $0x20] sm:$0xff]
    %v8347 = vld [vmem:[#allocation10 + $0x28] sm:$0xff]
    %v8348 = vld [vmem:[#allocation10 + $0x30] sm:$0xff]
    %v8349 = vld [vmem:[#allocation10 + $0x38] sm:$0xff]
    %v8350 = vld [vmem:[#allocation10 + $0x40] sm:$0xff]
    %v8351 = vld [vmem:[#allocation10 + $0x48] sm:$0xff]
    %v8352 = vld [vmem:[#allocation10 + $0x50] sm:$0xff]
    %v8353 = vld [vmem:[#allocation10 + $0x58] sm:$0xff]
    %v8354 = vld [vmem:[#allocation10 + $0x60] sm:$0xff]
    %v8355 = vld [vmem:[#allocation10 + $0x68] sm:$0xff]
    %v8356 = vld [vmem:[#allocation10 + $0x70] sm:$0xff]
    %v8357 = vld [vmem:[#allocation10 + $0x78] sm:$0xff]
    %v8358 = vld [vmem:[#allocation10 + $0x80] sm:$0xff]
    %v8359 = vld [vmem:[#allocation10 + $0x88] sm:$0xff]
    %v8360 = vld [vmem:[#allocation10 + $0x90] sm:$0xff]
    %v8361 = vld [vmem:[#allocation10 + $0x98] sm:$0xff]
    %v8362 = vld [vmem:[#allocation10 + $0xa0] sm:$0xff]
    %v8363 = vld [vmem:[#allocation10 + $0xa8] sm:$0xff]
    %v8364 = vld [vmem:[#allocation10 + $0xb0] sm:$0xff]
    %v8365 = vld [vmem:[#allocation10 + $0xb8] sm:$0xff]
    %v8366 = vld [vmem:[#allocation10 + $0xc0] sm:$0xff]
    %v8367 = vld [vmem:[#allocation10 + $0xc8] sm:$0xff]
    %v8368 = vld [vmem:[#allocation10 + $0xd0] sm:$0xff]
    %v8369 = vld [vmem:[#allocation10 + $0xd8] sm:$0xff]
    %v8370 = vld [vmem:[#allocation10 + $0xe0] sm:$0xff]
    %v8371 = vld [vmem:[#allocation10 + $0xe8] sm:$0xff]
    %v8372 = vld [vmem:[#allocation10 + $0xf0] sm:$0xff]
    %v8373 = vld [vmem:[#allocation10 + $0xf8] sm:$0xff]
    %v8374 = vld [vmem:[#allocation10 + $0x100] sm:$0xff]
    %v8375 = vld [vmem:[#allocation10 + $0x108] sm:$0xff]
    %v8376 = vld [vmem:[#allocation10 + $0x110] sm:$0xff]
    %v8377 = vld [vmem:[#allocation10 + $0x118] sm:$0xff]
    %v8378 = vld [vmem:[#allocation10 + $0x120] sm:$0xff]
    %v8379 = vld [vmem:[#allocation10 + $0x128] sm:$0xff]
    %v8380 = vld [vmem:[#allocation10 + $0x130] sm:$0xff]
    %v8381 = vld [vmem:[#allocation10 + $0x138] sm:$0xff]
    %v8382 = vld [vmem:[#allocation10 + $0x140] sm:$0xff]
    %v8383 = vld [vmem:[#allocation10 + $0x148] sm:$0xff]
    %v8384 = vld [vmem:[#allocation10 + $0x150] sm:$0xff]
    %v8385 = vld [vmem:[#allocation10 + $0x158] sm:$0xff]
    %v8386 = vld [vmem:[#allocation10 + $0x160] sm:$0xff]
    %v8387 = vld [vmem:[#allocation10 + $0x168] sm:$0xff]
    %v8388 = vld [vmem:[#allocation10 + $0x170] sm:$0xff]
    %v8389 = vld [vmem:[#allocation10 + $0x178] sm:$0xff]
    %v8390 = vld [vmem:[#allocation10 + $0x180] sm:$0xff]
    %v8391 = vld [vmem:[#allocation10 + $0x188] sm:$0xff]
    %v8392 = vld [vmem:[#allocation10 + $0x190] sm:$0xff]
    %v8393 = vld [vmem:[#allocation10 + $0x198] sm:$0xff]
    %v8394 = vld [vmem:[#allocation10 + $0x1a0] sm:$0xff]
    %v8395 = vld [vmem:[#allocation10 + $0x1a8] sm:$0xff]
    %v8396 = vld [vmem:[#allocation10 + $0x1b0] sm:$0xff]
    %v8397 = vld [vmem:[#allocation10 + $0x1b8] sm:$0xff]
    %v8399 = vsel %vm504, %v8335, 0
    %v8402 = vsel %vm504, %v8337, 0
    %8404 = vmatprep.subr.mxu0 %v8343
    %8405 = vmatpush1.msra.mxu0 %v8342
    %8406 = vmatprep.subr.mxu0 %v8345
    %8407 = vmatpush1.msra.mxu0 %v8344
    %8408 = vmatprep.subr.mxu0 %v8347
    %8409 = vmatpush1.msra.mxu0 %v8346
    %8410 = vmatprep.subr.mxu0 %v8349
    %8411 = vmatpush1.msra.mxu0 %v8348
    %8412 = vmatprep.subr.mxu0 %v8351
    %8413 = vmatpush1.msra.mxu0 %v8350
    %8414 = vmatprep.subr.mxu0 %v8353
    %8415 = vmatpush1.msra.mxu0 %v8352
    %8416 = vmatprep.subr.mxu0 %v8355
    %8417 = vmatpush1.msra.mxu0 %v8354
    %8418 = vmatprep.subr.mxu0 %v8357
    %8419 = vmatpush1.msra.mxu0 %v8356
    %8420 = vmatprep.subr.mxu0 %v8359
    %8421 = vmatpush1.msra.mxu0 %v8358
    %8422 = vmatprep.subr.mxu0 %v8361
    %8423 = vmatpush1.msra.mxu0 %v8360
    %8424 = vmatprep.subr.mxu0 %v8363
    %8425 = vmatpush1.msra.mxu0 %v8362
    %8426 = vmatprep.subr.mxu0 %v8365
    %8427 = vmatpush1.msra.mxu0 %v8364
    %8428 = vmatprep.subr.mxu0 %v8367
    %8429 = vmatpush1.msra.mxu0 %v8366
    %8430 = vmatprep.subr.mxu0 %v8369
    %8431 = vmatpush1.msra.mxu0 %v8368
    %8432 = vmatprep.subr.mxu0 %v8371
    %8433 = vmatpush1.msra.mxu0 %v8370
    %8434 = vmatprep.subr.mxu0 %v8373
    %8435 = vmatpush1.msra.mxu0 %v8372
    %8436 = vmatprep.subr.mxu0 %v8375
    %8437 = vmatpush1.msra.mxu0 %v8374
    %8438 = vmatprep.subr.mxu0 %v8377
    %8439 = vmatpush1.msra.mxu0 %v8376
    %8440 = vmatprep.subr.mxu0 %v8379
    %8441 = vmatpush1.msra.mxu0 %v8378
    %8442 = vmatprep.subr.mxu0 %v8381
    %8443 = vmatpush1.msra.mxu0 %v8380
    %8444 = vmatprep.subr.mxu0 %v8383
    %8445 = vmatpush1.msra.mxu0 %v8382
    %8446 = vmatprep.subr.mxu0 %v8385
    %8447 = vmatpush1.msra.mxu0 %v8384
    %8448 = vmatprep.subr.mxu0 %v8387
    %8449 = vmatpush1.msra.mxu0 %v8386
    %8450 = vmatprep.subr.mxu0 %v8389
    %8451 = vmatpush1.msra.mxu0 %v8388
    %8452 = vmatprep.subr.mxu0 %v8391
    %8453 = vmatpush1.msra.mxu0 %v8390
    %8454 = vmatprep.subr.mxu0 %v8393
    %8455 = vmatpush1.msra.mxu0 %v8392
    %8456 = vmatprep.subr.mxu0 %v8395
    %8457 = vmatpush1.msra.mxu0 %v8394
    %8458 = vmatprep.subr.mxu0 %v8397
    %8459 = vmatpush1.msra.mxu0 %v8396
    %8460 = vmatprep.subr.mxu0 0.0
    %8461 = vmatpush1.msra.mxu0 0.0
    %8462 = vmatprep.subr.mxu0 0.0
    %8463 = vmatpush1.msra.mxu0 0.0
    %8464 = vmatprep.subr.mxu0 0.0
    %8465 = vmatpush1.msra.mxu0 0.0
    %8466 = vmatprep.subr.mxu0 0.0
    %8467 = vmatpush1.msra.mxu0 0.0
    %8468 = vmatprep.mubr.f32.mxu0 %v8399
    %8469 = vmatmul.mubr.f32.gmra.mrb[0].mxu0 %v8334
    %v8470 = vpop.f32.mrb[0].mxu0
    %v8471 = vadd.f32 0.0, %v8470
    %v8472 = vpop.f32.mrb[0].mxu0
    %v8473 = vadd.f32 0.0, %v8472
    %8474 = vmatprep.mubr.f32.mxu0 %v8402
    %8475 = vmatmul.mubr.f32.gmra.mrb[0].mxu0 %v8336
    %v8476 = vpop.f32.mrb[0].mxu0
    %v8477 = vadd.f32 0.0, %v8476
    %v8478 = vpop.f32.mrb[0].mxu0
    %v8479 = vadd.f32 0.0, %v8478
    %8480 = vdwg.mxu0
    %s8481 = scalar_lea.vmem %s45, 32
    %v8482 = vld [vmem:[%s8481] sm:$0xff]
    %v8483 = vld [vmem:[%s8481 + $0x8] sm:$0xff]
    %v8484 = vld [vmem:[%s8481 + $0x10] sm:$0xff]
    %v8485 = vld [vmem:[%s8481 + $0x18] sm:$0x3f]
    %s8486 = scalar_lea.vmem [#allocation10], 448
    %v8487 = vld [vmem:[%s8486] sm:$0xff]
    %v8488 = vld [vmem:[%s8486 + $0x8] sm:$0xff]
    %v8489 = vld [vmem:[%s8486 + $0x10] sm:$0xff]
    %v8490 = vld [vmem:[%s8486 + $0x18] sm:$0xff]
    %v8491 = vld [vmem:[%s8486 + $0x20] sm:$0xff]
    %v8492 = vld [vmem:[%s8486 + $0x28] sm:$0xff]
    %v8493 = vld [vmem:[%s8486 + $0x30] sm:$0xff]
    %v8494 = vld [vmem:[%s8486 + $0x38] sm:$0xff]
    %v8495 = vld [vmem:[%s8486 + $0x40] sm:$0xff]
    %v8496 = vld [vmem:[%s8486 + $0x48] sm:$0xff]
    %v8497 = vld [vmem:[%s8486 + $0x50] sm:$0xff]
    %v8498 = vld [vmem:[%s8486 + $0x58] sm:$0xff]
    %v8499 = vld [vmem:[%s8486 + $0x60] sm:$0xff]
    %v8500 = vld [vmem:[%s8486 + $0x68] sm:$0xff]
    %v8501 = vld [vmem:[%s8486 + $0x70] sm:$0xff]
    %v8502 = vld [vmem:[%s8486 + $0x78] sm:$0xff]
    %v8503 = vld [vmem:[%s8486 + $0x80] sm:$0xff]
    %v8504 = vld [vmem:[%s8486 + $0x88] sm:$0xff]
    %v8505 = vld [vmem:[%s8486 + $0x90] sm:$0xff]
    %v8506 = vld [vmem:[%s8486 + $0x98] sm:$0xff]
    %v8507 = vld [vmem:[%s8486 + $0xa0] sm:$0xff]
    %v8508 = vld [vmem:[%s8486 + $0xa8] sm:$0xff]
    %v8509 = vld [vmem:[%s8486 + $0xb0] sm:$0xff]
    %v8510 = vld [vmem:[%s8486 + $0xb8] sm:$0xff]
    %v8511 = vld [vmem:[%s8486 + $0xc0] sm:$0xff]
    %v8512 = vld [vmem:[%s8486 + $0xc8] sm:$0xff]
    %v8513 = vld [vmem:[%s8486 + $0xd0] sm:$0xff]
    %v8514 = vld [vmem:[%s8486 + $0xd8] sm:$0xff]
    %v8515 = vld [vmem:[%s8486 + $0xe0] sm:$0xff]
    %v8516 = vld [vmem:[%s8486 + $0xe8] sm:$0xff]
    %v8517 = vld [vmem:[%s8486 + $0xf0] sm:$0xff]
    %v8518 = vld [vmem:[%s8486 + $0xf8] sm:$0xff]
    %v8519 = vld [vmem:[%s8486 + $0x100] sm:$0xff]
    %v8520 = vld [vmem:[%s8486 + $0x108] sm:$0xff]
    %v8521 = vld [vmem:[%s8486 + $0x110] sm:$0xff]
    %v8522 = vld [vmem:[%s8486 + $0x118] sm:$0xff]
    %v8523 = vld [vmem:[%s8486 + $0x120] sm:$0xff]
    %v8524 = vld [vmem:[%s8486 + $0x128] sm:$0xff]
    %v8525 = vld [vmem:[%s8486 + $0x130] sm:$0xff]
    %v8526 = vld [vmem:[%s8486 + $0x138] sm:$0xff]
    %v8527 = vld [vmem:[%s8486 + $0x140] sm:$0xff]
    %v8528 = vld [vmem:[%s8486 + $0x148] sm:$0xff]
    %v8529 = vld [vmem:[%s8486 + $0x150] sm:$0xff]
    %v8530 = vld [vmem:[%s8486 + $0x158] sm:$0xff]
    %v8531 = vld [vmem:[%s8486 + $0x160] sm:$0xff]
    %v8532 = vld [vmem:[%s8486 + $0x168] sm:$0xff]
    %v8533 = vld [vmem:[%s8486 + $0x170] sm:$0xff]
    %v8534 = vld [vmem:[%s8486 + $0x178] sm:$0xff]
    %v8535 = vld [vmem:[%s8486 + $0x180] sm:$0xff]
    %v8536 = vld [vmem:[%s8486 + $0x188] sm:$0xff]
    %v8537 = vld [vmem:[%s8486 + $0x190] sm:$0xff]
    %v8538 = vld [vmem:[%s8486 + $0x198] sm:$0xff]
    %v8539 = vld [vmem:[%s8486 + $0x1a0] sm:$0xff]
    %v8540 = vld [vmem:[%s8486 + $0x1a8] sm:$0xff]
    %v8541 = vld [vmem:[%s8486 + $0x1b0] sm:$0xff]
    %v8542 = vld [vmem:[%s8486 + $0x1b8] sm:$0xff]
    %8543 = vmatprep.subr.mxu0 %v8488
    %8544 = vmatpush1.msra.mxu0 %v8487
    %8545 = vmatprep.subr.mxu0 %v8490
    %8546 = vmatpush1.msra.mxu0 %v8489
    %8547 = vmatprep.subr.mxu0 %v8492
    %8548 = vmatpush1.msra.mxu0 %v8491
    %8549 = vmatprep.subr.mxu0 %v8494
    %8550 = vmatpush1.msra.mxu0 %v8493
    %8551 = vmatprep.subr.mxu0 %v8496
    %8552 = vmatpush1.msra.mxu0 %v8495
    %8553 = vmatprep.subr.mxu0 %v8498
    %8554 = vmatpush1.msra.mxu0 %v8497
    %8555 = vmatprep.subr.mxu0 %v8500
    %8556 = vmatpush1.msra.mxu0 %v8499
    %8557 = vmatprep.subr.mxu0 %v8502
    %8558 = vmatpush1.msra.mxu0 %v8501
    %8559 = vmatprep.subr.mxu0 %v8504
    %8560 = vmatpush1.msra.mxu0 %v8503
    %8561 = vmatprep.subr.mxu0 %v8506
    %8562 = vmatpush1.msra.mxu0 %v8505
    %8563 = vmatprep.subr.mxu0 %v8508
    %8564 = vmatpush1.msra.mxu0 %v8507
    %8565 = vmatprep.subr.mxu0 %v8510
    %8566 = vmatpush1.msra.mxu0 %v8509
    %8567 = vmatprep.subr.mxu0 %v8512
    %8568 = vmatpush1.msra.mxu0 %v8511
    %8569 = vmatprep.subr.mxu0 %v8514
    %8570 = vmatpush1.msra.mxu0 %v8513
    %8571 = vmatprep.subr.mxu0 %v8516
    %8572 = vmatpush1.msra.mxu0 %v8515
    %8573 = vmatprep.subr.mxu0 %v8518
    %8574 = vmatpush1.msra.mxu0 %v8517
    %8575 = vmatprep.subr.mxu0 %v8520
    %8576 = vmatpush1.msra.mxu0 %v8519
    %8577 = vmatprep.subr.mxu0 %v8522
    %8578 = vmatpush1.msra.mxu0 %v8521
    %8579 = vmatprep.subr.mxu0 %v8524
    %8580 = vmatpush1.msra.mxu0 %v8523
    %8581 = vmatprep.subr.mxu0 %v8526
    %8582 = vmatpush1.msra.mxu0 %v8525
    %8583 = vmatprep.subr.mxu0 %v8528
    %8584 = vmatpush1.msra.mxu0 %v8527
    %8585 = vmatprep.subr.mxu0 %v8530
    %8586 = vmatpush1.msra.mxu0 %v8529
    %8587 = vmatprep.subr.mxu0 %v8532
    %8588 = vmatpush1.msra.mxu0 %v8531
    %8589 = vmatprep.subr.mxu0 %v8534
    %8590 = vmatpush1.msra.mxu0 %v8533
    %8591 = vmatprep.subr.mxu0 %v8536
    %8592 = vmatpush1.msra.mxu0 %v8535
    %8593 = vmatprep.subr.mxu0 %v8538
    %8594 = vmatpush1.msra.mxu0 %v8537
    %8595 = vmatprep.subr.mxu0 %v8540
    %8596 = vmatpush1.msra.mxu0 %v8539
    %8597 = vmatprep.subr.mxu0 %v8542
    %8598 = vmatpush1.msra.mxu0 %v8541
    %8599 = vmatprep.subr.mxu0 0.0
    %8600 = vmatpush1.msra.mxu0 0.0
    %8601 = vmatprep.subr.mxu0 0.0
    %8602 = vmatpush1.msra.mxu0 0.0
    %8603 = vmatprep.subr.mxu0 0.0
    %8604 = vmatpush1.msra.mxu0 0.0
    %8605 = vmatprep.subr.mxu0 0.0
    %8606 = vmatpush1.msra.mxu0 0.0
    %8607 = vmatprep.mubr.f32.mxu0 %v8399
    %8608 = vmatmul.mubr.f32.gmra.mrb[0].mxu0 %v8334
    %v8609 = vpop.f32.mrb[0].mxu0
    %v8610 = vadd.f32 0.0, %v8609
    %v8611 = vpop.f32.mrb[0].mxu0
    %v8612 = vadd.f32 0.0, %v8611
    %8613 = vmatprep.mubr.f32.mxu0 %v8402
    %8614 = vmatmul.mubr.f32.gmra.mrb[0].mxu0 %v8336
    %v8615 = vpop.f32.mrb[0].mxu0
    %v8616 = vadd.f32 0.0, %v8615
    %v8617 = vpop.f32.mrb[0].mxu0
    %v8618 = vadd.f32 0.0, %v8617
    %8619 = vdwg.mxu0
    %vm8620 = vcmask 113664
    %v8622 = vsel %vm8620, %v8482, 0
    %v8625 = vsel %vm8620, %v8483, 0
    %v8628 = vsel %vm8620, %v8484, 0
    %v8631 = vsel %vm8620, %v8485, 0
    %v8634 = vsel %vm1662, %v8616, 0
    %v8637 = vsel %vm1662, %v8618, 0
    %8639 = vmatprep.subr.mxu0 %v8612
    %8640 = vmatpush1.msra.mxu0 %v8610
    %8641 = vmatprep.subr.mxu0 %v8637
    %8642 = vmatpush1.msra.mxu0 %v8634
    %8643 = vmatprep.subr.mxu0 0.0
    %8644 = vmatpush1.msra.mxu0 0.0
    %8645 = vmatprep.subr.mxu0 0.0
    %8646 = vmatpush1.msra.mxu0 0.0
    %8647 = vmatprep.subr.mxu0 0.0
    %8648 = vmatpush1.msra.mxu0 0.0
    %8649 = vmatprep.subr.mxu0 0.0
    %8650 = vmatpush1.msra.mxu0 0.0
    %8651 = vmatprep.subr.mxu0 0.0
    %8652 = vmatpush1.msra.mxu0 0.0
    %8653 = vmatprep.subr.mxu0 0.0
    %8654 = vmatpush1.msra.mxu0 0.0
    %8655 = vmatprep.subr.mxu0 0.0
    %8656 = vmatpush1.msra.mxu0 0.0
    %8657 = vmatprep.subr.mxu0 0.0
    %8658 = vmatpush1.msra.mxu0 0.0
    %8659 = vmatprep.subr.mxu0 0.0
    %8660 = vmatpush1.msra.mxu0 0.0
    %8661 = vmatprep.subr.mxu0 0.0
    %8662 = vmatpush1.msra.mxu0 0.0
    %8663 = vmatprep.subr.mxu0 0.0
    %8664 = vmatpush1.msra.mxu0 0.0
    %8665 = vmatprep.subr.mxu0 0.0
    %8666 = vmatpush1.msra.mxu0 0.0
    %8667 = vmatprep.subr.mxu0 0.0
    %8668 = vmatpush1.msra.mxu0 0.0
    %8669 = vmatprep.subr.mxu0 0.0
    %8670 = vmatpush1.msra.mxu0 0.0
    %8671 = vmatprep.subr.mxu0 0.0
    %8672 = vmatpush1.msra.mxu0 0.0
    %8673 = vmatprep.subr.mxu0 0.0
    %8674 = vmatpush1.msra.mxu0 0.0
    %8675 = vmatprep.subr.mxu0 0.0
    %8676 = vmatpush1.msra.mxu0 0.0
    %8677 = vmatprep.subr.mxu0 0.0
    %8678 = vmatpush1.msra.mxu0 0.0
    %8679 = vmatprep.subr.mxu0 0.0
    %8680 = vmatpush1.msra.mxu0 0.0
    %8681 = vmatprep.subr.mxu0 0.0
    %8682 = vmatpush1.msra.mxu0 0.0
    %8683 = vmatprep.subr.mxu0 0.0
    %8684 = vmatpush1.msra.mxu0 0.0
    %8685 = vmatprep.subr.mxu0 0.0
    %8686 = vmatpush1.msra.mxu0 0.0
    %8687 = vmatprep.subr.mxu0 0.0
    %8688 = vmatpush1.msra.mxu0 0.0
    %8689 = vmatprep.subr.mxu0 0.0
    %8690 = vmatpush1.msra.mxu0 0.0
    %8691 = vmatprep.subr.mxu0 0.0
    %8692 = vmatpush1.msra.mxu0 0.0
    %8693 = vmatprep.subr.mxu0 0.0
    %8694 = vmatpush1.msra.mxu0 0.0
    %8695 = vmatprep.subr.mxu0 0.0
    %8696 = vmatpush1.msra.mxu0 0.0
    %8697 = vmatprep.subr.mxu0 0.0
    %8698 = vmatpush1.msra.mxu0 0.0
    %8699 = vmatprep.subr.mxu0 0.0
    %8700 = vmatpush1.msra.mxu0 0.0
    %8701 = vmatprep.subr.mxu0 0.0
    %8702 = vmatpush1.msra.mxu0 0.0
    %8703 = vmatprep.mubr.f32.mxu0 0.0
    %8704 = vmatmul.mubr.f32.gmra.mrb[0].mxu0 %v8622
    %v8705 = vpop.f32.mrb[0].mxu0
    %v8706 = vadd.f32 0.0, %v8705
    %v8707 = vpop.f32.mrb[0].mxu0
    %v8708 = vadd.f32 0.0, %v8707
    %8709 = vmatprep.mubr.f32.mxu0 0.0
    %8710 = vmatmul.mubr.f32.gmra.mrb[0].mxu0 %v8625
    %v8711 = vpop.f32.mrb[0].mxu0
    %v8712 = vadd.f32 0.0, %v8711
    %v8713 = vpop.f32.mrb[0].mxu0
    %v8714 = vadd.f32 0.0, %v8713
    %8715 = vmatprep.mubr.f32.mxu0 0.0
    %8716 = vmatmul.mubr.f32.gmra.mrb[0].mxu0 %v8628
    %v8717 = vpop.f32.mrb[0].mxu0
    %v8718 = vadd.f32 0.0, %v8717
    %v8719 = vpop.f32.mrb[0].mxu0
    %v8720 = vadd.f32 0.0, %v8719
    %8721 = vmatprep.mubr.f32.mxu0 0.0
    %8722 = vmatmul.mubr.f32.gmra.mrb[0].mxu0 %v8631
    %v8723 = vpop.f32.mrb[0].mxu0
    %v8724 = vadd.f32 0.0, %v8723
    %v8725 = vpop.f32.mrb[0].mxu0
    %v8726 = vadd.f32 0.0, %v8725
    %8727 = vdwg.mxu0
    %v8729 = vsel %vm8620, %v8338, 0
    %v8732 = vsel %vm8620, %v8339, 0
    %v8735 = vsel %vm8620, %v8340, 0
    %v8738 = vsel %vm8620, %v8341, 0
    %v8741 = vsel %vm1662, %v8477, 0
    %v8744 = vsel %vm1662, %v8479, 0
    %8746 = vmatprep.subr.mxu0 %v8473
    %8747 = vmatpush1.msra.mxu0 %v8471
    %8748 = vmatprep.subr.mxu0 %v8744
    %8749 = vmatpush1.msra.mxu0 %v8741
    %8750 = vmatprep.subr.mxu0 0.0
    %8751 = vmatpush1.msra.mxu0 0.0
    %8752 = vmatprep.subr.mxu0 0.0
    %8753 = vmatpush1.msra.mxu0 0.0
    %8754 = vmatprep.subr.mxu0 0.0
    %8755 = vmatpush1.msra.mxu0 0.0
    %8756 = vmatprep.subr.mxu0 0.0
    %8757 = vmatpush1.msra.mxu0 0.0
    %8758 = vmatprep.subr.mxu0 0.0
    %8759 = vmatpush1.msra.mxu0 0.0
    %8760 = vmatprep.subr.mxu0 0.0
    %8761 = vmatpush1.msra.mxu0 0.0
    %8762 = vmatprep.subr.mxu0 0.0
    %8763 = vmatpush1.msra.mxu0 0.0
    %8764 = vmatprep.subr.mxu0 0.0
    %8765 = vmatpush1.msra.mxu0 0.0
    %8766 = vmatprep.subr.mxu0 0.0
    %8767 = vmatpush1.msra.mxu0 0.0
    %8768 = vmatprep.subr.mxu0 0.0
    %8769 = vmatpush1.msra.mxu0 0.0
    %8770 = vmatprep.subr.mxu0 0.0
    %8771 = vmatpush1.msra.mxu0 0.0
    %8772 = vmatprep.subr.mxu0 0.0
    %8773 = vmatpush1.msra.mxu0 0.0
    %8774 = vmatprep.subr.mxu0 0.0
    %8775 = vmatpush1.msra.mxu0 0.0
    %8776 = vmatprep.subr.mxu0 0.0
    %8777 = vmatpush1.msra.mxu0 0.0
    %8778 = vmatprep.subr.mxu0 0.0
    %8779 = vmatpush1.msra.mxu0 0.0
    %8780 = vmatprep.subr.mxu0 0.0
    %8781 = vmatpush1.msra.mxu0 0.0
    %8782 = vmatprep.subr.mxu0 0.0
    %8783 = vmatpush1.msra.mxu0 0.0
    %8784 = vmatprep.subr.mxu0 0.0
    %8785 = vmatpush1.msra.mxu0 0.0
    %8786 = vmatprep.subr.mxu0 0.0
    %8787 = vmatpush1.msra.mxu0 0.0
    %8788 = vmatprep.subr.mxu0 0.0
    %8789 = vmatpush1.msra.mxu0 0.0
    %8790 = vmatprep.subr.mxu0 0.0
    %8791 = vmatpush1.msra.mxu0 0.0
    %8792 = vmatprep.subr.mxu0 0.0
    %8793 = vmatpush1.msra.mxu0 0.0
    %8794 = vmatprep.subr.mxu0 0.0
    %8795 = vmatpush1.msra.mxu0 0.0
    %8796 = vmatprep.subr.mxu0 0.0
    %8797 = vmatpush1.msra.mxu0 0.0
    %8798 = vmatprep.subr.mxu0 0.0
    %8799 = vmatpush1.msra.mxu0 0.0
    %8800 = vmatprep.subr.mxu0 0.0
    %8801 = vmatpush1.msra.mxu0 0.0
    %8802 = vmatprep.subr.mxu0 0.0
    %8803 = vmatpush1.msra.mxu0 0.0
    %8804 = vmatprep.subr.mxu0 0.0
    %8805 = vmatpush1.msra.mxu0 0.0
    %8806 = vmatprep.subr.mxu0 0.0
    %8807 = vmatpush1.msra.mxu0 0.0
    %8808 = vmatprep.subr.mxu0 0.0
    %8809 = vmatpush1.msra.mxu0 0.0
    %8810 = vmatprep.mubr.f32.mxu0 0.0
    %8811 = vmatmul.mubr.f32.gmra.mrb[0].mxu0 %v8729
    %v8812 = vpop.f32.mrb[0].mxu0
    %v8813 = vadd.f32 %v8706, %v8812
    %v8814 = vpop.f32.mrb[0].mxu0
    %v8815 = vadd.f32 %v8708, %v8814
    %8816 = vmatprep.mubr.f32.mxu0 0.0
    %8817 = vmatmul.mubr.f32.gmra.mrb[0].mxu0 %v8732
    %v8818 = vpop.f32.mrb[0].mxu0
    %v8819 = vadd.f32 %v8712, %v8818
    %v8820 = vpop.f32.mrb[0].mxu0
    %v8821 = vadd.f32 %v8714, %v8820
    %8822 = vmatprep.mubr.f32.mxu0 0.0
    %8823 = vmatmul.mubr.f32.gmra.mrb[0].mxu0 %v8735
    %v8824 = vpop.f32.mrb[0].mxu0
    %v8825 = vadd.f32 %v8718, %v8824
    %v8826 = vpop.f32.mrb[0].mxu0
    %v8827 = vadd.f32 %v8720, %v8826
    %8828 = vmatprep.mubr.f32.mxu0 0.0
    %8829 = vmatmul.mubr.f32.gmra.mrb[0].mxu0 %v8738
    %v8830 = vpop.f32.mrb[0].mxu0
    %v8831 = vadd.f32 %v8724, %v8830
    %v8832 = vpop.f32.mrb[0].mxu0
    %v8833 = vadd.f32 %v8726, %v8832
    %8834 = vdwg.mxu0
    %s8835 = scalar_lea.vmem %s45, 64
    %v8836 = vld [vmem:[%s8835] sm:$0xff]
    %v8837 = vld [vmem:[%s8835 + $0x8] sm:$0xff]
    %v8838 = vld [vmem:[%s8835 + $0x10] sm:$0xff]
    %v8839 = vld [vmem:[%s8835 + $0x18] sm:$0x3f]
    %s8840 = scalar_lea.vmem [#allocation10], 896
    %v8841 = vld [vmem:[%s8840] sm:$0xff]
    %v8842 = vld [vmem:[%s8840 + $0x8] sm:$0xff]
    %v8843 = vld [vmem:[%s8840 + $0x10] sm:$0xff]
    %v8844 = vld [vmem:[%s8840 + $0x18] sm:$0xff]
    %v8845 = vld [vmem:[%s8840 + $0x20] sm:$0xff]
    %v8846 = vld [vmem:[%s8840 + $0x28] sm:$0xff]
    %v8847 = vld [vmem:[%s8840 + $0x30] sm:$0xff]
    %v8848 = vld [vmem:[%s8840 + $0x38] sm:$0xff]
    %v8849 = vld [vmem:[%s8840 + $0x40] sm:$0xff]
    %v8850 = vld [vmem:[%s8840 + $0x48] sm:$0xff]
    %v8851 = vld [vmem:[%s8840 + $0x50] sm:$0xff]
    %v8852 = vld [vmem:[%s8840 + $0x58] sm:$0xff]
    %v8853 = vld [vmem:[%s8840 + $0x60] sm:$0xff]
    %v8854 = vld [vmem:[%s8840 + $0x68] sm:$0xff]
    %v8855 = vld [vmem:[%s8840 + $0x70] sm:$0xff]
    %v8856 = vld [vmem:[%s8840 + $0x78] sm:$0xff]
    %v8857 = vld [vmem:[%s8840 + $0x80] sm:$0xff]
    %v8858 = vld [vmem:[%s8840 + $0x88] sm:$0xff]
    %v8859 = vld [vmem:[%s8840 + $0x90] sm:$0xff]
    %v8860 = vld [vmem:[%s8840 + $0x98] sm:$0xff]
    %v8861 = vld [vmem:[%s8840 + $0xa0] sm:$0xff]
    %v8862 = vld [vmem:[%s8840 + $0xa8] sm:$0xff]
    %v8863 = vld [vmem:[%s8840 + $0xb0] sm:$0xff]
    %v8864 = vld [vmem:[%s8840 + $0xb8] sm:$0xff]
    %v8865 = vld [vmem:[%s8840 + $0xc0] sm:$0xff]
    %v8866 = vld [vmem:[%s8840 + $0xc8] sm:$0xff]
    %v8867 = vld [vmem:[%s8840 + $0xd0] sm:$0xff]
    %v8868 = vld [vmem:[%s8840 + $0xd8] sm:$0xff]
    %v8869 = vld [vmem:[%s8840 + $0xe0] sm:$0xff]
    %v8870 = vld [vmem:[%s8840 + $0xe8] sm:$0xff]
    %v8871 = vld [vmem:[%s8840 + $0xf0] sm:$0xff]
    %v8872 = vld [vmem:[%s8840 + $0xf8] sm:$0xff]
    %v8873 = vld [vmem:[%s8840 + $0x100] sm:$0xff]
    %v8874 = vld [vmem:[%s8840 + $0x108] sm:$0xff]
    %v8875 = vld [vmem:[%s8840 + $0x110] sm:$0xff]
    %v8876 = vld [vmem:[%s8840 + $0x118] sm:$0xff]
    %v8877 = vld [vmem:[%s8840 + $0x120] sm:$0xff]
    %v8878 = vld [vmem:[%s8840 + $0x128] sm:$0xff]
    %v8879 = vld [vmem:[%s8840 + $0x130] sm:$0xff]
    %v8880 = vld [vmem:[%s8840 + $0x138] sm:$0xff]
    %v8881 = vld [vmem:[%s8840 + $0x140] sm:$0xff]
    %v8882 = vld [vmem:[%s8840 + $0x148] sm:$0xff]
    %v8883 = vld [vmem:[%s8840 + $0x150] sm:$0xff]
    %v8884 = vld [vmem:[%s8840 + $0x158] sm:$0xff]
    %v8885 = vld [vmem:[%s8840 + $0x160] sm:$0xff]
    %v8886 = vld [vmem:[%s8840 + $0x168] sm:$0xff]
    %v8887 = vld [vmem:[%s8840 + $0x170] sm:$0xff]
    %v8888 = vld [vmem:[%s8840 + $0x178] sm:$0xff]
    %v8889 = vld [vmem:[%s8840 + $0x180] sm:$0xff]
    %v8890 = vld [vmem:[%s8840 + $0x188] sm:$0xff]
    %v8891 = vld [vmem:[%s8840 + $0x190] sm:$0xff]
    %v8892 = vld [vmem:[%s8840 + $0x198] sm:$0xff]
    %v8893 = vld [vmem:[%s8840 + $0x1a0] sm:$0xff]
    %v8894 = vld [vmem:[%s8840 + $0x1a8] sm:$0xff]
    %v8895 = vld [vmem:[%s8840 + $0x1b0] sm:$0xff]
    %v8896 = vld [vmem:[%s8840 + $0x1b8] sm:$0xff]
    %8897 = vmatprep.subr.mxu0 %v8842
    %8898 = vmatpush1.msra.mxu0 %v8841
    %8899 = vmatprep.subr.mxu0 %v8844
    %8900 = vmatpush1.msra.mxu0 %v8843
    %8901 = vmatprep.subr.mxu0 %v8846
    %8902 = vmatpush1.msra.mxu0 %v8845
    %8903 = vmatprep.subr.mxu0 %v8848
    %8904 = vmatpush1.msra.mxu0 %v8847
    %8905 = vmatprep.subr.mxu0 %v8850
    %8906 = vmatpush1.msra.mxu0 %v8849
    %8907 = vmatprep.subr.mxu0 %v8852
    %8908 = vmatpush1.msra.mxu0 %v8851
    %8909 = vmatprep.subr.mxu0 %v8854
    %8910 = vmatpush1.msra.mxu0 %v8853
    %8911 = vmatprep.subr.mxu0 %v8856
    %8912 = vmatpush1.msra.mxu0 %v8855
    %8913 = vmatprep.subr.mxu0 %v8858
    %8914 = vmatpush1.msra.mxu0 %v8857
    %8915 = vmatprep.subr.mxu0 %v8860
    %8916 = vmatpush1.msra.mxu0 %v8859
    %8917 = vmatprep.subr.mxu0 %v8862
    %8918 = vmatpush1.msra.mxu0 %v8861
    %8919 = vmatprep.subr.mxu0 %v8864
    %8920 = vmatpush1.msra.mxu0 %v8863
    %8921 = vmatprep.subr.mxu0 %v8866
    %8922 = vmatpush1.msra.mxu0 %v8865
    %8923 = vmatprep.subr.mxu0 %v8868
    %8924 = vmatpush1.msra.mxu0 %v8867
    %8925 = vmatprep.subr.mxu0 %v8870
    %8926 = vmatpush1.msra.mxu0 %v8869
    %8927 = vmatprep.subr.mxu0 %v8872
    %8928 = vmatpush1.msra.mxu0 %v8871
    %8929 = vmatprep.subr.mxu0 %v8874
    %8930 = vmatpush1.msra.mxu0 %v8873
    %8931 = vmatprep.subr.mxu0 %v8876
    %8932 = vmatpush1.msra.mxu0 %v8875
    %8933 = vmatprep.subr.mxu0 %v8878
    %8934 = vmatpush1.msra.mxu0 %v8877
    %8935 = vmatprep.subr.mxu0 %v8880
    %8936 = vmatpush1.msra.mxu0 %v8879
    %8937 = vmatprep.subr.mxu0 %v8882
    %8938 = vmatpush1.msra.mxu0 %v8881
    %8939 = vmatprep.subr.mxu0 %v8884
    %8940 = vmatpush1.msra.mxu0 %v8883
    %8941 = vmatprep.subr.mxu0 %v8886
    %8942 = vmatpush1.msra.mxu0 %v8885
    %8943 = vmatprep.subr.mxu0 %v8888
    %8944 = vmatpush1.msra.mxu0 %v8887
    %8945 = vmatprep.subr.mxu0 %v8890
    %8946 = vmatpush1.msra.mxu0 %v8889
    %8947 = vmatprep.subr.mxu0 %v8892
    %8948 = vmatpush1.msra.mxu0 %v8891
    %8949 = vmatprep.subr.mxu0 %v8894
    %8950 = vmatpush1.msra.mxu0 %v8893
    %8951 = vmatprep.subr.mxu0 %v8896
    %8952 = vmatpush1.msra.mxu0 %v8895
    %8953 = vmatprep.subr.mxu0 0.0
    %8954 = vmatpush1.msra.mxu0 0.0
    %8955 = vmatprep.subr.mxu0 0.0
    %8956 = vmatpush1.msra.mxu0 0.0
    %8957 = vmatprep.subr.mxu0 0.0
    %8958 = vmatpush1.msra.mxu0 0.0
    %8959 = vmatprep.subr.mxu0 0.0
    %8960 = vmatpush1.msra.mxu0 0.0
    %8961 = vmatprep.mubr.f32.mxu0 %v8399
    %8962 = vmatmul.mubr.f32.gmra.mrb[0].mxu0 %v8334
    %v8963 = vpop.f32.mrb[0].mxu0
    %v8964 = vadd.f32 0.0, %v8963
    %v8965 = vpop.f32.mrb[0].mxu0
    %v8966 = vadd.f32 0.0, %v8965
    %8967 = vmatprep.mubr.f32.mxu0 %v8402
    %8968 = vmatmul.mubr.f32.gmra.mrb[0].mxu0 %v8336
    %v8969 = vpop.f32.mrb[0].mxu0
    %v8970 = vadd.f32 0.0, %v8969
    %v8971 = vpop.f32.mrb[0].mxu0
    %v8972 = vadd.f32 0.0, %v8971
    %8973 = vdwg.mxu0
    %v8975 = vsel %vm8620, %v8836, 0
    %v8978 = vsel %vm8620, %v8837, 0
    %v8981 = vsel %vm8620, %v8838, 0
    %v8984 = vsel %vm8620, %v8839, 0
    %v8987 = vsel %vm1662, %v8970, 0
    %v8990 = vsel %vm1662, %v8972, 0
    %8992 = vmatprep.subr.mxu0 %v8966
    %8993 = vmatpush1.msra.mxu0 %v8964
    %8994 = vmatprep.subr.mxu0 %v8990
    %8995 = vmatpush1.msra.mxu0 %v8987
    %8996 = vmatprep.subr.mxu0 0.0
    %8997 = vmatpush1.msra.mxu0 0.0
    %8998 = vmatprep.subr.mxu0 0.0
    %8999 = vmatpush1.msra.mxu0 0.0
    %9000 = vmatprep.subr.mxu0 0.0
    %9001 = vmatpush1.msra.mxu0 0.0
    %9002 = vmatprep.subr.mxu0 0.0
    %9003 = vmatpush1.msra.mxu0 0.0
    %9004 = vmatprep.subr.mxu0 0.0
    %9005 = vmatpush1.msra.mxu0 0.0
    %9006 = vmatprep.subr.mxu0 0.0
    %9007 = vmatpush1.msra.mxu0 0.0
    %9008 = vmatprep.subr.mxu0 0.0
    %9009 = vmatpush1.msra.mxu0 0.0
    %9010 = vmatprep.subr.mxu0 0.0
    %9011 = vmatpush1.msra.mxu0 0.0
    %9012 = vmatprep.subr.mxu0 0.0
    %9013 = vmatpush1.msra.mxu0 0.0
    %9014 = vmatprep.subr.mxu0 0.0
    %9015 = vmatpush1.msra.mxu0 0.0
    %9016 = vmatprep.subr.mxu0 0.0
    %9017 = vmatpush1.msra.mxu0 0.0
    %9018 = vmatprep.subr.mxu0 0.0
    %9019 = vmatpush1.msra.mxu0 0.0
    %9020 = vmatprep.subr.mxu0 0.0
    %9021 = vmatpush1.msra.mxu0 0.0
    %9022 = vmatprep.subr.mxu0 0.0
    %9023 = vmatpush1.msra.mxu0 0.0
    %9024 = vmatprep.subr.mxu0 0.0
    %9025 = vmatpush1.msra.mxu0 0.0
    %9026 = vmatprep.subr.mxu0 0.0
    %9027 = vmatpush1.msra.mxu0 0.0
    %9028 = vmatprep.subr.mxu0 0.0
    %9029 = vmatpush1.msra.mxu0 0.0
    %9030 = vmatprep.subr.mxu0 0.0
    %9031 = vmatpush1.msra.mxu0 0.0
    %9032 = vmatprep.subr.mxu0 0.0
    %9033 = vmatpush1.msra.mxu0 0.0
    %9034 = vmatprep.subr.mxu0 0.0
    %9035 = vmatpush1.msra.mxu0 0.0
    %9036 = vmatprep.subr.mxu0 0.0
    %9037 = vmatpush1.msra.mxu0 0.0
    %9038 = vmatprep.subr.mxu0 0.0
    %9039 = vmatpush1.msra.mxu0 0.0
    %9040 = vmatprep.subr.mxu0 0.0
    %9041 = vmatpush1.msra.mxu0 0.0
    %9042 = vmatprep.subr.mxu0 0.0
    %9043 = vmatpush1.msra.mxu0 0.0
    %9044 = vmatprep.subr.mxu0 0.0
    %9045 = vmatpush1.msra.mxu0 0.0
    %9046 = vmatprep.subr.mxu0 0.0
    %9047 = vmatpush1.msra.mxu0 0.0
    %9048 = vmatprep.subr.mxu0 0.0
    %9049 = vmatpush1.msra.mxu0 0.0
    %9050 = vmatprep.subr.mxu0 0.0
    %9051 = vmatpush1.msra.mxu0 0.0
    %9052 = vmatprep.subr.mxu0 0.0
    %9053 = vmatpush1.msra.mxu0 0.0
    %9054 = vmatprep.subr.mxu0 0.0
    %9055 = vmatpush1.msra.mxu0 0.0
    %9056 = vmatprep.mubr.f32.mxu0 0.0
    %9057 = vmatmul.mubr.f32.gmra.mrb[0].mxu0 %v8975
    %v9058 = vpop.f32.mrb[0].mxu0
    %v9059 = vadd.f32 0.0, %v9058
    %v9060 = vpop.f32.mrb[0].mxu0
    %v9061 = vadd.f32 0.0, %v9060
    %9062 = vmatprep.mubr.f32.mxu0 0.0
    %9063 = vmatmul.mubr.f32.gmra.mrb[0].mxu0 %v8978
    %v9064 = vpop.f32.mrb[0].mxu0
    %v9065 = vadd.f32 0.0, %v9064
    %v9066 = vpop.f32.mrb[0].mxu0
    %v9067 = vadd.f32 0.0, %v9066
    %9068 = vmatprep.mubr.f32.mxu0 0.0
    %9069 = vmatmul.mubr.f32.gmra.mrb[0].mxu0 %v8981
    %v9070 = vpop.f32.mrb[0].mxu0
    %v9071 = vadd.f32 0.0, %v9070
    %v9072 = vpop.f32.mrb[0].mxu0
    %v9073 = vadd.f32 0.0, %v9072
    %9074 = vmatprep.mubr.f32.mxu0 0.0
    %9075 = vmatmul.mubr.f32.gmra.mrb[0].mxu0 %v8984
    %v9076 = vpop.f32.mrb[0].mxu0
    %v9077 = vadd.f32 0.0, %v9076
    %v9078 = vpop.f32.mrb[0].mxu0
    %v9079 = vadd.f32 0.0, %v9078
    %9080 = vdwg.mxu0
    %v9081 = vadd.f32 %v8813, %v9059
    %v9082 = vadd.f32 %v8815, %v9061
    %v9083 = vadd.f32 %v8819, %v9065
    %v9084 = vadd.f32 %v8821, %v9067
    %v9085 = vadd.f32 %v8825, %v9071
    %v9086 = vadd.f32 %v8827, %v9073
    %v9087 = vadd.f32 %v8831, %v9077
    %v9088 = vadd.f32 %v8833, %v9079
    %v9089 = vld [vmem:[%s49] sm:$0x3]
    %v9091 = vlaneseq
    %v9092 = vshrl.u32 %v9091, 7
    %v9093 = vsub.s32 0, %v9092
    %v9094 = vrot.slane %v9089, %v9093
    %v9095 = vlaneseq
    %v9096 = vshrl.u32 %v9095, 7
    %v9097 = vsub.s32 1, %v9096
    %v9098 = vrot.slane %v9089, %v9097
    %v9101 = vadd.f32 %v9081, %v9094
    %v9102 = vadd.f32 %v9082, %v9098
    %v9103 = vadd.f32 %v9083, %v9094
    %v9104 = vadd.f32 %v9084, %v9098
    %v9105 = vadd.f32 %v9085, %v9094
    %v9106 = vadd.f32 %v9086, %v9098
    %v9107 = vadd.f32 %v9087, %v9094
    %v9108 = vadd.f32 %v9088, %v9098
    %v9109 = vmax.f32 %v9101, 0.0
    %v9110 = vmax.f32 %v9102, 0.0
    %v9111 = vmax.f32 %v9103, 0.0
    %v9112 = vmax.f32 %v9104, 0.0
    %v9113 = vmax.f32 %v9105, 0.0
    %v9114 = vmax.f32 %v9106, 0.0
    %v9115 = vmax.f32 %v9107, 0.0
    %v9116 = vmax.f32 %v9108, 0.0
    %v9117 = vld [vmem:[%s51] sm:$0xff]
    %v9118 = vld [vmem:[%s51 + $0x8] sm:$0xff]
    %v9119 = vld [vmem:[%s51 + $0x10] sm:$0xff]
    %v9120 = vld [vmem:[%s51 + $0x18] sm:$0xff]
    %v9121 = vld [vmem:[%s51 + $0x20] sm:$0xff]
    %v9122 = vld [vmem:[%s51 + $0x28] sm:$0xff]
    %v9123 = vld [vmem:[%s51 + $0x30] sm:$0xff]
    %v9124 = vld [vmem:[%s51 + $0x38] sm:$0xff]
    %v9125 = vld [vmem:[%s53] sm:$0xff]
    %v9126 = vld [vmem:[%s53 + $0x8] sm:$0xff]
    %v9127 = vld [vmem:[%s53 + $0x10] sm:$0xff]
    %v9128 = vld [vmem:[%s53 + $0x18] sm:$0xff]
    %v9129 = vld [vmem:[%s53 + $0x20] sm:$0xff]
    %v9130 = vld [vmem:[%s53 + $0x28] sm:$0xff]
    %v9131 = vld [vmem:[%s53 + $0x30] sm:$0xff]
    %v9132 = vld [vmem:[%s53 + $0x38] sm:$0xff]
    %v9133 = vld [vmem:[%s53 + $0x40] sm:$0xff]
    %v9134 = vld [vmem:[%s53 + $0x48] sm:$0xff]
    %v9135 = vld [vmem:[%s53 + $0x50] sm:$0xff]
    %v9136 = vld [vmem:[%s53 + $0x58] sm:$0xff]
    %v9137 = vld [vmem:[%s53 + $0x60] sm:$0xff]
    %v9138 = vld [vmem:[%s53 + $0x68] sm:$0xff]
    %v9139 = vld [vmem:[%s53 + $0x70] sm:$0xff]
    %v9140 = vld [vmem:[%s53 + $0x78] sm:$0xff]
    %v9141 = vld [vmem:[%s53 + $0x80] sm:$0xff]
    %v9142 = vld [vmem:[%s53 + $0x88] sm:$0xff]
    %v9143 = vld [vmem:[%s53 + $0x90] sm:$0xff]
    %v9144 = vld [vmem:[%s53 + $0x98] sm:$0xff]
    %v9145 = vld [vmem:[%s53 + $0xa0] sm:$0xff]
    %v9146 = vld [vmem:[%s53 + $0xa8] sm:$0xff]
    %v9147 = vld [vmem:[%s53 + $0xb0] sm:$0xff]
    %v9148 = vld [vmem:[%s53 + $0xb8] sm:$0xff]
    %v9149 = vld [vmem:[%s53 + $0xc0] sm:$0xff]
    %v9150 = vld [vmem:[%s53 + $0xc8] sm:$0xff]
    %v9151 = vld [vmem:[%s53 + $0xd0] sm:$0xff]
    %v9152 = vld [vmem:[%s53 + $0xd8] sm:$0xff]
    %v9153 = vld [vmem:[%s53 + $0xe0] sm:$0xff]
    %v9154 = vld [vmem:[%s53 + $0xe8] sm:$0xff]
    %vm9155 = vcmask 916480
    %v9157 = vsel %vm9155, %v9110, 0
    %v9160 = vsel %vm9155, %v9112, 0
    %v9163 = vsel %vm9155, %v9114, 0
    %v9166 = vsel %vm9155, %v9116, 0
    %9168 = vmatprep.subr.mxu0 0.0
    %9169 = vmatpush1.msra.mxu0 %v9125
    %9170 = vmatprep.subr.mxu0 0.0
    %9171 = vmatpush1.msra.mxu0 %v9126
    %9172 = vmatprep.subr.mxu0 0.0
    %9173 = vmatpush1.msra.mxu0 %v9127
    %9174 = vmatprep.subr.mxu0 0.0
    %9175 = vmatpush1.msra.mxu0 %v9128
    %9176 = vmatprep.subr.mxu0 0.0
    %9177 = vmatpush1.msra.mxu0 %v9129
    %9178 = vmatprep.subr.mxu0 0.0
    %9179 = vmatpush1.msra.mxu0 %v9130
    %9180 = vmatprep.subr.mxu0 0.0
    %9181 = vmatpush1.msra.mxu0 %v9131
    %9182 = vmatprep.subr.mxu0 0.0
    %9183 = vmatpush1.msra.mxu0 %v9132
    %9184 = vmatprep.subr.mxu0 0.0
    %9185 = vmatpush1.msra.mxu0 %v9133
    %9186 = vmatprep.subr.mxu0 0.0
    %9187 = vmatpush1.msra.mxu0 %v9134
    %9188 = vmatprep.subr.mxu0 0.0
    %9189 = vmatpush1.msra.mxu0 %v9135
    %9190 = vmatprep.subr.mxu0 0.0
    %9191 = vmatpush1.msra.mxu0 %v9136
    %9192 = vmatprep.subr.mxu0 0.0
    %9193 = vmatpush1.msra.mxu0 %v9137
    %9194 = vmatprep.subr.mxu0 0.0
    %9195 = vmatpush1.msra.mxu0 %v9138
    %9196 = vmatprep.subr.mxu0 0.0
    %9197 = vmatpush1.msra.mxu0 %v9139
    %9198 = vmatprep.subr.mxu0 0.0
    %9199 = vmatpush1.msra.mxu0 %v9140
    %9200 = vmatprep.subr.mxu0 0.0
    %9201 = vmatpush1.msra.mxu0 %v9141
    %9202 = vmatprep.subr.mxu0 0.0
    %9203 = vmatpush1.msra.mxu0 %v9142
    %9204 = vmatprep.subr.mxu0 0.0
    %9205 = vmatpush1.msra.mxu0 %v9143
    %9206 = vmatprep.subr.mxu0 0.0
    %9207 = vmatpush1.msra.mxu0 %v9144
    %9208 = vmatprep.subr.mxu0 0.0
    %9209 = vmatpush1.msra.mxu0 %v9145
    %9210 = vmatprep.subr.mxu0 0.0
    %9211 = vmatpush1.msra.mxu0 %v9146
    %9212 = vmatprep.subr.mxu0 0.0
    %9213 = vmatpush1.msra.mxu0 %v9147
    %9214 = vmatprep.subr.mxu0 0.0
    %9215 = vmatpush1.msra.mxu0 %v9148
    %9216 = vmatprep.subr.mxu0 0.0
    %9217 = vmatpush1.msra.mxu0 %v9149
    %9218 = vmatprep.subr.mxu0 0.0
    %9219 = vmatpush1.msra.mxu0 %v9150
    %9220 = vmatprep.subr.mxu0 0.0
    %9221 = vmatpush1.msra.mxu0 %v9151
    %9222 = vmatprep.subr.mxu0 0.0
    %9223 = vmatpush1.msra.mxu0 %v9152
    %9224 = vmatprep.subr.mxu0 0.0
    %9225 = vmatpush1.msra.mxu0 %v9153
    %9226 = vmatprep.subr.mxu0 0.0
    %9227 = vmatpush1.msra.mxu0 %v9154
    %9228 = vmatprep.subr.mxu0 0.0
    %9229 = vmatpush1.msra.mxu0 0.0
    %9230 = vmatprep.subr.mxu0 0.0
    %9231 = vmatpush1.msra.mxu0 0.0
    %9232 = vmatprep.mubr.f32.mxu0 %v9157
    %9233 = vmatmul.mubr.f32.gmra.mrb[0].mxu0 %v9109
    %v9234 = vpop.f32.mrb[0].mxu0
    %v9235 = vadd.f32 0.0, %v9234
    %v9236 = vpop.f32.mrb[0].mxu0
    %9237 = vmatprep.mubr.f32.mxu0 %v9160
    %9238 = vmatmul.mubr.f32.gmra.mrb[0].mxu0 %v9111
    %v9239 = vpop.f32.mrb[0].mxu0
    %v9240 = vadd.f32 0.0, %v9239
    %v9241 = vpop.f32.mrb[0].mxu0
    %9242 = vmatprep.mubr.f32.mxu0 %v9163
    %9243 = vmatmul.mubr.f32.gmra.mrb[0].mxu0 %v9113
    %v9244 = vpop.f32.mrb[0].mxu0
    %v9245 = vadd.f32 0.0, %v9244
    %v9246 = vpop.f32.mrb[0].mxu0
    %9247 = vmatprep.mubr.f32.mxu0 %v9166
    %9248 = vmatmul.mubr.f32.gmra.mrb[0].mxu0 %v9115
    %v9249 = vpop.f32.mrb[0].mxu0
    %v9250 = vadd.f32 0.0, %v9249
    %v9251 = vpop.f32.mrb[0].mxu0
    %9252 = vdwg.mxu0
    %s9253 = scalar_lea.vmem %s51, 64
    %v9254 = vld [vmem:[%s9253] sm:$0xff]
    %v9255 = vld [vmem:[%s9253 + $0x8] sm:$0xff]
    %v9256 = vld [vmem:[%s9253 + $0x10] sm:$0xff]
    %v9257 = vld [vmem:[%s9253 + $0x18] sm:$0xff]
    %v9258 = vld [vmem:[%s9253 + $0x20] sm:$0xff]
    %v9259 = vld [vmem:[%s9253 + $0x28] sm:$0xff]
    %v9260 = vld [vmem:[%s9253 + $0x30] sm:$0xff]
    %v9261 = vld [vmem:[%s9253 + $0x38] sm:$0xff]
    %s9262 = scalar_lea.vmem %s53, 240
    %v9263 = vld [vmem:[%s9262] sm:$0xff]
    %v9264 = vld [vmem:[%s9262 + $0x8] sm:$0xff]
    %v9265 = vld [vmem:[%s9262 + $0x10] sm:$0xff]
    %v9266 = vld [vmem:[%s9262 + $0x18] sm:$0xff]
    %v9267 = vld [vmem:[%s9262 + $0x20] sm:$0xff]
    %v9268 = vld [vmem:[%s9262 + $0x28] sm:$0xff]
    %v9269 = vld [vmem:[%s9262 + $0x30] sm:$0xff]
    %v9270 = vld [vmem:[%s9262 + $0x38] sm:$0xff]
    %v9271 = vld [vmem:[%s9262 + $0x40] sm:$0xff]
    %v9272 = vld [vmem:[%s9262 + $0x48] sm:$0xff]
    %v9273 = vld [vmem:[%s9262 + $0x50] sm:$0xff]
    %v9274 = vld [vmem:[%s9262 + $0x58] sm:$0xff]
    %v9275 = vld [vmem:[%s9262 + $0x60] sm:$0xff]
    %v9276 = vld [vmem:[%s9262 + $0x68] sm:$0xff]
    %v9277 = vld [vmem:[%s9262 + $0x70] sm:$0xff]
    %v9278 = vld [vmem:[%s9262 + $0x78] sm:$0xff]
    %v9279 = vld [vmem:[%s9262 + $0x80] sm:$0xff]
    %v9280 = vld [vmem:[%s9262 + $0x88] sm:$0xff]
    %v9281 = vld [vmem:[%s9262 + $0x90] sm:$0xff]
    %v9282 = vld [vmem:[%s9262 + $0x98] sm:$0xff]
    %v9283 = vld [vmem:[%s9262 + $0xa0] sm:$0xff]
    %v9284 = vld [vmem:[%s9262 + $0xa8] sm:$0xff]
    %v9285 = vld [vmem:[%s9262 + $0xb0] sm:$0xff]
    %v9286 = vld [vmem:[%s9262 + $0xb8] sm:$0xff]
    %v9287 = vld [vmem:[%s9262 + $0xc0] sm:$0xff]
    %v9288 = vld [vmem:[%s9262 + $0xc8] sm:$0xff]
    %v9289 = vld [vmem:[%s9262 + $0xd0] sm:$0xff]
    %v9290 = vld [vmem:[%s9262 + $0xd8] sm:$0xff]
    %v9291 = vld [vmem:[%s9262 + $0xe0] sm:$0xff]
    %v9292 = vld [vmem:[%s9262 + $0xe8] sm:$0xff]
    %9293 = vmatprep.subr.mxu0 0.0
    %9294 = vmatpush1.msra.mxu0 %v9263
    %9295 = vmatprep.subr.mxu0 0.0
    %9296 = vmatpush1.msra.mxu0 %v9264
    %9297 = vmatprep.subr.mxu0 0.0
    %9298 = vmatpush1.msra.mxu0 %v9265
    %9299 = vmatprep.subr.mxu0 0.0
    %9300 = vmatpush1.msra.mxu0 %v9266
    %9301 = vmatprep.subr.mxu0 0.0
    %9302 = vmatpush1.msra.mxu0 %v9267
    %9303 = vmatprep.subr.mxu0 0.0
    %9304 = vmatpush1.msra.mxu0 %v9268
    %9305 = vmatprep.subr.mxu0 0.0
    %9306 = vmatpush1.msra.mxu0 %v9269
    %9307 = vmatprep.subr.mxu0 0.0
    %9308 = vmatpush1.msra.mxu0 %v9270
    %9309 = vmatprep.subr.mxu0 0.0
    %9310 = vmatpush1.msra.mxu0 %v9271
    %9311 = vmatprep.subr.mxu0 0.0
    %9312 = vmatpush1.msra.mxu0 %v9272
    %9313 = vmatprep.subr.mxu0 0.0
    %9314 = vmatpush1.msra.mxu0 %v9273
    %9315 = vmatprep.subr.mxu0 0.0
    %9316 = vmatpush1.msra.mxu0 %v9274
    %9317 = vmatprep.subr.mxu0 0.0
    %9318 = vmatpush1.msra.mxu0 %v9275
    %9319 = vmatprep.subr.mxu0 0.0
    %9320 = vmatpush1.msra.mxu0 %v9276
    %9321 = vmatprep.subr.mxu0 0.0
    %9322 = vmatpush1.msra.mxu0 %v9277
    %9323 = vmatprep.subr.mxu0 0.0
    %9324 = vmatpush1.msra.mxu0 %v9278
    %9325 = vmatprep.subr.mxu0 0.0
    %9326 = vmatpush1.msra.mxu0 %v9279
    %9327 = vmatprep.subr.mxu0 0.0
    %9328 = vmatpush1.msra.mxu0 %v9280
    %9329 = vmatprep.subr.mxu0 0.0
    %9330 = vmatpush1.msra.mxu0 %v9281
    %9331 = vmatprep.subr.mxu0 0.0
    %9332 = vmatpush1.msra.mxu0 %v9282
    %9333 = vmatprep.subr.mxu0 0.0
    %9334 = vmatpush1.msra.mxu0 %v9283
    %9335 = vmatprep.subr.mxu0 0.0
    %9336 = vmatpush1.msra.mxu0 %v9284
    %9337 = vmatprep.subr.mxu0 0.0
    %9338 = vmatpush1.msra.mxu0 %v9285
    %9339 = vmatprep.subr.mxu0 0.0
    %9340 = vmatpush1.msra.mxu0 %v9286
    %9341 = vmatprep.subr.mxu0 0.0
    %9342 = vmatpush1.msra.mxu0 %v9287
    %9343 = vmatprep.subr.mxu0 0.0
    %9344 = vmatpush1.msra.mxu0 %v9288
    %9345 = vmatprep.subr.mxu0 0.0
    %9346 = vmatpush1.msra.mxu0 %v9289
    %9347 = vmatprep.subr.mxu0 0.0
    %9348 = vmatpush1.msra.mxu0 %v9290
    %9349 = vmatprep.subr.mxu0 0.0
    %9350 = vmatpush1.msra.mxu0 %v9291
    %9351 = vmatprep.subr.mxu0 0.0
    %9352 = vmatpush1.msra.mxu0 %v9292
    %9353 = vmatprep.subr.mxu0 0.0
    %9354 = vmatpush1.msra.mxu0 0.0
    %9355 = vmatprep.subr.mxu0 0.0
    %9356 = vmatpush1.msra.mxu0 0.0
    %9357 = vmatprep.mubr.f32.mxu0 %v9157
    %9358 = vmatmul.mubr.f32.gmra.mrb[0].mxu0 %v9109
    %v9359 = vpop.f32.mrb[0].mxu0
    %v9360 = vadd.f32 0.0, %v9359
    %v9361 = vpop.f32.mrb[0].mxu0
    %9362 = vmatprep.mubr.f32.mxu0 %v9160
    %9363 = vmatmul.mubr.f32.gmra.mrb[0].mxu0 %v9111
    %v9364 = vpop.f32.mrb[0].mxu0
    %v9365 = vadd.f32 0.0, %v9364
    %v9366 = vpop.f32.mrb[0].mxu0
    %9367 = vmatprep.mubr.f32.mxu0 %v9163
    %9368 = vmatmul.mubr.f32.gmra.mrb[0].mxu0 %v9113
    %v9369 = vpop.f32.mrb[0].mxu0
    %v9370 = vadd.f32 0.0, %v9369
    %v9371 = vpop.f32.mrb[0].mxu0
    %9372 = vmatprep.mubr.f32.mxu0 %v9166
    %9373 = vmatmul.mubr.f32.gmra.mrb[0].mxu0 %v9115
    %v9374 = vpop.f32.mrb[0].mxu0
    %v9375 = vadd.f32 0.0, %v9374
    %v9376 = vpop.f32.mrb[0].mxu0
    %9377 = vdwg.mxu0
    %v9379 = vsel %vm1655, %v9254, 0
    %v9382 = vsel %vm1655, %v9255, 0
    %v9385 = vsel %vm1655, %v9256, 0
    %v9388 = vsel %vm1655, %v9257, 0
    %v9391 = vsel %vm1655, %v9258, 0
    %v9394 = vsel %vm1655, %v9259, 0
    %v9397 = vsel %vm1655, %v9260, 0
    %v9400 = vsel %vm1655, %v9261, 0
    %v9403 = vsel %vm1662, %v9375, 0
    %9405 = vmatprep.subr.mxu0 0.0
    %9406 = vmatpush1.msra.mxu0 %v9360
    %9407 = vmatprep.subr.mxu0 0.0
    %9408 = vmatpush1.msra.mxu0 %v9365
    %9409 = vmatprep.subr.mxu0 0.0
    %9410 = vmatpush1.msra.mxu0 %v9370
    %9411 = vmatprep.subr.mxu0 0.0
    %9412 = vmatpush1.msra.mxu0 %v9403
    %9413 = vmatprep.subr.mxu0 0.0
    %9414 = vmatpush1.msra.mxu0 0.0
    %9415 = vmatprep.subr.mxu0 0.0
    %9416 = vmatpush1.msra.mxu0 0.0
    %9417 = vmatprep.subr.mxu0 0.0
    %9418 = vmatpush1.msra.mxu0 0.0
    %9419 = vmatprep.subr.mxu0 0.0
    %9420 = vmatpush1.msra.mxu0 0.0
    %9421 = vmatprep.subr.mxu0 0.0
    %9422 = vmatpush1.msra.mxu0 0.0
    %9423 = vmatprep.subr.mxu0 0.0
    %9424 = vmatpush1.msra.mxu0 0.0
    %9425 = vmatprep.subr.mxu0 0.0
    %9426 = vmatpush1.msra.mxu0 0.0
    %9427 = vmatprep.subr.mxu0 0.0
    %9428 = vmatpush1.msra.mxu0 0.0
    %9429 = vmatprep.subr.mxu0 0.0
    %9430 = vmatpush1.msra.mxu0 0.0
    %9431 = vmatprep.subr.mxu0 0.0
    %9432 = vmatpush1.msra.mxu0 0.0
    %9433 = vmatprep.subr.mxu0 0.0
    %9434 = vmatpush1.msra.mxu0 0.0
    %9435 = vmatprep.subr.mxu0 0.0
    %9436 = vmatpush1.msra.mxu0 0.0
    %9437 = vmatprep.subr.mxu0 0.0
    %9438 = vmatpush1.msra.mxu0 0.0
    %9439 = vmatprep.subr.mxu0 0.0
    %9440 = vmatpush1.msra.mxu0 0.0
    %9441 = vmatprep.subr.mxu0 0.0
    %9442 = vmatpush1.msra.mxu0 0.0
    %9443 = vmatprep.subr.mxu0 0.0
    %9444 = vmatpush1.msra.mxu0 0.0
    %9445 = vmatprep.subr.mxu0 0.0
    %9446 = vmatpush1.msra.mxu0 0.0
    %9447 = vmatprep.subr.mxu0 0.0
    %9448 = vmatpush1.msra.mxu0 0.0
    %9449 = vmatprep.subr.mxu0 0.0
    %9450 = vmatpush1.msra.mxu0 0.0
    %9451 = vmatprep.subr.mxu0 0.0
    %9452 = vmatpush1.msra.mxu0 0.0
    %9453 = vmatprep.subr.mxu0 0.0
    %9454 = vmatpush1.msra.mxu0 0.0
    %9455 = vmatprep.subr.mxu0 0.0
    %9456 = vmatpush1.msra.mxu0 0.0
    %9457 = vmatprep.subr.mxu0 0.0
    %9458 = vmatpush1.msra.mxu0 0.0
    %9459 = vmatprep.subr.mxu0 0.0
    %9460 = vmatpush1.msra.mxu0 0.0
    %9461 = vmatprep.subr.mxu0 0.0
    %9462 = vmatpush1.msra.mxu0 0.0
    %9463 = vmatprep.subr.mxu0 0.0
    %9464 = vmatpush1.msra.mxu0 0.0
    %9465 = vmatprep.subr.mxu0 0.0
    %9466 = vmatpush1.msra.mxu0 0.0
    %9467 = vmatprep.subr.mxu0 0.0
    %9468 = vmatpush1.msra.mxu0 0.0
    %9469 = vmatprep.mubr.f32.mxu0 0.0
    %9470 = vmatmul.mubr.f32.gmra.mrb[0].mxu0 %v9379
    %v9471 = vpop.f32.mrb[0].mxu0
    %v9472 = vadd.f32 0.0, %v9471
    %v9473 = vpop.f32.mrb[0].mxu0
    %9474 = vmatprep.mubr.f32.mxu0 0.0
    %9475 = vmatmul.mubr.f32.gmra.mrb[0].mxu0 %v9382
    %v9476 = vpop.f32.mrb[0].mxu0
    %v9477 = vadd.f32 0.0, %v9476
    %v9478 = vpop.f32.mrb[0].mxu0
    %9479 = vmatprep.mubr.f32.mxu0 0.0
    %9480 = vmatmul.mubr.f32.gmra.mrb[0].mxu0 %v9385
    %v9481 = vpop.f32.mrb[0].mxu0
    %v9482 = vadd.f32 0.0, %v9481
    %v9483 = vpop.f32.mrb[0].mxu0
    %9484 = vmatprep.mubr.f32.mxu0 0.0
    %9485 = vmatmul.mubr.f32.gmra.mrb[0].mxu0 %v9388
    %v9486 = vpop.f32.mrb[0].mxu0
    %v9487 = vadd.f32 0.0, %v9486
    %v9488 = vpop.f32.mrb[0].mxu0
    %9489 = vmatprep.mubr.f32.mxu0 0.0
    %9490 = vmatmul.mubr.f32.gmra.mrb[0].mxu0 %v9391
    %v9491 = vpop.f32.mrb[0].mxu0
    %v9492 = vadd.f32 0.0, %v9491
    %v9493 = vpop.f32.mrb[0].mxu0
    %9494 = vmatprep.mubr.f32.mxu0 0.0
    %9495 = vmatmul.mubr.f32.gmra.mrb[0].mxu0 %v9394
    %v9496 = vpop.f32.mrb[0].mxu0
    %v9497 = vadd.f32 0.0, %v9496
    %v9498 = vpop.f32.mrb[0].mxu0
    %9499 = vmatprep.mubr.f32.mxu0 0.0
    %9500 = vmatmul.mubr.f32.gmra.mrb[0].mxu0 %v9397
    %v9501 = vpop.f32.mrb[0].mxu0
    %v9502 = vadd.f32 0.0, %v9501
    %v9503 = vpop.f32.mrb[0].mxu0
    %9504 = vmatprep.mubr.f32.mxu0 0.0
    %9505 = vmatmul.mubr.f32.gmra.mrb[0].mxu0 %v9400
    %v9506 = vpop.f32.mrb[0].mxu0
    %v9507 = vadd.f32 0.0, %v9506
    %v9508 = vpop.f32.mrb[0].mxu0
    %9509 = vdwg.mxu0
    %v9511 = vsel %vm1655, %v9117, 0
    %v9514 = vsel %vm1655, %v9118, 0
    %v9517 = vsel %vm1655, %v9119, 0
    %v9520 = vsel %vm1655, %v9120, 0
    %v9523 = vsel %vm1655, %v9121, 0
    %v9526 = vsel %vm1655, %v9122, 0
    %v9529 = vsel %vm1655, %v9123, 0
    %v9532 = vsel %vm1655, %v9124, 0
    %v9535 = vsel %vm1662, %v9250, 0
    %9537 = vmatprep.subr.mxu0 0.0
    %9538 = vmatpush1.msra.mxu0 %v9235
    %9539 = vmatprep.subr.mxu0 0.0
    %9540 = vmatpush1.msra.mxu0 %v9240
    %9541 = vmatprep.subr.mxu0 0.0
    %9542 = vmatpush1.msra.mxu0 %v9245
    %9543 = vmatprep.subr.mxu0 0.0
    %9544 = vmatpush1.msra.mxu0 %v9535
    %9545 = vmatprep.subr.mxu0 0.0
    %9546 = vmatpush1.msra.mxu0 0.0
    %9547 = vmatprep.subr.mxu0 0.0
    %9548 = vmatpush1.msra.mxu0 0.0
    %9549 = vmatprep.subr.mxu0 0.0
    %9550 = vmatpush1.msra.mxu0 0.0
    %9551 = vmatprep.subr.mxu0 0.0
    %9552 = vmatpush1.msra.mxu0 0.0
    %9553 = vmatprep.subr.mxu0 0.0
    %9554 = vmatpush1.msra.mxu0 0.0
    %9555 = vmatprep.subr.mxu0 0.0
    %9556 = vmatpush1.msra.mxu0 0.0
    %9557 = vmatprep.subr.mxu0 0.0
    %9558 = vmatpush1.msra.mxu0 0.0
    %9559 = vmatprep.subr.mxu0 0.0
    %9560 = vmatpush1.msra.mxu0 0.0
    %9561 = vmatprep.subr.mxu0 0.0
    %9562 = vmatpush1.msra.mxu0 0.0
    %9563 = vmatprep.subr.mxu0 0.0
    %9564 = vmatpush1.msra.mxu0 0.0
    %9565 = vmatprep.subr.mxu0 0.0
    %9566 = vmatpush1.msra.mxu0 0.0
    %9567 = vmatprep.subr.mxu0 0.0
    %9568 = vmatpush1.msra.mxu0 0.0
    %9569 = vmatprep.subr.mxu0 0.0
    %9570 = vmatpush1.msra.mxu0 0.0
    %9571 = vmatprep.subr.mxu0 0.0
    %9572 = vmatpush1.msra.mxu0 0.0
    %9573 = vmatprep.subr.mxu0 0.0
    %9574 = vmatpush1.msra.mxu0 0.0
    %9575 = vmatprep.subr.mxu0 0.0
    %9576 = vmatpush1.msra.mxu0 0.0
    %9577 = vmatprep.subr.mxu0 0.0
    %9578 = vmatpush1.msra.mxu0 0.0
    %9579 = vmatprep.subr.mxu0 0.0
    %9580 = vmatpush1.msra.mxu0 0.0
    %9581 = vmatprep.subr.mxu0 0.0
    %9582 = vmatpush1.msra.mxu0 0.0
    %9583 = vmatprep.subr.mxu0 0.0
    %9584 = vmatpush1.msra.mxu0 0.0
    %9585 = vmatprep.subr.mxu0 0.0
    %9586 = vmatpush1.msra.mxu0 0.0
    %9587 = vmatprep.subr.mxu0 0.0
    %9588 = vmatpush1.msra.mxu0 0.0
    %9589 = vmatprep.subr.mxu0 0.0
    %9590 = vmatpush1.msra.mxu0 0.0
    %9591 = vmatprep.subr.mxu0 0.0
    %9592 = vmatpush1.msra.mxu0 0.0
    %9593 = vmatprep.subr.mxu0 0.0
    %9594 = vmatpush1.msra.mxu0 0.0
    %9595 = vmatprep.subr.mxu0 0.0
    %9596 = vmatpush1.msra.mxu0 0.0
    %9597 = vmatprep.subr.mxu0 0.0
    %9598 = vmatpush1.msra.mxu0 0.0
    %9599 = vmatprep.subr.mxu0 0.0
    %9600 = vmatpush1.msra.mxu0 0.0
    %9601 = vmatprep.mubr.f32.mxu0 0.0
    %9602 = vmatmul.mubr.f32.gmra.mrb[0].mxu0 %v9511
    %v9603 = vpop.f32.mrb[0].mxu0
    %v9604 = vadd.f32 %v9472, %v9603
    %v9605 = vpop.f32.mrb[0].mxu0
    %9606 = vmatprep.mubr.f32.mxu0 0.0
    %9607 = vmatmul.mubr.f32.gmra.mrb[0].mxu0 %v9514
    %v9608 = vpop.f32.mrb[0].mxu0
    %v9609 = vadd.f32 %v9477, %v9608
    %v9610 = vpop.f32.mrb[0].mxu0
    %9611 = vmatprep.mubr.f32.mxu0 0.0
    %9612 = vmatmul.mubr.f32.gmra.mrb[0].mxu0 %v9517
    %v9613 = vpop.f32.mrb[0].mxu0
    %v9614 = vadd.f32 %v9482, %v9613
    %v9615 = vpop.f32.mrb[0].mxu0
    %9616 = vmatprep.mubr.f32.mxu0 0.0
    %9617 = vmatmul.mubr.f32.gmra.mrb[0].mxu0 %v9520
    %v9618 = vpop.f32.mrb[0].mxu0
    %v9619 = vadd.f32 %v9487, %v9618
    %v9620 = vpop.f32.mrb[0].mxu0
    %9621 = vmatprep.mubr.f32.mxu0 0.0
    %9622 = vmatmul.mubr.f32.gmra.mrb[0].mxu0 %v9523
    %v9623 = vpop.f32.mrb[0].mxu0
    %v9624 = vadd.f32 %v9492, %v9623
    %v9625 = vpop.f32.mrb[0].mxu0
    %9626 = vmatprep.mubr.f32.mxu0 0.0
    %9627 = vmatmul.mubr.f32.gmra.mrb[0].mxu0 %v9526
    %v9628 = vpop.f32.mrb[0].mxu0
    %v9629 = vadd.f32 %v9497, %v9628
    %v9630 = vpop.f32.mrb[0].mxu0
    %9631 = vmatprep.mubr.f32.mxu0 0.0
    %9632 = vmatmul.mubr.f32.gmra.mrb[0].mxu0 %v9529
    %v9633 = vpop.f32.mrb[0].mxu0
    %v9634 = vadd.f32 %v9502, %v9633
    %v9635 = vpop.f32.mrb[0].mxu0
    %9636 = vmatprep.mubr.f32.mxu0 0.0
    %9637 = vmatmul.mubr.f32.gmra.mrb[0].mxu0 %v9532
    %v9638 = vpop.f32.mrb[0].mxu0
    %v9639 = vadd.f32 %v9507, %v9638
    %v9640 = vpop.f32.mrb[0].mxu0
    %9641 = vdwg.mxu0
    %s9642 = scalar_lea.vmem %s51, 128
    %v9643 = vld [vmem:[%s9642] sm:$0xff]
    %v9644 = vld [vmem:[%s9642 + $0x8] sm:$0xff]
    %v9645 = vld [vmem:[%s9642 + $0x10] sm:$0xff]
    %v9646 = vld [vmem:[%s9642 + $0x18] sm:$0xff]
    %v9647 = vld [vmem:[%s9642 + $0x20] sm:$0xff]
    %v9648 = vld [vmem:[%s9642 + $0x28] sm:$0xff]
    %v9649 = vld [vmem:[%s9642 + $0x30] sm:$0xff]
    %v9650 = vld [vmem:[%s9642 + $0x38] sm:$0xff]
    %s9651 = scalar_lea.vmem %s53, 480
    %v9652 = vld [vmem:[%s9651] sm:$0xff]
    %v9653 = vld [vmem:[%s9651 + $0x8] sm:$0xff]
    %v9654 = vld [vmem:[%s9651 + $0x10] sm:$0xff]
    %v9655 = vld [vmem:[%s9651 + $0x18] sm:$0xff]
    %v9656 = vld [vmem:[%s9651 + $0x20] sm:$0xff]
    %v9657 = vld [vmem:[%s9651 + $0x28] sm:$0xff]
    %v9658 = vld [vmem:[%s9651 + $0x30] sm:$0xff]
    %v9659 = vld [vmem:[%s9651 + $0x38] sm:$0xff]
    %v9660 = vld [vmem:[%s9651 + $0x40] sm:$0xff]
    %v9661 = vld [vmem:[%s9651 + $0x48] sm:$0xff]
    %v9662 = vld [vmem:[%s9651 + $0x50] sm:$0xff]
    %v9663 = vld [vmem:[%s9651 + $0x58] sm:$0xff]
    %v9664 = vld [vmem:[%s9651 + $0x60] sm:$0xff]
    %v9665 = vld [vmem:[%s9651 + $0x68] sm:$0xff]
    %v9666 = vld [vmem:[%s9651 + $0x70] sm:$0xff]
    %v9667 = vld [vmem:[%s9651 + $0x78] sm:$0xff]
    %v9668 = vld [vmem:[%s9651 + $0x80] sm:$0xff]
    %v9669 = vld [vmem:[%s9651 + $0x88] sm:$0xff]
    %v9670 = vld [vmem:[%s9651 + $0x90] sm:$0xff]
    %v9671 = vld [vmem:[%s9651 + $0x98] sm:$0xff]
    %v9672 = vld [vmem:[%s9651 + $0xa0] sm:$0xff]
    %v9673 = vld [vmem:[%s9651 + $0xa8] sm:$0xff]
    %v9674 = vld [vmem:[%s9651 + $0xb0] sm:$0xff]
    %v9675 = vld [vmem:[%s9651 + $0xb8] sm:$0xff]
    %v9676 = vld [vmem:[%s9651 + $0xc0] sm:$0xff]
    %v9677 = vld [vmem:[%s9651 + $0xc8] sm:$0xff]
    %v9678 = vld [vmem:[%s9651 + $0xd0] sm:$0xff]
    %v9679 = vld [vmem:[%s9651 + $0xd8] sm:$0xff]
    %v9680 = vld [vmem:[%s9651 + $0xe0] sm:$0xff]
    %v9681 = vld [vmem:[%s9651 + $0xe8] sm:$0xff]
    %9682 = vmatprep.subr.mxu0 0.0
    %9683 = vmatpush1.msra.mxu0 %v9652
    %9684 = vmatprep.subr.mxu0 0.0
    %9685 = vmatpush1.msra.mxu0 %v9653
    %9686 = vmatprep.subr.mxu0 0.0
    %9687 = vmatpush1.msra.mxu0 %v9654
    %9688 = vmatprep.subr.mxu0 0.0
    %9689 = vmatpush1.msra.mxu0 %v9655
    %9690 = vmatprep.subr.mxu0 0.0
    %9691 = vmatpush1.msra.mxu0 %v9656
    %9692 = vmatprep.subr.mxu0 0.0
    %9693 = vmatpush1.msra.mxu0 %v9657
    %9694 = vmatprep.subr.mxu0 0.0
    %9695 = vmatpush1.msra.mxu0 %v9658
    %9696 = vmatprep.subr.mxu0 0.0
    %9697 = vmatpush1.msra.mxu0 %v9659
    %9698 = vmatprep.subr.mxu0 0.0
    %9699 = vmatpush1.msra.mxu0 %v9660
    %9700 = vmatprep.subr.mxu0 0.0
    %9701 = vmatpush1.msra.mxu0 %v9661
    %9702 = vmatprep.subr.mxu0 0.0
    %9703 = vmatpush1.msra.mxu0 %v9662
    %9704 = vmatprep.subr.mxu0 0.0
    %9705 = vmatpush1.msra.mxu0 %v9663
    %9706 = vmatprep.subr.mxu0 0.0
    %9707 = vmatpush1.msra.mxu0 %v9664
    %9708 = vmatprep.subr.mxu0 0.0
    %9709 = vmatpush1.msra.mxu0 %v9665
    %9710 = vmatprep.subr.mxu0 0.0
    %9711 = vmatpush1.msra.mxu0 %v9666
    %9712 = vmatprep.subr.mxu0 0.0
    %9713 = vmatpush1.msra.mxu0 %v9667
    %9714 = vmatprep.subr.mxu0 0.0
    %9715 = vmatpush1.msra.mxu0 %v9668
    %9716 = vmatprep.subr.mxu0 0.0
    %9717 = vmatpush1.msra.mxu0 %v9669
    %9718 = vmatprep.subr.mxu0 0.0
    %9719 = vmatpush1.msra.mxu0 %v9670
    %9720 = vmatprep.subr.mxu0 0.0
    %9721 = vmatpush1.msra.mxu0 %v9671
    %9722 = vmatprep.subr.mxu0 0.0
    %9723 = vmatpush1.msra.mxu0 %v9672
    %9724 = vmatprep.subr.mxu0 0.0
    %9725 = vmatpush1.msra.mxu0 %v9673
    %9726 = vmatprep.subr.mxu0 0.0
    %9727 = vmatpush1.msra.mxu0 %v9674
    %9728 = vmatprep.subr.mxu0 0.0
    %9729 = vmatpush1.msra.mxu0 %v9675
    %9730 = vmatprep.subr.mxu0 0.0
    %9731 = vmatpush1.msra.mxu0 %v9676
    %9732 = vmatprep.subr.mxu0 0.0
    %9733 = vmatpush1.msra.mxu0 %v9677
    %9734 = vmatprep.subr.mxu0 0.0
    %9735 = vmatpush1.msra.mxu0 %v9678
    %9736 = vmatprep.subr.mxu0 0.0
    %9737 = vmatpush1.msra.mxu0 %v9679
    %9738 = vmatprep.subr.mxu0 0.0
    %9739 = vmatpush1.msra.mxu0 %v9680
    %9740 = vmatprep.subr.mxu0 0.0
    %9741 = vmatpush1.msra.mxu0 %v9681
    %9742 = vmatprep.subr.mxu0 0.0
    %9743 = vmatpush1.msra.mxu0 0.0
    %9744 = vmatprep.subr.mxu0 0.0
    %9745 = vmatpush1.msra.mxu0 0.0
    %9746 = vmatprep.mubr.f32.mxu0 %v9157
    %9747 = vmatmul.mubr.f32.gmra.mrb[0].mxu0 %v9109
    %v9748 = vpop.f32.mrb[0].mxu0
    %v9749 = vadd.f32 0.0, %v9748
    %v9750 = vpop.f32.mrb[0].mxu0
    %9751 = vmatprep.mubr.f32.mxu0 %v9160
    %9752 = vmatmul.mubr.f32.gmra.mrb[0].mxu0 %v9111
    %v9753 = vpop.f32.mrb[0].mxu0
    %v9754 = vadd.f32 0.0, %v9753
    %v9755 = vpop.f32.mrb[0].mxu0
    %9756 = vmatprep.mubr.f32.mxu0 %v9163
    %9757 = vmatmul.mubr.f32.gmra.mrb[0].mxu0 %v9113
    %v9758 = vpop.f32.mrb[0].mxu0
    %v9759 = vadd.f32 0.0, %v9758
    %v9760 = vpop.f32.mrb[0].mxu0
    %9761 = vmatprep.mubr.f32.mxu0 %v9166
    %9762 = vmatmul.mubr.f32.gmra.mrb[0].mxu0 %v9115
    %v9763 = vpop.f32.mrb[0].mxu0
    %v9764 = vadd.f32 0.0, %v9763
    %v9765 = vpop.f32.mrb[0].mxu0
    %9766 = vdwg.mxu0
    %v9768 = vsel %vm1655, %v9643, 0
    %v9771 = vsel %vm1655, %v9644, 0
    %v9774 = vsel %vm1655, %v9645, 0
    %v9777 = vsel %vm1655, %v9646, 0
    %v9780 = vsel %vm1655, %v9647, 0
    %v9783 = vsel %vm1655, %v9648, 0
    %v9786 = vsel %vm1655, %v9649, 0
    %v9789 = vsel %vm1655, %v9650, 0
    %v9792 = vsel %vm1662, %v9764, 0
    %9794 = vmatprep.subr.mxu0 0.0
    %9795 = vmatpush1.msra.mxu0 %v9749
    %9796 = vmatprep.subr.mxu0 0.0
    %9797 = vmatpush1.msra.mxu0 %v9754
    %9798 = vmatprep.subr.mxu0 0.0
    %9799 = vmatpush1.msra.mxu0 %v9759
    %9800 = vmatprep.subr.mxu0 0.0
    %9801 = vmatpush1.msra.mxu0 %v9792
    %9802 = vmatprep.subr.mxu0 0.0
    %9803 = vmatpush1.msra.mxu0 0.0
    %9804 = vmatprep.subr.mxu0 0.0
    %9805 = vmatpush1.msra.mxu0 0.0
    %9806 = vmatprep.subr.mxu0 0.0
    %9807 = vmatpush1.msra.mxu0 0.0
    %9808 = vmatprep.subr.mxu0 0.0
    %9809 = vmatpush1.msra.mxu0 0.0
    %9810 = vmatprep.subr.mxu0 0.0
    %9811 = vmatpush1.msra.mxu0 0.0
    %9812 = vmatprep.subr.mxu0 0.0
    %9813 = vmatpush1.msra.mxu0 0.0
    %9814 = vmatprep.subr.mxu0 0.0
    %9815 = vmatpush1.msra.mxu0 0.0
    %9816 = vmatprep.subr.mxu0 0.0
    %9817 = vmatpush1.msra.mxu0 0.0
    %9818 = vmatprep.subr.mxu0 0.0
    %9819 = vmatpush1.msra.mxu0 0.0
    %9820 = vmatprep.subr.mxu0 0.0
    %9821 = vmatpush1.msra.mxu0 0.0
    %9822 = vmatprep.subr.mxu0 0.0
    %9823 = vmatpush1.msra.mxu0 0.0
    %9824 = vmatprep.subr.mxu0 0.0
    %9825 = vmatpush1.msra.mxu0 0.0
    %9826 = vmatprep.subr.mxu0 0.0
    %9827 = vmatpush1.msra.mxu0 0.0
    %9828 = vmatprep.subr.mxu0 0.0
    %9829 = vmatpush1.msra.mxu0 0.0
    %9830 = vmatprep.subr.mxu0 0.0
    %9831 = vmatpush1.msra.mxu0 0.0
    %9832 = vmatprep.subr.mxu0 0.0
    %9833 = vmatpush1.msra.mxu0 0.0
    %9834 = vmatprep.subr.mxu0 0.0
    %9835 = vmatpush1.msra.mxu0 0.0
    %9836 = vmatprep.subr.mxu0 0.0
    %9837 = vmatpush1.msra.mxu0 0.0
    %9838 = vmatprep.subr.mxu0 0.0
    %9839 = vmatpush1.msra.mxu0 0.0
    %9840 = vmatprep.subr.mxu0 0.0
    %9841 = vmatpush1.msra.mxu0 0.0
    %9842 = vmatprep.subr.mxu0 0.0
    %9843 = vmatpush1.msra.mxu0 0.0
    %9844 = vmatprep.subr.mxu0 0.0
    %9845 = vmatpush1.msra.mxu0 0.0
    %9846 = vmatprep.subr.mxu0 0.0
    %9847 = vmatpush1.msra.mxu0 0.0
    %9848 = vmatprep.subr.mxu0 0.0
    %9849 = vmatpush1.msra.mxu0 0.0
    %9850 = vmatprep.subr.mxu0 0.0
    %9851 = vmatpush1.msra.mxu0 0.0
    %9852 = vmatprep.subr.mxu0 0.0
    %9853 = vmatpush1.msra.mxu0 0.0
    %9854 = vmatprep.subr.mxu0 0.0
    %9855 = vmatpush1.msra.mxu0 0.0
    %9856 = vmatprep.subr.mxu0 0.0
    %9857 = vmatpush1.msra.mxu0 0.0
    %9858 = vmatprep.mubr.f32.mxu0 0.0
    %9859 = vmatmul.mubr.f32.gmra.mrb[0].mxu0 %v9768
    %v9860 = vpop.f32.mrb[0].mxu0
    %v9861 = vadd.f32 0.0, %v9860
    %v9862 = vpop.f32.mrb[0].mxu0
    %9863 = vmatprep.mubr.f32.mxu0 0.0
    %9864 = vmatmul.mubr.f32.gmra.mrb[0].mxu0 %v9771
    %v9865 = vpop.f32.mrb[0].mxu0
    %v9866 = vadd.f32 0.0, %v9865
    %v9867 = vpop.f32.mrb[0].mxu0
    %9868 = vmatprep.mubr.f32.mxu0 0.0
    %9869 = vmatmul.mubr.f32.gmra.mrb[0].mxu0 %v9774
    %v9870 = vpop.f32.mrb[0].mxu0
    %v9871 = vadd.f32 0.0, %v9870
    %v9872 = vpop.f32.mrb[0].mxu0
    %9873 = vmatprep.mubr.f32.mxu0 0.0
    %9874 = vmatmul.mubr.f32.gmra.mrb[0].mxu0 %v9777
    %v9875 = vpop.f32.mrb[0].mxu0
    %v9876 = vadd.f32 0.0, %v9875
    %v9877 = vpop.f32.mrb[0].mxu0
    %9878 = vmatprep.mubr.f32.mxu0 0.0
    %9879 = vmatmul.mubr.f32.gmra.mrb[0].mxu0 %v9780
    %v9880 = vpop.f32.mrb[0].mxu0
    %v9881 = vadd.f32 0.0, %v9880
    %v9882 = vpop.f32.mrb[0].mxu0
    %9883 = vmatprep.mubr.f32.mxu0 0.0
    %9884 = vmatmul.mubr.f32.gmra.mrb[0].mxu0 %v9783
    %v9885 = vpop.f32.mrb[0].mxu0
    %v9886 = vadd.f32 0.0, %v9885
    %v9887 = vpop.f32.mrb[0].mxu0
    %9888 = vmatprep.mubr.f32.mxu0 0.0
    %9889 = vmatmul.mubr.f32.gmra.mrb[0].mxu0 %v9786
    %v9890 = vpop.f32.mrb[0].mxu0
    %v9891 = vadd.f32 0.0, %v9890
    %v9892 = vpop.f32.mrb[0].mxu0
    %9893 = vmatprep.mubr.f32.mxu0 0.0
    %9894 = vmatmul.mubr.f32.gmra.mrb[0].mxu0 %v9789
    %v9895 = vpop.f32.mrb[0].mxu0
    %v9896 = vadd.f32 0.0, %v9895
    %v9897 = vpop.f32.mrb[0].mxu0
    %9898 = vdwg.mxu0
    %v9899 = vadd.f32 %v9604, %v9861
    %v9900 = vadd.f32 %v9609, %v9866
    %v9901 = vadd.f32 %v9614, %v9871
    %v9902 = vadd.f32 %v9619, %v9876
    %v9903 = vadd.f32 %v9624, %v9881
    %v9904 = vadd.f32 %v9629, %v9886
    %v9905 = vadd.f32 %v9634, %v9891
    %v9906 = vadd.f32 %v9639, %v9896
    %s9907 = scalar_lea.vmem %s51, 192
    %v9908 = vld [vmem:[%s9907] sm:$0xff]
    %v9909 = vld [vmem:[%s9907 + $0x8] sm:$0xff]
    %v9910 = vld [vmem:[%s9907 + $0x10] sm:$0xff]
    %v9911 = vld [vmem:[%s9907 + $0x18] sm:$0xff]
    %v9912 = vld [vmem:[%s9907 + $0x20] sm:$0xff]
    %v9913 = vld [vmem:[%s9907 + $0x28] sm:$0xff]
    %v9914 = vld [vmem:[%s9907 + $0x30] sm:$0xff]
    %v9915 = vld [vmem:[%s9907 + $0x38] sm:$0xff]
    %s9916 = scalar_lea.vmem %s53, 720
    %v9917 = vld [vmem:[%s9916] sm:$0xff]
    %v9918 = vld [vmem:[%s9916 + $0x8] sm:$0xff]
    %v9919 = vld [vmem:[%s9916 + $0x10] sm:$0xff]
    %v9920 = vld [vmem:[%s9916 + $0x18] sm:$0xff]
    %v9921 = vld [vmem:[%s9916 + $0x20] sm:$0xff]
    %v9922 = vld [vmem:[%s9916 + $0x28] sm:$0xff]
    %v9923 = vld [vmem:[%s9916 + $0x30] sm:$0xff]
    %v9924 = vld [vmem:[%s9916 + $0x38] sm:$0xff]
    %v9925 = vld [vmem:[%s9916 + $0x40] sm:$0xff]
    %v9926 = vld [vmem:[%s9916 + $0x48] sm:$0xff]
    %v9927 = vld [vmem:[%s9916 + $0x50] sm:$0xff]
    %v9928 = vld [vmem:[%s9916 + $0x58] sm:$0xff]
    %v9929 = vld [vmem:[%s9916 + $0x60] sm:$0xff]
    %v9930 = vld [vmem:[%s9916 + $0x68] sm:$0xff]
    %v9931 = vld [vmem:[%s9916 + $0x70] sm:$0xff]
    %v9932 = vld [vmem:[%s9916 + $0x78] sm:$0xff]
    %v9933 = vld [vmem:[%s9916 + $0x80] sm:$0xff]
    %v9934 = vld [vmem:[%s9916 + $0x88] sm:$0xff]
    %v9935 = vld [vmem:[%s9916 + $0x90] sm:$0xff]
    %v9936 = vld [vmem:[%s9916 + $0x98] sm:$0xff]
    %v9937 = vld [vmem:[%s9916 + $0xa0] sm:$0xff]
    %v9938 = vld [vmem:[%s9916 + $0xa8] sm:$0xff]
    %v9939 = vld [vmem:[%s9916 + $0xb0] sm:$0xff]
    %v9940 = vld [vmem:[%s9916 + $0xb8] sm:$0xff]
    %v9941 = vld [vmem:[%s9916 + $0xc0] sm:$0xff]
    %v9942 = vld [vmem:[%s9916 + $0xc8] sm:$0xff]
    %v9943 = vld [vmem:[%s9916 + $0xd0] sm:$0xff]
    %v9944 = vld [vmem:[%s9916 + $0xd8] sm:$0xff]
    %v9945 = vld [vmem:[%s9916 + $0xe0] sm:$0xff]
    %v9946 = vld [vmem:[%s9916 + $0xe8] sm:$0xff]
    %9947 = vmatprep.subr.mxu0 0.0
    %9948 = vmatpush1.msra.mxu0 %v9917
    %9949 = vmatprep.subr.mxu0 0.0
    %9950 = vmatpush1.msra.mxu0 %v9918
    %9951 = vmatprep.subr.mxu0 0.0
    %9952 = vmatpush1.msra.mxu0 %v9919
    %9953 = vmatprep.subr.mxu0 0.0
    %9954 = vmatpush1.msra.mxu0 %v9920
    %9955 = vmatprep.subr.mxu0 0.0
    %9956 = vmatpush1.msra.mxu0 %v9921
    %9957 = vmatprep.subr.mxu0 0.0
    %9958 = vmatpush1.msra.mxu0 %v9922
    %9959 = vmatprep.subr.mxu0 0.0
    %9960 = vmatpush1.msra.mxu0 %v9923
    %9961 = vmatprep.subr.mxu0 0.0
    %9962 = vmatpush1.msra.mxu0 %v9924
    %9963 = vmatprep.subr.mxu0 0.0
    %9964 = vmatpush1.msra.mxu0 %v9925
    %9965 = vmatprep.subr.mxu0 0.0
    %9966 = vmatpush1.msra.mxu0 %v9926
    %9967 = vmatprep.subr.mxu0 0.0
    %9968 = vmatpush1.msra.mxu0 %v9927
    %9969 = vmatprep.subr.mxu0 0.0
    %9970 = vmatpush1.msra.mxu0 %v9928
    %9971 = vmatprep.subr.mxu0 0.0
    %9972 = vmatpush1.msra.mxu0 %v9929
    %9973 = vmatprep.subr.mxu0 0.0
    %9974 = vmatpush1.msra.mxu0 %v9930
    %9975 = vmatprep.subr.mxu0 0.0
    %9976 = vmatpush1.msra.mxu0 %v9931
    %9977 = vmatprep.subr.mxu0 0.0
    %9978 = vmatpush1.msra.mxu0 %v9932
    %9979 = vmatprep.subr.mxu0 0.0
    %9980 = vmatpush1.msra.mxu0 %v9933
    %9981 = vmatprep.subr.mxu0 0.0
    %9982 = vmatpush1.msra.mxu0 %v9934
    %9983 = vmatprep.subr.mxu0 0.0
    %9984 = vmatpush1.msra.mxu0 %v9935
    %9985 = vmatprep.subr.mxu0 0.0
    %9986 = vmatpush1.msra.mxu0 %v9936
    %9987 = vmatprep.subr.mxu0 0.0
    %9988 = vmatpush1.msra.mxu0 %v9937
    %9989 = vmatprep.subr.mxu0 0.0
    %9990 = vmatpush1.msra.mxu0 %v9938
    %9991 = vmatprep.subr.mxu0 0.0
    %9992 = vmatpush1.msra.mxu0 %v9939
    %9993 = vmatprep.subr.mxu0 0.0
    %9994 = vmatpush1.msra.mxu0 %v9940
    %9995 = vmatprep.subr.mxu0 0.0
    %9996 = vmatpush1.msra.mxu0 %v9941
    %9997 = vmatprep.subr.mxu0 0.0
    %9998 = vmatpush1.msra.mxu0 %v9942
    %9999 = vmatprep.subr.mxu0 0.0
    %10000 = vmatpush1.msra.mxu0 %v9943
    %10001 = vmatprep.subr.mxu0 0.0
    %10002 = vmatpush1.msra.mxu0 %v9944
    %10003 = vmatprep.subr.mxu0 0.0
    %10004 = vmatpush1.msra.mxu0 %v9945
    %10005 = vmatprep.subr.mxu0 0.0
    %10006 = vmatpush1.msra.mxu0 %v9946
    %10007 = vmatprep.subr.mxu0 0.0
    %10008 = vmatpush1.msra.mxu0 0.0
    %10009 = vmatprep.subr.mxu0 0.0
    %10010 = vmatpush1.msra.mxu0 0.0
    %10011 = vmatprep.mubr.f32.mxu0 %v9157
    %10012 = vmatmul.mubr.f32.gmra.mrb[0].mxu0 %v9109
    %v10013 = vpop.f32.mrb[0].mxu0
    %v10014 = vadd.f32 0.0, %v10013
    %v10015 = vpop.f32.mrb[0].mxu0
    %10016 = vmatprep.mubr.f32.mxu0 %v9160
    %10017 = vmatmul.mubr.f32.gmra.mrb[0].mxu0 %v9111
    %v10018 = vpop.f32.mrb[0].mxu0
    %v10019 = vadd.f32 0.0, %v10018
    %v10020 = vpop.f32.mrb[0].mxu0
    %10021 = vmatprep.mubr.f32.mxu0 %v9163
    %10022 = vmatmul.mubr.f32.gmra.mrb[0].mxu0 %v9113
    %v10023 = vpop.f32.mrb[0].mxu0
    %v10024 = vadd.f32 0.0, %v10023
    %v10025 = vpop.f32.mrb[0].mxu0
    %10026 = vmatprep.mubr.f32.mxu0 %v9166
    %10027 = vmatmul.mubr.f32.gmra.mrb[0].mxu0 %v9115
    %v10028 = vpop.f32.mrb[0].mxu0
    %v10029 = vadd.f32 0.0, %v10028
    %v10030 = vpop.f32.mrb[0].mxu0
    %10031 = vdwg.mxu0
    %v10033 = vsel %vm1655, %v9908, 0
    %v10036 = vsel %vm1655, %v9909, 0
    %v10039 = vsel %vm1655, %v9910, 0
    %v10042 = vsel %vm1655, %v9911, 0
    %v10045 = vsel %vm1655, %v9912, 0
    %v10048 = vsel %vm1655, %v9913, 0
    %v10051 = vsel %vm1655, %v9914, 0
    %v10054 = vsel %vm1655, %v9915, 0
    %v10057 = vsel %vm1662, %v10029, 0
    %10059 = vmatprep.subr.mxu0 0.0
    %10060 = vmatpush1.msra.mxu0 %v10014
    %10061 = vmatprep.subr.mxu0 0.0
    %10062 = vmatpush1.msra.mxu0 %v10019
    %10063 = vmatprep.subr.mxu0 0.0
    %10064 = vmatpush1.msra.mxu0 %v10024
    %10065 = vmatprep.subr.mxu0 0.0
    %10066 = vmatpush1.msra.mxu0 %v10057
    %10067 = vmatprep.subr.mxu0 0.0
    %10068 = vmatpush1.msra.mxu0 0.0
    %10069 = vmatprep.subr.mxu0 0.0
    %10070 = vmatpush1.msra.mxu0 0.0
    %10071 = vmatprep.subr.mxu0 0.0
    %10072 = vmatpush1.msra.mxu0 0.0
    %10073 = vmatprep.subr.mxu0 0.0
    %10074 = vmatpush1.msra.mxu0 0.0
    %10075 = vmatprep.subr.mxu0 0.0
    %10076 = vmatpush1.msra.mxu0 0.0
    %10077 = vmatprep.subr.mxu0 0.0
    %10078 = vmatpush1.msra.mxu0 0.0
    %10079 = vmatprep.subr.mxu0 0.0
    %10080 = vmatpush1.msra.mxu0 0.0
    %10081 = vmatprep.subr.mxu0 0.0
    %10082 = vmatpush1.msra.mxu0 0.0
    %10083 = vmatprep.subr.mxu0 0.0
    %10084 = vmatpush1.msra.mxu0 0.0
    %10085 = vmatprep.subr.mxu0 0.0
    %10086 = vmatpush1.msra.mxu0 0.0
    %10087 = vmatprep.subr.mxu0 0.0
    %10088 = vmatpush1.msra.mxu0 0.0
    %10089 = vmatprep.subr.mxu0 0.0
    %10090 = vmatpush1.msra.mxu0 0.0
    %10091 = vmatprep.subr.mxu0 0.0
    %10092 = vmatpush1.msra.mxu0 0.0
    %10093 = vmatprep.subr.mxu0 0.0
    %10094 = vmatpush1.msra.mxu0 0.0
    %10095 = vmatprep.subr.mxu0 0.0
    %10096 = vmatpush1.msra.mxu0 0.0
    %10097 = vmatprep.subr.mxu0 0.0
    %10098 = vmatpush1.msra.mxu0 0.0
    %10099 = vmatprep.subr.mxu0 0.0
    %10100 = vmatpush1.msra.mxu0 0.0
    %10101 = vmatprep.subr.mxu0 0.0
    %10102 = vmatpush1.msra.mxu0 0.0
    %10103 = vmatprep.subr.mxu0 0.0
    %10104 = vmatpush1.msra.mxu0 0.0
    %10105 = vmatprep.subr.mxu0 0.0
    %10106 = vmatpush1.msra.mxu0 0.0
    %10107 = vmatprep.subr.mxu0 0.0
    %10108 = vmatpush1.msra.mxu0 0.0
    %10109 = vmatprep.subr.mxu0 0.0
    %10110 = vmatpush1.msra.mxu0 0.0
    %10111 = vmatprep.subr.mxu0 0.0
    %10112 = vmatpush1.msra.mxu0 0.0
    %10113 = vmatprep.subr.mxu0 0.0
    %10114 = vmatpush1.msra.mxu0 0.0
    %10115 = vmatprep.subr.mxu0 0.0
    %10116 = vmatpush1.msra.mxu0 0.0
    %10117 = vmatprep.subr.mxu0 0.0
    %10118 = vmatpush1.msra.mxu0 0.0
    %10119 = vmatprep.subr.mxu0 0.0
    %10120 = vmatpush1.msra.mxu0 0.0
    %10121 = vmatprep.subr.mxu0 0.0
    %10122 = vmatpush1.msra.mxu0 0.0
    %10123 = vmatprep.mubr.f32.mxu0 0.0
    %10124 = vmatmul.mubr.f32.gmra.mrb[0].mxu0 %v10033
    %v10125 = vpop.f32.mrb[0].mxu0
    %v10126 = vadd.f32 0.0, %v10125
    %v10127 = vpop.f32.mrb[0].mxu0
    %10128 = vmatprep.mubr.f32.mxu0 0.0
    %10129 = vmatmul.mubr.f32.gmra.mrb[0].mxu0 %v10036
    %v10130 = vpop.f32.mrb[0].mxu0
    %v10131 = vadd.f32 0.0, %v10130
    %v10132 = vpop.f32.mrb[0].mxu0
    %10133 = vmatprep.mubr.f32.mxu0 0.0
    %10134 = vmatmul.mubr.f32.gmra.mrb[0].mxu0 %v10039
    %v10135 = vpop.f32.mrb[0].mxu0
    %v10136 = vadd.f32 0.0, %v10135
    %v10137 = vpop.f32.mrb[0].mxu0
    %10138 = vmatprep.mubr.f32.mxu0 0.0
    %10139 = vmatmul.mubr.f32.gmra.mrb[0].mxu0 %v10042
    %v10140 = vpop.f32.mrb[0].mxu0
    %v10141 = vadd.f32 0.0, %v10140
    %v10142 = vpop.f32.mrb[0].mxu0
    %10143 = vmatprep.mubr.f32.mxu0 0.0
    %10144 = vmatmul.mubr.f32.gmra.mrb[0].mxu0 %v10045
    %v10145 = vpop.f32.mrb[0].mxu0
    %v10146 = vadd.f32 0.0, %v10145
    %v10147 = vpop.f32.mrb[0].mxu0
    %10148 = vmatprep.mubr.f32.mxu0 0.0
    %10149 = vmatmul.mubr.f32.gmra.mrb[0].mxu0 %v10048
    %v10150 = vpop.f32.mrb[0].mxu0
    %v10151 = vadd.f32 0.0, %v10150
    %v10152 = vpop.f32.mrb[0].mxu0
    %10153 = vmatprep.mubr.f32.mxu0 0.0
    %10154 = vmatmul.mubr.f32.gmra.mrb[0].mxu0 %v10051
    %v10155 = vpop.f32.mrb[0].mxu0
    %v10156 = vadd.f32 0.0, %v10155
    %v10157 = vpop.f32.mrb[0].mxu0
    %10158 = vmatprep.mubr.f32.mxu0 0.0
    %10159 = vmatmul.mubr.f32.gmra.mrb[0].mxu0 %v10054
    %v10160 = vpop.f32.mrb[0].mxu0
    %v10161 = vadd.f32 0.0, %v10160
    %v10162 = vpop.f32.mrb[0].mxu0
    %10163 = vdwg.mxu0
    %v10164 = vadd.f32 %v9899, %v10126
    %v10165 = vadd.f32 %v9900, %v10131
    %v10166 = vadd.f32 %v9901, %v10136
    %v10167 = vadd.f32 %v9902, %v10141
    %v10168 = vadd.f32 %v9903, %v10146
    %v10169 = vadd.f32 %v9904, %v10151
    %v10170 = vadd.f32 %v9905, %v10156
    %v10171 = vadd.f32 %v9906, %v10161
    %v10172 = vld [vmem:[%s55] sm:$0x1]
    %v10174 = vlaneseq
    %v10175 = vshrl.u32 %v10174, 7
    %v10176 = vsub.s32 0, %v10175
    %v10177 = vrot.slane %v10172, %v10176
    %v10179 = vadd.f32 %v10164, %v10177
    %v10180 = vadd.f32 %v10165, %v10177
    %v10181 = vadd.f32 %v10166, %v10177
    %v10182 = vadd.f32 %v10167, %v10177
    %v10183 = vadd.f32 %v10168, %v10177
    %v10184 = vadd.f32 %v10169, %v10177
    %v10185 = vadd.f32 %v10170, %v10177
    %v10186 = vadd.f32 %v10171, %v10177
    %v10187 = vsub.f32 0.0, %v10179
    %v10188 = vsub.f32 0.0, %v10180
    %v10189 = vsub.f32 0.0, %v10181
    %v10190 = vsub.f32 0.0, %v10182
    %v10191 = vsub.f32 0.0, %v10183
    %v10192 = vsub.f32 0.0, %v10184
    %v10193 = vsub.f32 0.0, %v10185
    %v10194 = vsub.f32 0.0, %v10186
    %v10195 = vmul.f32 %v10187, 1.442695
    %v10196 = vpow.pop %v10195
    %v10197 = vmul.f32 %v10188, 1.442695
    %v10198 = vpow.pop %v10197
    %v10199 = vmul.f32 %v10189, 1.442695
    %v10200 = vpow.pop %v10199
    %v10201 = vmul.f32 %v10190, 1.442695
    %v10202 = vpow.pop %v10201
    %v10203 = vmul.f32 %v10191, 1.442695
    %v10204 = vpow.pop %v10203
    %v10205 = vmul.f32 %v10192, 1.442695
    %v10206 = vpow.pop %v10205
    %v10207 = vmul.f32 %v10193, 1.442695
    %v10208 = vpow.pop %v10207
    %v10209 = vmul.f32 %v10194, 1.442695
    %v10210 = vpow.pop %v10209
    %v10211 = vadd.f32 %v10196, 1.0
    %v10212 = vadd.f32 %v10198, 1.0
    %v10213 = vadd.f32 %v10200, 1.0
    %v10214 = vadd.f32 %v10202, 1.0
    %v10215 = vadd.f32 %v10204, 1.0
    %v10216 = vadd.f32 %v10206, 1.0
    %v10217 = vadd.f32 %v10208, 1.0
    %v10218 = vadd.f32 %v10210, 1.0
    %v10219 = vrcp.pop %v10211
    %v10220 = vmul.f32 1.0, %v10219
    %v10221 = vrcp.pop %v10212
    %v10222 = vmul.f32 1.0, %v10221
    %v10223 = vrcp.pop %v10213
    %v10224 = vmul.f32 1.0, %v10223
    %v10225 = vrcp.pop %v10214
    %v10226 = vmul.f32 1.0, %v10225
    %v10227 = vrcp.pop %v10215
    %v10228 = vmul.f32 1.0, %v10227
    %v10229 = vrcp.pop %v10216
    %v10230 = vmul.f32 1.0, %v10229
    %v10231 = vrcp.pop %v10217
    %v10232 = vmul.f32 1.0, %v10231
    %v10233 = vrcp.pop %v10218
    %v10234 = vmul.f32 1.0, %v10233
    %10235 = vst.msk [vmem:[%s57] sm:$0xff] %vm504, %v10220
    %10236 = vst.msk [vmem:[%s57 + $0x8] sm:$0xff] %vm504, %v10222
    %10237 = vst.msk [vmem:[%s57 + $0x10] sm:$0xff] %vm504, %v10224
    %10238 = vst.msk [vmem:[%s57 + $0x18] sm:$0xff] %vm504, %v10226
    %10239 = vst.msk [vmem:[%s57 + $0x20] sm:$0xff] %vm504, %v10228
    %10240 = vst.msk [vmem:[%s57 + $0x28] sm:$0xff] %vm504, %v10230
    %10241 = vst.msk [vmem:[%s57 + $0x30] sm:$0xff] %vm504, %v10232
    %10242 = vst.msk [vmem:[%s57 + $0x38] sm:$0xff] %vm504, %v10234
    %v10243 = vsub.f32 %v195, %v10220
    %v10244 = vsub.f32 %v196, %v10222
    %v10245 = vsub.f32 %v197, %v10224
    %v10246 = vsub.f32 %v198, %v10226
    %v10247 = vsub.f32 %v199, %v10228
    %v10248 = vsub.f32 %v200, %v10230
    %v10249 = vsub.f32 %v201, %v10232
    %v10250 = vsub.f32 %v202, %v10234
    %v10251 = vmul.f32 %v10243, %v10243
    %v10252 = vmul.f32 %v10244, %v10244
    %v10253 = vmul.f32 %v10245, %v10245
    %v10254 = vmul.f32 %v10246, %v10246
    %v10255 = vmul.f32 %v10247, %v10247
    %v10256 = vmul.f32 %v10248, %v10248
    %v10257 = vmul.f32 %v10249, %v10249
    %v10258 = vmul.f32 %v10250, %v10250
    %v10259 = vsel %vm504, %v10251, 0.0
    %v10260 = vsel %vm504, %v10252, 0.0
    %v10261 = vadd.f32 %v10259, %v10260
    %v10262 = vsel %vm504, %v10253, 0.0
    %v10263 = vadd.f32 %v10261, %v10262
    %v10264 = vsel %vm504, %v10254, 0.0
    %v10265 = vadd.f32 %v10263, %v10264
    %v10266 = vsel %vm504, %v10255, 0.0
    %v10267 = vadd.f32 %v10265, %v10266
    %v10268 = vsel %vm504, %v10256, 0.0
    %v10269 = vadd.f32 %v10267, %v10268
    %v10270 = vsel %vm504, %v10257, 0.0
    %v10271 = vadd.f32 %v10269, %v10270
    %v10272 = vsel %vm504, %v10258, 0.0
    %v10273 = vadd.f32 %v10271, %v10272
    %10274 = vadd.xlane.f32.xlu0 %v10273
    %v10275 = vpop.xlane.xlu0 %10274
    %v10276 = vrot.slane %v10275, 4
    %v10277 = vadd.f32 %v10275, %v10276
    %v10278 = vrot.slane %v10277, 2
    %v10279 = vadd.f32 %v10277, %v10278
    %v10280 = vrot.slane %v10279, 1
    %v10281 = vadd.f32 %v10279, %v10280
    %s10282 = vtos %v10281
    %s10283 = smul.f32 %s10282, 0.00016276042
    %v10284 = vstv %s10283
    %10285 = vst.msk [vmem:[#allocation12] sm:$0x1] %vm6370, %v10284
    // Predicated region
    $region134: #{unet_forward.1} parent=1 // pred_check
      _
    $region135: #{unet_forward.1} parent=1 // pred_check_branch
      %10287 = sbr.rel (0) target = $region137
    $region136: #{unet_forward.1} parent=1 // pred_region
      _
    $region137: #{unet_forward.1} parent=1 // pred_fallthru
      _
    // Predicated region
    $region138: #{unet_forward.1} parent=1 // pred_check
      _
    $region139: #{unet_forward.1} parent=1 // pred_check_branch
      %10289 = sbr.rel (0) target = $region141
    $region140: #{unet_forward.1} parent=1 // pred_region
      %s10291 = ssub.s32 32, 32
      %10292 = vsyncadd [#allocation4], %s10291
      %s10294 = sshll.u32 [#allocation11], 4
      %s10295 = int_to_ptr.vmem [resolvable:$true] %s10294
      %10297 = dma.vmem_to_hbm [thread:$0]  %s10295, 32, %s59, [#allocation4]
    $region141: #{unet_forward.1} parent=1 // pred_fallthru
      _
    // Predicated region
    $region142: #{unet_forward.1} parent=1 // pred_check
      _
    $region143: #{unet_forward.1} parent=1 // pred_check_branch
      %10299 = sbr.rel (0) target = $region145
    $region144: #{unet_forward.1} parent=1 // pred_region
      %s10301 = ssub.s32 16, 16
      %10302 = vsyncadd [#allocation13], %s10301
      %s10304 = sshll.u32 [#allocation12], 4
      %s10305 = int_to_ptr.vmem [resolvable:$true] %s10304
      %10307 = dma.vmem_to_hbm [thread:$0]  %s10305, 16, %s61, [#allocation13]
    $region145: #{unet_forward.1} parent=1 // pred_fallthru
      _
    // Predicated region
    $region146: #{unet_forward.1} parent=1 // pred_check
      _
    $region147: #{unet_forward.1} parent=1 // pred_check_branch
      %10309 = sbr.rel (0) target = $region149
    $region148: #{unet_forward.1} parent=1 // pred_region
      %s10311 = ssub.s32 16, 16
      %10312 = vsyncadd [#allocation13], %s10311
      %s10314 = sshll.u32 [#allocation14], 4
      %s10315 = int_to_ptr.vmem [resolvable:$true] %s10314
      %10317 = dma.vmem_to_hbm [thread:$0]  %s10315, 16, %s63, [#allocation13]
    $region149: #{unet_forward.1} parent=1 // pred_fallthru
      _
    // Predicated region
    $region150: #{unet_forward.1} parent=1 // pred_check
      _
    $region151: #{unet_forward.1} parent=1 // pred_check_branch
      %10319 = sbr.rel (0) target = $region153
    $region152: #{unet_forward.1} parent=1 // pred_region
      _
    $region153: #{unet_forward.1} parent=1 // pred_fallthru
      _
    // Predicated region
    $region154: #{unet_forward.1} parent=1 // pred_check
      _
    $region155: #{unet_forward.1} parent=1 // pred_check_branch
      %10321 = sbr.rel (0) target = $region157
    $region156: #{unet_forward.1} parent=1 // pred_region
      %10322 = dma.done [#allocation4], 32
    $region157: #{unet_forward.1} parent=1 // pred_fallthru
      _
    // Predicated region
    $region158: #{unet_forward.1} parent=1 // pred_check
      _
    $region159: #{unet_forward.1} parent=1 // pred_check_branch
      %10324 = sbr.rel (0) target = $region161
    $region160: #{unet_forward.1} parent=1 // pred_region
      %10325 = dma.done [#allocation13], 16
    $region161: #{unet_forward.1} parent=1 // pred_fallthru
      _
    // Predicated region
    $region162: #{unet_forward.1} parent=1 // pred_check
      _
    $region163: #{unet_forward.1} parent=1 // pred_check_branch
      %10327 = sbr.rel (0) target = $region165
    $region164: #{unet_forward.1} parent=1 // pred_region
      %10328 = dma.done [#allocation13], 16
    $region165: #{unet_forward.1} parent=1 // pred_fallthru
      _
    %10329 = vsyncpa [#allocation3], 1
    %10330 = vsyncpa [#allocation6], 1
    %10331 = vsyncpa [#allocation9], 1
    %10332 = vsyncpa [#allocation4], 1
    %10333 = vsyncpa [#allocation13], 1

</llo_original>
